<compile_context>
chip_gen: v7x
topology: tpu7x:2x2x1
jax: 0.10.0
libtpu: 0.0.40
codegen_flags: <defaults>
</compile_context>

<pallas_src>
import functools

import jax
import jax.numpy as jnp
from jax.experimental import pallas as pl
from jax.experimental.pallas import tpu as pltpu


LANES = 128          # lane width: all kernel output N dims padded to this
_MASK_VAL = -1e30    # finite "-inf" for padded logit columns


def _round_up(x, m):
    return (x + m - 1) // m * m


def _cdiv(a, b):
    return (a + b - 1) // b


def _pick_row_tile(m, cap=2048):
    """Row tile: as large as possible (<= cap), multiple of 8, balanced steps."""
    n = _cdiv(m, cap)
    return _round_up(_cdiv(m, n), 8)


def _pick_batch_tile(b, cap=128):
    """Batch tile for the fused conv2+head kernel: multiple of 8, >=2 grid
    steps when batch allows (v7x megacore), capped for v5e scoped VMEM."""
    if b <= 8:
        return b
    n = max(2, _cdiv(b, cap))
    return _round_up(_cdiv(b, n), 8)


def _pad_to_multiple(a, mult, axis):
    pad = (-a.shape[axis]) % mult
    if pad == 0:
        return a
    widths = [(0, 0)] * a.ndim
    widths[axis] = (0, pad)
    return jnp.pad(a, widths)


def _pad_cols(a, n):
    return jnp.pad(a, ((0, 0), (0, n - a.shape[1]))) if n > a.shape[1] else a


def _bias_pad(b, n):
    return jnp.pad(b, (0, n - b.shape[0])).reshape(1, n).astype(jnp.float32)


# ---------------------------------------------------------------------------
# Kernel A: fused  conv1(as matmul) + bias + 2x2 max-pool + ReLU
# ---------------------------------------------------------------------------
def _conv_pool_relu_kernel(p00_ref, p01_ref, p10_ref, p11_ref,
                           w_ref, b_ref, o_ref):
    w = w_ref[...]
    y = jnp.maximum(
        jnp.maximum(
            jnp.dot(p00_ref[...], w, preferred_element_type=jnp.float32),
            jnp.dot(p01_ref[...], w, preferred_element_type=jnp.float32)),
        jnp.maximum(
            jnp.dot(p10_ref[...], w, preferred_element_type=jnp.float32),
            jnp.dot(p11_ref[...], w, preferred_element_type=jnp.float32)))
    # max_pool(conv + b) == max_pool(conv) + b ; then ReLU (all f32).
    o_ref[...] = jnp.maximum(y + b_ref[...], 0.0).astype(o_ref.dtype)


def conv_pool_relu(corners, w_pad, b_pad, *, tm):
    """corners: 4 x [M, Kp] bf16 patch matrices (one per 2x2-pool corner).
    w_pad: [Kp, 128] bf16.  b_pad: [1, 128] f32.  Returns [M, 128] bf16."""
    M, Kp = corners[0].shape
    Np = w_pad.shape[1]
    grid = (M // tm,)
    row_spec = pl.BlockSpec((tm, Kp), lambda i: (i, 0))
    return pl.pallas_call(
        _conv_pool_relu_kernel,
        out_shape=jax.ShapeDtypeStruct((M, Np), jnp.bfloat16),
        grid=grid,
        in_specs=[row_spec, row_spec, row_spec, row_spec,
                  pl.BlockSpec((Kp, Np), lambda i: (0, 0)),   # resident weight
                  pl.BlockSpec((1, Np), lambda i: (0, 0))],   # resident bias
        out_specs=pl.BlockSpec((tm, Np), lambda i: (i, 0)),
        compiler_params=pltpu.CompilerParams(
            dimension_semantics=("parallel",)),
    )(*corners, w_pad, b_pad)


# ---------------------------------------------------------------------------
# Kernel B: fused  conv2 + bias + 2x2 max-pool + ReLU + fc1 + ReLU + fc2
#           + log_softmax   (one pallas_call, gridded over batch tiles)
# ---------------------------------------------------------------------------
def _conv2_head_kernel(c00_ref, c01_ref, c10_ref, c11_ref,
                       w2_ref, b2_ref, wf1_ref, bf1_ref, wf2_ref, bf2_ref,
                       o_ref, *, n_cls, n_pool):
    w2 = w2_ref[...]                       # (256, 128) bf16, resident
    b2 = b2_ref[...]                       # (1, 128) f32
    acc = jnp.zeros(o_ref.shape, jnp.float32)   # fc1 pre-activation (tb, 128)
    # Loop over the 16 pooled positions p (= h*4 + w of the torch flatten).
    for p in range(n_pool):
        y = jnp.maximum(
            jnp.maximum(
                jnp.dot(c00_ref[p, :, :], w2, preferred_element_type=jnp.float32),
                jnp.dot(c01_ref[p, :, :], w2, preferred_element_type=jnp.float32)),
            jnp.maximum(
                jnp.dot(c10_ref[p, :, :], w2, preferred_element_type=jnp.float32),
                jnp.dot(c11_ref[p, :, :], w2, preferred_element_type=jnp.float32)))
        h = jnp.maximum(y + b2, 0.0)                       # (tb, 128) f32
        # fc1 contribution of pooled position p (flatten folded into weights).
        acc = acc + jnp.dot(h.astype(jnp.bfloat16), wf1_ref[p, :, :],
                            preferred_element_type=jnp.float32)
    h1 = jnp.maximum(acc + bf1_ref[...], 0.0)              # fc1 + ReLU
    logits = jnp.dot(h1.astype(jnp.bfloat16), wf2_ref[...],
                     preferred_element_type=jnp.float32) + bf2_ref[...]
    # mask lane-padding columns so they don't pollute the softmax
    col = jax.lax.broadcasted_iota(jnp.int32, logits.shape, 1)
    logits = jnp.where(col < n_cls, logits, _MASK_VAL)
    m = jnp.max(logits, axis=-1, keepdims=True)
    z = logits - m
    lse = jnp.log(jnp.sum(jnp.exp(z), axis=-1, keepdims=True))
    o_ref[...] = (z - lse).astype(o_ref.dtype)


def conv2_head(corners, w2, b2, wf1, bf1, wf2, bf2, *, tb, n_cls):
    """corners: 4 x [16, Bp, 256] bf16 (pooled-position-major conv2 patches).
    Returns log_softmax rows [Bp, 128] f32 (first n_cls lanes valid)."""
    P, Bp, K2 = corners[0].shape
    Np = w2.shape[1]
    grid = (Bp // tb,)
    corner_spec = pl.BlockSpec((P, tb, K2), lambda i: (0, i, 0))
    return pl.pallas_call(
        functools.partial(_conv2_head_kernel, n_cls=n_cls, n_pool=P),
        out_shape=jax.ShapeDtypeStruct((Bp, Np), jnp.float32),
        grid=grid,
        in_specs=[corner_spec, corner_spec, corner_spec, corner_spec,
                  pl.BlockSpec((K2, Np), lambda i: (0, 0)),    # conv2 weight
                  pl.BlockSpec((1, Np), lambda i: (0, 0)),     # conv2 bias
                  pl.BlockSpec((P, Np, Np), lambda i: (0, 0, 0)),  # fc1 weight
                  pl.BlockSpec((1, Np), lambda i: (0, 0)),     # fc1 bias
                  pl.BlockSpec((Np, Np), lambda i: (0, 0)),    # fc2 weight
                  pl.BlockSpec((1, Np), lambda i: (0, 0))],    # fc2 bias
        out_specs=pl.BlockSpec((tb, Np), lambda i: (i, 0)),
        compiler_params=pltpu.CompilerParams(
            dimension_semantics=("parallel",)),
    )(*corners, w2, b2, wf1, bf1, wf2, bf2)


# ---------------------------------------------------------------------------
# Wrapper-side layout glue (plain JAX, lane-dense): pool-corner im2col
# ---------------------------------------------------------------------------
def _conv1_corners(x_nchw):
    """conv1 patches (Cin=1), one [B*144, 25] matrix per 2x2-pool corner.
    Row m = b*144 + ph*12 + pw ; column = kh*5 + kw."""
    B = x_nchw.shape[0]
    xs = x_nchw[:, 0, :, :]                                  # (B, 28, 28)
    k, OH, OW = 5, 24, 24
    slices = [xs[:, kh:kh + OH, kw:kw + OW]
              for kh in range(k) for kw in range(k)]
    p = jnp.stack(slices, axis=-1)                           # (B, 24, 24, 25)
    return [p[:, di::2, dj::2, :].reshape(B * 144, 25)
            for di in (0, 1) for dj in (0, 1)]


def _conv2_corners(y1_nhwc):
    """conv2 patches from the lane-dense conv1 activation (B, 12, 12, 128).
    4 matrices of shape (16, B, 256): leading dim = pooled position
    p = ph*4 + pw ; columns ordered (kh, kw, c) with c over the 10 real
    channels, zero-padded 250 -> 256."""
    B = y1_nhwc.shape[0]
    k, C, OH, OW = 5, 10, 8, 8
    slices = [y1_nhwc[:, kh:kh + OH, kw:kw + OW, :C]
              for kh in range(k) for kw in range(k)]
    p = jnp.concatenate(slices, axis=-1)                     # (B, 8, 8, 250)
    p = jnp.pad(p, ((0, 0), (0, 0), (0, 0), (0, 256 - 250)))
    corners = []
    for di in (0, 1):
        for dj in (0, 1):
            c = p[:, di::2, dj::2, :]                        # (B, 4, 4, 256)
            corners.append(jnp.transpose(c, (1, 2, 0, 3)).reshape(16, B, 256))
    return corners


# ---------------------------------------------------------------------------
# Full forward pass (matches MNIST_Network.forward, eval mode)
# ---------------------------------------------------------------------------
def mnist_forward(x, params):
    B = x.shape[0]

    # ---- conv1 + maxpool(2) + relu : kernel A ----
    K1p = 32                                                 # 25 -> 32
    corners1 = [_pad_cols(c, K1p).astype(jnp.bfloat16) for c in _conv1_corners(x)]
    M1 = B * 144
    tm1 = _pick_row_tile(M1, cap=2048)
    corners1 = [_pad_to_multiple(c, tm1, axis=0) for c in corners1]
    w1m = jnp.pad(params["conv1_w"].reshape(10, 25).T,
                  ((0, K1p - 25), (0, LANES - 10))).astype(jnp.bfloat16)
    b1m = _bias_pad(params["conv1_b"], LANES)
    y1 = conv_pool_relu(corners1, w1m, b1m, tm=tm1)          # (M1p, 128) bf16
    y1 = y1[:M1].reshape(B, 12, 12, LANES)                   # NHWC, lane-dense

    # ---- conv2 + dropout2d + maxpool(2) + relu + fc1 + relu + fc2
    #      + log_softmax : kernel B (fully fused) ----
    # TODO(synk): Dropout2d is treated as identity (eval mode); training-mode
    #             per-channel dropout is not implemented.
    corners2 = _conv2_corners(y1)                            # 4 x (16, B, 256)
    tb = _pick_batch_tile(B, cap=128)
    corners2 = [_pad_to_multiple(c, tb, axis=1) for c in corners2]

    # conv2 weight rows in (kh, kw, ci) order to match the patch columns.
    w2m = jnp.transpose(params["conv2_w"], (2, 3, 1, 0)).reshape(250, 20)
    w2m = jnp.pad(w2m, ((0, 256 - 250), (0, LANES - 20))).astype(jnp.bfloat16)
    b2m = _bias_pad(params["conv2_b"], LANES)

    # fc1 weight with the torch NCHW .view(-1, 320) flatten folded in:
    # torch input index = c*16 + p  ->  wf1m[p, c, j].
    wf1m = params["fc1_w"].T.reshape(20, 16, 50)             # (c, p, j)
    wf1m = jnp.transpose(wf1m, (1, 0, 2))                    # (p, c, j)
    wf1m = jnp.pad(wf1m, ((0, 0), (0, LANES - 20),
                          (0, LANES - 50))).astype(jnp.bfloat16)
    bf1m = _bias_pad(params["fc1_b"], LANES)
    wf2m = jnp.pad(params["fc2_w"].T,
                   ((0, LANES - 50), (0, LANES - 10))).astype(jnp.bfloat16)
    bf2m = _bias_pad(params["fc2_b"], LANES)

    out = conv2_head(corners2, w2m, b2m, wf1m, bf1m, wf2m, bf2m,
                     tb=tb, n_cls=10)                        # (Bp, 128) f32
    return out[:B, :10]


# ---------------------------------------------------------------------------
# Pure-JAX reference (sanity check)
# ---------------------------------------------------------------------------
def mnist_forward_ref(x, params):
    def conv(x, w, b):
        y = jax.lax.conv_general_dilated(
            x, w, (1, 1), "VALID",
            dimension_numbers=("NCHW", "OIHW", "NCHW"))
        return y + b[None, :, None, None]

    def pool_relu(x):
        y = jax.lax.reduce_window(x, -jnp.inf, jax.lax.max,
                                  (1, 1, 2, 2), (1, 1, 2, 2), "VALID")
        return jnp.maximum(y, 0.0)

    y = pool_relu(conv(x, params["conv1_w"], params["conv1_b"]))
    y = pool_relu(conv(y, params["conv2_w"], params["conv2_b"]))
    y = y.reshape(x.shape[0], 320)
    y = jnp.maximum(y @ params["fc1_w"].T + params["fc1_b"], 0.0)
    logits = y @ params["fc2_w"].T + params["fc2_b"]
    return jax.nn.log_softmax(logits, axis=1)


# ---------------------------------------------------------------------------
def init_params(key):
    ks = jax.random.split(key, 8)
    s = 0.1
    return {
        "conv1_w": s * jax.random.normal(ks[0], (10, 1, 5, 5), jnp.float32),
        "conv1_b": s * jax.random.normal(ks[1], (10,), jnp.float32),
        "conv2_w": s * jax.random.normal(ks[2], (20, 10, 5, 5), jnp.float32),
        "conv2_b": s * jax.random.normal(ks[3], (20,), jnp.float32),
        "fc1_w": s * jax.random.normal(ks[4], (50, 320), jnp.float32),
        "fc1_b": s * jax.random.normal(ks[5], (50,), jnp.float32),
        "fc2_w": s * jax.random.normal(ks[6], (10, 50), jnp.float32),
        "fc2_b": s * jax.random.normal(ks[7], (10,), jnp.float32),
    }


if __name__ == "__main__":
    key = jax.random.PRNGKey(0)
    pkey, xkey = jax.random.split(key)
    params = init_params(pkey)
    # MNIST geometry is fixed by the 320-wide flatten: 28x28, 1 input channel.
    x = jax.random.normal(xkey, (2, 1, 28, 28), jnp.float32)

    fwd = jax.jit(mnist_forward)
    out = jax.block_until_ready(fwd(x, params))
    assert out.shape == (2, 10) and out.dtype == jnp.float32

    ref = jax.block_until_ready(mnist_forward_ref(x, params))
    err = float(jnp.max(jnp.abs(out - ref)))
    # bf16 operands + f32 accumulation: loosened tolerance vs pure-f32 reference.
    assert jnp.allclose(out, ref, rtol=5e-2, atol=5e-2), err

    print("KERNEL_OK")
</pallas_src>

<mosaic_0001>
module attributes {stable_mosaic.version = 11 : i64} {
  func.func @_conv_pool_relu_kernel(%arg0: i32, %arg1: memref<288x32xbf16, #tpu.memory_space<vmem>>, %arg2: memref<288x32xbf16, #tpu.memory_space<vmem>>, %arg3: memref<288x32xbf16, #tpu.memory_space<vmem>>, %arg4: memref<288x32xbf16, #tpu.memory_space<vmem>>, %arg5: memref<32x128xbf16, #tpu.memory_space<vmem>>, %arg6: memref<1x128xf32, #tpu.memory_space<vmem>>, %arg7: memref<288x128xbf16, #tpu.memory_space<vmem>>) attributes {dimension_semantics = [#tpu.dimension_semantics<parallel>], iteration_bounds = array<i64: 1>, scalar_prefetch = 0 : i64, scratch_operands = 0 : i64, tpu.core_type = #tpu.core_type<tc>, window_params = [{transform_indices = @transform_0, window_bounds = array<i64: 288, 32>}, {transform_indices = @transform_1, window_bounds = array<i64: 288, 32>}, {transform_indices = @transform_2, window_bounds = array<i64: 288, 32>}, {transform_indices = @transform_3, window_bounds = array<i64: 288, 32>}, {pipeline_mode = #tpu.pipeline_mode<synchronous>, transform_indices = @transform_4, window_bounds = array<i64: 32, 128>}, {pipeline_mode = #tpu.pipeline_mode<synchronous>, transform_indices = @transform_5, window_bounds = array<i64: 1, 128>}, {transform_indices = @transform_6, window_bounds = array<i64: 288, 128>}]} {
    %c0 = arith.constant 0 : index
    %c0_0 = arith.constant 0 : index
    %0 = vector.load %arg5[%c0, %c0_0] : memref<32x128xbf16, #tpu.memory_space<vmem>>, vector<32x128xbf16>
    %c0_1 = arith.constant 0 : index
    %c0_2 = arith.constant 0 : index
    %1 = vector.load %arg1[%c0_1, %c0_2] : memref<288x32xbf16, #tpu.memory_space<vmem>>, vector<288x32xbf16>
    %cst = arith.constant dense<0.000000e+00> : vector<288x128xf32>
    %2 = tpu.matmul %1, %0, %cst {dimension_numbers = #tpu.dot_dimension_numbers<[1], [0], [0], [1], [0, 0, 1, 1], [], []>} : vector<288x32xbf16>, vector<32x128xbf16>, vector<288x128xf32> -> vector<288x128xf32>
    %c0_3 = arith.constant 0 : index
    %c0_4 = arith.constant 0 : index
    %3 = vector.load %arg2[%c0_3, %c0_4] : memref<288x32xbf16, #tpu.memory_space<vmem>>, vector<288x32xbf16>
    %cst_5 = arith.constant dense<0.000000e+00> : vector<288x128xf32>
    %4 = tpu.matmul %3, %0, %cst_5 {dimension_numbers = #tpu.dot_dimension_numbers<[1], [0], [0], [1], [0, 0, 1, 1], [], []>} : vector<288x32xbf16>, vector<32x128xbf16>, vector<288x128xf32> -> vector<288x128xf32>
    %5 = arith.maximumf %2, %4 : vector<288x128xf32>
    %c0_6 = arith.constant 0 : index
    %c0_7 = arith.constant 0 : index
    %6 = vector.load %arg3[%c0_6, %c0_7] : memref<288x32xbf16, #tpu.memory_space<vmem>>, vector<288x32xbf16>
    %cst_8 = arith.constant dense<0.000000e+00> : vector<288x128xf32>
    %7 = tpu.matmul %6, %0, %cst_8 {dimension_numbers = #tpu.dot_dimension_numbers<[1], [0], [0], [1], [0, 0, 1, 1], [], []>} : vector<288x32xbf16>, vector<32x128xbf16>, vector<288x128xf32> -> vector<288x128xf32>
    %c0_9 = arith.constant 0 : index
    %c0_10 = arith.constant 0 : index
    %8 = vector.load %arg4[%c0_9, %c0_10] : memref<288x32xbf16, #tpu.memory_space<vmem>>, vector<288x32xbf16>
    %cst_11 = arith.constant dense<0.000000e+00> : vector<288x128xf32>
    %9 = tpu.matmul %8, %0, %cst_11 {dimension_numbers = #tpu.dot_dimension_numbers<[1], [0], [0], [1], [0, 0, 1, 1], [], []>} : vector<288x32xbf16>, vector<32x128xbf16>, vector<288x128xf32> -> vector<288x128xf32>
    %10 = arith.maximumf %7, %9 : vector<288x128xf32>
    %11 = arith.maximumf %5, %10 : vector<288x128xf32>
    %c0_12 = arith.constant 0 : index
    %c0_13 = arith.constant 0 : index
    %12 = vector.load %arg6[%c0_12, %c0_13] : memref<1x128xf32, #tpu.memory_space<vmem>>, vector<1x128xf32>
    %13 = vector.broadcast %12 : vector<1x128xf32> to vector<288x128xf32>
    %14 = arith.addf %11, %13 : vector<288x128xf32>
    %cst_14 = arith.constant 0.000000e+00 : f32
    %15 = vector.broadcast %cst_14 : f32 to vector<288x128xf32>
    %16 = arith.maximumf %14, %15 : vector<288x128xf32>
    %17 = arith.truncf %16 : vector<288x128xf32> to vector<288x128xbf16>
    %c0_15 = arith.constant 0 : index
    %c0_16 = arith.constant 0 : index
    %18 = vector.load %arg7[%c0_15, %c0_16] : memref<288x128xbf16, #tpu.memory_space<vmem>>, vector<288x128xbf16>
    tpu.vector_store %arg7[%c0_15, %c0_16], %17 {strides = array<i32>} : memref<288x128xbf16, #tpu.memory_space<vmem>>, vector<288x128xbf16>,
    return
  }
  func.func @transform_0(%arg0: i32) -> (i32, i32) {
    %c0_i32 = arith.constant 0 : i32
    %c0_i32_0 = arith.constant 0 : i32
    return %arg0, %c0_i32 : i32, i32
  }
  func.func @transform_1(%arg0: i32) -> (i32, i32) {
    %c0_i32 = arith.constant 0 : i32
    %c0_i32_0 = arith.constant 0 : i32
    return %arg0, %c0_i32 : i32, i32
  }
  func.func @transform_2(%arg0: i32) -> (i32, i32) {
    %c0_i32 = arith.constant 0 : i32
    %c0_i32_0 = arith.constant 0 : i32
    return %arg0, %c0_i32 : i32, i32
  }
  func.func @transform_3(%arg0: i32) -> (i32, i32) {
    %c0_i32 = arith.constant 0 : i32
    %c0_i32_0 = arith.constant 0 : i32
    return %arg0, %c0_i32 : i32, i32
  }
  func.func @transform_4(%arg0: i32) -> (i32, i32) {
    %c0_i32 = arith.constant 0 : i32
    %c0_i32_0 = arith.constant 0 : i32
    %c0_i32_1 = arith.constant 0 : i32
    return %c0_i32, %c0_i32_0 : i32, i32
  }
  func.func @transform_5(%arg0: i32) -> (i32, i32) {
    %c0_i32 = arith.constant 0 : i32
    %c0_i32_0 = arith.constant 0 : i32
    %c0_i32_1 = arith.constant 0 : i32
    return %c0_i32, %c0_i32_0 : i32, i32
  }
  func.func @transform_6(%arg0: i32) -> (i32, i32) {
    %c0_i32 = arith.constant 0 : i32
    %c0_i32_0 = arith.constant 0 : i32
    return %arg0, %c0_i32 : i32, i32
  }
}

module attributes {stable_mosaic.version = 11 : i64} {
  func.func @_conv2_head_kernel(%arg0: i32, %arg1: memref<16x2x256xbf16, #tpu.memory_space<vmem>>, %arg2: memref<16x2x256xbf16, #tpu.memory_space<vmem>>, %arg3: memref<16x2x256xbf16, #tpu.memory_space<vmem>>, %arg4: memref<16x2x256xbf16, #tpu.memory_space<vmem>>, %arg5: memref<256x128xbf16, #tpu.memory_space<vmem>>, %arg6: memref<1x128xf32, #tpu.memory_space<vmem>>, %arg7: memref<16x128x128xbf16, #tpu.memory_space<vmem>>, %arg8: memref<1x128xf32, #tpu.memory_space<vmem>>, %arg9: memref<128x128xbf16, #tpu.memory_space<vmem>>, %arg10: memref<1x128xf32, #tpu.memory_space<vmem>>, %arg11: memref<2x128xf32, #tpu.memory_space<vmem>>) attributes {dimension_semantics = [#tpu.dimension_semantics<parallel>], iteration_bounds = array<i64: 1>, scalar_prefetch = 0 : i64, scratch_operands = 0 : i64, tpu.core_type = #tpu.core_type<tc>, window_params = [{transform_indices = @transform_0, window_bounds = array<i64: 16, 2, 256>}, {transform_indices = @transform_1, window_bounds = array<i64: 16, 2, 256>}, {transform_indices = @transform_2, window_bounds = array<i64: 16, 2, 256>}, {transform_indices = @transform_3, window_bounds = array<i64: 16, 2, 256>}, {pipeline_mode = #tpu.pipeline_mode<synchronous>, transform_indices = @transform_4, window_bounds = array<i64: 256, 128>}, {pipeline_mode = #tpu.pipeline_mode<synchronous>, transform_indices = @transform_5, window_bounds = array<i64: 1, 128>}, {pipeline_mode = #tpu.pipeline_mode<synchronous>, transform_indices = @transform_6, window_bounds = array<i64: 16, 128, 128>}, {pipeline_mode = #tpu.pipeline_mode<synchronous>, transform_indices = @transform_7, window_bounds = array<i64: 1, 128>}, {pipeline_mode = #tpu.pipeline_mode<synchronous>, transform_indices = @transform_8, window_bounds = array<i64: 128, 128>}, {pipeline_mode = #tpu.pipeline_mode<synchronous>, transform_indices = @transform_9, window_bounds = array<i64: 1, 128>}, {transform_indices = @transform_10, window_bounds = array<i64: 2, 128>}]} {
    %c0 = arith.constant 0 : index
    %c0_0 = arith.constant 0 : index
    %0 = vector.load %arg5[%c0, %c0_0] : memref<256x128xbf16, #tpu.memory_space<vmem>>, vector<256x128xbf16>
    %c0_1 = arith.constant 0 : index
    %c0_2 = arith.constant 0 : index
    %1 = vector.load %arg6[%c0_1, %c0_2] : memref<1x128xf32, #tpu.memory_space<vmem>>, vector<1x128xf32>
    %cst = arith.constant 0.000000e+00 : f32
    %2 = vector.broadcast %cst : f32 to vector<2x128xf32>
    %c0_3 = arith.constant 0 : index
    %c0_4 = arith.constant 0 : index
    %c0_5 = arith.constant 0 : index
    %3 = vector.load %arg1[%c0_3, %c0_4, %c0_5] : memref<16x2x256xbf16, #tpu.memory_space<vmem>>, vector<1x2x256xbf16>
    %4 = vector.shape_cast %3 : vector<1x2x256xbf16> to vector<2x256xbf16>
    %cst_6 = arith.constant dense<0.000000e+00> : vector<2x128xf32>
    %5 = tpu.matmul %4, %0, %cst_6 {dimension_numbers = #tpu.dot_dimension_numbers<[1], [0], [0], [1], [0, 0, 1, 1], [], []>} : vector<2x256xbf16>, vector<256x128xbf16>, vector<2x128xf32> -> vector<2x128xf32>
    %c0_7 = arith.constant 0 : index
    %c0_8 = arith.constant 0 : index
    %c0_9 = arith.constant 0 : index
    %6 = vector.load %arg2[%c0_7, %c0_8, %c0_9] : memref<16x2x256xbf16, #tpu.memory_space<vmem>>, vector<1x2x256xbf16>
    %7 = vector.shape_cast %6 : vector<1x2x256xbf16> to vector<2x256xbf16>
    %cst_10 = arith.constant dense<0.000000e+00> : vector<2x128xf32>
    %8 = tpu.matmul %7, %0, %cst_10 {dimension_numbers = #tpu.dot_dimension_numbers<[1], [0], [0], [1], [0, 0, 1, 1], [], []>} : vector<2x256xbf16>, vector<256x128xbf16>, vector<2x128xf32> -> vector<2x128xf32>
    %9 = arith.maximumf %5, %8 : vector<2x128xf32>
    %c0_11 = arith.constant 0 : index
    %c0_12 = arith.constant 0 : index
    %c0_13 = arith.constant 0 : index
    %10 = vector.load %arg3[%c0_11, %c0_12, %c0_13] : memref<16x2x256xbf16, #tpu.memory_space<vmem>>, vector<1x2x256xbf16>
    %11 = vector.shape_cast %10 : vector<1x2x256xbf16> to vector<2x256xbf16>
    %cst_14 = arith.constant dense<0.000000e+00> : vector<2x128xf32>
    %12 = tpu.matmul %11, %0, %cst_14 {dimension_numbers = #tpu.dot_dimension_numbers<[1], [0], [0], [1], [0, 0, 1, 1], [], []>} : vector<2x256xbf16>, vector<256x128xbf16>, vector<2x128xf32> -> vector<2x128xf32>
    %c0_15 = arith.constant 0 : index
    %c0_16 = arith.constant 0 : index
    %c0_17 = arith.constant 0 : index
    %13 = vector.load %arg4[%c0_15, %c0_16, %c0_17] : memref<16x2x256xbf16, #tpu.memory_space<vmem>>, vector<1x2x256xbf16>
    %14 = vector.shape_cast %13 : vector<1x2x256xbf16> to vector<2x256xbf16>
    %cst_18 = arith.constant dense<0.000000e+00> : vector<2x128xf32>
    %15 = tpu.matmul %14, %0, %cst_18 {dimension_numbers = #tpu.dot_dimension_numbers<[1], [0], [0], [1], [0, 0, 1, 1], [], []>} : vector<2x256xbf16>, vector<256x128xbf16>, vector<2x128xf32> -> vector<2x128xf32>
    %16 = arith.maximumf %12, %15 : vector<2x128xf32>
    %17 = arith.maximumf %9, %16 : vector<2x128xf32>
    %18 = vector.broadcast %1 : vector<1x128xf32> to vector<2x128xf32>
    %19 = arith.addf %17, %18 : vector<2x128xf32>
    %cst_19 = arith.constant 0.000000e+00 : f32
    %20 = vector.broadcast %cst_19 : f32 to vector<2x128xf32>
    %21 = arith.maximumf %19, %20 : vector<2x128xf32>
    %22 = arith.truncf %21 : vector<2x128xf32> to vector<2x128xbf16>
    %c0_20 = arith.constant 0 : index
    %c0_21 = arith.constant 0 : index
    %c0_22 = arith.constant 0 : index
    %23 = vector.load %arg7[%c0_20, %c0_21, %c0_22] : memref<16x128x128xbf16, #tpu.memory_space<vmem>>, vector<1x128x128xbf16>
    %24 = vector.shape_cast %23 : vector<1x128x128xbf16> to vector<128x128xbf16>
    %cst_23 = arith.constant dense<0.000000e+00> : vector<2x128xf32>
    %25 = tpu.matmul %22, %24, %cst_23 {dimension_numbers = #tpu.dot_dimension_numbers<[1], [0], [0], [1], [0, 0, 1, 1], [], []>} : vector<2x128xbf16>, vector<128x128xbf16>, vector<2x128xf32> -> vector<2x128xf32>
    %26 = arith.addf %2, %25 : vector<2x128xf32>
    %c1 = arith.constant 1 : index
    %c0_24 = arith.constant 0 : index
    %c0_25 = arith.constant 0 : index
    %27 = vector.load %arg1[%c1, %c0_24, %c0_25] : memref<16x2x256xbf16, #tpu.memory_space<vmem>>, vector<1x2x256xbf16>
    %28 = vector.shape_cast %27 : vector<1x2x256xbf16> to vector<2x256xbf16>
    %cst_26 = arith.constant dense<0.000000e+00> : vector<2x128xf32>
    %29 = tpu.matmul %28, %0, %cst_26 {dimension_numbers = #tpu.dot_dimension_numbers<[1], [0], [0], [1], [0, 0, 1, 1], [], []>} : vector<2x256xbf16>, vector<256x128xbf16>, vector<2x128xf32> -> vector<2x128xf32>
    %c1_27 = arith.constant 1 : index
    %c0_28 = arith.constant 0 : index
    %c0_29 = arith.constant 0 : index
    %30 = vector.load %arg2[%c1_27, %c0_28, %c0_29] : memref<16x2x256xbf16, #tpu.memory_space<vmem>>, vector<1x2x256xbf16>
    %31 = vector.shape_cast %30 : vector<1x2x256xbf16> to vector<2x256xbf16>
    %cst_30 = arith.constant dense<0.000000e+00> : vector<2x128xf32>
    %32 = tpu.matmul %31, %0, %cst_30 {dimension_numbers = #tpu.dot_dimension_numbers<[1], [0], [0], [1], [0, 0, 1, 1], [], []>} : vector<2x256xbf16>, vector<256x128xbf16>, vector<2x128xf32> -> vector<2x128xf32>
    %33 = arith.maximumf %29, %32 : vector<2x128xf32>
    %c1_31 = arith.constant 1 : index
    %c0_32 = arith.constant 0 : index
    %c0_33 = arith.constant 0 : index
    %34 = vector.load %arg3[%c1_31, %c0_32, %c0_33] : memref<16x2x256xbf16, #tpu.memory_space<vmem>>, vector<1x2x256xbf16>
    %35 = vector.shape_cast %34 : vector<1x2x256xbf16> to vector<2x256xbf16>
    %cst_34 = arith.constant dense<0.000000e+00> : vector<2x128xf32>
    %36 = tpu.matmul %35, %0, %cst_34 {dimension_numbers = #tpu.dot_dimension_numbers<[1], [0], [0], [1], [0, 0, 1, 1], [], []>} : vector<2x256xbf16>, vector<256x128xbf16>, vector<2x128xf32> -> vector<2x128xf32>
    %c1_35 = arith.constant 1 : index
    %c0_36 = arith.constant 0 : index
    %c0_37 = arith.constant 0 : index
    %37 = vector.load %arg4[%c1_35, %c0_36, %c0_37] : memref<16x2x256xbf16, #tpu.memory_space<vmem>>, vector<1x2x256xbf16>
    %38 = vector.shape_cast %37 : vector<1x2x256xbf16> to vector<2x256xbf16>
    %cst_38 = arith.constant dense<0.000000e+00> : vector<2x128xf32>
    %39 = tpu.matmul %38, %0, %cst_38 {dimension_numbers = #tpu.dot_dimension_numbers<[1], [0], [0], [1], [0, 0, 1, 1], [], []>} : vector<2x256xbf16>, vector<256x128xbf16>, vector<2x128xf32> -> vector<2x128xf32>
    %40 = arith.maximumf %36, %39 : vector<2x128xf32>
    %41 = arith.maximumf %33, %40 : vector<2x128xf32>
    %42 = vector.broadcast %1 : vector<1x128xf32> to vector<2x128xf32>
    %43 = arith.addf %41, %42 : vector<2x128xf32>
    %cst_39 = arith.constant 0.000000e+00 : f32
    %44 = vector.broadcast %cst_39 : f32 to vector<2x128xf32>
    %45 = arith.maximumf %43, %44 : vector<2x128xf32>
    %46 = arith.truncf %45 : vector<2x128xf32> to vector<2x128xbf16>
    %c1_40 = arith.constant 1 : index
    %c0_41 = arith.constant 0 : index
    %c0_42 = arith.constant 0 : index
    %47 = vector.load %arg7[%c1_40, %c0_41, %c0_42] : memref<16x128x128xbf16, #tpu.memory_space<vmem>>, vector<1x128x128xbf16>
    %48 = vector.shape_cast %47 : vector<1x128x128xbf16> to vector<128x128xbf16>
    %cst_43 = arith.constant dense<0.000000e+00> : vector<2x128xf32>
    %49 = tpu.matmul %46, %48, %cst_43 {dimension_numbers = #tpu.dot_dimension_numbers<[1], [0], [0], [1], [0, 0, 1, 1], [], []>} : vector<2x128xbf16>, vector<128x128xbf16>, vector<2x128xf32> -> vector<2x128xf32>
    %50 = arith.addf %26, %49 : vector<2x128xf32>
    %c2 = arith.constant 2 : index
    %c0_44 = arith.constant 0 : index
    %c0_45 = arith.constant 0 : index
    %51 = vector.load %arg1[%c2, %c0_44, %c0_45] : memref<16x2x256xbf16, #tpu.memory_space<vmem>>, vector<1x2x256xbf16>
    %52 = vector.shape_cast %51 : vector<1x2x256xbf16> to vector<2x256xbf16>
    %cst_46 = arith.constant dense<0.000000e+00> : vector<2x128xf32>
    %53 = tpu.matmul %52, %0, %cst_46 {dimension_numbers = #tpu.dot_dimension_numbers<[1], [0], [0], [1], [0, 0, 1, 1], [], []>} : vector<2x256xbf16>, vector<256x128xbf16>, vector<2x128xf32> -> vector<2x128xf32>
    %c2_47 = arith.constant 2 : index
    %c0_48 = arith.constant 0 : index
    %c0_49 = arith.constant 0 : index
    %54 = vector.load %arg2[%c2_47, %c0_48, %c0_49] : memref<16x2x256xbf16, #tpu.memory_space<vmem>>, vector<1x2x256xbf16>
    %55 = vector.shape_cast %54 : vector<1x2x256xbf16> to vector<2x256xbf16>
    %cst_50 = arith.constant dense<0.000000e+00> : vector<2x128xf32>
    %56 = tpu.matmul %55, %0, %cst_50 {dimension_numbers = #tpu.dot_dimension_numbers<[1], [0], [0], [1], [0, 0, 1, 1], [], []>} : vector<2x256xbf16>, vector<256x128xbf16>, vector<2x128xf32> -> vector<2x128xf32>
    %57 = arith.maximumf %53, %56 : vector<2x128xf32>
    %c2_51 = arith.constant 2 : index
    %c0_52 = arith.constant 0 : index
    %c0_53 = arith.constant 0 : index
    %58 = vector.load %arg3[%c2_51, %c0_52, %c0_53] : memref<16x2x256xbf16, #tpu.memory_space<vmem>>, vector<1x2x256xbf16>
    %59 = vector.shape_cast %58 : vector<1x2x256xbf16> to vector<2x256xbf16>
    %cst_54 = arith.constant dense<0.000000e+00> : vector<2x128xf32>
    %60 = tpu.matmul %59, %0, %cst_54 {dimension_numbers = #tpu.dot_dimension_numbers<[1], [0], [0], [1], [0, 0, 1, 1], [], []>} : vector<2x256xbf16>, vector<256x128xbf16>, vector<2x128xf32> -> vector<2x128xf32>
    %c2_55 = arith.constant 2 : index
    %c0_56 = arith.constant 0 : index
    %c0_57 = arith.constant 0 : index
    %61 = vector.load %arg4[%c2_55, %c0_56, %c0_57] : memref<16x2x256xbf16, #tpu.memory_space<vmem>>, vector<1x2x256xbf16>
    %62 = vector.shape_cast %61 : vector<1x2x256xbf16> to vector<2x256xbf16>
    %cst_58 = arith.constant dense<0.000000e+00> : vector<2x128xf32>
    %63 = tpu.matmul %62, %0, %cst_58 {dimension_numbers = #tpu.dot_dimension_numbers<[1], [0], [0], [1], [0, 0, 1, 1], [], []>} : vector<2x256xbf16>, vector<256x128xbf16>, vector<2x128xf32> -> vector<2x128xf32>
    %64 = arith.maximumf %60, %63 : vector<2x128xf32>
    %65 = arith.maximumf %57, %64 : vector<2x128xf32>
    %66 = vector.broadcast %1 : vector<1x128xf32> to vector<2x128xf32>
    %67 = arith.addf %65, %66 : vector<2x128xf32>
    %cst_59 = arith.constant 0.000000e+00 : f32
    %68 = vector.broadcast %cst_59 : f32 to vector<2x128xf32>
    %69 = arith.maximumf %67, %68 : vector<2x128xf32>
    %70 = arith.truncf %69 : vector<2x128xf32> to vector<2x128xbf16>
    %c2_60 = arith.constant 2 : index
    %c0_61 = arith.constant 0 : index
    %c0_62 = arith.constant 0 : index
    %71 = vector.load %arg7[%c2_60, %c0_61, %c0_62] : memref<16x128x128xbf16, #tpu.memory_space<vmem>>, vector<1x128x128xbf16>
    %72 = vector.shape_cast %71 : vector<1x128x128xbf16> to vector<128x128xbf16>
    %cst_63 = arith.constant dense<0.000000e+00> : vector<2x128xf32>
    %73 = tpu.matmul %70, %72, %cst_63 {dimension_numbers = #tpu.dot_dimension_numbers<[1], [0], [0], [1], [0, 0, 1, 1], [], []>} : vector<2x128xbf16>, vector<128x128xbf16>, vector<2x128xf32> -> vector<2x128xf32>
    %74 = arith.addf %50, %73 : vector<2x128xf32>
    %c3 = arith.constant 3 : index
    %c0_64 = arith.constant 0 : index
    %c0_65 = arith.constant 0 : index
    %75 = vector.load %arg1[%c3, %c0_64, %c0_65] : memref<16x2x256xbf16, #tpu.memory_space<vmem>>, vector<1x2x256xbf16>
    %76 = vector.shape_cast %75 : vector<1x2x256xbf16> to vector<2x256xbf16>
    %cst_66 = arith.constant dense<0.000000e+00> : vector<2x128xf32>
    %77 = tpu.matmul %76, %0, %cst_66 {dimension_numbers = #tpu.dot_dimension_numbers<[1], [0], [0], [1], [0, 0, 1, 1], [], []>} : vector<2x256xbf16>, vector<256x128xbf16>, vector<2x128xf32> -> vector<2x128xf32>
    %c3_67 = arith.constant 3 : index
    %c0_68 = arith.constant 0 : index
    %c0_69 = arith.constant 0 : index
    %78 = vector.load %arg2[%c3_67, %c0_68, %c0_69] : memref<16x2x256xbf16, #tpu.memory_space<vmem>>, vector<1x2x256xbf16>
    %79 = vector.shape_cast %78 : vector<1x2x256xbf16> to vector<2x256xbf16>
    %cst_70 = arith.constant dense<0.000000e+00> : vector<2x128xf32>
    %80 = tpu.matmul %79, %0, %cst_70 {dimension_numbers = #tpu.dot_dimension_numbers<[1], [0], [0], [1], [0, 0, 1, 1], [], []>} : vector<2x256xbf16>, vector<256x128xbf16>, vector<2x128xf32> -> vector<2x128xf32>
    %81 = arith.maximumf %77, %80 : vector<2x128xf32>
    %c3_71 = arith.constant 3 : index
    %c0_72 = arith.constant 0 : index
    %c0_73 = arith.constant 0 : index
    %82 = vector.load %arg3[%c3_71, %c0_72, %c0_73] : memref<16x2x256xbf16, #tpu.memory_space<vmem>>, vector<1x2x256xbf16>
    %83 = vector.shape_cast %82 : vector<1x2x256xbf16> to vector<2x256xbf16>
    %cst_74 = arith.constant dense<0.000000e+00> : vector<2x128xf32>
    %84 = tpu.matmul %83, %0, %cst_74 {dimension_numbers = #tpu.dot_dimension_numbers<[1], [0], [0], [1], [0, 0, 1, 1], [], []>} : vector<2x256xbf16>, vector<256x128xbf16>, vector<2x128xf32> -> vector<2x128xf32>
    %c3_75 = arith.constant 3 : index
    %c0_76 = arith.constant 0 : index
    %c0_77 = arith.constant 0 : index
    %85 = vector.load %arg4[%c3_75, %c0_76, %c0_77] : memref<16x2x256xbf16, #tpu.memory_space<vmem>>, vector<1x2x256xbf16>
    %86 = vector.shape_cast %85 : vector<1x2x256xbf16> to vector<2x256xbf16>
    %cst_78 = arith.constant dense<0.000000e+00> : vector<2x128xf32>
    %87 = tpu.matmul %86, %0, %cst_78 {dimension_numbers = #tpu.dot_dimension_numbers<[1], [0], [0], [1], [0, 0, 1, 1], [], []>} : vector<2x256xbf16>, vector<256x128xbf16>, vector<2x128xf32> -> vector<2x128xf32>
    %88 = arith.maximumf %84, %87 : vector<2x128xf32>
    %89 = arith.maximumf %81, %88 : vector<2x128xf32>
    %90 = vector.broadcast %1 : vector<1x128xf32> to vector<2x128xf32>
    %91 = arith.addf %89, %90 : vector<2x128xf32>
    %cst_79 = arith.constant 0.000000e+00 : f32
    %92 = vector.broadcast %cst_79 : f32 to vector<2x128xf32>
    %93 = arith.maximumf %91, %92 : vector<2x128xf32>
    %94 = arith.truncf %93 : vector<2x128xf32> to vector<2x128xbf16>
    %c3_80 = arith.constant 3 : index
    %c0_81 = arith.constant 0 : index
    %c0_82 = arith.constant 0 : index
    %95 = vector.load %arg7[%c3_80, %c0_81, %c0_82] : memref<16x128x128xbf16, #tpu.memory_space<vmem>>, vector<1x128x128xbf16>
    %96 = vector.shape_cast %95 : vector<1x128x128xbf16> to vector<128x128xbf16>
    %cst_83 = arith.constant dense<0.000000e+00> : vector<2x128xf32>
    %97 = tpu.matmul %94, %96, %cst_83 {dimension_numbers = #tpu.dot_dimension_numbers<[1], [0], [0], [1], [0, 0, 1, 1], [], []>} : vector<2x128xbf16>, vector<128x128xbf16>, vector<2x128xf32> -> vector<2x128xf32>
    %98 = arith.addf %74, %97 : vector<2x128xf32>
    %c4 = arith.constant 4 : index
    %c0_84 = arith.constant 0 : index
    %c0_85 = arith.constant 0 : index
    %99 = vector.load %arg1[%c4, %c0_84, %c0_85] : memref<16x2x256xbf16, #tpu.memory_space<vmem>>, vector<1x2x256xbf16>
    %100 = vector.shape_cast %99 : vector<1x2x256xbf16> to vector<2x256xbf16>
    %cst_86 = arith.constant dense<0.000000e+00> : vector<2x128xf32>
    %101 = tpu.matmul %100, %0, %cst_86 {dimension_numbers = #tpu.dot_dimension_numbers<[1], [0], [0], [1], [0, 0, 1, 1], [], []>} : vector<2x256xbf16>, vector<256x128xbf16>, vector<2x128xf32> -> vector<2x128xf32>
    %c4_87 = arith.constant 4 : index
    %c0_88 = arith.constant 0 : index
    %c0_89 = arith.constant 0 : index
    %102 = vector.load %arg2[%c4_87, %c0_88, %c0_89] : memref<16x2x256xbf16, #tpu.memory_space<vmem>>, vector<1x2x256xbf16>
    %103 = vector.shape_cast %102 : vector<1x2x256xbf16> to vector<2x256xbf16>
    %cst_90 = arith.constant dense<0.000000e+00> : vector<2x128xf32>
    %104 = tpu.matmul %103, %0, %cst_90 {dimension_numbers = #tpu.dot_dimension_numbers<[1], [0], [0], [1], [0, 0, 1, 1], [], []>} : vector<2x256xbf16>, vector<256x128xbf16>, vector<2x128xf32> -> vector<2x128xf32>
    %105 = arith.maximumf %101, %104 : vector<2x128xf32>
    %c4_91 = arith.constant 4 : index
    %c0_92 = arith.constant 0 : index
    %c0_93 = arith.constant 0 : index
    %106 = vector.load %arg3[%c4_91, %c0_92, %c0_93] : memref<16x2x256xbf16, #tpu.memory_space<vmem>>, vector<1x2x256xbf16>
    %107 = vector.shape_cast %106 : vector<1x2x256xbf16> to vector<2x256xbf16>
    %cst_94 = arith.constant dense<0.000000e+00> : vector<2x128xf32>
    %108 = tpu.matmul %107, %0, %cst_94 {dimension_numbers = #tpu.dot_dimension_numbers<[1], [0], [0], [1], [0, 0, 1, 1], [], []>} : vector<2x256xbf16>, vector<256x128xbf16>, vector<2x128xf32> -> vector<2x128xf32>
    %c4_95 = arith.constant 4 : index
    %c0_96 = arith.constant 0 : index
    %c0_97 = arith.constant 0 : index
    %109 = vector.load %arg4[%c4_95, %c0_96, %c0_97] : memref<16x2x256xbf16, #tpu.memory_space<vmem>>, vector<1x2x256xbf16>
    %110 = vector.shape_cast %109 : vector<1x2x256xbf16> to vector<2x256xbf16>
    %cst_98 = arith.constant dense<0.000000e+00> : vector<2x128xf32>
    %111 = tpu.matmul %110, %0, %cst_98 {dimension_numbers = #tpu.dot_dimension_numbers<[1], [0], [0], [1], [0, 0, 1, 1], [], []>} : vector<2x256xbf16>, vector<256x128xbf16>, vector<2x128xf32> -> vector<2x128xf32>
    %112 = arith.maximumf %108, %111 : vector<2x128xf32>
    %113 = arith.maximumf %105, %112 : vector<2x128xf32>
    %114 = vector.broadcast %1 : vector<1x128xf32> to vector<2x128xf32>
    %115 = arith.addf %113, %114 : vector<2x128xf32>
    %cst_99 = arith.constant 0.000000e+00 : f32
    %116 = vector.broadcast %cst_99 : f32 to vector<2x128xf32>
    %117 = arith.maximumf %115, %116 : vector<2x128xf32>
    %118 = arith.truncf %117 : vector<2x128xf32> to vector<2x128xbf16>
    %c4_100 = arith.constant 4 : index
    %c0_101 = arith.constant 0 : index
    %c0_102 = arith.constant 0 : index
    %119 = vector.load %arg7[%c4_100, %c0_101, %c0_102] : memref<16x128x128xbf16, #tpu.memory_space<vmem>>, vector<1x128x128xbf16>
    %120 = vector.shape_cast %119 : vector<1x128x128xbf16> to vector<128x128xbf16>
    %cst_103 = arith.constant dense<0.000000e+00> : vector<2x128xf32>
    %121 = tpu.matmul %118, %120, %cst_103 {dimension_numbers = #tpu.dot_dimension_numbers<[1], [0], [0], [1], [0, 0, 1, 1], [], []>} : vector<2x128xbf16>, vector<128x128xbf16>, vector<2x128xf32> -> vector<2x128xf32>
    %122 = arith.addf %98, %121 : vector<2x128xf32>
    %c5 = arith.constant 5 : index
    %c0_104 = arith.constant 0 : index
    %c0_105 = arith.constant 0 : index
    %123 = vector.load %arg1[%c5, %c0_104, %c0_105] : memref<16x2x256xbf16, #tpu.memory_space<vmem>>, vector<1x2x256xbf16>
    %124 = vector.shape_cast %123 : vector<1x2x256xbf16> to vector<2x256xbf16>
    %cst_106 = arith.constant dense<0.000000e+00> : vector<2x128xf32>
    %125 = tpu.matmul %124, %0, %cst_106 {dimension_numbers = #tpu.dot_dimension_numbers<[1], [0], [0], [1], [0, 0, 1, 1], [], []>} : vector<2x256xbf16>, vector<256x128xbf16>, vector<2x128xf32> -> vector<2x128xf32>
    %c5_107 = arith.constant 5 : index
    %c0_108 = arith.constant 0 : index
    %c0_109 = arith.constant 0 : index
    %126 = vector.load %arg2[%c5_107, %c0_108, %c0_109] : memref<16x2x256xbf16, #tpu.memory_space<vmem>>, vector<1x2x256xbf16>
    %127 = vector.shape_cast %126 : vector<1x2x256xbf16> to vector<2x256xbf16>
    %cst_110 = arith.constant dense<0.000000e+00> : vector<2x128xf32>
    %128 = tpu.matmul %127, %0, %cst_110 {dimension_numbers = #tpu.dot_dimension_numbers<[1], [0], [0], [1], [0, 0, 1, 1], [], []>} : vector<2x256xbf16>, vector<256x128xbf16>, vector<2x128xf32> -> vector<2x128xf32>
    %129 = arith.maximumf %125, %128 : vector<2x128xf32>
    %c5_111 = arith.constant 5 : index
    %c0_112 = arith.constant 0 : index
    %c0_113 = arith.constant 0 : index
    %130 = vector.load %arg3[%c5_111, %c0_112, %c0_113] : memref<16x2x256xbf16, #tpu.memory_space<vmem>>, vector<1x2x256xbf16>
    %131 = vector.shape_cast %130 : vector<1x2x256xbf16> to vector<2x256xbf16>
    %cst_114 = arith.constant dense<0.000000e+00> : vector<2x128xf32>
    %132 = tpu.matmul %131, %0, %cst_114 {dimension_numbers = #tpu.dot_dimension_numbers<[1], [0], [0], [1], [0, 0, 1, 1], [], []>} : vector<2x256xbf16>, vector<256x128xbf16>, vector<2x128xf32> -> vector<2x128xf32>
    %c5_115 = arith.constant 5 : index
    %c0_116 = arith.constant 0 : index
    %c0_117 = arith.constant 0 : index
    %133 = vector.load %arg4[%c5_115, %c0_116, %c0_117] : memref<16x2x256xbf16, #tpu.memory_space<vmem>>, vector<1x2x256xbf16>
    %134 = vector.shape_cast %133 : vector<1x2x256xbf16> to vector<2x256xbf16>
    %cst_118 = arith.constant dense<0.000000e+00> : vector<2x128xf32>
    %135 = tpu.matmul %134, %0, %cst_118 {dimension_numbers = #tpu.dot_dimension_numbers<[1], [0], [0], [1], [0, 0, 1, 1], [], []>} : vector<2x256xbf16>, vector<256x128xbf16>, vector<2x128xf32> -> vector<2x128xf32>
    %136 = arith.maximumf %132, %135 : vector<2x128xf32>
    %137 = arith.maximumf %129, %136 : vector<2x128xf32>
    %138 = vector.broadcast %1 : vector<1x128xf32> to vector<2x128xf32>
    %139 = arith.addf %137, %138 : vector<2x128xf32>
    %cst_119 = arith.constant 0.000000e+00 : f32
    %140 = vector.broadcast %cst_119 : f32 to vector<2x128xf32>
    %141 = arith.maximumf %139, %140 : vector<2x128xf32>
    %142 = arith.truncf %141 : vector<2x128xf32> to vector<2x128xbf16>
    %c5_120 = arith.constant 5 : index
    %c0_121 = arith.constant 0 : index
    %c0_122 = arith.constant 0 : index
    %143 = vector.load %arg7[%c5_120, %c0_121, %c0_122] : memref<16x128x128xbf16, #tpu.memory_space<vmem>>, vector<1x128x128xbf16>
    %144 = vector.shape_cast %143 : vector<1x128x128xbf16> to vector<128x128xbf16>
    %cst_123 = arith.constant dense<0.000000e+00> : vector<2x128xf32>
    %145 = tpu.matmul %142, %144, %cst_123 {dimension_numbers = #tpu.dot_dimension_numbers<[1], [0], [0], [1], [0, 0, 1, 1], [], []>} : vector<2x128xbf16>, vector<128x128xbf16>, vector<2x128xf32> -> vector<2x128xf32>
    %146 = arith.addf %122, %145 : vector<2x128xf32>
    %c6 = arith.constant 6 : index
    %c0_124 = arith.constant 0 : index
    %c0_125 = arith.constant 0 : index
    %147 = vector.load %arg1[%c6, %c0_124, %c0_125] : memref<16x2x256xbf16, #tpu.memory_space<vmem>>, vector<1x2x256xbf16>
    %148 = vector.shape_cast %147 : vector<1x2x256xbf16> to vector<2x256xbf16>
    %cst_126 = arith.constant dense<0.000000e+00> : vector<2x128xf32>
    %149 = tpu.matmul %148, %0, %cst_126 {dimension_numbers = #tpu.dot_dimension_numbers<[1], [0], [0], [1], [0, 0, 1, 1], [], []>} : vector<2x256xbf16>, vector<256x128xbf16>, vector<2x128xf32> -> vector<2x128xf32>
    %c6_127 = arith.constant 6 : index
    %c0_128 = arith.constant 0 : index
    %c0_129 = arith.constant 0 : index
    %150 = vector.load %arg2[%c6_127, %c0_128, %c0_129] : memref<16x2x256xbf16, #tpu.memory_space<vmem>>, vector<1x2x256xbf16>
    %151 = vector.shape_cast %150 : vector<1x2x256xbf16> to vector<2x256xbf16>
    %cst_130 = arith.constant dense<0.000000e+00> : vector<2x128xf32>
    %152 = tpu.matmul %151, %0, %cst_130 {dimension_numbers = #tpu.dot_dimension_numbers<[1], [0], [0], [1], [0, 0, 1, 1], [], []>} : vector<2x256xbf16>, vector<256x128xbf16>, vector<2x128xf32> -> vector<2x128xf32>
    %153 = arith.maximumf %149, %152 : vector<2x128xf32>
    %c6_131 = arith.constant 6 : index
    %c0_132 = arith.constant 0 : index
    %c0_133 = arith.constant 0 : index
    %154 = vector.load %arg3[%c6_131, %c0_132, %c0_133] : memref<16x2x256xbf16, #tpu.memory_space<vmem>>, vector<1x2x256xbf16>
    %155 = vector.shape_cast %154 : vector<1x2x256xbf16> to vector<2x256xbf16>
    %cst_134 = arith.constant dense<0.000000e+00> : vector<2x128xf32>
    %156 = tpu.matmul %155, %0, %cst_134 {dimension_numbers = #tpu.dot_dimension_numbers<[1], [0], [0], [1], [0, 0, 1, 1], [], []>} : vector<2x256xbf16>, vector<256x128xbf16>, vector<2x128xf32> -> vector<2x128xf32>
    %c6_135 = arith.constant 6 : index
    %c0_136 = arith.constant 0 : index
    %c0_137 = arith.constant 0 : index
    %157 = vector.load %arg4[%c6_135, %c0_136, %c0_137] : memref<16x2x256xbf16, #tpu.memory_space<vmem>>, vector<1x2x256xbf16>
    %158 = vector.shape_cast %157 : vector<1x2x256xbf16> to vector<2x256xbf16>
    %cst_138 = arith.constant dense<0.000000e+00> : vector<2x128xf32>
    %159 = tpu.matmul %158, %0, %cst_138 {dimension_numbers = #tpu.dot_dimension_numbers<[1], [0], [0], [1], [0, 0, 1, 1], [], []>} : vector<2x256xbf16>, vector<256x128xbf16>, vector<2x128xf32> -> vector<2x128xf32>
    %160 = arith.maximumf %156, %159 : vector<2x128xf32>
    %161 = arith.maximumf %153, %160 : vector<2x128xf32>
    %162 = vector.broadcast %1 : vector<1x128xf32> to vector<2x128xf32>
    %163 = arith.addf %161, %162 : vector<2x128xf32>
    %cst_139 = arith.constant 0.000000e+00 : f32
    %164 = vector.broadcast %cst_139 : f32 to vector<2x128xf32>
    %165 = arith.maximumf %163, %164 : vector<2x128xf32>
    %166 = arith.truncf %165 : vector<2x128xf32> to vector<2x128xbf16>
    %c6_140 = arith.constant 6 : index
    %c0_141 = arith.constant 0 : index
    %c0_142 = arith.constant 0 : index
    %167 = vector.load %arg7[%c6_140, %c0_141, %c0_142] : memref<16x128x128xbf16, #tpu.memory_space<vmem>>, vector<1x128x128xbf16>
    %168 = vector.shape_cast %167 : vector<1x128x128xbf16> to vector<128x128xbf16>
    %cst_143 = arith.constant dense<0.000000e+00> : vector<2x128xf32>
    %169 = tpu.matmul %166, %168, %cst_143 {dimension_numbers = #tpu.dot_dimension_numbers<[1], [0], [0], [1], [0, 0, 1, 1], [], []>} : vector<2x128xbf16>, vector<128x128xbf16>, vector<2x128xf32> -> vector<2x128xf32>
    %170 = arith.addf %146, %169 : vector<2x128xf32>
    %c7 = arith.constant 7 : index
    %c0_144 = arith.constant 0 : index
    %c0_145 = arith.constant 0 : index
    %171 = vector.load %arg1[%c7, %c0_144, %c0_145] : memref<16x2x256xbf16, #tpu.memory_space<vmem>>, vector<1x2x256xbf16>
    %172 = vector.shape_cast %171 : vector<1x2x256xbf16> to vector<2x256xbf16>
    %cst_146 = arith.constant dense<0.000000e+00> : vector<2x128xf32>
    %173 = tpu.matmul %172, %0, %cst_146 {dimension_numbers = #tpu.dot_dimension_numbers<[1], [0], [0], [1], [0, 0, 1, 1], [], []>} : vector<2x256xbf16>, vector<256x128xbf16>, vector<2x128xf32> -> vector<2x128xf32>
    %c7_147 = arith.constant 7 : index
    %c0_148 = arith.constant 0 : index
    %c0_149 = arith.constant 0 : index
    %174 = vector.load %arg2[%c7_147, %c0_148, %c0_149] : memref<16x2x256xbf16, #tpu.memory_space<vmem>>, vector<1x2x256xbf16>
    %175 = vector.shape_cast %174 : vector<1x2x256xbf16> to vector<2x256xbf16>
    %cst_150 = arith.constant dense<0.000000e+00> : vector<2x128xf32>
    %176 = tpu.matmul %175, %0, %cst_150 {dimension_numbers = #tpu.dot_dimension_numbers<[1], [0], [0], [1], [0, 0, 1, 1], [], []>} : vector<2x256xbf16>, vector<256x128xbf16>, vector<2x128xf32> -> vector<2x128xf32>
    %177 = arith.maximumf %173, %176 : vector<2x128xf32>
    %c7_151 = arith.constant 7 : index
    %c0_152 = arith.constant 0 : index
    %c0_153 = arith.constant 0 : index
    %178 = vector.load %arg3[%c7_151, %c0_152, %c0_153] : memref<16x2x256xbf16, #tpu.memory_space<vmem>>, vector<1x2x256xbf16>
    %179 = vector.shape_cast %178 : vector<1x2x256xbf16> to vector<2x256xbf16>
    %cst_154 = arith.constant dense<0.000000e+00> : vector<2x128xf32>
    %180 = tpu.matmul %179, %0, %cst_154 {dimension_numbers = #tpu.dot_dimension_numbers<[1], [0], [0], [1], [0, 0, 1, 1], [], []>} : vector<2x256xbf16>, vector<256x128xbf16>, vector<2x128xf32> -> vector<2x128xf32>
    %c7_155 = arith.constant 7 : index
    %c0_156 = arith.constant 0 : index
    %c0_157 = arith.constant 0 : index
    %181 = vector.load %arg4[%c7_155, %c0_156, %c0_157] : memref<16x2x256xbf16, #tpu.memory_space<vmem>>, vector<1x2x256xbf16>
    %182 = vector.shape_cast %181 : vector<1x2x256xbf16> to vector<2x256xbf16>
    %cst_158 = arith.constant dense<0.000000e+00> : vector<2x128xf32>
    %183 = tpu.matmul %182, %0, %cst_158 {dimension_numbers = #tpu.dot_dimension_numbers<[1], [0], [0], [1], [0, 0, 1, 1], [], []>} : vector<2x256xbf16>, vector<256x128xbf16>, vector<2x128xf32> -> vector<2x128xf32>
    %184 = arith.maximumf %180, %183 : vector<2x128xf32>
    %185 = arith.maximumf %177, %184 : vector<2x128xf32>
    %186 = vector.broadcast %1 : vector<1x128xf32> to vector<2x128xf32>
    %187 = arith.addf %185, %186 : vector<2x128xf32>
    %cst_159 = arith.constant 0.000000e+00 : f32
    %188 = vector.broadcast %cst_159 : f32 to vector<2x128xf32>
    %189 = arith.maximumf %187, %188 : vector<2x128xf32>
    %190 = arith.truncf %189 : vector<2x128xf32> to vector<2x128xbf16>
    %c7_160 = arith.constant 7 : index
    %c0_161 = arith.constant 0 : index
    %c0_162 = arith.constant 0 : index
    %191 = vector.load %arg7[%c7_160, %c0_161, %c0_162] : memref<16x128x128xbf16, #tpu.memory_space<vmem>>, vector<1x128x128xbf16>
    %192 = vector.shape_cast %191 : vector<1x128x128xbf16> to vector<128x128xbf16>
    %cst_163 = arith.constant dense<0.000000e+00> : vector<2x128xf32>
    %193 = tpu.matmul %190, %192, %cst_163 {dimension_numbers = #tpu.dot_dimension_numbers<[1], [0], [0], [1], [0, 0, 1, 1], [], []>} : vector<2x128xbf16>, vector<128x128xbf16>, vector<2x128xf32> -> vector<2x128xf32>
    %194 = arith.addf %170, %193 : vector<2x128xf32>
    %c8 = arith.constant 8 : index
    %c0_164 = arith.constant 0 : index
    %c0_165 = arith.constant 0 : index
    %195 = vector.load %arg1[%c8, %c0_164, %c0_165] : memref<16x2x256xbf16, #tpu.memory_space<vmem>>, vector<1x2x256xbf16>
    %196 = vector.shape_cast %195 : vector<1x2x256xbf16> to vector<2x256xbf16>
    %cst_166 = arith.constant dense<0.000000e+00> : vector<2x128xf32>
    %197 = tpu.matmul %196, %0, %cst_166 {dimension_numbers = #tpu.dot_dimension_numbers<[1], [0], [0], [1], [0, 0, 1, 1], [], []>} : vector<2x256xbf16>, vector<256x128xbf16>, vector<2x128xf32> -> vector<2x128xf32>
    %c8_167 = arith.constant 8 : index
    %c0_168 = arith.constant 0 : index
    %c0_169 = arith.constant 0 : index
    %198 = vector.load %arg2[%c8_167, %c0_168, %c0_169] : memref<16x2x256xbf16, #tpu.memory_space<vmem>>, vector<1x2x256xbf16>
    %199 = vector.shape_cast %198 : vector<1x2x256xbf16> to vector<2x256xbf16>
    %cst_170 = arith.constant dense<0.000000e+00> : vector<2x128xf32>
    %200 = tpu.matmul %199, %0, %cst_170 {dimension_numbers = #tpu.dot_dimension_numbers<[1], [0], [0], [1], [0, 0, 1, 1], [], []>} : vector<2x256xbf16>, vector<256x128xbf16>, vector<2x128xf32> -> vector<2x128xf32>
    %201 = arith.maximumf %197, %200 : vector<2x128xf32>
    %c8_171 = arith.constant 8 : index
    %c0_172 = arith.constant 0 : index
    %c0_173 = arith.constant 0 : index
    %202 = vector.load %arg3[%c8_171, %c0_172, %c0_173] : memref<16x2x256xbf16, #tpu.memory_space<vmem>>, vector<1x2x256xbf16>
    %203 = vector.shape_cast %202 : vector<1x2x256xbf16> to vector<2x256xbf16>
    %cst_174 = arith.constant dense<0.000000e+00> : vector<2x128xf32>
    %204 = tpu.matmul %203, %0, %cst_174 {dimension_numbers = #tpu.dot_dimension_numbers<[1], [0], [0], [1], [0, 0, 1, 1], [], []>} : vector<2x256xbf16>, vector<256x128xbf16>, vector<2x128xf32> -> vector<2x128xf32>
    %c8_175 = arith.constant 8 : index
    %c0_176 = arith.constant 0 : index
    %c0_177 = arith.constant 0 : index
    %205 = vector.load %arg4[%c8_175, %c0_176, %c0_177] : memref<16x2x256xbf16, #tpu.memory_space<vmem>>, vector<1x2x256xbf16>
    %206 = vector.shape_cast %205 : vector<1x2x256xbf16> to vector<2x256xbf16>
    %cst_178 = arith.constant dense<0.000000e+00> : vector<2x128xf32>
    %207 = tpu.matmul %206, %0, %cst_178 {dimension_numbers = #tpu.dot_dimension_numbers<[1], [0], [0], [1], [0, 0, 1, 1], [], []>} : vector<2x256xbf16>, vector<256x128xbf16>, vector<2x128xf32> -> vector<2x128xf32>
    %208 = arith.maximumf %204, %207 : vector<2x128xf32>
    %209 = arith.maximumf %201, %208 : vector<2x128xf32>
    %210 = vector.broadcast %1 : vector<1x128xf32> to vector<2x128xf32>
    %211 = arith.addf %209, %210 : vector<2x128xf32>
    %cst_179 = arith.constant 0.000000e+00 : f32
    %212 = vector.broadcast %cst_179 : f32 to vector<2x128xf32>
    %213 = arith.maximumf %211, %212 : vector<2x128xf32>
    %214 = arith.truncf %213 : vector<2x128xf32> to vector<2x128xbf16>
    %c8_180 = arith.constant 8 : index
    %c0_181 = arith.constant 0 : index
    %c0_182 = arith.constant 0 : index
    %215 = vector.load %arg7[%c8_180, %c0_181, %c0_182] : memref<16x128x128xbf16, #tpu.memory_space<vmem>>, vector<1x128x128xbf16>
    %216 = vector.shape_cast %215 : vector<1x128x128xbf16> to vector<128x128xbf16>
    %cst_183 = arith.constant dense<0.000000e+00> : vector<2x128xf32>
    %217 = tpu.matmul %214, %216, %cst_183 {dimension_numbers = #tpu.dot_dimension_numbers<[1], [0], [0], [1], [0, 0, 1, 1], [], []>} : vector<2x128xbf16>, vector<128x128xbf16>, vector<2x128xf32> -> vector<2x128xf32>
    %218 = arith.addf %194, %217 : vector<2x128xf32>
    %c9 = arith.constant 9 : index
    %c0_184 = arith.constant 0 : index
    %c0_185 = arith.constant 0 : index
    %219 = vector.load %arg1[%c9, %c0_184, %c0_185] : memref<16x2x256xbf16, #tpu.memory_space<vmem>>, vector<1x2x256xbf16>
    %220 = vector.shape_cast %219 : vector<1x2x256xbf16> to vector<2x256xbf16>
    %cst_186 = arith.constant dense<0.000000e+00> : vector<2x128xf32>
    %221 = tpu.matmul %220, %0, %cst_186 {dimension_numbers = #tpu.dot_dimension_numbers<[1], [0], [0], [1], [0, 0, 1, 1], [], []>} : vector<2x256xbf16>, vector<256x128xbf16>, vector<2x128xf32> -> vector<2x128xf32>
    %c9_187 = arith.constant 9 : index
    %c0_188 = arith.constant 0 : index
    %c0_189 = arith.constant 0 : index
    %222 = vector.load %arg2[%c9_187, %c0_188, %c0_189] : memref<16x2x256xbf16, #tpu.memory_space<vmem>>, vector<1x2x256xbf16>
    %223 = vector.shape_cast %222 : vector<1x2x256xbf16> to vector<2x256xbf16>
    %cst_190 = arith.constant dense<0.000000e+00> : vector<2x128xf32>
    %224 = tpu.matmul %223, %0, %cst_190 {dimension_numbers = #tpu.dot_dimension_numbers<[1], [0], [0], [1], [0, 0, 1, 1], [], []>} : vector<2x256xbf16>, vector<256x128xbf16>, vector<2x128xf32> -> vector<2x128xf32>
    %225 = arith.maximumf %221, %224 : vector<2x128xf32>
    %c9_191 = arith.constant 9 : index
    %c0_192 = arith.constant 0 : index
    %c0_193 = arith.constant 0 : index
    %226 = vector.load %arg3[%c9_191, %c0_192, %c0_193] : memref<16x2x256xbf16, #tpu.memory_space<vmem>>, vector<1x2x256xbf16>
    %227 = vector.shape_cast %226 : vector<1x2x256xbf16> to vector<2x256xbf16>
    %cst_194 = arith.constant dense<0.000000e+00> : vector<2x128xf32>
    %228 = tpu.matmul %227, %0, %cst_194 {dimension_numbers = #tpu.dot_dimension_numbers<[1], [0], [0], [1], [0, 0, 1, 1], [], []>} : vector<2x256xbf16>, vector<256x128xbf16>, vector<2x128xf32> -> vector<2x128xf32>
    %c9_195 = arith.constant 9 : index
    %c0_196 = arith.constant 0 : index
    %c0_197 = arith.constant 0 : index
    %229 = vector.load %arg4[%c9_195, %c0_196, %c0_197] : memref<16x2x256xbf16, #tpu.memory_space<vmem>>, vector<1x2x256xbf16>
    %230 = vector.shape_cast %229 : vector<1x2x256xbf16> to vector<2x256xbf16>
    %cst_198 = arith.constant dense<0.000000e+00> : vector<2x128xf32>
    %231 = tpu.matmul %230, %0, %cst_198 {dimension_numbers = #tpu.dot_dimension_numbers<[1], [0], [0], [1], [0, 0, 1, 1], [], []>} : vector<2x256xbf16>, vector<256x128xbf16>, vector<2x128xf32> -> vector<2x128xf32>
    %232 = arith.maximumf %228, %231 : vector<2x128xf32>
    %233 = arith.maximumf %225, %232 : vector<2x128xf32>
    %234 = vector.broadcast %1 : vector<1x128xf32> to vector<2x128xf32>
    %235 = arith.addf %233, %234 : vector<2x128xf32>
    %cst_199 = arith.constant 0.000000e+00 : f32
    %236 = vector.broadcast %cst_199 : f32 to vector<2x128xf32>
    %237 = arith.maximumf %235, %236 : vector<2x128xf32>
    %238 = arith.truncf %237 : vector<2x128xf32> to vector<2x128xbf16>
    %c9_200 = arith.constant 9 : index
    %c0_201 = arith.constant 0 : index
    %c0_202 = arith.constant 0 : index
    %239 = vector.load %arg7[%c9_200, %c0_201, %c0_202] : memref<16x128x128xbf16, #tpu.memory_space<vmem>>, vector<1x128x128xbf16>
    %240 = vector.shape_cast %239 : vector<1x128x128xbf16> to vector<128x128xbf16>
    %cst_203 = arith.constant dense<0.000000e+00> : vector<2x128xf32>
    %241 = tpu.matmul %238, %240, %cst_203 {dimension_numbers = #tpu.dot_dimension_numbers<[1], [0], [0], [1], [0, 0, 1, 1], [], []>} : vector<2x128xbf16>, vector<128x128xbf16>, vector<2x128xf32> -> vector<2x128xf32>
    %242 = arith.addf %218, %241 : vector<2x128xf32>
    %c10 = arith.constant 10 : index
    %c0_204 = arith.constant 0 : index
    %c0_205 = arith.constant 0 : index
    %243 = vector.load %arg1[%c10, %c0_204, %c0_205] : memref<16x2x256xbf16, #tpu.memory_space<vmem>>, vector<1x2x256xbf16>
    %244 = vector.shape_cast %243 : vector<1x2x256xbf16> to vector<2x256xbf16>
    %cst_206 = arith.constant dense<0.000000e+00> : vector<2x128xf32>
    %245 = tpu.matmul %244, %0, %cst_206 {dimension_numbers = #tpu.dot_dimension_numbers<[1], [0], [0], [1], [0, 0, 1, 1], [], []>} : vector<2x256xbf16>, vector<256x128xbf16>, vector<2x128xf32> -> vector<2x128xf32>
    %c10_207 = arith.constant 10 : index
    %c0_208 = arith.constant 0 : index
    %c0_209 = arith.constant 0 : index
    %246 = vector.load %arg2[%c10_207, %c0_208, %c0_209] : memref<16x2x256xbf16, #tpu.memory_space<vmem>>, vector<1x2x256xbf16>
    %247 = vector.shape_cast %246 : vector<1x2x256xbf16> to vector<2x256xbf16>
    %cst_210 = arith.constant dense<0.000000e+00> : vector<2x128xf32>
    %248 = tpu.matmul %247, %0, %cst_210 {dimension_numbers = #tpu.dot_dimension_numbers<[1], [0], [0], [1], [0, 0, 1, 1], [], []>} : vector<2x256xbf16>, vector<256x128xbf16>, vector<2x128xf32> -> vector<2x128xf32>
    %249 = arith.maximumf %245, %248 : vector<2x128xf32>
    %c10_211 = arith.constant 10 : index
    %c0_212 = arith.constant 0 : index
    %c0_213 = arith.constant 0 : index
    %250 = vector.load %arg3[%c10_211, %c0_212, %c0_213] : memref<16x2x256xbf16, #tpu.memory_space<vmem>>, vector<1x2x256xbf16>
    %251 = vector.shape_cast %250 : vector<1x2x256xbf16> to vector<2x256xbf16>
    %cst_214 = arith.constant dense<0.000000e+00> : vector<2x128xf32>
    %252 = tpu.matmul %251, %0, %cst_214 {dimension_numbers = #tpu.dot_dimension_numbers<[1], [0], [0], [1], [0, 0, 1, 1], [], []>} : vector<2x256xbf16>, vector<256x128xbf16>, vector<2x128xf32> -> vector<2x128xf32>
    %c10_215 = arith.constant 10 : index
    %c0_216 = arith.constant 0 : index
    %c0_217 = arith.constant 0 : index
    %253 = vector.load %arg4[%c10_215, %c0_216, %c0_217] : memref<16x2x256xbf16, #tpu.memory_space<vmem>>, vector<1x2x256xbf16>
    %254 = vector.shape_cast %253 : vector<1x2x256xbf16> to vector<2x256xbf16>
    %cst_218 = arith.constant dense<0.000000e+00> : vector<2x128xf32>
    %255 = tpu.matmul %254, %0, %cst_218 {dimension_numbers = #tpu.dot_dimension_numbers<[1], [0], [0], [1], [0, 0, 1, 1], [], []>} : vector<2x256xbf16>, vector<256x128xbf16>, vector<2x128xf32> -> vector<2x128xf32>
    %256 = arith.maximumf %252, %255 : vector<2x128xf32>
    %257 = arith.maximumf %249, %256 : vector<2x128xf32>
    %258 = vector.broadcast %1 : vector<1x128xf32> to vector<2x128xf32>
    %259 = arith.addf %257, %258 : vector<2x128xf32>
    %cst_219 = arith.constant 0.000000e+00 : f32
    %260 = vector.broadcast %cst_219 : f32 to vector<2x128xf32>
    %261 = arith.maximumf %259, %260 : vector<2x128xf32>
    %262 = arith.truncf %261 : vector<2x128xf32> to vector<2x128xbf16>
    %c10_220 = arith.constant 10 : index
    %c0_221 = arith.constant 0 : index
    %c0_222 = arith.constant 0 : index
    %263 = vector.load %arg7[%c10_220, %c0_221, %c0_222] : memref<16x128x128xbf16, #tpu.memory_space<vmem>>, vector<1x128x128xbf16>
    %264 = vector.shape_cast %263 : vector<1x128x128xbf16> to vector<128x128xbf16>
    %cst_223 = arith.constant dense<0.000000e+00> : vector<2x128xf32>
    %265 = tpu.matmul %262, %264, %cst_223 {dimension_numbers = #tpu.dot_dimension_numbers<[1], [0], [0], [1], [0, 0, 1, 1], [], []>} : vector<2x128xbf16>, vector<128x128xbf16>, vector<2x128xf32> -> vector<2x128xf32>
    %266 = arith.addf %242, %265 : vector<2x128xf32>
    %c11 = arith.constant 11 : index
    %c0_224 = arith.constant 0 : index
    %c0_225 = arith.constant 0 : index
    %267 = vector.load %arg1[%c11, %c0_224, %c0_225] : memref<16x2x256xbf16, #tpu.memory_space<vmem>>, vector<1x2x256xbf16>
    %268 = vector.shape_cast %267 : vector<1x2x256xbf16> to vector<2x256xbf16>
    %cst_226 = arith.constant dense<0.000000e+00> : vector<2x128xf32>
    %269 = tpu.matmul %268, %0, %cst_226 {dimension_numbers = #tpu.dot_dimension_numbers<[1], [0], [0], [1], [0, 0, 1, 1], [], []>} : vector<2x256xbf16>, vector<256x128xbf16>, vector<2x128xf32> -> vector<2x128xf32>
    %c11_227 = arith.constant 11 : index
    %c0_228 = arith.constant 0 : index
    %c0_229 = arith.constant 0 : index
    %270 = vector.load %arg2[%c11_227, %c0_228, %c0_229] : memref<16x2x256xbf16, #tpu.memory_space<vmem>>, vector<1x2x256xbf16>
    %271 = vector.shape_cast %270 : vector<1x2x256xbf16> to vector<2x256xbf16>
    %cst_230 = arith.constant dense<0.000000e+00> : vector<2x128xf32>
    %272 = tpu.matmul %271, %0, %cst_230 {dimension_numbers = #tpu.dot_dimension_numbers<[1], [0], [0], [1], [0, 0, 1, 1], [], []>} : vector<2x256xbf16>, vector<256x128xbf16>, vector<2x128xf32> -> vector<2x128xf32>
    %273 = arith.maximumf %269, %272 : vector<2x128xf32>
    %c11_231 = arith.constant 11 : index
    %c0_232 = arith.constant 0 : index
    %c0_233 = arith.constant 0 : index
    %274 = vector.load %arg3[%c11_231, %c0_232, %c0_233] : memref<16x2x256xbf16, #tpu.memory_space<vmem>>, vector<1x2x256xbf16>
    %275 = vector.shape_cast %274 : vector<1x2x256xbf16> to vector<2x256xbf16>
    %cst_234 = arith.constant dense<0.000000e+00> : vector<2x128xf32>
    %276 = tpu.matmul %275, %0, %cst_234 {dimension_numbers = #tpu.dot_dimension_numbers<[1], [0], [0], [1], [0, 0, 1, 1], [], []>} : vector<2x256xbf16>, vector<256x128xbf16>, vector<2x128xf32> -> vector<2x128xf32>
    %c11_235 = arith.constant 11 : index
    %c0_236 = arith.constant 0 : index
    %c0_237 = arith.constant 0 : index
    %277 = vector.load %arg4[%c11_235, %c0_236, %c0_237] : memref<16x2x256xbf16, #tpu.memory_space<vmem>>, vector<1x2x256xbf16>
    %278 = vector.shape_cast %277 : vector<1x2x256xbf16> to vector<2x256xbf16>
    %cst_238 = arith.constant dense<0.000000e+00> : vector<2x128xf32>
    %279 = tpu.matmul %278, %0, %cst_238 {dimension_numbers = #tpu.dot_dimension_numbers<[1], [0], [0], [1], [0, 0, 1, 1], [], []>} : vector<2x256xbf16>, vector<256x128xbf16>, vector<2x128xf32> -> vector<2x128xf32>
    %280 = arith.maximumf %276, %279 : vector<2x128xf32>
    %281 = arith.maximumf %273, %280 : vector<2x128xf32>
    %282 = vector.broadcast %1 : vector<1x128xf32> to vector<2x128xf32>
    %283 = arith.addf %281, %282 : vector<2x128xf32>
    %cst_239 = arith.constant 0.000000e+00 : f32
    %284 = vector.broadcast %cst_239 : f32 to vector<2x128xf32>
    %285 = arith.maximumf %283, %284 : vector<2x128xf32>
    %286 = arith.truncf %285 : vector<2x128xf32> to vector<2x128xbf16>
    %c11_240 = arith.constant 11 : index
    %c0_241 = arith.constant 0 : index
    %c0_242 = arith.constant 0 : index
    %287 = vector.load %arg7[%c11_240, %c0_241, %c0_242] : memref<16x128x128xbf16, #tpu.memory_space<vmem>>, vector<1x128x128xbf16>
    %288 = vector.shape_cast %287 : vector<1x128x128xbf16> to vector<128x128xbf16>
    %cst_243 = arith.constant dense<0.000000e+00> : vector<2x128xf32>
    %289 = tpu.matmul %286, %288, %cst_243 {dimension_numbers = #tpu.dot_dimension_numbers<[1], [0], [0], [1], [0, 0, 1, 1], [], []>} : vector<2x128xbf16>, vector<128x128xbf16>, vector<2x128xf32> -> vector<2x128xf32>
    %290 = arith.addf %266, %289 : vector<2x128xf32>
    %c12 = arith.constant 12 : index
    %c0_244 = arith.constant 0 : index
    %c0_245 = arith.constant 0 : index
    %291 = vector.load %arg1[%c12, %c0_244, %c0_245] : memref<16x2x256xbf16, #tpu.memory_space<vmem>>, vector<1x2x256xbf16>
    %292 = vector.shape_cast %291 : vector<1x2x256xbf16> to vector<2x256xbf16>
    %cst_246 = arith.constant dense<0.000000e+00> : vector<2x128xf32>
    %293 = tpu.matmul %292, %0, %cst_246 {dimension_numbers = #tpu.dot_dimension_numbers<[1], [0], [0], [1], [0, 0, 1, 1], [], []>} : vector<2x256xbf16>, vector<256x128xbf16>, vector<2x128xf32> -> vector<2x128xf32>
    %c12_247 = arith.constant 12 : index
    %c0_248 = arith.constant 0 : index
    %c0_249 = arith.constant 0 : index
    %294 = vector.load %arg2[%c12_247, %c0_248, %c0_249] : memref<16x2x256xbf16, #tpu.memory_space<vmem>>, vector<1x2x256xbf16>
    %295 = vector.shape_cast %294 : vector<1x2x256xbf16> to vector<2x256xbf16>
    %cst_250 = arith.constant dense<0.000000e+00> : vector<2x128xf32>
    %296 = tpu.matmul %295, %0, %cst_250 {dimension_numbers = #tpu.dot_dimension_numbers<[1], [0], [0], [1], [0, 0, 1, 1], [], []>} : vector<2x256xbf16>, vector<256x128xbf16>, vector<2x128xf32> -> vector<2x128xf32>
    %297 = arith.maximumf %293, %296 : vector<2x128xf32>
    %c12_251 = arith.constant 12 : index
    %c0_252 = arith.constant 0 : index
    %c0_253 = arith.constant 0 : index
    %298 = vector.load %arg3[%c12_251, %c0_252, %c0_253] : memref<16x2x256xbf16, #tpu.memory_space<vmem>>, vector<1x2x256xbf16>
    %299 = vector.shape_cast %298 : vector<1x2x256xbf16> to vector<2x256xbf16>
    %cst_254 = arith.constant dense<0.000000e+00> : vector<2x128xf32>
    %300 = tpu.matmul %299, %0, %cst_254 {dimension_numbers = #tpu.dot_dimension_numbers<[1], [0], [0], [1], [0, 0, 1, 1], [], []>} : vector<2x256xbf16>, vector<256x128xbf16>, vector<2x128xf32> -> vector<2x128xf32>
    %c12_255 = arith.constant 12 : index
    %c0_256 = arith.constant 0 : index
    %c0_257 = arith.constant 0 : index
    %301 = vector.load %arg4[%c12_255, %c0_256, %c0_257] : memref<16x2x256xbf16, #tpu.memory_space<vmem>>, vector<1x2x256xbf16>
    %302 = vector.shape_cast %301 : vector<1x2x256xbf16> to vector<2x256xbf16>
    %cst_258 = arith.constant dense<0.000000e+00> : vector<2x128xf32>
    %303 = tpu.matmul %302, %0, %cst_258 {dimension_numbers = #tpu.dot_dimension_numbers<[1], [0], [0], [1], [0, 0, 1, 1], [], []>} : vector<2x256xbf16>, vector<256x128xbf16>, vector<2x128xf32> -> vector<2x128xf32>
    %304 = arith.maximumf %300, %303 : vector<2x128xf32>
    %305 = arith.maximumf %297, %304 : vector<2x128xf32>
    %306 = vector.broadcast %1 : vector<1x128xf32> to vector<2x128xf32>
    %307 = arith.addf %305, %306 : vector<2x128xf32>
    %cst_259 = arith.constant 0.000000e+00 : f32
    %308 = vector.broadcast %cst_259 : f32 to vector<2x128xf32>
    %309 = arith.maximumf %307, %308 : vector<2x128xf32>
    %310 = arith.truncf %309 : vector<2x128xf32> to vector<2x128xbf16>
    %c12_260 = arith.constant 12 : index
    %c0_261 = arith.constant 0 : index
    %c0_262 = arith.constant 0 : index
    %311 = vector.load %arg7[%c12_260, %c0_261, %c0_262] : memref<16x128x128xbf16, #tpu.memory_space<vmem>>, vector<1x128x128xbf16>
    %312 = vector.shape_cast %311 : vector<1x128x128xbf16> to vector<128x128xbf16>
    %cst_263 = arith.constant dense<0.000000e+00> : vector<2x128xf32>
    %313 = tpu.matmul %310, %312, %cst_263 {dimension_numbers = #tpu.dot_dimension_numbers<[1], [0], [0], [1], [0, 0, 1, 1], [], []>} : vector<2x128xbf16>, vector<128x128xbf16>, vector<2x128xf32> -> vector<2x128xf32>
    %314 = arith.addf %290, %313 : vector<2x128xf32>
    %c13 = arith.constant 13 : index
    %c0_264 = arith.constant 0 : index
    %c0_265 = arith.constant 0 : index
    %315 = vector.load %arg1[%c13, %c0_264, %c0_265] : memref<16x2x256xbf16, #tpu.memory_space<vmem>>, vector<1x2x256xbf16>
    %316 = vector.shape_cast %315 : vector<1x2x256xbf16> to vector<2x256xbf16>
    %cst_266 = arith.constant dense<0.000000e+00> : vector<2x128xf32>
    %317 = tpu.matmul %316, %0, %cst_266 {dimension_numbers = #tpu.dot_dimension_numbers<[1], [0], [0], [1], [0, 0, 1, 1], [], []>} : vector<2x256xbf16>, vector<256x128xbf16>, vector<2x128xf32> -> vector<2x128xf32>
    %c13_267 = arith.constant 13 : index
    %c0_268 = arith.constant 0 : index
    %c0_269 = arith.constant 0 : index
    %318 = vector.load %arg2[%c13_267, %c0_268, %c0_269] : memref<16x2x256xbf16, #tpu.memory_space<vmem>>, vector<1x2x256xbf16>
    %319 = vector.shape_cast %318 : vector<1x2x256xbf16> to vector<2x256xbf16>
    %cst_270 = arith.constant dense<0.000000e+00> : vector<2x128xf32>
    %320 = tpu.matmul %319, %0, %cst_270 {dimension_numbers = #tpu.dot_dimension_numbers<[1], [0], [0], [1], [0, 0, 1, 1], [], []>} : vector<2x256xbf16>, vector<256x128xbf16>, vector<2x128xf32> -> vector<2x128xf32>
    %321 = arith.maximumf %317, %320 : vector<2x128xf32>
    %c13_271 = arith.constant 13 : index
    %c0_272 = arith.constant 0 : index
    %c0_273 = arith.constant 0 : index
    %322 = vector.load %arg3[%c13_271, %c0_272, %c0_273] : memref<16x2x256xbf16, #tpu.memory_space<vmem>>, vector<1x2x256xbf16>
    %323 = vector.shape_cast %322 : vector<1x2x256xbf16> to vector<2x256xbf16>
    %cst_274 = arith.constant dense<0.000000e+00> : vector<2x128xf32>
    %324 = tpu.matmul %323, %0, %cst_274 {dimension_numbers = #tpu.dot_dimension_numbers<[1], [0], [0], [1], [0, 0, 1, 1], [], []>} : vector<2x256xbf16>, vector<256x128xbf16>, vector<2x128xf32> -> vector<2x128xf32>
    %c13_275 = arith.constant 13 : index
    %c0_276 = arith.constant 0 : index
    %c0_277 = arith.constant 0 : index
    %325 = vector.load %arg4[%c13_275, %c0_276, %c0_277] : memref<16x2x256xbf16, #tpu.memory_space<vmem>>, vector<1x2x256xbf16>
    %326 = vector.shape_cast %325 : vector<1x2x256xbf16> to vector<2x256xbf16>
    %cst_278 = arith.constant dense<0.000000e+00> : vector<2x128xf32>
    %327 = tpu.matmul %326, %0, %cst_278 {dimension_numbers = #tpu.dot_dimension_numbers<[1], [0], [0], [1], [0, 0, 1, 1], [], []>} : vector<2x256xbf16>, vector<256x128xbf16>, vector<2x128xf32> -> vector<2x128xf32>
    %328 = arith.maximumf %324, %327 : vector<2x128xf32>
    %329 = arith.maximumf %321, %328 : vector<2x128xf32>
    %330 = vector.broadcast %1 : vector<1x128xf32> to vector<2x128xf32>
    %331 = arith.addf %329, %330 : vector<2x128xf32>
    %cst_279 = arith.constant 0.000000e+00 : f32
    %332 = vector.broadcast %cst_279 : f32 to vector<2x128xf32>
    %333 = arith.maximumf %331, %332 : vector<2x128xf32>
    %334 = arith.truncf %333 : vector<2x128xf32> to vector<2x128xbf16>
    %c13_280 = arith.constant 13 : index
    %c0_281 = arith.constant 0 : index
    %c0_282 = arith.constant 0 : index
    %335 = vector.load %arg7[%c13_280, %c0_281, %c0_282] : memref<16x128x128xbf16, #tpu.memory_space<vmem>>, vector<1x128x128xbf16>
    %336 = vector.shape_cast %335 : vector<1x128x128xbf16> to vector<128x128xbf16>
    %cst_283 = arith.constant dense<0.000000e+00> : vector<2x128xf32>
    %337 = tpu.matmul %334, %336, %cst_283 {dimension_numbers = #tpu.dot_dimension_numbers<[1], [0], [0], [1], [0, 0, 1, 1], [], []>} : vector<2x128xbf16>, vector<128x128xbf16>, vector<2x128xf32> -> vector<2x128xf32>
    %338 = arith.addf %314, %337 : vector<2x128xf32>
    %c14 = arith.constant 14 : index
    %c0_284 = arith.constant 0 : index
    %c0_285 = arith.constant 0 : index
    %339 = vector.load %arg1[%c14, %c0_284, %c0_285] : memref<16x2x256xbf16, #tpu.memory_space<vmem>>, vector<1x2x256xbf16>
    %340 = vector.shape_cast %339 : vector<1x2x256xbf16> to vector<2x256xbf16>
    %cst_286 = arith.constant dense<0.000000e+00> : vector<2x128xf32>
    %341 = tpu.matmul %340, %0, %cst_286 {dimension_numbers = #tpu.dot_dimension_numbers<[1], [0], [0], [1], [0, 0, 1, 1], [], []>} : vector<2x256xbf16>, vector<256x128xbf16>, vector<2x128xf32> -> vector<2x128xf32>
    %c14_287 = arith.constant 14 : index
    %c0_288 = arith.constant 0 : index
    %c0_289 = arith.constant 0 : index
    %342 = vector.load %arg2[%c14_287, %c0_288, %c0_289] : memref<16x2x256xbf16, #tpu.memory_space<vmem>>, vector<1x2x256xbf16>
    %343 = vector.shape_cast %342 : vector<1x2x256xbf16> to vector<2x256xbf16>
    %cst_290 = arith.constant dense<0.000000e+00> : vector<2x128xf32>
    %344 = tpu.matmul %343, %0, %cst_290 {dimension_numbers = #tpu.dot_dimension_numbers<[1], [0], [0], [1], [0, 0, 1, 1], [], []>} : vector<2x256xbf16>, vector<256x128xbf16>, vector<2x128xf32> -> vector<2x128xf32>
    %345 = arith.maximumf %341, %344 : vector<2x128xf32>
    %c14_291 = arith.constant 14 : index
    %c0_292 = arith.constant 0 : index
    %c0_293 = arith.constant 0 : index
    %346 = vector.load %arg3[%c14_291, %c0_292, %c0_293] : memref<16x2x256xbf16, #tpu.memory_space<vmem>>, vector<1x2x256xbf16>
    %347 = vector.shape_cast %346 : vector<1x2x256xbf16> to vector<2x256xbf16>
    %cst_294 = arith.constant dense<0.000000e+00> : vector<2x128xf32>
    %348 = tpu.matmul %347, %0, %cst_294 {dimension_numbers = #tpu.dot_dimension_numbers<[1], [0], [0], [1], [0, 0, 1, 1], [], []>} : vector<2x256xbf16>, vector<256x128xbf16>, vector<2x128xf32> -> vector<2x128xf32>
    %c14_295 = arith.constant 14 : index
    %c0_296 = arith.constant 0 : index
    %c0_297 = arith.constant 0 : index
    %349 = vector.load %arg4[%c14_295, %c0_296, %c0_297] : memref<16x2x256xbf16, #tpu.memory_space<vmem>>, vector<1x2x256xbf16>
    %350 = vector.shape_cast %349 : vector<1x2x256xbf16> to vector<2x256xbf16>
    %cst_298 = arith.constant dense<0.000000e+00> : vector<2x128xf32>
    %351 = tpu.matmul %350, %0, %cst_298 {dimension_numbers = #tpu.dot_dimension_numbers<[1], [0], [0], [1], [0, 0, 1, 1], [], []>} : vector<2x256xbf16>, vector<256x128xbf16>, vector<2x128xf32> -> vector<2x128xf32>
    %352 = arith.maximumf %348, %351 : vector<2x128xf32>
    %353 = arith.maximumf %345, %352 : vector<2x128xf32>
    %354 = vector.broadcast %1 : vector<1x128xf32> to vector<2x128xf32>
    %355 = arith.addf %353, %354 : vector<2x128xf32>
    %cst_299 = arith.constant 0.000000e+00 : f32
    %356 = vector.broadcast %cst_299 : f32 to vector<2x128xf32>
    %357 = arith.maximumf %355, %356 : vector<2x128xf32>
    %358 = arith.truncf %357 : vector<2x128xf32> to vector<2x128xbf16>
    %c14_300 = arith.constant 14 : index
    %c0_301 = arith.constant 0 : index
    %c0_302 = arith.constant 0 : index
    %359 = vector.load %arg7[%c14_300, %c0_301, %c0_302] : memref<16x128x128xbf16, #tpu.memory_space<vmem>>, vector<1x128x128xbf16>
    %360 = vector.shape_cast %359 : vector<1x128x128xbf16> to vector<128x128xbf16>
    %cst_303 = arith.constant dense<0.000000e+00> : vector<2x128xf32>
    %361 = tpu.matmul %358, %360, %cst_303 {dimension_numbers = #tpu.dot_dimension_numbers<[1], [0], [0], [1], [0, 0, 1, 1], [], []>} : vector<2x128xbf16>, vector<128x128xbf16>, vector<2x128xf32> -> vector<2x128xf32>
    %362 = arith.addf %338, %361 : vector<2x128xf32>
    %c15 = arith.constant 15 : index
    %c0_304 = arith.constant 0 : index
    %c0_305 = arith.constant 0 : index
    %363 = vector.load %arg1[%c15, %c0_304, %c0_305] : memref<16x2x256xbf16, #tpu.memory_space<vmem>>, vector<1x2x256xbf16>
    %364 = vector.shape_cast %363 : vector<1x2x256xbf16> to vector<2x256xbf16>
    %cst_306 = arith.constant dense<0.000000e+00> : vector<2x128xf32>
    %365 = tpu.matmul %364, %0, %cst_306 {dimension_numbers = #tpu.dot_dimension_numbers<[1], [0], [0], [1], [0, 0, 1, 1], [], []>} : vector<2x256xbf16>, vector<256x128xbf16>, vector<2x128xf32> -> vector<2x128xf32>
    %c15_307 = arith.constant 15 : index
    %c0_308 = arith.constant 0 : index
    %c0_309 = arith.constant 0 : index
    %366 = vector.load %arg2[%c15_307, %c0_308, %c0_309] : memref<16x2x256xbf16, #tpu.memory_space<vmem>>, vector<1x2x256xbf16>
    %367 = vector.shape_cast %366 : vector<1x2x256xbf16> to vector<2x256xbf16>
    %cst_310 = arith.constant dense<0.000000e+00> : vector<2x128xf32>
    %368 = tpu.matmul %367, %0, %cst_310 {dimension_numbers = #tpu.dot_dimension_numbers<[1], [0], [0], [1], [0, 0, 1, 1], [], []>} : vector<2x256xbf16>, vector<256x128xbf16>, vector<2x128xf32> -> vector<2x128xf32>
    %369 = arith.maximumf %365, %368 : vector<2x128xf32>
    %c15_311 = arith.constant 15 : index
    %c0_312 = arith.constant 0 : index
    %c0_313 = arith.constant 0 : index
    %370 = vector.load %arg3[%c15_311, %c0_312, %c0_313] : memref<16x2x256xbf16, #tpu.memory_space<vmem>>, vector<1x2x256xbf16>
    %371 = vector.shape_cast %370 : vector<1x2x256xbf16> to vector<2x256xbf16>
    %cst_314 = arith.constant dense<0.000000e+00> : vector<2x128xf32>
    %372 = tpu.matmul %371, %0, %cst_314 {dimension_numbers = #tpu.dot_dimension_numbers<[1], [0], [0], [1], [0, 0, 1, 1], [], []>} : vector<2x256xbf16>, vector<256x128xbf16>, vector<2x128xf32> -> vector<2x128xf32>
    %c15_315 = arith.constant 15 : index
    %c0_316 = arith.constant 0 : index
    %c0_317 = arith.constant 0 : index
    %373 = vector.load %arg4[%c15_315, %c0_316, %c0_317] : memref<16x2x256xbf16, #tpu.memory_space<vmem>>, vector<1x2x256xbf16>
    %374 = vector.shape_cast %373 : vector<1x2x256xbf16> to vector<2x256xbf16>
    %cst_318 = arith.constant dense<0.000000e+00> : vector<2x128xf32>
    %375 = tpu.matmul %374, %0, %cst_318 {dimension_numbers = #tpu.dot_dimension_numbers<[1], [0], [0], [1], [0, 0, 1, 1], [], []>} : vector<2x256xbf16>, vector<256x128xbf16>, vector<2x128xf32> -> vector<2x128xf32>
    %376 = arith.maximumf %372, %375 : vector<2x128xf32>
    %377 = arith.maximumf %369, %376 : vector<2x128xf32>
    %378 = vector.broadcast %1 : vector<1x128xf32> to vector<2x128xf32>
    %379 = arith.addf %377, %378 : vector<2x128xf32>
    %cst_319 = arith.constant 0.000000e+00 : f32
    %380 = vector.broadcast %cst_319 : f32 to vector<2x128xf32>
    %381 = arith.maximumf %379, %380 : vector<2x128xf32>
    %382 = arith.truncf %381 : vector<2x128xf32> to vector<2x128xbf16>
    %c15_320 = arith.constant 15 : index
    %c0_321 = arith.constant 0 : index
    %c0_322 = arith.constant 0 : index
    %383 = vector.load %arg7[%c15_320, %c0_321, %c0_322] : memref<16x128x128xbf16, #tpu.memory_space<vmem>>, vector<1x128x128xbf16>
    %384 = vector.shape_cast %383 : vector<1x128x128xbf16> to vector<128x128xbf16>
    %cst_323 = arith.constant dense<0.000000e+00> : vector<2x128xf32>
    %385 = tpu.matmul %382, %384, %cst_323 {dimension_numbers = #tpu.dot_dimension_numbers<[1], [0], [0], [1], [0, 0, 1, 1], [], []>} : vector<2x128xbf16>, vector<128x128xbf16>, vector<2x128xf32> -> vector<2x128xf32>
    %386 = arith.addf %362, %385 : vector<2x128xf32>
    %c0_324 = arith.constant 0 : index
    %c0_325 = arith.constant 0 : index
    %387 = vector.load %arg8[%c0_324, %c0_325] : memref<1x128xf32, #tpu.memory_space<vmem>>, vector<1x128xf32>
    %388 = vector.broadcast %387 : vector<1x128xf32> to vector<2x128xf32>
    %389 = arith.addf %386, %388 : vector<2x128xf32>
    %cst_326 = arith.constant 0.000000e+00 : f32
    %390 = vector.broadcast %cst_326 : f32 to vector<2x128xf32>
    %391 = arith.maximumf %389, %390 : vector<2x128xf32>
    %392 = arith.truncf %391 : vector<2x128xf32> to vector<2x128xbf16>
    %c0_327 = arith.constant 0 : index
    %c0_328 = arith.constant 0 : index
    %393 = vector.load %arg9[%c0_327, %c0_328] : memref<128x128xbf16, #tpu.memory_space<vmem>>, vector<128x128xbf16>
    %cst_329 = arith.constant dense<0.000000e+00> : vector<2x128xf32>
    %394 = tpu.matmul %392, %393, %cst_329 {dimension_numbers = #tpu.dot_dimension_numbers<[1], [0], [0], [1], [0, 0, 1, 1], [], []>} : vector<2x128xbf16>, vector<128x128xbf16>, vector<2x128xf32> -> vector<2x128xf32>
    %c0_330 = arith.constant 0 : index
    %c0_331 = arith.constant 0 : index
    %395 = vector.load %arg10[%c0_330, %c0_331] : memref<1x128xf32, #tpu.memory_space<vmem>>, vector<1x128xf32>
    %396 = vector.broadcast %395 : vector<1x128xf32> to vector<2x128xf32>
    %397 = arith.addf %394, %396 : vector<2x128xf32>
    %398 = tpu.iota {dimensions = array<i32: 1>} : vector<2x128xi32>
    %c10_i32 = arith.constant 10 : i32
    %399 = vector.broadcast %c10_i32 : i32 to vector<2x128xi32>
    %400 = arith.cmpi slt, %398, %399 : vector<2x128xi32>
    %cst_332 = arith.constant -1.000000e+30 : f32
    %401 = vector.broadcast %cst_332 : f32 to vector<2x128xf32>
    %402 = arith.select %400, %397, %401 : vector<2x128xi1>, vector<2x128xf32>
    %cst_333 = arith.constant dense<0xFF800000> : vector<2xf32>
    %403 = vector.multi_reduction <maximumf>, %402, %cst_333 [1] : vector<2x128xf32> to vector<2xf32>
    %404 = vector.shape_cast %403 : vector<2xf32> to vector<2x1xf32>
    %405 = vector.broadcast %404 : vector<2x1xf32> to vector<2x128xf32>
    %406 = arith.subf %402, %405 : vector<2x128xf32>
    %407 = math.exp %406 : vector<2x128xf32>
    %cst_334 = arith.constant dense<0.000000e+00> : vector<2xf32>
    %408 = vector.multi_reduction <add>, %407, %cst_334 [1] : vector<2x128xf32> to vector<2xf32>
    %409 = vector.shape_cast %408 : vector<2xf32> to vector<2x1xf32>
    %410 = math.log %409 : vector<2x1xf32>
    %411 = vector.broadcast %410 : vector<2x1xf32> to vector<2x128xf32>
    %412 = arith.subf %406, %411 : vector<2x128xf32>
    %c0_335 = arith.constant 0 : index
    %c0_336 = arith.constant 0 : index
    %413 = vector.load %arg11[%c0_335, %c0_336] : memref<2x128xf32, #tpu.memory_space<vmem>>, vector<2x128xf32>
    tpu.vector_store %arg11[%c0_335, %c0_336], %412 {strides = array<i32>} : memref<2x128xf32, #tpu.memory_space<vmem>>, vector<2x128xf32>,
    return
  }
  func.func @transform_0(%arg0: i32) -> (i32, i32, i32) {
    %c0_i32 = arith.constant 0 : i32
    %c0_i32_0 = arith.constant 0 : i32
    %c0_i32_1 = arith.constant 0 : i32
    return %c0_i32, %arg0, %c0_i32_0 : i32, i32, i32
  }
  func.func @transform_1(%arg0: i32) -> (i32, i32, i32) {
    %c0_i32 = arith.constant 0 : i32
    %c0_i32_0 = arith.constant 0 : i32
    %c0_i32_1 = arith.constant 0 : i32
    return %c0_i32, %arg0, %c0_i32_0 : i32, i32, i32
  }
  func.func @transform_2(%arg0: i32) -> (i32, i32, i32) {
    %c0_i32 = arith.constant 0 : i32
    %c0_i32_0 = arith.constant 0 : i32
    %c0_i32_1 = arith.constant 0 : i32
    return %c0_i32, %arg0, %c0_i32_0 : i32, i32, i32
  }
  func.func @transform_3(%arg0: i32) -> (i32, i32, i32) {
    %c0_i32 = arith.constant 0 : i32
    %c0_i32_0 = arith.constant 0 : i32
    %c0_i32_1 = arith.constant 0 : i32
    return %c0_i32, %arg0, %c0_i32_0 : i32, i32, i32
  }
  func.func @transform_4(%arg0: i32) -> (i32, i32) {
    %c0_i32 = arith.constant 0 : i32
    %c0_i32_0 = arith.constant 0 : i32
    %c0_i32_1 = arith.constant 0 : i32
    return %c0_i32, %c0_i32_0 : i32, i32
  }
  func.func @transform_5(%arg0: i32) -> (i32, i32) {
    %c0_i32 = arith.constant 0 : i32
    %c0_i32_0 = arith.constant 0 : i32
    %c0_i32_1 = arith.constant 0 : i32
    return %c0_i32, %c0_i32_0 : i32, i32
  }
  func.func @transform_6(%arg0: i32) -> (i32, i32, i32) {
    %c0_i32 = arith.constant 0 : i32
    %c0_i32_0 = arith.constant 0 : i32
    %c0_i32_1 = arith.constant 0 : i32
    %c0_i32_2 = arith.constant 0 : i32
    return %c0_i32, %c0_i32_0, %c0_i32_1 : i32, i32, i32
  }
  func.func @transform_7(%arg0: i32) -> (i32, i32) {
    %c0_i32 = arith.constant 0 : i32
    %c0_i32_0 = arith.constant 0 : i32
    %c0_i32_1 = arith.constant 0 : i32
    return %c0_i32, %c0_i32_0 : i32, i32
  }
  func.func @transform_8(%arg0: i32) -> (i32, i32) {
    %c0_i32 = arith.constant 0 : i32
    %c0_i32_0 = arith.constant 0 : i32
    %c0_i32_1 = arith.constant 0 : i32
    return %c0_i32, %c0_i32_0 : i32, i32
  }
  func.func @transform_9(%arg0: i32) -> (i32, i32) {
    %c0_i32 = arith.constant 0 : i32
    %c0_i32_0 = arith.constant 0 : i32
    %c0_i32_1 = arith.constant 0 : i32
    return %c0_i32, %c0_i32_0 : i32, i32
  }
  func.func @transform_10(%arg0: i32) -> (i32, i32) {
    %c0_i32 = arith.constant 0 : i32
    %c0_i32_0 = arith.constant 0 : i32
    return %arg0, %c0_i32 : i32, i32
  }
}

</mosaic_0001>

<llo_original>
// kernel: mnist_forward.2
$region0: #{mnist_forward.2}
  #allocation0 [shape = 'u32[]', space=smem, size = 0x4, offset = 0x4, fixed_abs, tag = 'smem constant byte address 0x4 - core index']
  #allocation1 [shape = 'u32[144,128]{1,0:T(1,128)}', space=vmem, size = 0x12000, scoped, tag = 'internal scratch']
  %s0 = inlined_call_operand.vmem [shape: bf16[288,32], index: 0, kind: input, shape index: {}]
  %s1 = inlined_call_operand.vmem [shape: bf16[288,32], index: 1, kind: input, shape index: {}]
  %s2 = inlined_call_operand.vmem [shape: bf16[288,32], index: 2, kind: input, shape index: {}]
  %s3 = inlined_call_operand.vmem [shape: bf16[288,32], index: 3, kind: input, shape index: {}]
  %s4 = inlined_call_operand.vmem [shape: bf16[32,128], index: 4, kind: input, shape index: {}]
  %s5 = inlined_call_operand.vmem [shape: f32[1,128], index: 5, kind: input, shape index: {}]
  %s6 = inlined_call_operand.vmem [shape: bf16[288,128], index: 6, kind: output, shape index: {}]
  %s7 = sld [smem:[#allocation0]]
  $region34: #{mnist_forward.2} parent=0
    _
  %s9 = ssub.s32 1, %s7
  %s10 = scalar_select 0, %s9, %s7
  // Predicated region
  $region2: #{mnist_forward.2} parent=0 // pred_check
    _
  $region3: #{mnist_forward.2} parent=0 // pred_check_branch
    %12 = sbr.rel (0) target = $region5
  $region4: #{mnist_forward.2} parent=0 // pred_region
    _
  $region5: #{mnist_forward.2} parent=0 // pred_fallthru
    _
  // Predicated region
  $region6: #{mnist_forward.2} parent=0 // pred_check
    _
  $region7: #{mnist_forward.2} parent=0 // pred_check_branch
    %14 = sbr.rel (0) target = $region9
  $region8: #{mnist_forward.2} parent=0 // pred_region
    _
  $region9: #{mnist_forward.2} parent=0 // pred_fallthru
    _
  // Predicated region
  $region10: #{mnist_forward.2} parent=0 // pred_check
    _
  $region11: #{mnist_forward.2} parent=0 // pred_check_branch
    %16 = sbr.rel (0) target = $region13
  $region12: #{mnist_forward.2} parent=0 // pred_region
    _
  $region13: #{mnist_forward.2} parent=0 // pred_fallthru
    _
  // Predicated region
  $region14: #{mnist_forward.2} parent=0 // pred_check
    _
  $region15: #{mnist_forward.2} parent=0 // pred_check_branch
    %18 = sbr.rel (0) target = $region17
  $region16: #{mnist_forward.2} parent=0 // pred_region
    _
  $region17: #{mnist_forward.2} parent=0 // pred_fallthru
    _
  // Predicated region
  $region18: #{mnist_forward.2} parent=0 // pred_check
    _
  $region19: #{mnist_forward.2} parent=0 // pred_check_branch
    %20 = sbr.rel (0) target = $region21
  $region20: #{mnist_forward.2} parent=0 // pred_region
    _
  $region21: #{mnist_forward.2} parent=0 // pred_fallthru
    _
  // Predicated region
  $region22: #{mnist_forward.2} parent=0 // pred_check
    _
  $region23: #{mnist_forward.2} parent=0 // pred_check_branch
    %22 = sbr.rel (0) target = $region25
  $region24: #{mnist_forward.2} parent=0 // pred_region
    _
  $region25: #{mnist_forward.2} parent=0 // pred_fallthru
    _
  %v24 = vld [vmem:[%s4] sm:$0xf]
  %v25 = vld [vmem:[%s4 + $0x4] sm:$0xf]
  %v26 = vld [vmem:[%s4 + $0x8] sm:$0xf]
  %v27 = vld [vmem:[%s4 + $0xc] sm:$0xf]
  %v28 = vld [vmem:[%s0] sm:$0xf]
  %v29 = vld [vmem:[%s0 + $0x4] sm:$0xf]
  %v30 = vld [vmem:[%s0 + $0x8] sm:$0xf]
  %v31 = vld [vmem:[%s0 + $0xc] sm:$0xf]
  %v32 = vld [vmem:[%s0 + $0x10] sm:$0xf]
  %v33 = vld [vmem:[%s0 + $0x14] sm:$0xf]
  %v34 = vld [vmem:[%s0 + $0x18] sm:$0xf]
  %v35 = vld [vmem:[%s0 + $0x1c] sm:$0xf]
  %v36 = vld [vmem:[%s0 + $0x20] sm:$0xf]
  %v37 = vld [vmem:[%s0 + $0x24] sm:$0xf]
  %v38 = vld [vmem:[%s0 + $0x28] sm:$0xf]
  %v39 = vld [vmem:[%s0 + $0x2c] sm:$0xf]
  %v40 = vld [vmem:[%s0 + $0x30] sm:$0xf]
  %v41 = vld [vmem:[%s0 + $0x34] sm:$0xf]
  %v42 = vld [vmem:[%s0 + $0x38] sm:$0xf]
  %v43 = vld [vmem:[%s0 + $0x3c] sm:$0xf]
  %v44 = vld [vmem:[%s0 + $0x40] sm:$0xf]
  %v45 = vld [vmem:[%s0 + $0x44] sm:$0xf]
  %v46 = vld [vmem:[%s0 + $0x48] sm:$0xf]
  %v47 = vld [vmem:[%s0 + $0x4c] sm:$0xf]
  %v48 = vld [vmem:[%s0 + $0x50] sm:$0xf]
  %v49 = vld [vmem:[%s0 + $0x54] sm:$0xf]
  %v50 = vld [vmem:[%s0 + $0x58] sm:$0xf]
  %v51 = vld [vmem:[%s0 + $0x5c] sm:$0xf]
  %v52 = vld [vmem:[%s0 + $0x60] sm:$0xf]
  %v53 = vld [vmem:[%s0 + $0x64] sm:$0xf]
  %v54 = vld [vmem:[%s0 + $0x68] sm:$0xf]
  %v55 = vld [vmem:[%s0 + $0x6c] sm:$0xf]
  %v56 = vld [vmem:[%s0 + $0x70] sm:$0xf]
  %v57 = vld [vmem:[%s0 + $0x74] sm:$0xf]
  %v58 = vld [vmem:[%s0 + $0x78] sm:$0xf]
  %v59 = vld [vmem:[%s0 + $0x7c] sm:$0xf]
  %v60 = vld [vmem:[%s0 + $0x80] sm:$0xf]
  %v61 = vld [vmem:[%s0 + $0x84] sm:$0xf]
  %v62 = vld [vmem:[%s0 + $0x88] sm:$0xf]
  %v63 = vld [vmem:[%s0 + $0x8c] sm:$0xf]
  %v100 = vunpack.c.l.b16 %v28
  %v101 = vunpack.c.l.b16 %v29
  %v102 = vunpack.c.l.b16 %v30
  %v103 = vunpack.c.l.b16 %v31
  %v104 = vunpack.c.l.b16 %v32
  %v105 = vunpack.c.l.b16 %v33
  %v106 = vunpack.c.l.b16 %v34
  %v107 = vunpack.c.l.b16 %v35
  %v108 = vunpack.c.l.b16 %v36
  %v109 = vunpack.c.l.b16 %v37
  %v110 = vunpack.c.l.b16 %v38
  %v111 = vunpack.c.l.b16 %v39
  %v112 = vunpack.c.l.b16 %v40
  %v113 = vunpack.c.l.b16 %v41
  %v114 = vunpack.c.l.b16 %v42
  %v115 = vunpack.c.l.b16 %v43
  %v116 = vunpack.c.l.b16 %v44
  %v117 = vunpack.c.l.b16 %v45
  %v118 = vunpack.c.l.b16 %v46
  %v119 = vunpack.c.l.b16 %v47
  %v120 = vunpack.c.l.b16 %v48
  %v121 = vunpack.c.l.b16 %v49
  %v122 = vunpack.c.l.b16 %v50
  %v123 = vunpack.c.l.b16 %v51
  %v124 = vunpack.c.l.b16 %v52
  %v125 = vunpack.c.l.b16 %v53
  %v126 = vunpack.c.l.b16 %v54
  %v127 = vunpack.c.l.b16 %v55
  %v128 = vunpack.c.l.b16 %v56
  %v129 = vunpack.c.l.b16 %v57
  %v130 = vunpack.c.l.b16 %v58
  %v131 = vunpack.c.l.b16 %v59
  %v132 = vunpack.c.l.b16 %v60
  %v133 = vunpack.c.l.b16 %v61
  %v134 = vunpack.c.l.b16 %v62
  %v135 = vunpack.c.l.b16 %v63
  %v136 = vpack.c.b16 %v101, %v100
  %v137 = vpack.c.b16 %v103, %v102
  %v138 = vpack.c.b16 %v105, %v104
  %v139 = vpack.c.b16 %v107, %v106
  %v140 = vpack.c.b16 %v109, %v108
  %v141 = vpack.c.b16 %v111, %v110
  %v142 = vpack.c.b16 %v113, %v112
  %v143 = vpack.c.b16 %v115, %v114
  %v144 = vpack.c.b16 %v117, %v116
  %v145 = vpack.c.b16 %v119, %v118
  %v146 = vpack.c.b16 %v121, %v120
  %v147 = vpack.c.b16 %v123, %v122
  %v148 = vpack.c.b16 %v125, %v124
  %v149 = vpack.c.b16 %v127, %v126
  %v150 = vpack.c.b16 %v129, %v128
  %v151 = vpack.c.b16 %v131, %v130
  %v152 = vpack.c.b16 %v133, %v132
  %v153 = vpack.c.b16 %v135, %v134
  %v158 = vunpack.c.l.b16 %v24
  %v159 = vunpack.c.l.b16 %v25
  %v160 = vunpack.c.l.b16 %v26
  %v161 = vunpack.c.l.b16 %v27
  %v162 = vpack.c.b16 %v159, %v158
  %v163 = vpack.c.b16 %v161, %v160
  %vm166 = vcmask 261120
  %v168 = vsel %vm166, %v136, 0
  %v171 = vsel %vm166, %v137, 0
  %v174 = vsel %vm166, %v138, 0
  %v177 = vsel %vm166, %v139, 0
  %v180 = vsel %vm166, %v140, 0
  %v183 = vsel %vm166, %v141, 0
  %v186 = vsel %vm166, %v142, 0
  %v189 = vsel %vm166, %v143, 0
  %v192 = vsel %vm166, %v144, 0
  %v195 = vsel %vm166, %v145, 0
  %v198 = vsel %vm166, %v146, 0
  %v201 = vsel %vm166, %v147, 0
  %v204 = vsel %vm166, %v148, 0
  %v207 = vsel %vm166, %v149, 0
  %v210 = vsel %vm166, %v150, 0
  %v213 = vsel %vm166, %v151, 0
  %v216 = vsel %vm166, %v152, 0
  %v219 = vsel %vm166, %v153, 0
  %221 = vmatprep.subr.bf16.mxu0 0
  %222 = vmatpush1.bf16.msra.mxu0 %v162
  %223 = vmatprep.subr.bf16.mxu0 0
  %224 = vmatpush1.bf16.msra.mxu0 %v163
  %225 = vmatprep.subr.bf16.mxu0 0
  %226 = vmatpush1.bf16.msra.mxu0 0
  %227 = vmatprep.subr.bf16.mxu0 0
  %228 = vmatpush1.bf16.msra.mxu0 0
  %229 = vmatprep.subr.bf16.mxu0 0
  %230 = vmatpush1.bf16.msra.mxu0 0
  %231 = vmatprep.subr.bf16.mxu0 0
  %232 = vmatpush1.bf16.msra.mxu0 0
  %233 = vmatprep.subr.bf16.mxu0 0
  %234 = vmatpush1.bf16.msra.mxu0 0
  %235 = vmatprep.subr.bf16.mxu0 0
  %236 = vmatpush1.bf16.msra.mxu0 0
  %237 = vmatprep.subr.bf16.mxu0 0
  %238 = vmatpush1.bf16.msra.mxu0 0
  %239 = vmatprep.subr.bf16.mxu0 0
  %240 = vmatpush1.bf16.msra.mxu0 0
  %241 = vmatprep.subr.bf16.mxu0 0
  %242 = vmatpush1.bf16.msra.mxu0 0
  %243 = vmatprep.subr.bf16.mxu0 0
  %244 = vmatpush1.bf16.msra.mxu0 0
  %245 = vmatprep.subr.bf16.mxu0 0
  %246 = vmatpush1.bf16.msra.mxu0 0
  %247 = vmatprep.subr.bf16.mxu0 0
  %248 = vmatpush1.bf16.msra.mxu0 0
  %249 = vmatprep.subr.bf16.mxu0 0
  %250 = vmatpush1.bf16.msra.mxu0 0
  %251 = vmatprep.subr.bf16.mxu0 0
  %252 = vmatpush1.bf16.msra.mxu0 0
  %253 = vmatprep.mubr.bf16.mxu0 0
  %254 = vmatmul.mubr.bf16.gmra.mrb[0].mxu0 %v168
  %v255 = vpop.f32.mrb[0].mxu0
  %v256 = vadd.f32 0.0, %v255
  %v257 = vpop.f32.mrb[0].mxu0
  %v258 = vpop.f32.mrb[0].mxu0
  %v259 = vadd.f32 0.0, %v258
  %v260 = vpop.f32.mrb[0].mxu0
  %261 = vmatprep.mubr.bf16.mxu0 0
  %262 = vmatmul.mubr.bf16.gmra.mrb[0].mxu0 %v171
  %v263 = vpop.f32.mrb[0].mxu0
  %v264 = vadd.f32 0.0, %v263
  %v265 = vpop.f32.mrb[0].mxu0
  %v266 = vpop.f32.mrb[0].mxu0
  %v267 = vadd.f32 0.0, %v266
  %v268 = vpop.f32.mrb[0].mxu0
  %269 = vmatprep.mubr.bf16.mxu0 0
  %270 = vmatmul.mubr.bf16.gmra.mrb[0].mxu0 %v174
  %v271 = vpop.f32.mrb[0].mxu0
  %v272 = vadd.f32 0.0, %v271
  %v273 = vpop.f32.mrb[0].mxu0
  %v274 = vpop.f32.mrb[0].mxu0
  %v275 = vadd.f32 0.0, %v274
  %v276 = vpop.f32.mrb[0].mxu0
  %277 = vmatprep.mubr.bf16.mxu0 0
  %278 = vmatmul.mubr.bf16.gmra.mrb[0].mxu0 %v177
  %v279 = vpop.f32.mrb[0].mxu0
  %v280 = vadd.f32 0.0, %v279
  %v281 = vpop.f32.mrb[0].mxu0
  %v282 = vpop.f32.mrb[0].mxu0
  %v283 = vadd.f32 0.0, %v282
  %v284 = vpop.f32.mrb[0].mxu0
  %285 = vmatprep.mubr.bf16.mxu0 0
  %286 = vmatmul.mubr.bf16.gmra.mrb[0].mxu0 %v180
  %v287 = vpop.f32.mrb[0].mxu0
  %v288 = vadd.f32 0.0, %v287
  %v289 = vpop.f32.mrb[0].mxu0
  %v290 = vpop.f32.mrb[0].mxu0
  %v291 = vadd.f32 0.0, %v290
  %v292 = vpop.f32.mrb[0].mxu0
  %293 = vmatprep.mubr.bf16.mxu0 0
  %294 = vmatmul.mubr.bf16.gmra.mrb[0].mxu0 %v183
  %v295 = vpop.f32.mrb[0].mxu0
  %v296 = vadd.f32 0.0, %v295
  %v297 = vpop.f32.mrb[0].mxu0
  %v298 = vpop.f32.mrb[0].mxu0
  %v299 = vadd.f32 0.0, %v298
  %v300 = vpop.f32.mrb[0].mxu0
  %301 = vmatprep.mubr.bf16.mxu0 0
  %302 = vmatmul.mubr.bf16.gmra.mrb[0].mxu0 %v186
  %v303 = vpop.f32.mrb[0].mxu0
  %v304 = vadd.f32 0.0, %v303
  %v305 = vpop.f32.mrb[0].mxu0
  %v306 = vpop.f32.mrb[0].mxu0
  %v307 = vadd.f32 0.0, %v306
  %v308 = vpop.f32.mrb[0].mxu0
  %309 = vmatprep.mubr.bf16.mxu0 0
  %310 = vmatmul.mubr.bf16.gmra.mrb[0].mxu0 %v189
  %v311 = vpop.f32.mrb[0].mxu0
  %v312 = vadd.f32 0.0, %v311
  %v313 = vpop.f32.mrb[0].mxu0
  %v314 = vpop.f32.mrb[0].mxu0
  %v315 = vadd.f32 0.0, %v314
  %v316 = vpop.f32.mrb[0].mxu0
  %317 = vmatprep.mubr.bf16.mxu0 0
  %318 = vmatmul.mubr.bf16.gmra.mrb[0].mxu0 %v192
  %v319 = vpop.f32.mrb[0].mxu0
  %v320 = vadd.f32 0.0, %v319
  %v321 = vpop.f32.mrb[0].mxu0
  %v322 = vpop.f32.mrb[0].mxu0
  %v323 = vadd.f32 0.0, %v322
  %v324 = vpop.f32.mrb[0].mxu0
  %325 = vmatprep.mubr.bf16.mxu0 0
  %326 = vmatmul.mubr.bf16.gmra.mrb[0].mxu0 %v195
  %v327 = vpop.f32.mrb[0].mxu0
  %v328 = vadd.f32 0.0, %v327
  %v329 = vpop.f32.mrb[0].mxu0
  %v330 = vpop.f32.mrb[0].mxu0
  %v331 = vadd.f32 0.0, %v330
  %v332 = vpop.f32.mrb[0].mxu0
  %333 = vmatprep.mubr.bf16.mxu0 0
  %334 = vmatmul.mubr.bf16.gmra.mrb[0].mxu0 %v198
  %v335 = vpop.f32.mrb[0].mxu0
  %v336 = vadd.f32 0.0, %v335
  %v337 = vpop.f32.mrb[0].mxu0
  %v338 = vpop.f32.mrb[0].mxu0
  %v339 = vadd.f32 0.0, %v338
  %v340 = vpop.f32.mrb[0].mxu0
  %341 = vmatprep.mubr.bf16.mxu0 0
  %342 = vmatmul.mubr.bf16.gmra.mrb[0].mxu0 %v201
  %v343 = vpop.f32.mrb[0].mxu0
  %v344 = vadd.f32 0.0, %v343
  %v345 = vpop.f32.mrb[0].mxu0
  %v346 = vpop.f32.mrb[0].mxu0
  %v347 = vadd.f32 0.0, %v346
  %v348 = vpop.f32.mrb[0].mxu0
  %349 = vmatprep.mubr.bf16.mxu0 0
  %350 = vmatmul.mubr.bf16.gmra.mrb[0].mxu0 %v204
  %v351 = vpop.f32.mrb[0].mxu0
  %v352 = vadd.f32 0.0, %v351
  %v353 = vpop.f32.mrb[0].mxu0
  %v354 = vpop.f32.mrb[0].mxu0
  %v355 = vadd.f32 0.0, %v354
  %v356 = vpop.f32.mrb[0].mxu0
  %357 = vmatprep.mubr.bf16.mxu0 0
  %358 = vmatmul.mubr.bf16.gmra.mrb[0].mxu0 %v207
  %v359 = vpop.f32.mrb[0].mxu0
  %v360 = vadd.f32 0.0, %v359
  %v361 = vpop.f32.mrb[0].mxu0
  %v362 = vpop.f32.mrb[0].mxu0
  %v363 = vadd.f32 0.0, %v362
  %v364 = vpop.f32.mrb[0].mxu0
  %365 = vmatprep.mubr.bf16.mxu0 0
  %366 = vmatmul.mubr.bf16.gmra.mrb[0].mxu0 %v210
  %v367 = vpop.f32.mrb[0].mxu0
  %v368 = vadd.f32 0.0, %v367
  %v369 = vpop.f32.mrb[0].mxu0
  %v370 = vpop.f32.mrb[0].mxu0
  %v371 = vadd.f32 0.0, %v370
  %v372 = vpop.f32.mrb[0].mxu0
  %373 = vmatprep.mubr.bf16.mxu0 0
  %374 = vmatmul.mubr.bf16.gmra.mrb[0].mxu0 %v213
  %v375 = vpop.f32.mrb[0].mxu0
  %v376 = vadd.f32 0.0, %v375
  %v377 = vpop.f32.mrb[0].mxu0
  %v378 = vpop.f32.mrb[0].mxu0
  %v379 = vadd.f32 0.0, %v378
  %v380 = vpop.f32.mrb[0].mxu0
  %381 = vmatprep.mubr.bf16.mxu0 0
  %382 = vmatmul.mubr.bf16.gmra.mrb[0].mxu0 %v216
  %v383 = vpop.f32.mrb[0].mxu0
  %v384 = vadd.f32 0.0, %v383
  %v385 = vpop.f32.mrb[0].mxu0
  %v386 = vpop.f32.mrb[0].mxu0
  %v387 = vadd.f32 0.0, %v386
  %v388 = vpop.f32.mrb[0].mxu0
  %389 = vmatprep.mubr.bf16.mxu0 0
  %390 = vmatmul.mubr.bf16.gmra.mrb[0].mxu0 %v219
  %v391 = vpop.f32.mrb[0].mxu0
  %v392 = vadd.f32 0.0, %v391
  %v393 = vpop.f32.mrb[0].mxu0
  %v394 = vpop.f32.mrb[0].mxu0
  %v395 = vadd.f32 0.0, %v394
  %v396 = vpop.f32.mrb[0].mxu0
  %397 = vdwg.mxu0
  %v398 = vld [vmem:[%s1] sm:$0xf]
  %v399 = vld [vmem:[%s1 + $0x4] sm:$0xf]
  %v400 = vld [vmem:[%s1 + $0x8] sm:$0xf]
  %v401 = vld [vmem:[%s1 + $0xc] sm:$0xf]
  %v402 = vld [vmem:[%s1 + $0x10] sm:$0xf]
  %v403 = vld [vmem:[%s1 + $0x14] sm:$0xf]
  %v404 = vld [vmem:[%s1 + $0x18] sm:$0xf]
  %v405 = vld [vmem:[%s1 + $0x1c] sm:$0xf]
  %v406 = vld [vmem:[%s1 + $0x20] sm:$0xf]
  %v407 = vld [vmem:[%s1 + $0x24] sm:$0xf]
  %v408 = vld [vmem:[%s1 + $0x28] sm:$0xf]
  %v409 = vld [vmem:[%s1 + $0x2c] sm:$0xf]
  %v410 = vld [vmem:[%s1 + $0x30] sm:$0xf]
  %v411 = vld [vmem:[%s1 + $0x34] sm:$0xf]
  %v412 = vld [vmem:[%s1 + $0x38] sm:$0xf]
  %v413 = vld [vmem:[%s1 + $0x3c] sm:$0xf]
  %v414 = vld [vmem:[%s1 + $0x40] sm:$0xf]
  %v415 = vld [vmem:[%s1 + $0x44] sm:$0xf]
  %v416 = vld [vmem:[%s1 + $0x48] sm:$0xf]
  %v417 = vld [vmem:[%s1 + $0x4c] sm:$0xf]
  %v418 = vld [vmem:[%s1 + $0x50] sm:$0xf]
  %v419 = vld [vmem:[%s1 + $0x54] sm:$0xf]
  %v420 = vld [vmem:[%s1 + $0x58] sm:$0xf]
  %v421 = vld [vmem:[%s1 + $0x5c] sm:$0xf]
  %v422 = vld [vmem:[%s1 + $0x60] sm:$0xf]
  %v423 = vld [vmem:[%s1 + $0x64] sm:$0xf]
  %v424 = vld [vmem:[%s1 + $0x68] sm:$0xf]
  %v425 = vld [vmem:[%s1 + $0x6c] sm:$0xf]
  %v426 = vld [vmem:[%s1 + $0x70] sm:$0xf]
  %v427 = vld [vmem:[%s1 + $0x74] sm:$0xf]
  %v428 = vld [vmem:[%s1 + $0x78] sm:$0xf]
  %v429 = vld [vmem:[%s1 + $0x7c] sm:$0xf]
  %v430 = vld [vmem:[%s1 + $0x80] sm:$0xf]
  %v431 = vld [vmem:[%s1 + $0x84] sm:$0xf]
  %v432 = vld [vmem:[%s1 + $0x88] sm:$0xf]
  %v433 = vld [vmem:[%s1 + $0x8c] sm:$0xf]
  %v470 = vunpack.c.l.b16 %v398
  %v471 = vunpack.c.l.b16 %v399
  %v472 = vunpack.c.l.b16 %v400
  %v473 = vunpack.c.l.b16 %v401
  %v474 = vunpack.c.l.b16 %v402
  %v475 = vunpack.c.l.b16 %v403
  %v476 = vunpack.c.l.b16 %v404
  %v477 = vunpack.c.l.b16 %v405
  %v478 = vunpack.c.l.b16 %v406
  %v479 = vunpack.c.l.b16 %v407
  %v480 = vunpack.c.l.b16 %v408
  %v481 = vunpack.c.l.b16 %v409
  %v482 = vunpack.c.l.b16 %v410
  %v483 = vunpack.c.l.b16 %v411
  %v484 = vunpack.c.l.b16 %v412
  %v485 = vunpack.c.l.b16 %v413
  %v486 = vunpack.c.l.b16 %v414
  %v487 = vunpack.c.l.b16 %v415
  %v488 = vunpack.c.l.b16 %v416
  %v489 = vunpack.c.l.b16 %v417
  %v490 = vunpack.c.l.b16 %v418
  %v491 = vunpack.c.l.b16 %v419
  %v492 = vunpack.c.l.b16 %v420
  %v493 = vunpack.c.l.b16 %v421
  %v494 = vunpack.c.l.b16 %v422
  %v495 = vunpack.c.l.b16 %v423
  %v496 = vunpack.c.l.b16 %v424
  %v497 = vunpack.c.l.b16 %v425
  %v498 = vunpack.c.l.b16 %v426
  %v499 = vunpack.c.l.b16 %v427
  %v500 = vunpack.c.l.b16 %v428
  %v501 = vunpack.c.l.b16 %v429
  %v502 = vunpack.c.l.b16 %v430
  %v503 = vunpack.c.l.b16 %v431
  %v504 = vunpack.c.l.b16 %v432
  %v505 = vunpack.c.l.b16 %v433
  %v506 = vpack.c.b16 %v471, %v470
  %v507 = vpack.c.b16 %v473, %v472
  %v508 = vpack.c.b16 %v475, %v474
  %v509 = vpack.c.b16 %v477, %v476
  %v510 = vpack.c.b16 %v479, %v478
  %v511 = vpack.c.b16 %v481, %v480
  %v512 = vpack.c.b16 %v483, %v482
  %v513 = vpack.c.b16 %v485, %v484
  %v514 = vpack.c.b16 %v487, %v486
  %v515 = vpack.c.b16 %v489, %v488
  %v516 = vpack.c.b16 %v491, %v490
  %v517 = vpack.c.b16 %v493, %v492
  %v518 = vpack.c.b16 %v495, %v494
  %v519 = vpack.c.b16 %v497, %v496
  %v520 = vpack.c.b16 %v499, %v498
  %v521 = vpack.c.b16 %v501, %v500
  %v522 = vpack.c.b16 %v503, %v502
  %v523 = vpack.c.b16 %v505, %v504
  %v525 = vsel %vm166, %v506, 0
  %v528 = vsel %vm166, %v507, 0
  %v531 = vsel %vm166, %v508, 0
  %v534 = vsel %vm166, %v509, 0
  %v537 = vsel %vm166, %v510, 0
  %v540 = vsel %vm166, %v511, 0
  %v543 = vsel %vm166, %v512, 0
  %v546 = vsel %vm166, %v513, 0
  %v549 = vsel %vm166, %v514, 0
  %v552 = vsel %vm166, %v515, 0
  %v555 = vsel %vm166, %v516, 0
  %v558 = vsel %vm166, %v517, 0
  %v561 = vsel %vm166, %v518, 0
  %v564 = vsel %vm166, %v519, 0
  %v567 = vsel %vm166, %v520, 0
  %v570 = vsel %vm166, %v521, 0
  %v573 = vsel %vm166, %v522, 0
  %v576 = vsel %vm166, %v523, 0
  %578 = vmatprep.subr.bf16.mxu0 0
  %579 = vmatpush1.bf16.msra.mxu0 %v162
  %580 = vmatprep.subr.bf16.mxu0 0
  %581 = vmatpush1.bf16.msra.mxu0 %v163
  %582 = vmatprep.subr.bf16.mxu0 0
  %583 = vmatpush1.bf16.msra.mxu0 0
  %584 = vmatprep.subr.bf16.mxu0 0
  %585 = vmatpush1.bf16.msra.mxu0 0
  %586 = vmatprep.subr.bf16.mxu0 0
  %587 = vmatpush1.bf16.msra.mxu0 0
  %588 = vmatprep.subr.bf16.mxu0 0
  %589 = vmatpush1.bf16.msra.mxu0 0
  %590 = vmatprep.subr.bf16.mxu0 0
  %591 = vmatpush1.bf16.msra.mxu0 0
  %592 = vmatprep.subr.bf16.mxu0 0
  %593 = vmatpush1.bf16.msra.mxu0 0
  %594 = vmatprep.subr.bf16.mxu0 0
  %595 = vmatpush1.bf16.msra.mxu0 0
  %596 = vmatprep.subr.bf16.mxu0 0
  %597 = vmatpush1.bf16.msra.mxu0 0
  %598 = vmatprep.subr.bf16.mxu0 0
  %599 = vmatpush1.bf16.msra.mxu0 0
  %600 = vmatprep.subr.bf16.mxu0 0
  %601 = vmatpush1.bf16.msra.mxu0 0
  %602 = vmatprep.subr.bf16.mxu0 0
  %603 = vmatpush1.bf16.msra.mxu0 0
  %604 = vmatprep.subr.bf16.mxu0 0
  %605 = vmatpush1.bf16.msra.mxu0 0
  %606 = vmatprep.subr.bf16.mxu0 0
  %607 = vmatpush1.bf16.msra.mxu0 0
  %608 = vmatprep.subr.bf16.mxu0 0
  %609 = vmatpush1.bf16.msra.mxu0 0
  %610 = vmatprep.mubr.bf16.mxu0 0
  %611 = vmatmul.mubr.bf16.gmra.mrb[0].mxu0 %v525
  %v612 = vpop.f32.mrb[0].mxu0
  %v613 = vadd.f32 0.0, %v612
  %v614 = vpop.f32.mrb[0].mxu0
  %v615 = vpop.f32.mrb[0].mxu0
  %v616 = vadd.f32 0.0, %v615
  %v617 = vpop.f32.mrb[0].mxu0
  %618 = vmatprep.mubr.bf16.mxu0 0
  %619 = vmatmul.mubr.bf16.gmra.mrb[0].mxu0 %v528
  %v620 = vpop.f32.mrb[0].mxu0
  %v621 = vadd.f32 0.0, %v620
  %v622 = vpop.f32.mrb[0].mxu0
  %v623 = vpop.f32.mrb[0].mxu0
  %v624 = vadd.f32 0.0, %v623
  %v625 = vpop.f32.mrb[0].mxu0
  %626 = vmatprep.mubr.bf16.mxu0 0
  %627 = vmatmul.mubr.bf16.gmra.mrb[0].mxu0 %v531
  %v628 = vpop.f32.mrb[0].mxu0
  %v629 = vadd.f32 0.0, %v628
  %v630 = vpop.f32.mrb[0].mxu0
  %v631 = vpop.f32.mrb[0].mxu0
  %v632 = vadd.f32 0.0, %v631
  %v633 = vpop.f32.mrb[0].mxu0
  %634 = vmatprep.mubr.bf16.mxu0 0
  %635 = vmatmul.mubr.bf16.gmra.mrb[0].mxu0 %v534
  %v636 = vpop.f32.mrb[0].mxu0
  %v637 = vadd.f32 0.0, %v636
  %v638 = vpop.f32.mrb[0].mxu0
  %v639 = vpop.f32.mrb[0].mxu0
  %v640 = vadd.f32 0.0, %v639
  %v641 = vpop.f32.mrb[0].mxu0
  %642 = vmatprep.mubr.bf16.mxu0 0
  %643 = vmatmul.mubr.bf16.gmra.mrb[0].mxu0 %v537
  %v644 = vpop.f32.mrb[0].mxu0
  %v645 = vadd.f32 0.0, %v644
  %v646 = vpop.f32.mrb[0].mxu0
  %v647 = vpop.f32.mrb[0].mxu0
  %v648 = vadd.f32 0.0, %v647
  %v649 = vpop.f32.mrb[0].mxu0
  %650 = vmatprep.mubr.bf16.mxu0 0
  %651 = vmatmul.mubr.bf16.gmra.mrb[0].mxu0 %v540
  %v652 = vpop.f32.mrb[0].mxu0
  %v653 = vadd.f32 0.0, %v652
  %v654 = vpop.f32.mrb[0].mxu0
  %v655 = vpop.f32.mrb[0].mxu0
  %v656 = vadd.f32 0.0, %v655
  %v657 = vpop.f32.mrb[0].mxu0
  %658 = vmatprep.mubr.bf16.mxu0 0
  %659 = vmatmul.mubr.bf16.gmra.mrb[0].mxu0 %v543
  %v660 = vpop.f32.mrb[0].mxu0
  %v661 = vadd.f32 0.0, %v660
  %v662 = vpop.f32.mrb[0].mxu0
  %v663 = vpop.f32.mrb[0].mxu0
  %v664 = vadd.f32 0.0, %v663
  %v665 = vpop.f32.mrb[0].mxu0
  %666 = vmatprep.mubr.bf16.mxu0 0
  %667 = vmatmul.mubr.bf16.gmra.mrb[0].mxu0 %v546
  %v668 = vpop.f32.mrb[0].mxu0
  %v669 = vadd.f32 0.0, %v668
  %v670 = vpop.f32.mrb[0].mxu0
  %v671 = vpop.f32.mrb[0].mxu0
  %v672 = vadd.f32 0.0, %v671
  %v673 = vpop.f32.mrb[0].mxu0
  %674 = vmatprep.mubr.bf16.mxu0 0
  %675 = vmatmul.mubr.bf16.gmra.mrb[0].mxu0 %v549
  %v676 = vpop.f32.mrb[0].mxu0
  %v677 = vadd.f32 0.0, %v676
  %v678 = vpop.f32.mrb[0].mxu0
  %v679 = vpop.f32.mrb[0].mxu0
  %v680 = vadd.f32 0.0, %v679
  %v681 = vpop.f32.mrb[0].mxu0
  %682 = vmatprep.mubr.bf16.mxu0 0
  %683 = vmatmul.mubr.bf16.gmra.mrb[0].mxu0 %v552
  %v684 = vpop.f32.mrb[0].mxu0
  %v685 = vadd.f32 0.0, %v684
  %v686 = vpop.f32.mrb[0].mxu0
  %v687 = vpop.f32.mrb[0].mxu0
  %v688 = vadd.f32 0.0, %v687
  %v689 = vpop.f32.mrb[0].mxu0
  %690 = vmatprep.mubr.bf16.mxu0 0
  %691 = vmatmul.mubr.bf16.gmra.mrb[0].mxu0 %v555
  %v692 = vpop.f32.mrb[0].mxu0
  %v693 = vadd.f32 0.0, %v692
  %v694 = vpop.f32.mrb[0].mxu0
  %v695 = vpop.f32.mrb[0].mxu0
  %v696 = vadd.f32 0.0, %v695
  %v697 = vpop.f32.mrb[0].mxu0
  %698 = vmatprep.mubr.bf16.mxu0 0
  %699 = vmatmul.mubr.bf16.gmra.mrb[0].mxu0 %v558
  %v700 = vpop.f32.mrb[0].mxu0
  %v701 = vadd.f32 0.0, %v700
  %v702 = vpop.f32.mrb[0].mxu0
  %v703 = vpop.f32.mrb[0].mxu0
  %v704 = vadd.f32 0.0, %v703
  %v705 = vpop.f32.mrb[0].mxu0
  %706 = vmatprep.mubr.bf16.mxu0 0
  %707 = vmatmul.mubr.bf16.gmra.mrb[0].mxu0 %v561
  %v708 = vpop.f32.mrb[0].mxu0
  %v709 = vadd.f32 0.0, %v708
  %v710 = vpop.f32.mrb[0].mxu0
  %v711 = vpop.f32.mrb[0].mxu0
  %v712 = vadd.f32 0.0, %v711
  %v713 = vpop.f32.mrb[0].mxu0
  %714 = vmatprep.mubr.bf16.mxu0 0
  %715 = vmatmul.mubr.bf16.gmra.mrb[0].mxu0 %v564
  %v716 = vpop.f32.mrb[0].mxu0
  %v717 = vadd.f32 0.0, %v716
  %v718 = vpop.f32.mrb[0].mxu0
  %v719 = vpop.f32.mrb[0].mxu0
  %v720 = vadd.f32 0.0, %v719
  %v721 = vpop.f32.mrb[0].mxu0
  %722 = vmatprep.mubr.bf16.mxu0 0
  %723 = vmatmul.mubr.bf16.gmra.mrb[0].mxu0 %v567
  %v724 = vpop.f32.mrb[0].mxu0
  %v725 = vadd.f32 0.0, %v724
  %v726 = vpop.f32.mrb[0].mxu0
  %v727 = vpop.f32.mrb[0].mxu0
  %v728 = vadd.f32 0.0, %v727
  %v729 = vpop.f32.mrb[0].mxu0
  %730 = vmatprep.mubr.bf16.mxu0 0
  %731 = vmatmul.mubr.bf16.gmra.mrb[0].mxu0 %v570
  %v732 = vpop.f32.mrb[0].mxu0
  %v733 = vadd.f32 0.0, %v732
  %v734 = vpop.f32.mrb[0].mxu0
  %v735 = vpop.f32.mrb[0].mxu0
  %v736 = vadd.f32 0.0, %v735
  %v737 = vpop.f32.mrb[0].mxu0
  %738 = vmatprep.mubr.bf16.mxu0 0
  %739 = vmatmul.mubr.bf16.gmra.mrb[0].mxu0 %v573
  %v740 = vpop.f32.mrb[0].mxu0
  %v741 = vadd.f32 0.0, %v740
  %v742 = vpop.f32.mrb[0].mxu0
  %v743 = vpop.f32.mrb[0].mxu0
  %v744 = vadd.f32 0.0, %v743
  %v745 = vpop.f32.mrb[0].mxu0
  %746 = vmatprep.mubr.bf16.mxu0 0
  %747 = vmatmul.mubr.bf16.gmra.mrb[0].mxu0 %v576
  %v748 = vpop.f32.mrb[0].mxu0
  %v749 = vadd.f32 0.0, %v748
  %v750 = vpop.f32.mrb[0].mxu0
  %v751 = vpop.f32.mrb[0].mxu0
  %v752 = vadd.f32 0.0, %v751
  %v753 = vpop.f32.mrb[0].mxu0
  %754 = vdwg.mxu0
  %v755 = vmax.f32 %v256, %v613
  %v756 = vmax.f32 %v259, %v616
  %v757 = vmax.f32 %v264, %v621
  %v758 = vmax.f32 %v267, %v624
  %v759 = vmax.f32 %v272, %v629
  %v760 = vmax.f32 %v275, %v632
  %v761 = vmax.f32 %v280, %v637
  %v762 = vmax.f32 %v283, %v640
  %v763 = vmax.f32 %v288, %v645
  %v764 = vmax.f32 %v291, %v648
  %v765 = vmax.f32 %v296, %v653
  %v766 = vmax.f32 %v299, %v656
  %v767 = vmax.f32 %v304, %v661
  %v768 = vmax.f32 %v307, %v664
  %v769 = vmax.f32 %v312, %v669
  %v770 = vmax.f32 %v315, %v672
  %v771 = vmax.f32 %v320, %v677
  %v772 = vmax.f32 %v323, %v680
  %v773 = vmax.f32 %v328, %v685
  %v774 = vmax.f32 %v331, %v688
  %v775 = vmax.f32 %v336, %v693
  %v776 = vmax.f32 %v339, %v696
  %v777 = vmax.f32 %v344, %v701
  %v778 = vmax.f32 %v347, %v704
  %v779 = vmax.f32 %v352, %v709
  %v780 = vmax.f32 %v355, %v712
  %v781 = vmax.f32 %v360, %v717
  %v782 = vmax.f32 %v363, %v720
  %v783 = vmax.f32 %v368, %v725
  %v784 = vmax.f32 %v371, %v728
  %v785 = vmax.f32 %v376, %v733
  %v786 = vmax.f32 %v379, %v736
  %v787 = vmax.f32 %v384, %v741
  %v788 = vmax.f32 %v387, %v744
  %v789 = vmax.f32 %v392, %v749
  %v790 = vmax.f32 %v395, %v752
  %v791 = vld [vmem:[%s2] sm:$0xf]
  %v792 = vld [vmem:[%s2 + $0x4] sm:$0xf]
  %v793 = vld [vmem:[%s2 + $0x8] sm:$0xf]
  %v794 = vld [vmem:[%s2 + $0xc] sm:$0xf]
  %v795 = vld [vmem:[%s2 + $0x10] sm:$0xf]
  %v796 = vld [vmem:[%s2 + $0x14] sm:$0xf]
  %v797 = vld [vmem:[%s2 + $0x18] sm:$0xf]
  %v798 = vld [vmem:[%s2 + $0x1c] sm:$0xf]
  %v799 = vld [vmem:[%s2 + $0x20] sm:$0xf]
  %v800 = vld [vmem:[%s2 + $0x24] sm:$0xf]
  %v801 = vld [vmem:[%s2 + $0x28] sm:$0xf]
  %v802 = vld [vmem:[%s2 + $0x2c] sm:$0xf]
  %v803 = vld [vmem:[%s2 + $0x30] sm:$0xf]
  %v804 = vld [vmem:[%s2 + $0x34] sm:$0xf]
  %v805 = vld [vmem:[%s2 + $0x38] sm:$0xf]
  %v806 = vld [vmem:[%s2 + $0x3c] sm:$0xf]
  %v807 = vld [vmem:[%s2 + $0x40] sm:$0xf]
  %v808 = vld [vmem:[%s2 + $0x44] sm:$0xf]
  %v809 = vld [vmem:[%s2 + $0x48] sm:$0xf]
  %v810 = vld [vmem:[%s2 + $0x4c] sm:$0xf]
  %v811 = vld [vmem:[%s2 + $0x50] sm:$0xf]
  %v812 = vld [vmem:[%s2 + $0x54] sm:$0xf]
  %v813 = vld [vmem:[%s2 + $0x58] sm:$0xf]
  %v814 = vld [vmem:[%s2 + $0x5c] sm:$0xf]
  %v815 = vld [vmem:[%s2 + $0x60] sm:$0xf]
  %v816 = vld [vmem:[%s2 + $0x64] sm:$0xf]
  %v817 = vld [vmem:[%s2 + $0x68] sm:$0xf]
  %v818 = vld [vmem:[%s2 + $0x6c] sm:$0xf]
  %v819 = vld [vmem:[%s2 + $0x70] sm:$0xf]
  %v820 = vld [vmem:[%s2 + $0x74] sm:$0xf]
  %v821 = vld [vmem:[%s2 + $0x78] sm:$0xf]
  %v822 = vld [vmem:[%s2 + $0x7c] sm:$0xf]
  %v823 = vld [vmem:[%s2 + $0x80] sm:$0xf]
  %v824 = vld [vmem:[%s2 + $0x84] sm:$0xf]
  %v825 = vld [vmem:[%s2 + $0x88] sm:$0xf]
  %v826 = vld [vmem:[%s2 + $0x8c] sm:$0xf]
  %v863 = vunpack.c.l.b16 %v791
  %v864 = vunpack.c.l.b16 %v792
  %v865 = vunpack.c.l.b16 %v793
  %v866 = vunpack.c.l.b16 %v794
  %v867 = vunpack.c.l.b16 %v795
  %v868 = vunpack.c.l.b16 %v796
  %v869 = vunpack.c.l.b16 %v797
  %v870 = vunpack.c.l.b16 %v798
  %v871 = vunpack.c.l.b16 %v799
  %v872 = vunpack.c.l.b16 %v800
  %v873 = vunpack.c.l.b16 %v801
  %v874 = vunpack.c.l.b16 %v802
  %v875 = vunpack.c.l.b16 %v803
  %v876 = vunpack.c.l.b16 %v804
  %v877 = vunpack.c.l.b16 %v805
  %v878 = vunpack.c.l.b16 %v806
  %v879 = vunpack.c.l.b16 %v807
  %v880 = vunpack.c.l.b16 %v808
  %v881 = vunpack.c.l.b16 %v809
  %v882 = vunpack.c.l.b16 %v810
  %v883 = vunpack.c.l.b16 %v811
  %v884 = vunpack.c.l.b16 %v812
  %v885 = vunpack.c.l.b16 %v813
  %v886 = vunpack.c.l.b16 %v814
  %v887 = vunpack.c.l.b16 %v815
  %v888 = vunpack.c.l.b16 %v816
  %v889 = vunpack.c.l.b16 %v817
  %v890 = vunpack.c.l.b16 %v818
  %v891 = vunpack.c.l.b16 %v819
  %v892 = vunpack.c.l.b16 %v820
  %v893 = vunpack.c.l.b16 %v821
  %v894 = vunpack.c.l.b16 %v822
  %v895 = vunpack.c.l.b16 %v823
  %v896 = vunpack.c.l.b16 %v824
  %v897 = vunpack.c.l.b16 %v825
  %v898 = vunpack.c.l.b16 %v826
  %v899 = vpack.c.b16 %v864, %v863
  %v900 = vpack.c.b16 %v866, %v865
  %v901 = vpack.c.b16 %v868, %v867
  %v902 = vpack.c.b16 %v870, %v869
  %v903 = vpack.c.b16 %v872, %v871
  %v904 = vpack.c.b16 %v874, %v873
  %v905 = vpack.c.b16 %v876, %v875
  %v906 = vpack.c.b16 %v878, %v877
  %v907 = vpack.c.b16 %v880, %v879
  %v908 = vpack.c.b16 %v882, %v881
  %v909 = vpack.c.b16 %v884, %v883
  %v910 = vpack.c.b16 %v886, %v885
  %v911 = vpack.c.b16 %v888, %v887
  %v912 = vpack.c.b16 %v890, %v889
  %v913 = vpack.c.b16 %v892, %v891
  %v914 = vpack.c.b16 %v894, %v893
  %v915 = vpack.c.b16 %v896, %v895
  %v916 = vpack.c.b16 %v898, %v897
  %v918 = vsel %vm166, %v899, 0
  %v921 = vsel %vm166, %v900, 0
  %v924 = vsel %vm166, %v901, 0
  %v927 = vsel %vm166, %v902, 0
  %v930 = vsel %vm166, %v903, 0
  %v933 = vsel %vm166, %v904, 0
  %v936 = vsel %vm166, %v905, 0
  %v939 = vsel %vm166, %v906, 0
  %v942 = vsel %vm166, %v907, 0
  %v945 = vsel %vm166, %v908, 0
  %v948 = vsel %vm166, %v909, 0
  %v951 = vsel %vm166, %v910, 0
  %v954 = vsel %vm166, %v911, 0
  %v957 = vsel %vm166, %v912, 0
  %v960 = vsel %vm166, %v913, 0
  %v963 = vsel %vm166, %v914, 0
  %v966 = vsel %vm166, %v915, 0
  %v969 = vsel %vm166, %v916, 0
  %971 = vmatprep.subr.bf16.mxu0 0
  %972 = vmatpush1.bf16.msra.mxu0 %v162
  %973 = vmatprep.subr.bf16.mxu0 0
  %974 = vmatpush1.bf16.msra.mxu0 %v163
  %975 = vmatprep.subr.bf16.mxu0 0
  %976 = vmatpush1.bf16.msra.mxu0 0
  %977 = vmatprep.subr.bf16.mxu0 0
  %978 = vmatpush1.bf16.msra.mxu0 0
  %979 = vmatprep.subr.bf16.mxu0 0
  %980 = vmatpush1.bf16.msra.mxu0 0
  %981 = vmatprep.subr.bf16.mxu0 0
  %982 = vmatpush1.bf16.msra.mxu0 0
  %983 = vmatprep.subr.bf16.mxu0 0
  %984 = vmatpush1.bf16.msra.mxu0 0
  %985 = vmatprep.subr.bf16.mxu0 0
  %986 = vmatpush1.bf16.msra.mxu0 0
  %987 = vmatprep.subr.bf16.mxu0 0
  %988 = vmatpush1.bf16.msra.mxu0 0
  %989 = vmatprep.subr.bf16.mxu0 0
  %990 = vmatpush1.bf16.msra.mxu0 0
  %991 = vmatprep.subr.bf16.mxu0 0
  %992 = vmatpush1.bf16.msra.mxu0 0
  %993 = vmatprep.subr.bf16.mxu0 0
  %994 = vmatpush1.bf16.msra.mxu0 0
  %995 = vmatprep.subr.bf16.mxu0 0
  %996 = vmatpush1.bf16.msra.mxu0 0
  %997 = vmatprep.subr.bf16.mxu0 0
  %998 = vmatpush1.bf16.msra.mxu0 0
  %999 = vmatprep.subr.bf16.mxu0 0
  %1000 = vmatpush1.bf16.msra.mxu0 0
  %1001 = vmatprep.subr.bf16.mxu0 0
  %1002 = vmatpush1.bf16.msra.mxu0 0
  %1003 = vmatprep.mubr.bf16.mxu0 0
  %1004 = vmatmul.mubr.bf16.gmra.mrb[0].mxu0 %v918
  %v1005 = vpop.f32.mrb[0].mxu0
  %v1006 = vadd.f32 0.0, %v1005
  %v1007 = vpop.f32.mrb[0].mxu0
  %v1008 = vpop.f32.mrb[0].mxu0
  %v1009 = vadd.f32 0.0, %v1008
  %v1010 = vpop.f32.mrb[0].mxu0
  %1011 = vmatprep.mubr.bf16.mxu0 0
  %1012 = vmatmul.mubr.bf16.gmra.mrb[0].mxu0 %v921
  %v1013 = vpop.f32.mrb[0].mxu0
  %v1014 = vadd.f32 0.0, %v1013
  %v1015 = vpop.f32.mrb[0].mxu0
  %v1016 = vpop.f32.mrb[0].mxu0
  %v1017 = vadd.f32 0.0, %v1016
  %v1018 = vpop.f32.mrb[0].mxu0
  %1019 = vmatprep.mubr.bf16.mxu0 0
  %1020 = vmatmul.mubr.bf16.gmra.mrb[0].mxu0 %v924
  %v1021 = vpop.f32.mrb[0].mxu0
  %v1022 = vadd.f32 0.0, %v1021
  %v1023 = vpop.f32.mrb[0].mxu0
  %v1024 = vpop.f32.mrb[0].mxu0
  %v1025 = vadd.f32 0.0, %v1024
  %v1026 = vpop.f32.mrb[0].mxu0
  %1027 = vmatprep.mubr.bf16.mxu0 0
  %1028 = vmatmul.mubr.bf16.gmra.mrb[0].mxu0 %v927
  %v1029 = vpop.f32.mrb[0].mxu0
  %v1030 = vadd.f32 0.0, %v1029
  %v1031 = vpop.f32.mrb[0].mxu0
  %v1032 = vpop.f32.mrb[0].mxu0
  %v1033 = vadd.f32 0.0, %v1032
  %v1034 = vpop.f32.mrb[0].mxu0
  %1035 = vmatprep.mubr.bf16.mxu0 0
  %1036 = vmatmul.mubr.bf16.gmra.mrb[0].mxu0 %v930
  %v1037 = vpop.f32.mrb[0].mxu0
  %v1038 = vadd.f32 0.0, %v1037
  %v1039 = vpop.f32.mrb[0].mxu0
  %v1040 = vpop.f32.mrb[0].mxu0
  %v1041 = vadd.f32 0.0, %v1040
  %v1042 = vpop.f32.mrb[0].mxu0
  %1043 = vmatprep.mubr.bf16.mxu0 0
  %1044 = vmatmul.mubr.bf16.gmra.mrb[0].mxu0 %v933
  %v1045 = vpop.f32.mrb[0].mxu0
  %v1046 = vadd.f32 0.0, %v1045
  %v1047 = vpop.f32.mrb[0].mxu0
  %v1048 = vpop.f32.mrb[0].mxu0
  %v1049 = vadd.f32 0.0, %v1048
  %v1050 = vpop.f32.mrb[0].mxu0
  %1051 = vmatprep.mubr.bf16.mxu0 0
  %1052 = vmatmul.mubr.bf16.gmra.mrb[0].mxu0 %v936
  %v1053 = vpop.f32.mrb[0].mxu0
  %v1054 = vadd.f32 0.0, %v1053
  %v1055 = vpop.f32.mrb[0].mxu0
  %v1056 = vpop.f32.mrb[0].mxu0
  %v1057 = vadd.f32 0.0, %v1056
  %v1058 = vpop.f32.mrb[0].mxu0
  %1059 = vmatprep.mubr.bf16.mxu0 0
  %1060 = vmatmul.mubr.bf16.gmra.mrb[0].mxu0 %v939
  %v1061 = vpop.f32.mrb[0].mxu0
  %v1062 = vadd.f32 0.0, %v1061
  %v1063 = vpop.f32.mrb[0].mxu0
  %v1064 = vpop.f32.mrb[0].mxu0
  %v1065 = vadd.f32 0.0, %v1064
  %v1066 = vpop.f32.mrb[0].mxu0
  %1067 = vmatprep.mubr.bf16.mxu0 0
  %1068 = vmatmul.mubr.bf16.gmra.mrb[0].mxu0 %v942
  %v1069 = vpop.f32.mrb[0].mxu0
  %v1070 = vadd.f32 0.0, %v1069
  %v1071 = vpop.f32.mrb[0].mxu0
  %v1072 = vpop.f32.mrb[0].mxu0
  %v1073 = vadd.f32 0.0, %v1072
  %v1074 = vpop.f32.mrb[0].mxu0
  %1075 = vmatprep.mubr.bf16.mxu0 0
  %1076 = vmatmul.mubr.bf16.gmra.mrb[0].mxu0 %v945
  %v1077 = vpop.f32.mrb[0].mxu0
  %v1078 = vadd.f32 0.0, %v1077
  %v1079 = vpop.f32.mrb[0].mxu0
  %v1080 = vpop.f32.mrb[0].mxu0
  %v1081 = vadd.f32 0.0, %v1080
  %v1082 = vpop.f32.mrb[0].mxu0
  %1083 = vmatprep.mubr.bf16.mxu0 0
  %1084 = vmatmul.mubr.bf16.gmra.mrb[0].mxu0 %v948
  %v1085 = vpop.f32.mrb[0].mxu0
  %v1086 = vadd.f32 0.0, %v1085
  %v1087 = vpop.f32.mrb[0].mxu0
  %v1088 = vpop.f32.mrb[0].mxu0
  %v1089 = vadd.f32 0.0, %v1088
  %v1090 = vpop.f32.mrb[0].mxu0
  %1091 = vmatprep.mubr.bf16.mxu0 0
  %1092 = vmatmul.mubr.bf16.gmra.mrb[0].mxu0 %v951
  %v1093 = vpop.f32.mrb[0].mxu0
  %v1094 = vadd.f32 0.0, %v1093
  %v1095 = vpop.f32.mrb[0].mxu0
  %v1096 = vpop.f32.mrb[0].mxu0
  %v1097 = vadd.f32 0.0, %v1096
  %v1098 = vpop.f32.mrb[0].mxu0
  %1099 = vmatprep.mubr.bf16.mxu0 0
  %1100 = vmatmul.mubr.bf16.gmra.mrb[0].mxu0 %v954
  %v1101 = vpop.f32.mrb[0].mxu0
  %v1102 = vadd.f32 0.0, %v1101
  %v1103 = vpop.f32.mrb[0].mxu0
  %v1104 = vpop.f32.mrb[0].mxu0
  %v1105 = vadd.f32 0.0, %v1104
  %v1106 = vpop.f32.mrb[0].mxu0
  %1107 = vmatprep.mubr.bf16.mxu0 0
  %1108 = vmatmul.mubr.bf16.gmra.mrb[0].mxu0 %v957
  %v1109 = vpop.f32.mrb[0].mxu0
  %v1110 = vadd.f32 0.0, %v1109
  %v1111 = vpop.f32.mrb[0].mxu0
  %v1112 = vpop.f32.mrb[0].mxu0
  %v1113 = vadd.f32 0.0, %v1112
  %v1114 = vpop.f32.mrb[0].mxu0
  %1115 = vmatprep.mubr.bf16.mxu0 0
  %1116 = vmatmul.mubr.bf16.gmra.mrb[0].mxu0 %v960
  %v1117 = vpop.f32.mrb[0].mxu0
  %v1118 = vadd.f32 0.0, %v1117
  %v1119 = vpop.f32.mrb[0].mxu0
  %v1120 = vpop.f32.mrb[0].mxu0
  %v1121 = vadd.f32 0.0, %v1120
  %v1122 = vpop.f32.mrb[0].mxu0
  %1123 = vmatprep.mubr.bf16.mxu0 0
  %1124 = vmatmul.mubr.bf16.gmra.mrb[0].mxu0 %v963
  %v1125 = vpop.f32.mrb[0].mxu0
  %v1126 = vadd.f32 0.0, %v1125
  %v1127 = vpop.f32.mrb[0].mxu0
  %v1128 = vpop.f32.mrb[0].mxu0
  %v1129 = vadd.f32 0.0, %v1128
  %v1130 = vpop.f32.mrb[0].mxu0
  %1131 = vmatprep.mubr.bf16.mxu0 0
  %1132 = vmatmul.mubr.bf16.gmra.mrb[0].mxu0 %v966
  %v1133 = vpop.f32.mrb[0].mxu0
  %v1134 = vadd.f32 0.0, %v1133
  %v1135 = vpop.f32.mrb[0].mxu0
  %v1136 = vpop.f32.mrb[0].mxu0
  %v1137 = vadd.f32 0.0, %v1136
  %v1138 = vpop.f32.mrb[0].mxu0
  %1139 = vmatprep.mubr.bf16.mxu0 0
  %1140 = vmatmul.mubr.bf16.gmra.mrb[0].mxu0 %v969
  %v1141 = vpop.f32.mrb[0].mxu0
  %v1142 = vadd.f32 0.0, %v1141
  %v1143 = vpop.f32.mrb[0].mxu0
  %v1144 = vpop.f32.mrb[0].mxu0
  %v1145 = vadd.f32 0.0, %v1144
  %v1146 = vpop.f32.mrb[0].mxu0
  %1147 = vdwg.mxu0
  %v1148 = vld [vmem:[%s3] sm:$0xf]
  %v1149 = vld [vmem:[%s3 + $0x4] sm:$0xf]
  %v1150 = vld [vmem:[%s3 + $0x8] sm:$0xf]
  %v1151 = vld [vmem:[%s3 + $0xc] sm:$0xf]
  %v1152 = vld [vmem:[%s3 + $0x10] sm:$0xf]
  %v1153 = vld [vmem:[%s3 + $0x14] sm:$0xf]
  %v1154 = vld [vmem:[%s3 + $0x18] sm:$0xf]
  %v1155 = vld [vmem:[%s3 + $0x1c] sm:$0xf]
  %v1156 = vld [vmem:[%s3 + $0x20] sm:$0xf]
  %v1157 = vld [vmem:[%s3 + $0x24] sm:$0xf]
  %v1158 = vld [vmem:[%s3 + $0x28] sm:$0xf]
  %v1159 = vld [vmem:[%s3 + $0x2c] sm:$0xf]
  %v1160 = vld [vmem:[%s3 + $0x30] sm:$0xf]
  %v1161 = vld [vmem:[%s3 + $0x34] sm:$0xf]
  %v1162 = vld [vmem:[%s3 + $0x38] sm:$0xf]
  %v1163 = vld [vmem:[%s3 + $0x3c] sm:$0xf]
  %v1164 = vld [vmem:[%s3 + $0x40] sm:$0xf]
  %v1165 = vld [vmem:[%s3 + $0x44] sm:$0xf]
  %v1166 = vld [vmem:[%s3 + $0x48] sm:$0xf]
  %v1167 = vld [vmem:[%s3 + $0x4c] sm:$0xf]
  %v1168 = vld [vmem:[%s3 + $0x50] sm:$0xf]
  %v1169 = vld [vmem:[%s3 + $0x54] sm:$0xf]
  %v1170 = vld [vmem:[%s3 + $0x58] sm:$0xf]
  %v1171 = vld [vmem:[%s3 + $0x5c] sm:$0xf]
  %v1172 = vld [vmem:[%s3 + $0x60] sm:$0xf]
  %v1173 = vld [vmem:[%s3 + $0x64] sm:$0xf]
  %v1174 = vld [vmem:[%s3 + $0x68] sm:$0xf]
  %v1175 = vld [vmem:[%s3 + $0x6c] sm:$0xf]
  %v1176 = vld [vmem:[%s3 + $0x70] sm:$0xf]
  %v1177 = vld [vmem:[%s3 + $0x74] sm:$0xf]
  %v1178 = vld [vmem:[%s3 + $0x78] sm:$0xf]
  %v1179 = vld [vmem:[%s3 + $0x7c] sm:$0xf]
  %v1180 = vld [vmem:[%s3 + $0x80] sm:$0xf]
  %v1181 = vld [vmem:[%s3 + $0x84] sm:$0xf]
  %v1182 = vld [vmem:[%s3 + $0x88] sm:$0xf]
  %v1183 = vld [vmem:[%s3 + $0x8c] sm:$0xf]
  %v1220 = vunpack.c.l.b16 %v1148
  %v1221 = vunpack.c.l.b16 %v1149
  %v1222 = vunpack.c.l.b16 %v1150
  %v1223 = vunpack.c.l.b16 %v1151
  %v1224 = vunpack.c.l.b16 %v1152
  %v1225 = vunpack.c.l.b16 %v1153
  %v1226 = vunpack.c.l.b16 %v1154
  %v1227 = vunpack.c.l.b16 %v1155
  %v1228 = vunpack.c.l.b16 %v1156
  %v1229 = vunpack.c.l.b16 %v1157
  %v1230 = vunpack.c.l.b16 %v1158
  %v1231 = vunpack.c.l.b16 %v1159
  %v1232 = vunpack.c.l.b16 %v1160
  %v1233 = vunpack.c.l.b16 %v1161
  %v1234 = vunpack.c.l.b16 %v1162
  %v1235 = vunpack.c.l.b16 %v1163
  %v1236 = vunpack.c.l.b16 %v1164
  %v1237 = vunpack.c.l.b16 %v1165
  %v1238 = vunpack.c.l.b16 %v1166
  %v1239 = vunpack.c.l.b16 %v1167
  %v1240 = vunpack.c.l.b16 %v1168
  %v1241 = vunpack.c.l.b16 %v1169
  %v1242 = vunpack.c.l.b16 %v1170
  %v1243 = vunpack.c.l.b16 %v1171
  %v1244 = vunpack.c.l.b16 %v1172
  %v1245 = vunpack.c.l.b16 %v1173
  %v1246 = vunpack.c.l.b16 %v1174
  %v1247 = vunpack.c.l.b16 %v1175
  %v1248 = vunpack.c.l.b16 %v1176
  %v1249 = vunpack.c.l.b16 %v1177
  %v1250 = vunpack.c.l.b16 %v1178
  %v1251 = vunpack.c.l.b16 %v1179
  %v1252 = vunpack.c.l.b16 %v1180
  %v1253 = vunpack.c.l.b16 %v1181
  %v1254 = vunpack.c.l.b16 %v1182
  %v1255 = vunpack.c.l.b16 %v1183
  %v1256 = vpack.c.b16 %v1221, %v1220
  %v1257 = vpack.c.b16 %v1223, %v1222
  %v1258 = vpack.c.b16 %v1225, %v1224
  %v1259 = vpack.c.b16 %v1227, %v1226
  %v1260 = vpack.c.b16 %v1229, %v1228
  %v1261 = vpack.c.b16 %v1231, %v1230
  %v1262 = vpack.c.b16 %v1233, %v1232
  %v1263 = vpack.c.b16 %v1235, %v1234
  %v1264 = vpack.c.b16 %v1237, %v1236
  %v1265 = vpack.c.b16 %v1239, %v1238
  %v1266 = vpack.c.b16 %v1241, %v1240
  %v1267 = vpack.c.b16 %v1243, %v1242
  %v1268 = vpack.c.b16 %v1245, %v1244
  %v1269 = vpack.c.b16 %v1247, %v1246
  %v1270 = vpack.c.b16 %v1249, %v1248
  %v1271 = vpack.c.b16 %v1251, %v1250
  %v1272 = vpack.c.b16 %v1253, %v1252
  %v1273 = vpack.c.b16 %v1255, %v1254
  %v1275 = vsel %vm166, %v1256, 0
  %v1278 = vsel %vm166, %v1257, 0
  %v1281 = vsel %vm166, %v1258, 0
  %v1284 = vsel %vm166, %v1259, 0
  %v1287 = vsel %vm166, %v1260, 0
  %v1290 = vsel %vm166, %v1261, 0
  %v1293 = vsel %vm166, %v1262, 0
  %v1296 = vsel %vm166, %v1263, 0
  %v1299 = vsel %vm166, %v1264, 0
  %v1302 = vsel %vm166, %v1265, 0
  %v1305 = vsel %vm166, %v1266, 0
  %v1308 = vsel %vm166, %v1267, 0
  %v1311 = vsel %vm166, %v1268, 0
  %v1314 = vsel %vm166, %v1269, 0
  %v1317 = vsel %vm166, %v1270, 0
  %v1320 = vsel %vm166, %v1271, 0
  %v1323 = vsel %vm166, %v1272, 0
  %v1326 = vsel %vm166, %v1273, 0
  %1328 = vmatprep.subr.bf16.mxu0 0
  %1329 = vmatpush1.bf16.msra.mxu0 %v162
  %1330 = vmatprep.subr.bf16.mxu0 0
  %1331 = vmatpush1.bf16.msra.mxu0 %v163
  %1332 = vmatprep.subr.bf16.mxu0 0
  %1333 = vmatpush1.bf16.msra.mxu0 0
  %1334 = vmatprep.subr.bf16.mxu0 0
  %1335 = vmatpush1.bf16.msra.mxu0 0
  %1336 = vmatprep.subr.bf16.mxu0 0
  %1337 = vmatpush1.bf16.msra.mxu0 0
  %1338 = vmatprep.subr.bf16.mxu0 0
  %1339 = vmatpush1.bf16.msra.mxu0 0
  %1340 = vmatprep.subr.bf16.mxu0 0
  %1341 = vmatpush1.bf16.msra.mxu0 0
  %1342 = vmatprep.subr.bf16.mxu0 0
  %1343 = vmatpush1.bf16.msra.mxu0 0
  %1344 = vmatprep.subr.bf16.mxu0 0
  %1345 = vmatpush1.bf16.msra.mxu0 0
  %1346 = vmatprep.subr.bf16.mxu0 0
  %1347 = vmatpush1.bf16.msra.mxu0 0
  %1348 = vmatprep.subr.bf16.mxu0 0
  %1349 = vmatpush1.bf16.msra.mxu0 0
  %1350 = vmatprep.subr.bf16.mxu0 0
  %1351 = vmatpush1.bf16.msra.mxu0 0
  %1352 = vmatprep.subr.bf16.mxu0 0
  %1353 = vmatpush1.bf16.msra.mxu0 0
  %1354 = vmatprep.subr.bf16.mxu0 0
  %1355 = vmatpush1.bf16.msra.mxu0 0
  %1356 = vmatprep.subr.bf16.mxu0 0
  %1357 = vmatpush1.bf16.msra.mxu0 0
  %1358 = vmatprep.subr.bf16.mxu0 0
  %1359 = vmatpush1.bf16.msra.mxu0 0
  %1360 = vmatprep.mubr.bf16.mxu0 0
  %1361 = vmatmul.mubr.bf16.gmra.mrb[0].mxu0 %v1275
  %v1362 = vpop.f32.mrb[0].mxu0
  %v1363 = vadd.f32 0.0, %v1362
  %v1364 = vpop.f32.mrb[0].mxu0
  %v1365 = vpop.f32.mrb[0].mxu0
  %v1366 = vadd.f32 0.0, %v1365
  %v1367 = vpop.f32.mrb[0].mxu0
  %1368 = vmatprep.mubr.bf16.mxu0 0
  %1369 = vmatmul.mubr.bf16.gmra.mrb[0].mxu0 %v1278
  %v1370 = vpop.f32.mrb[0].mxu0
  %v1371 = vadd.f32 0.0, %v1370
  %v1372 = vpop.f32.mrb[0].mxu0
  %v1373 = vpop.f32.mrb[0].mxu0
  %v1374 = vadd.f32 0.0, %v1373
  %v1375 = vpop.f32.mrb[0].mxu0
  %1376 = vmatprep.mubr.bf16.mxu0 0
  %1377 = vmatmul.mubr.bf16.gmra.mrb[0].mxu0 %v1281
  %v1378 = vpop.f32.mrb[0].mxu0
  %v1379 = vadd.f32 0.0, %v1378
  %v1380 = vpop.f32.mrb[0].mxu0
  %v1381 = vpop.f32.mrb[0].mxu0
  %v1382 = vadd.f32 0.0, %v1381
  %v1383 = vpop.f32.mrb[0].mxu0
  %1384 = vmatprep.mubr.bf16.mxu0 0
  %1385 = vmatmul.mubr.bf16.gmra.mrb[0].mxu0 %v1284
  %v1386 = vpop.f32.mrb[0].mxu0
  %v1387 = vadd.f32 0.0, %v1386
  %v1388 = vpop.f32.mrb[0].mxu0
  %v1389 = vpop.f32.mrb[0].mxu0
  %v1390 = vadd.f32 0.0, %v1389
  %v1391 = vpop.f32.mrb[0].mxu0
  %1392 = vmatprep.mubr.bf16.mxu0 0
  %1393 = vmatmul.mubr.bf16.gmra.mrb[0].mxu0 %v1287
  %v1394 = vpop.f32.mrb[0].mxu0
  %v1395 = vadd.f32 0.0, %v1394
  %v1396 = vpop.f32.mrb[0].mxu0
  %v1397 = vpop.f32.mrb[0].mxu0
  %v1398 = vadd.f32 0.0, %v1397
  %v1399 = vpop.f32.mrb[0].mxu0
  %1400 = vmatprep.mubr.bf16.mxu0 0
  %1401 = vmatmul.mubr.bf16.gmra.mrb[0].mxu0 %v1290
  %v1402 = vpop.f32.mrb[0].mxu0
  %v1403 = vadd.f32 0.0, %v1402
  %v1404 = vpop.f32.mrb[0].mxu0
  %v1405 = vpop.f32.mrb[0].mxu0
  %v1406 = vadd.f32 0.0, %v1405
  %v1407 = vpop.f32.mrb[0].mxu0
  %1408 = vmatprep.mubr.bf16.mxu0 0
  %1409 = vmatmul.mubr.bf16.gmra.mrb[0].mxu0 %v1293
  %v1410 = vpop.f32.mrb[0].mxu0
  %v1411 = vadd.f32 0.0, %v1410
  %v1412 = vpop.f32.mrb[0].mxu0
  %v1413 = vpop.f32.mrb[0].mxu0
  %v1414 = vadd.f32 0.0, %v1413
  %v1415 = vpop.f32.mrb[0].mxu0
  %1416 = vmatprep.mubr.bf16.mxu0 0
  %1417 = vmatmul.mubr.bf16.gmra.mrb[0].mxu0 %v1296
  %v1418 = vpop.f32.mrb[0].mxu0
  %v1419 = vadd.f32 0.0, %v1418
  %v1420 = vpop.f32.mrb[0].mxu0
  %v1421 = vpop.f32.mrb[0].mxu0
  %v1422 = vadd.f32 0.0, %v1421
  %v1423 = vpop.f32.mrb[0].mxu0
  %1424 = vmatprep.mubr.bf16.mxu0 0
  %1425 = vmatmul.mubr.bf16.gmra.mrb[0].mxu0 %v1299
  %v1426 = vpop.f32.mrb[0].mxu0
  %v1427 = vadd.f32 0.0, %v1426
  %v1428 = vpop.f32.mrb[0].mxu0
  %v1429 = vpop.f32.mrb[0].mxu0
  %v1430 = vadd.f32 0.0, %v1429
  %v1431 = vpop.f32.mrb[0].mxu0
  %1432 = vmatprep.mubr.bf16.mxu0 0
  %1433 = vmatmul.mubr.bf16.gmra.mrb[0].mxu0 %v1302
  %v1434 = vpop.f32.mrb[0].mxu0
  %v1435 = vadd.f32 0.0, %v1434
  %v1436 = vpop.f32.mrb[0].mxu0
  %v1437 = vpop.f32.mrb[0].mxu0
  %v1438 = vadd.f32 0.0, %v1437
  %v1439 = vpop.f32.mrb[0].mxu0
  %1440 = vmatprep.mubr.bf16.mxu0 0
  %1441 = vmatmul.mubr.bf16.gmra.mrb[0].mxu0 %v1305
  %v1442 = vpop.f32.mrb[0].mxu0
  %v1443 = vadd.f32 0.0, %v1442
  %v1444 = vpop.f32.mrb[0].mxu0
  %v1445 = vpop.f32.mrb[0].mxu0
  %v1446 = vadd.f32 0.0, %v1445
  %v1447 = vpop.f32.mrb[0].mxu0
  %1448 = vmatprep.mubr.bf16.mxu0 0
  %1449 = vmatmul.mubr.bf16.gmra.mrb[0].mxu0 %v1308
  %v1450 = vpop.f32.mrb[0].mxu0
  %v1451 = vadd.f32 0.0, %v1450
  %v1452 = vpop.f32.mrb[0].mxu0
  %v1453 = vpop.f32.mrb[0].mxu0
  %v1454 = vadd.f32 0.0, %v1453
  %v1455 = vpop.f32.mrb[0].mxu0
  %1456 = vmatprep.mubr.bf16.mxu0 0
  %1457 = vmatmul.mubr.bf16.gmra.mrb[0].mxu0 %v1311
  %v1458 = vpop.f32.mrb[0].mxu0
  %v1459 = vadd.f32 0.0, %v1458
  %v1460 = vpop.f32.mrb[0].mxu0
  %v1461 = vpop.f32.mrb[0].mxu0
  %v1462 = vadd.f32 0.0, %v1461
  %v1463 = vpop.f32.mrb[0].mxu0
  %1464 = vmatprep.mubr.bf16.mxu0 0
  %1465 = vmatmul.mubr.bf16.gmra.mrb[0].mxu0 %v1314
  %v1466 = vpop.f32.mrb[0].mxu0
  %v1467 = vadd.f32 0.0, %v1466
  %v1468 = vpop.f32.mrb[0].mxu0
  %v1469 = vpop.f32.mrb[0].mxu0
  %v1470 = vadd.f32 0.0, %v1469
  %v1471 = vpop.f32.mrb[0].mxu0
  %1472 = vmatprep.mubr.bf16.mxu0 0
  %1473 = vmatmul.mubr.bf16.gmra.mrb[0].mxu0 %v1317
  %v1474 = vpop.f32.mrb[0].mxu0
  %v1475 = vadd.f32 0.0, %v1474
  %v1476 = vpop.f32.mrb[0].mxu0
  %v1477 = vpop.f32.mrb[0].mxu0
  %v1478 = vadd.f32 0.0, %v1477
  %v1479 = vpop.f32.mrb[0].mxu0
  %1480 = vmatprep.mubr.bf16.mxu0 0
  %1481 = vmatmul.mubr.bf16.gmra.mrb[0].mxu0 %v1320
  %v1482 = vpop.f32.mrb[0].mxu0
  %v1483 = vadd.f32 0.0, %v1482
  %v1484 = vpop.f32.mrb[0].mxu0
  %v1485 = vpop.f32.mrb[0].mxu0
  %v1486 = vadd.f32 0.0, %v1485
  %v1487 = vpop.f32.mrb[0].mxu0
  %1488 = vmatprep.mubr.bf16.mxu0 0
  %1489 = vmatmul.mubr.bf16.gmra.mrb[0].mxu0 %v1323
  %v1490 = vpop.f32.mrb[0].mxu0
  %v1491 = vadd.f32 0.0, %v1490
  %v1492 = vpop.f32.mrb[0].mxu0
  %v1493 = vpop.f32.mrb[0].mxu0
  %v1494 = vadd.f32 0.0, %v1493
  %v1495 = vpop.f32.mrb[0].mxu0
  %1496 = vmatprep.mubr.bf16.mxu0 0
  %1497 = vmatmul.mubr.bf16.gmra.mrb[0].mxu0 %v1326
  %v1498 = vpop.f32.mrb[0].mxu0
  %v1499 = vadd.f32 0.0, %v1498
  %v1500 = vpop.f32.mrb[0].mxu0
  %v1501 = vpop.f32.mrb[0].mxu0
  %v1502 = vadd.f32 0.0, %v1501
  %v1503 = vpop.f32.mrb[0].mxu0
  %1504 = vdwg.mxu0
  %v1505 = vmax.f32 %v1006, %v1363
  %v1506 = vmax.f32 %v1009, %v1366
  %v1507 = vmax.f32 %v1014, %v1371
  %v1508 = vmax.f32 %v1017, %v1374
  %v1509 = vmax.f32 %v1022, %v1379
  %v1510 = vmax.f32 %v1025, %v1382
  %v1511 = vmax.f32 %v1030, %v1387
  %v1512 = vmax.f32 %v1033, %v1390
  %v1513 = vmax.f32 %v1038, %v1395
  %v1514 = vmax.f32 %v1041, %v1398
  %v1515 = vmax.f32 %v1046, %v1403
  %v1516 = vmax.f32 %v1049, %v1406
  %v1517 = vmax.f32 %v1054, %v1411
  %v1518 = vmax.f32 %v1057, %v1414
  %v1519 = vmax.f32 %v1062, %v1419
  %v1520 = vmax.f32 %v1065, %v1422
  %v1521 = vmax.f32 %v1070, %v1427
  %v1522 = vmax.f32 %v1073, %v1430
  %v1523 = vmax.f32 %v1078, %v1435
  %v1524 = vmax.f32 %v1081, %v1438
  %v1525 = vmax.f32 %v1086, %v1443
  %v1526 = vmax.f32 %v1089, %v1446
  %v1527 = vmax.f32 %v1094, %v1451
  %v1528 = vmax.f32 %v1097, %v1454
  %v1529 = vmax.f32 %v1102, %v1459
  %v1530 = vmax.f32 %v1105, %v1462
  %v1531 = vmax.f32 %v1110, %v1467
  %v1532 = vmax.f32 %v1113, %v1470
  %v1533 = vmax.f32 %v1118, %v1475
  %v1534 = vmax.f32 %v1121, %v1478
  %v1535 = vmax.f32 %v1126, %v1483
  %v1536 = vmax.f32 %v1129, %v1486
  %v1537 = vmax.f32 %v1134, %v1491
  %v1538 = vmax.f32 %v1137, %v1494
  %v1539 = vmax.f32 %v1142, %v1499
  %v1540 = vmax.f32 %v1145, %v1502
  %v1541 = vmax.f32 %v755, %v1505
  %v1542 = vmax.f32 %v756, %v1506
  %v1543 = vmax.f32 %v757, %v1507
  %v1544 = vmax.f32 %v758, %v1508
  %v1545 = vmax.f32 %v759, %v1509
  %v1546 = vmax.f32 %v760, %v1510
  %v1547 = vmax.f32 %v761, %v1511
  %v1548 = vmax.f32 %v762, %v1512
  %v1549 = vmax.f32 %v763, %v1513
  %v1550 = vmax.f32 %v764, %v1514
  %v1551 = vmax.f32 %v765, %v1515
  %v1552 = vmax.f32 %v766, %v1516
  %v1553 = vmax.f32 %v767, %v1517
  %v1554 = vmax.f32 %v768, %v1518
  %v1555 = vmax.f32 %v769, %v1519
  %v1556 = vmax.f32 %v770, %v1520
  %v1557 = vmax.f32 %v771, %v1521
  %v1558 = vmax.f32 %v772, %v1522
  %v1559 = vmax.f32 %v773, %v1523
  %v1560 = vmax.f32 %v774, %v1524
  %v1561 = vmax.f32 %v775, %v1525
  %v1562 = vmax.f32 %v776, %v1526
  %v1563 = vmax.f32 %v777, %v1527
  %v1564 = vmax.f32 %v778, %v1528
  %v1565 = vmax.f32 %v779, %v1529
  %v1566 = vmax.f32 %v780, %v1530
  %v1567 = vmax.f32 %v781, %v1531
  %v1568 = vmax.f32 %v782, %v1532
  %v1569 = vmax.f32 %v783, %v1533
  %v1570 = vmax.f32 %v784, %v1534
  %v1571 = vmax.f32 %v785, %v1535
  %v1572 = vmax.f32 %v786, %v1536
  %v1573 = vmax.f32 %v787, %v1537
  %v1574 = vmax.f32 %v788, %v1538
  %v1575 = vmax.f32 %v789, %v1539
  %v1576 = vmax.f32 %v790, %v1540
  %v1577 = vld [vmem:[%s5] sm:$0x1]
  %v1579 = vlaneseq
  %v1580 = vshrl.u32 %v1579, 7
  %v1581 = vsub.s32 0, %v1580
  %v1582 = vrot.slane %v1577, %v1581
  %v1584 = vadd.f32 %v1541, %v1582
  %v1585 = vadd.f32 %v1542, %v1582
  %v1586 = vadd.f32 %v1543, %v1582
  %v1587 = vadd.f32 %v1544, %v1582
  %v1588 = vadd.f32 %v1545, %v1582
  %v1589 = vadd.f32 %v1546, %v1582
  %v1590 = vadd.f32 %v1547, %v1582
  %v1591 = vadd.f32 %v1548, %v1582
  %v1592 = vadd.f32 %v1549, %v1582
  %v1593 = vadd.f32 %v1550, %v1582
  %v1594 = vadd.f32 %v1551, %v1582
  %v1595 = vadd.f32 %v1552, %v1582
  %v1596 = vadd.f32 %v1553, %v1582
  %v1597 = vadd.f32 %v1554, %v1582
  %v1598 = vadd.f32 %v1555, %v1582
  %v1599 = vadd.f32 %v1556, %v1582
  %v1600 = vadd.f32 %v1557, %v1582
  %v1601 = vadd.f32 %v1558, %v1582
  %v1602 = vadd.f32 %v1559, %v1582
  %v1603 = vadd.f32 %v1560, %v1582
  %v1604 = vadd.f32 %v1561, %v1582
  %v1605 = vadd.f32 %v1562, %v1582
  %v1606 = vadd.f32 %v1563, %v1582
  %v1607 = vadd.f32 %v1564, %v1582
  %v1608 = vadd.f32 %v1565, %v1582
  %v1609 = vadd.f32 %v1566, %v1582
  %v1610 = vadd.f32 %v1567, %v1582
  %v1611 = vadd.f32 %v1568, %v1582
  %v1612 = vadd.f32 %v1569, %v1582
  %v1613 = vadd.f32 %v1570, %v1582
  %v1614 = vadd.f32 %v1571, %v1582
  %v1615 = vadd.f32 %v1572, %v1582
  %v1616 = vadd.f32 %v1573, %v1582
  %v1617 = vadd.f32 %v1574, %v1582
  %v1618 = vadd.f32 %v1575, %v1582
  %v1619 = vadd.f32 %v1576, %v1582
  %v1620 = vmax.f32 %v1584, 0.0
  %v1621 = vmax.f32 %v1585, 0.0
  %v1622 = vmax.f32 %v1586, 0.0
  %v1623 = vmax.f32 %v1587, 0.0
  %v1624 = vmax.f32 %v1588, 0.0
  %v1625 = vmax.f32 %v1589, 0.0
  %v1626 = vmax.f32 %v1590, 0.0
  %v1627 = vmax.f32 %v1591, 0.0
  %v1628 = vmax.f32 %v1592, 0.0
  %v1629 = vmax.f32 %v1593, 0.0
  %v1630 = vmax.f32 %v1594, 0.0
  %v1631 = vmax.f32 %v1595, 0.0
  %v1632 = vmax.f32 %v1596, 0.0
  %v1633 = vmax.f32 %v1597, 0.0
  %v1634 = vmax.f32 %v1598, 0.0
  %v1635 = vmax.f32 %v1599, 0.0
  %v1636 = vmax.f32 %v1600, 0.0
  %v1637 = vmax.f32 %v1601, 0.0
  %v1638 = vmax.f32 %v1602, 0.0
  %v1639 = vmax.f32 %v1603, 0.0
  %v1640 = vmax.f32 %v1604, 0.0
  %v1641 = vmax.f32 %v1605, 0.0
  %v1642 = vmax.f32 %v1606, 0.0
  %v1643 = vmax.f32 %v1607, 0.0
  %v1644 = vmax.f32 %v1608, 0.0
  %v1645 = vmax.f32 %v1609, 0.0
  %v1646 = vmax.f32 %v1610, 0.0
  %v1647 = vmax.f32 %v1611, 0.0
  %v1648 = vmax.f32 %v1612, 0.0
  %v1649 = vmax.f32 %v1613, 0.0
  %v1650 = vmax.f32 %v1614, 0.0
  %v1651 = vmax.f32 %v1615, 0.0
  %v1652 = vmax.f32 %v1616, 0.0
  %v1653 = vmax.f32 %v1617, 0.0
  %v1654 = vmax.f32 %v1618, 0.0
  %v1655 = vmax.f32 %v1619, 0.0
  %v1656 = vpack.c.bf16 %v1621, %v1620
  %v1657 = vpack.c.bf16 %v1623, %v1622
  %v1658 = vpack.c.bf16 %v1625, %v1624
  %v1659 = vpack.c.bf16 %v1627, %v1626
  %v1660 = vpack.c.bf16 %v1629, %v1628
  %v1661 = vpack.c.bf16 %v1631, %v1630
  %v1662 = vpack.c.bf16 %v1633, %v1632
  %v1663 = vpack.c.bf16 %v1635, %v1634
  %v1664 = vpack.c.bf16 %v1637, %v1636
  %v1665 = vpack.c.bf16 %v1639, %v1638
  %v1666 = vpack.c.bf16 %v1641, %v1640
  %v1667 = vpack.c.bf16 %v1643, %v1642
  %v1668 = vpack.c.bf16 %v1645, %v1644
  %v1669 = vpack.c.bf16 %v1647, %v1646
  %v1670 = vpack.c.bf16 %v1649, %v1648
  %v1671 = vpack.c.bf16 %v1651, %v1650
  %v1672 = vpack.c.bf16 %v1653, %v1652
  %v1673 = vpack.c.bf16 %v1655, %v1654
  %v1692 = vunpack.c.l.b16 %v1656
  %v1693 = vunpack.c.h.b16 %v1656
  %v1694 = vunpack.c.l.b16 %v1657
  %v1695 = vunpack.c.h.b16 %v1657
  %v1696 = vunpack.c.l.b16 %v1658
  %v1697 = vunpack.c.h.b16 %v1658
  %v1698 = vunpack.c.l.b16 %v1659
  %v1699 = vunpack.c.h.b16 %v1659
  %v1700 = vunpack.c.l.b16 %v1660
  %v1701 = vunpack.c.h.b16 %v1660
  %v1702 = vunpack.c.l.b16 %v1661
  %v1703 = vunpack.c.h.b16 %v1661
  %v1704 = vunpack.c.l.b16 %v1662
  %v1705 = vunpack.c.h.b16 %v1662
  %v1706 = vunpack.c.l.b16 %v1663
  %v1707 = vunpack.c.h.b16 %v1663
  %v1708 = vunpack.c.l.b16 %v1664
  %v1709 = vunpack.c.h.b16 %v1664
  %v1710 = vunpack.c.l.b16 %v1665
  %v1711 = vunpack.c.h.b16 %v1665
  %v1712 = vunpack.c.l.b16 %v1666
  %v1713 = vunpack.c.h.b16 %v1666
  %v1714 = vunpack.c.l.b16 %v1667
  %v1715 = vunpack.c.h.b16 %v1667
  %v1716 = vunpack.c.l.b16 %v1668
  %v1717 = vunpack.c.h.b16 %v1668
  %v1718 = vunpack.c.l.b16 %v1669
  %v1719 = vunpack.c.h.b16 %v1669
  %v1720 = vunpack.c.l.b16 %v1670
  %v1721 = vunpack.c.h.b16 %v1670
  %v1722 = vunpack.c.l.b16 %v1671
  %v1723 = vunpack.c.h.b16 %v1671
  %v1724 = vunpack.c.l.b16 %v1672
  %v1725 = vunpack.c.h.b16 %v1672
  %v1726 = vunpack.c.l.b16 %v1673
  %v1727 = vunpack.c.h.b16 %v1673
  %v1728 = vpack.c.b16 %v1692, %v1692
  %v1729 = vpack.c.b16 %v1693, %v1693
  %v1730 = vpack.c.b16 %v1694, %v1694
  %v1731 = vpack.c.b16 %v1695, %v1695
  %v1732 = vpack.c.b16 %v1696, %v1696
  %v1733 = vpack.c.b16 %v1697, %v1697
  %v1734 = vpack.c.b16 %v1698, %v1698
  %v1735 = vpack.c.b16 %v1699, %v1699
  %v1736 = vpack.c.b16 %v1700, %v1700
  %v1737 = vpack.c.b16 %v1701, %v1701
  %v1738 = vpack.c.b16 %v1702, %v1702
  %v1739 = vpack.c.b16 %v1703, %v1703
  %v1740 = vpack.c.b16 %v1704, %v1704
  %v1741 = vpack.c.b16 %v1705, %v1705
  %v1742 = vpack.c.b16 %v1706, %v1706
  %v1743 = vpack.c.b16 %v1707, %v1707
  %v1744 = vpack.c.b16 %v1708, %v1708
  %v1745 = vpack.c.b16 %v1709, %v1709
  %v1746 = vpack.c.b16 %v1710, %v1710
  %v1747 = vpack.c.b16 %v1711, %v1711
  %v1748 = vpack.c.b16 %v1712, %v1712
  %v1749 = vpack.c.b16 %v1713, %v1713
  %v1750 = vpack.c.b16 %v1714, %v1714
  %v1751 = vpack.c.b16 %v1715, %v1715
  %v1752 = vpack.c.b16 %v1716, %v1716
  %v1753 = vpack.c.b16 %v1717, %v1717
  %v1754 = vpack.c.b16 %v1718, %v1718
  %v1755 = vpack.c.b16 %v1719, %v1719
  %v1756 = vpack.c.b16 %v1720, %v1720
  %v1757 = vpack.c.b16 %v1721, %v1721
  %v1758 = vpack.c.b16 %v1722, %v1722
  %v1759 = vpack.c.b16 %v1723, %v1723
  %v1760 = vpack.c.b16 %v1724, %v1724
  %v1761 = vpack.c.b16 %v1725, %v1725
  %v1762 = vpack.c.b16 %v1726, %v1726
  %v1763 = vpack.c.b16 %v1727, %v1727
  %1800 = vst [vmem:[%s6] sm:$0xf] %v1728
  %1801 = vst [vmem:[%s6 + $0x4] sm:$0xf] %v1729
  %1802 = vst [vmem:[%s6 + $0x8] sm:$0xf] %v1730
  %1803 = vst [vmem:[%s6 + $0xc] sm:$0xf] %v1731
  %1804 = vst [vmem:[%s6 + $0x10] sm:$0xf] %v1732
  %1805 = vst [vmem:[%s6 + $0x14] sm:$0xf] %v1733
  %1806 = vst [vmem:[%s6 + $0x18] sm:$0xf] %v1734
  %1807 = vst [vmem:[%s6 + $0x1c] sm:$0xf] %v1735
  %1808 = vst [vmem:[%s6 + $0x20] sm:$0xf] %v1736
  %1809 = vst [vmem:[%s6 + $0x24] sm:$0xf] %v1737
  %1810 = vst [vmem:[%s6 + $0x28] sm:$0xf] %v1738
  %1811 = vst [vmem:[%s6 + $0x2c] sm:$0xf] %v1739
  %1812 = vst [vmem:[%s6 + $0x30] sm:$0xf] %v1740
  %1813 = vst [vmem:[%s6 + $0x34] sm:$0xf] %v1741
  %1814 = vst [vmem:[%s6 + $0x38] sm:$0xf] %v1742
  %1815 = vst [vmem:[%s6 + $0x3c] sm:$0xf] %v1743
  %1816 = vst [vmem:[%s6 + $0x40] sm:$0xf] %v1744
  %1817 = vst [vmem:[%s6 + $0x44] sm:$0xf] %v1745
  %1818 = vst [vmem:[%s6 + $0x48] sm:$0xf] %v1746
  %1819 = vst [vmem:[%s6 + $0x4c] sm:$0xf] %v1747
  %1820 = vst [vmem:[%s6 + $0x50] sm:$0xf] %v1748
  %1821 = vst [vmem:[%s6 + $0x54] sm:$0xf] %v1749
  %1822 = vst [vmem:[%s6 + $0x58] sm:$0xf] %v1750
  %1823 = vst [vmem:[%s6 + $0x5c] sm:$0xf] %v1751
  %1824 = vst [vmem:[%s6 + $0x60] sm:$0xf] %v1752
  %1825 = vst [vmem:[%s6 + $0x64] sm:$0xf] %v1753
  %1826 = vst [vmem:[%s6 + $0x68] sm:$0xf] %v1754
  %1827 = vst [vmem:[%s6 + $0x6c] sm:$0xf] %v1755
  %1828 = vst [vmem:[%s6 + $0x70] sm:$0xf] %v1756
  %1829 = vst [vmem:[%s6 + $0x74] sm:$0xf] %v1757
  %1830 = vst [vmem:[%s6 + $0x78] sm:$0xf] %v1758
  %1831 = vst [vmem:[%s6 + $0x7c] sm:$0xf] %v1759
  %1832 = vst [vmem:[%s6 + $0x80] sm:$0xf] %v1760
  %1833 = vst [vmem:[%s6 + $0x84] sm:$0xf] %v1761
  %1834 = vst [vmem:[%s6 + $0x88] sm:$0xf] %v1762
  %1835 = vst [vmem:[%s6 + $0x8c] sm:$0xf] %v1763
  // Predicated region
  $region26: #{mnist_forward.2} parent=0 // pred_check
    _
  $region27: #{mnist_forward.2} parent=0 // pred_check_branch
    %1837 = sbr.rel (0) target = $region29
  $region28: #{mnist_forward.2} parent=0 // pred_region
    _
  $region29: #{mnist_forward.2} parent=0 // pred_fallthru
    _
  // Predicated region
  $region30: #{mnist_forward.2} parent=0 // pred_check
    _
  $region31: #{mnist_forward.2} parent=0 // pred_check_branch
    %1839 = sbr.rel (0) target = $region33
  $region32: #{mnist_forward.2} parent=0 // pred_region
    _
  $region33: #{mnist_forward.2} parent=0 // pred_fallthru
    _

// kernel: mnist_forward.3
$region0: #{mnist_forward.3}
  #allocation0 [shape = 'u32[]', space=smem, size = 0x4, offset = 0x4, fixed_abs, tag = 'smem constant byte address 0x4 - core index']
  #allocation1 [shape = 'u32[144,128]{1,0:T(1,128)}', space=vmem, size = 0x12000, scoped, tag = 'internal scratch']
  %s0 = inlined_call_operand.vmem [shape: bf16[16,2,256], index: 0, kind: input, shape index: {}]
  %s1 = inlined_call_operand.vmem [shape: bf16[16,2,256], index: 1, kind: input, shape index: {}]
  %s2 = inlined_call_operand.vmem [shape: bf16[16,2,256], index: 2, kind: input, shape index: {}]
  %s3 = inlined_call_operand.vmem [shape: bf16[16,2,256], index: 3, kind: input, shape index: {}]
  %s4 = inlined_call_operand.vmem [shape: bf16[256,128], index: 4, kind: input, shape index: {}]
  %s5 = inlined_call_operand.vmem [shape: f32[1,128], index: 5, kind: input, shape index: {}]
  %s6 = inlined_call_operand.vmem [shape: bf16[16,128,128], index: 6, kind: input, shape index: {}]
  %s7 = inlined_call_operand.vmem [shape: f32[1,128], index: 7, kind: input, shape index: {}]
  %s8 = inlined_call_operand.vmem [shape: bf16[128,128], index: 8, kind: input, shape index: {}]
  %s9 = inlined_call_operand.vmem [shape: f32[1,128], index: 9, kind: input, shape index: {}]
  %s10 = inlined_call_operand.hbm [shape: f32[2,128], index: 10, kind: output, shape index: {}]
  %s11 = sld [smem:[#allocation0]]
  $region50: #{mnist_forward.3} parent=0
    _
  %s13 = ssub.s32 1, %s11
  %s14 = scalar_select 0, %s13, %s11
  $region1: #{mnist_forward.3} parent=0
    #allocation2 [shape = 'u8[1024]{0}', space=vmem, size = 0x400, scoped, tag = 'output window, operand 0, single buffered']
    #allocation3 [shape = 's32[1]{0}', space=sflag, size = 0x4, scoped, tag = 'scoped memory for mnist_forward.3']
    %15 = vsyncpa [#allocation3], 0
    // Predicated region
    $region2: #{mnist_forward.3} parent=1 // pred_check
      _
    $region3: #{mnist_forward.3} parent=1 // pred_check_branch
      %17 = sbr.rel (0) target = $region5
    $region4: #{mnist_forward.3} parent=1 // pred_region
      _
    $region5: #{mnist_forward.3} parent=1 // pred_fallthru
      _
    // Predicated region
    $region6: #{mnist_forward.3} parent=1 // pred_check
      _
    $region7: #{mnist_forward.3} parent=1 // pred_check_branch
      %19 = sbr.rel (0) target = $region9
    $region8: #{mnist_forward.3} parent=1 // pred_region
      _
    $region9: #{mnist_forward.3} parent=1 // pred_fallthru
      _
    // Predicated region
    $region10: #{mnist_forward.3} parent=1 // pred_check
      _
    $region11: #{mnist_forward.3} parent=1 // pred_check_branch
      %21 = sbr.rel (0) target = $region13
    $region12: #{mnist_forward.3} parent=1 // pred_region
      _
    $region13: #{mnist_forward.3} parent=1 // pred_fallthru
      _
    // Predicated region
    $region14: #{mnist_forward.3} parent=1 // pred_check
      _
    $region15: #{mnist_forward.3} parent=1 // pred_check_branch
      %23 = sbr.rel (0) target = $region17
    $region16: #{mnist_forward.3} parent=1 // pred_region
      _
    $region17: #{mnist_forward.3} parent=1 // pred_fallthru
      _
    // Predicated region
    $region18: #{mnist_forward.3} parent=1 // pred_check
      _
    $region19: #{mnist_forward.3} parent=1 // pred_check_branch
      %25 = sbr.rel (0) target = $region21
    $region20: #{mnist_forward.3} parent=1 // pred_region
      _
    $region21: #{mnist_forward.3} parent=1 // pred_fallthru
      _
    // Predicated region
    $region22: #{mnist_forward.3} parent=1 // pred_check
      _
    $region23: #{mnist_forward.3} parent=1 // pred_check_branch
      %27 = sbr.rel (0) target = $region25
    $region24: #{mnist_forward.3} parent=1 // pred_region
      _
    $region25: #{mnist_forward.3} parent=1 // pred_fallthru
      _
    // Predicated region
    $region26: #{mnist_forward.3} parent=1 // pred_check
      _
    $region27: #{mnist_forward.3} parent=1 // pred_check_branch
      %29 = sbr.rel (0) target = $region29
    $region28: #{mnist_forward.3} parent=1 // pred_region
      _
    $region29: #{mnist_forward.3} parent=1 // pred_fallthru
      _
    // Predicated region
    $region30: #{mnist_forward.3} parent=1 // pred_check
      _
    $region31: #{mnist_forward.3} parent=1 // pred_check_branch
      %31 = sbr.rel (0) target = $region33
    $region32: #{mnist_forward.3} parent=1 // pred_region
      _
    $region33: #{mnist_forward.3} parent=1 // pred_fallthru
      _
    // Predicated region
    $region34: #{mnist_forward.3} parent=1 // pred_check
      _
    $region35: #{mnist_forward.3} parent=1 // pred_check_branch
      %33 = sbr.rel (0) target = $region37
    $region36: #{mnist_forward.3} parent=1 // pred_region
      _
    $region37: #{mnist_forward.3} parent=1 // pred_fallthru
      _
    // Predicated region
    $region38: #{mnist_forward.3} parent=1 // pred_check
      _
    $region39: #{mnist_forward.3} parent=1 // pred_check_branch
      %35 = sbr.rel (0) target = $region41
    $region40: #{mnist_forward.3} parent=1 // pred_region
      _
    $region41: #{mnist_forward.3} parent=1 // pred_fallthru
      _
    %v37 = vld [vmem:[%s4] sm:$0xf]
    %v38 = vld [vmem:[%s4 + $0x4] sm:$0xf]
    %v39 = vld [vmem:[%s4 + $0x8] sm:$0xf]
    %v40 = vld [vmem:[%s4 + $0xc] sm:$0xf]
    %v41 = vld [vmem:[%s4 + $0x10] sm:$0xf]
    %v42 = vld [vmem:[%s4 + $0x14] sm:$0xf]
    %v43 = vld [vmem:[%s4 + $0x18] sm:$0xf]
    %v44 = vld [vmem:[%s4 + $0x1c] sm:$0xf]
    %v45 = vld [vmem:[%s4 + $0x20] sm:$0xf]
    %v46 = vld [vmem:[%s4 + $0x24] sm:$0xf]
    %v47 = vld [vmem:[%s4 + $0x28] sm:$0xf]
    %v48 = vld [vmem:[%s4 + $0x2c] sm:$0xf]
    %v49 = vld [vmem:[%s4 + $0x30] sm:$0xf]
    %v50 = vld [vmem:[%s4 + $0x34] sm:$0xf]
    %v51 = vld [vmem:[%s4 + $0x38] sm:$0xf]
    %v52 = vld [vmem:[%s4 + $0x3c] sm:$0xf]
    %v53 = vld [vmem:[%s4 + $0x40] sm:$0xf]
    %v54 = vld [vmem:[%s4 + $0x44] sm:$0xf]
    %v55 = vld [vmem:[%s4 + $0x48] sm:$0xf]
    %v56 = vld [vmem:[%s4 + $0x4c] sm:$0xf]
    %v57 = vld [vmem:[%s4 + $0x50] sm:$0xf]
    %v58 = vld [vmem:[%s4 + $0x54] sm:$0xf]
    %v59 = vld [vmem:[%s4 + $0x58] sm:$0xf]
    %v60 = vld [vmem:[%s4 + $0x5c] sm:$0xf]
    %v61 = vld [vmem:[%s4 + $0x60] sm:$0xf]
    %v62 = vld [vmem:[%s4 + $0x64] sm:$0xf]
    %v63 = vld [vmem:[%s4 + $0x68] sm:$0xf]
    %v64 = vld [vmem:[%s4 + $0x6c] sm:$0xf]
    %v65 = vld [vmem:[%s4 + $0x70] sm:$0xf]
    %v66 = vld [vmem:[%s4 + $0x74] sm:$0xf]
    %v67 = vld [vmem:[%s4 + $0x78] sm:$0xf]
    %v68 = vld [vmem:[%s4 + $0x7c] sm:$0xf]
    %v69 = vld [vmem:[%s5] sm:$0x1]
    %v70 = vld [vmem:[%s0] sm:$0x3]
    %v73 = vunpack.c.l.s4 1966171168
    %v74 = vunpack.c.0.s8 %v73
    %v75 = vlaneseq
    %v76 = vshrl.u32 %v75, 7
    %v77 = vsub.s32 %v74, %v76
    %v78 = vrot.slane %v70, %v77
    %v79 = vcombine.high %v78, %v78
    %v81 = vunpack.c.l.s4 1966171168
    %v82 = vunpack.c.0.s8 %v81
    %v83 = vlaneseq
    %v84 = vshrl.u32 %v83, 7
    %v85 = vsub.s32 %v82, %v84
    %v86 = vrot.slane %v78, %v85
    %v88 = vunpack.c.l.s4 1966171168
    %v89 = vunpack.c.0.s8 %v88
    %v90 = vlaneseq
    %v91 = vshrl.u32 %v90, 7
    %v92 = vsub.s32 %v89, %v91
    %v93 = vrot.slane %v79, %v92
    %v128 = vunpack.c.l.b16 %v37
    %v129 = vunpack.c.l.b16 %v38
    %v130 = vunpack.c.l.b16 %v39
    %v131 = vunpack.c.l.b16 %v40
    %v132 = vunpack.c.l.b16 %v41
    %v133 = vunpack.c.l.b16 %v42
    %v134 = vunpack.c.l.b16 %v43
    %v135 = vunpack.c.l.b16 %v44
    %v136 = vunpack.c.l.b16 %v45
    %v137 = vunpack.c.l.b16 %v46
    %v138 = vunpack.c.l.b16 %v47
    %v139 = vunpack.c.l.b16 %v48
    %v140 = vunpack.c.l.b16 %v49
    %v141 = vunpack.c.l.b16 %v50
    %v142 = vunpack.c.l.b16 %v51
    %v143 = vunpack.c.l.b16 %v52
    %v144 = vunpack.c.l.b16 %v53
    %v145 = vunpack.c.l.b16 %v54
    %v146 = vunpack.c.l.b16 %v55
    %v147 = vunpack.c.l.b16 %v56
    %v148 = vunpack.c.l.b16 %v57
    %v149 = vunpack.c.l.b16 %v58
    %v150 = vunpack.c.l.b16 %v59
    %v151 = vunpack.c.l.b16 %v60
    %v152 = vunpack.c.l.b16 %v61
    %v153 = vunpack.c.l.b16 %v62
    %v154 = vunpack.c.l.b16 %v63
    %v155 = vunpack.c.l.b16 %v64
    %v156 = vunpack.c.l.b16 %v65
    %v157 = vunpack.c.l.b16 %v66
    %v158 = vunpack.c.l.b16 %v67
    %v159 = vunpack.c.l.b16 %v68
    %v160 = vpack.c.b16 %v129, %v128
    %v161 = vpack.c.b16 %v131, %v130
    %v162 = vpack.c.b16 %v133, %v132
    %v163 = vpack.c.b16 %v135, %v134
    %v164 = vpack.c.b16 %v137, %v136
    %v165 = vpack.c.b16 %v139, %v138
    %v166 = vpack.c.b16 %v141, %v140
    %v167 = vpack.c.b16 %v143, %v142
    %v168 = vpack.c.b16 %v145, %v144
    %v169 = vpack.c.b16 %v147, %v146
    %v170 = vpack.c.b16 %v149, %v148
    %v171 = vpack.c.b16 %v151, %v150
    %v172 = vpack.c.b16 %v153, %v152
    %v173 = vpack.c.b16 %v155, %v154
    %v174 = vpack.c.b16 %v157, %v156
    %v175 = vpack.c.b16 %v159, %v158
    %192 = vmatprep.subr.bf16.mxu0 0
    %193 = vmatpush1.bf16.msra.mxu0 %v160
    %194 = vmatprep.subr.bf16.mxu0 0
    %195 = vmatpush1.bf16.msra.mxu0 %v161
    %196 = vmatprep.subr.bf16.mxu0 0
    %197 = vmatpush1.bf16.msra.mxu0 %v162
    %198 = vmatprep.subr.bf16.mxu0 0
    %199 = vmatpush1.bf16.msra.mxu0 %v163
    %200 = vmatprep.subr.bf16.mxu0 0
    %201 = vmatpush1.bf16.msra.mxu0 %v164
    %202 = vmatprep.subr.bf16.mxu0 0
    %203 = vmatpush1.bf16.msra.mxu0 %v165
    %204 = vmatprep.subr.bf16.mxu0 0
    %205 = vmatpush1.bf16.msra.mxu0 %v166
    %206 = vmatprep.subr.bf16.mxu0 0
    %207 = vmatpush1.bf16.msra.mxu0 %v167
    %208 = vmatprep.subr.bf16.mxu0 0
    %209 = vmatpush1.bf16.msra.mxu0 %v168
    %210 = vmatprep.subr.bf16.mxu0 0
    %211 = vmatpush1.bf16.msra.mxu0 %v169
    %212 = vmatprep.subr.bf16.mxu0 0
    %213 = vmatpush1.bf16.msra.mxu0 %v170
    %214 = vmatprep.subr.bf16.mxu0 0
    %215 = vmatpush1.bf16.msra.mxu0 %v171
    %216 = vmatprep.subr.bf16.mxu0 0
    %217 = vmatpush1.bf16.msra.mxu0 %v172
    %218 = vmatprep.subr.bf16.mxu0 0
    %219 = vmatpush1.bf16.msra.mxu0 %v173
    %220 = vmatprep.subr.bf16.mxu0 0
    %221 = vmatpush1.bf16.msra.mxu0 %v174
    %222 = vmatprep.subr.bf16.mxu0 0
    %223 = vmatpush1.bf16.msra.mxu0 %v175
    %224 = vmatprep.mubr.bf16.mxu0 %v93
    %225 = vmatmul.mubr.bf16.gmra.mrb[0].mxu0 %v86
    %v226 = vpop.f32.mrb[0].mxu0
    %v227 = vadd.f32 0.0, %v226
    %v228 = vpop.f32.mrb[0].mxu0
    %v229 = vpop.f32.mrb[0].mxu0
    %v230 = vpop.f32.mrb[0].mxu0
    %231 = vdwg.mxu0
    %v232 = vld [vmem:[%s1] sm:$0x3]
    %v235 = vunpack.c.l.s4 1966171168
    %v236 = vunpack.c.0.s8 %v235
    %v237 = vlaneseq
    %v238 = vshrl.u32 %v237, 7
    %v239 = vsub.s32 %v236, %v238
    %v240 = vrot.slane %v232, %v239
    %v241 = vcombine.high %v240, %v240
    %v243 = vunpack.c.l.s4 1966171168
    %v244 = vunpack.c.0.s8 %v243
    %v245 = vlaneseq
    %v246 = vshrl.u32 %v245, 7
    %v247 = vsub.s32 %v244, %v246
    %v248 = vrot.slane %v240, %v247
    %v250 = vunpack.c.l.s4 1966171168
    %v251 = vunpack.c.0.s8 %v250
    %v252 = vlaneseq
    %v253 = vshrl.u32 %v252, 7
    %v254 = vsub.s32 %v251, %v253
    %v255 = vrot.slane %v241, %v254
    %258 = vmatprep.subr.bf16.mxu0 0
    %259 = vmatpush1.bf16.msra.mxu0 %v160
    %260 = vmatprep.subr.bf16.mxu0 0
    %261 = vmatpush1.bf16.msra.mxu0 %v161
    %262 = vmatprep.subr.bf16.mxu0 0
    %263 = vmatpush1.bf16.msra.mxu0 %v162
    %264 = vmatprep.subr.bf16.mxu0 0
    %265 = vmatpush1.bf16.msra.mxu0 %v163
    %266 = vmatprep.subr.bf16.mxu0 0
    %267 = vmatpush1.bf16.msra.mxu0 %v164
    %268 = vmatprep.subr.bf16.mxu0 0
    %269 = vmatpush1.bf16.msra.mxu0 %v165
    %270 = vmatprep.subr.bf16.mxu0 0
    %271 = vmatpush1.bf16.msra.mxu0 %v166
    %272 = vmatprep.subr.bf16.mxu0 0
    %273 = vmatpush1.bf16.msra.mxu0 %v167
    %274 = vmatprep.subr.bf16.mxu0 0
    %275 = vmatpush1.bf16.msra.mxu0 %v168
    %276 = vmatprep.subr.bf16.mxu0 0
    %277 = vmatpush1.bf16.msra.mxu0 %v169
    %278 = vmatprep.subr.bf16.mxu0 0
    %279 = vmatpush1.bf16.msra.mxu0 %v170
    %280 = vmatprep.subr.bf16.mxu0 0
    %281 = vmatpush1.bf16.msra.mxu0 %v171
    %282 = vmatprep.subr.bf16.mxu0 0
    %283 = vmatpush1.bf16.msra.mxu0 %v172
    %284 = vmatprep.subr.bf16.mxu0 0
    %285 = vmatpush1.bf16.msra.mxu0 %v173
    %286 = vmatprep.subr.bf16.mxu0 0
    %287 = vmatpush1.bf16.msra.mxu0 %v174
    %288 = vmatprep.subr.bf16.mxu0 0
    %289 = vmatpush1.bf16.msra.mxu0 %v175
    %290 = vmatprep.mubr.bf16.mxu0 %v255
    %291 = vmatmul.mubr.bf16.gmra.mrb[0].mxu0 %v248
    %v292 = vpop.f32.mrb[0].mxu0
    %v293 = vadd.f32 0.0, %v292
    %v294 = vpop.f32.mrb[0].mxu0
    %v295 = vpop.f32.mrb[0].mxu0
    %v296 = vpop.f32.mrb[0].mxu0
    %297 = vdwg.mxu0
    %v298 = vmax.f32 %v227, %v293
    %v299 = vld [vmem:[%s2] sm:$0x3]
    %v302 = vunpack.c.l.s4 1966171168
    %v303 = vunpack.c.0.s8 %v302
    %v304 = vlaneseq
    %v305 = vshrl.u32 %v304, 7
    %v306 = vsub.s32 %v303, %v305
    %v307 = vrot.slane %v299, %v306
    %v308 = vcombine.high %v307, %v307
    %v310 = vunpack.c.l.s4 1966171168
    %v311 = vunpack.c.0.s8 %v310
    %v312 = vlaneseq
    %v313 = vshrl.u32 %v312, 7
    %v314 = vsub.s32 %v311, %v313
    %v315 = vrot.slane %v307, %v314
    %v317 = vunpack.c.l.s4 1966171168
    %v318 = vunpack.c.0.s8 %v317
    %v319 = vlaneseq
    %v320 = vshrl.u32 %v319, 7
    %v321 = vsub.s32 %v318, %v320
    %v322 = vrot.slane %v308, %v321
    %325 = vmatprep.subr.bf16.mxu0 0
    %326 = vmatpush1.bf16.msra.mxu0 %v160
    %327 = vmatprep.subr.bf16.mxu0 0
    %328 = vmatpush1.bf16.msra.mxu0 %v161
    %329 = vmatprep.subr.bf16.mxu0 0
    %330 = vmatpush1.bf16.msra.mxu0 %v162
    %331 = vmatprep.subr.bf16.mxu0 0
    %332 = vmatpush1.bf16.msra.mxu0 %v163
    %333 = vmatprep.subr.bf16.mxu0 0
    %334 = vmatpush1.bf16.msra.mxu0 %v164
    %335 = vmatprep.subr.bf16.mxu0 0
    %336 = vmatpush1.bf16.msra.mxu0 %v165
    %337 = vmatprep.subr.bf16.mxu0 0
    %338 = vmatpush1.bf16.msra.mxu0 %v166
    %339 = vmatprep.subr.bf16.mxu0 0
    %340 = vmatpush1.bf16.msra.mxu0 %v167
    %341 = vmatprep.subr.bf16.mxu0 0
    %342 = vmatpush1.bf16.msra.mxu0 %v168
    %343 = vmatprep.subr.bf16.mxu0 0
    %344 = vmatpush1.bf16.msra.mxu0 %v169
    %345 = vmatprep.subr.bf16.mxu0 0
    %346 = vmatpush1.bf16.msra.mxu0 %v170
    %347 = vmatprep.subr.bf16.mxu0 0
    %348 = vmatpush1.bf16.msra.mxu0 %v171
    %349 = vmatprep.subr.bf16.mxu0 0
    %350 = vmatpush1.bf16.msra.mxu0 %v172
    %351 = vmatprep.subr.bf16.mxu0 0
    %352 = vmatpush1.bf16.msra.mxu0 %v173
    %353 = vmatprep.subr.bf16.mxu0 0
    %354 = vmatpush1.bf16.msra.mxu0 %v174
    %355 = vmatprep.subr.bf16.mxu0 0
    %356 = vmatpush1.bf16.msra.mxu0 %v175
    %357 = vmatprep.mubr.bf16.mxu0 %v322
    %358 = vmatmul.mubr.bf16.gmra.mrb[0].mxu0 %v315
    %v359 = vpop.f32.mrb[0].mxu0
    %v360 = vadd.f32 0.0, %v359
    %v361 = vpop.f32.mrb[0].mxu0
    %v362 = vpop.f32.mrb[0].mxu0
    %v363 = vpop.f32.mrb[0].mxu0
    %364 = vdwg.mxu0
    %v365 = vld [vmem:[%s3] sm:$0x3]
    %v368 = vunpack.c.l.s4 1966171168
    %v369 = vunpack.c.0.s8 %v368
    %v370 = vlaneseq
    %v371 = vshrl.u32 %v370, 7
    %v372 = vsub.s32 %v369, %v371
    %v373 = vrot.slane %v365, %v372
    %v374 = vcombine.high %v373, %v373
    %v376 = vunpack.c.l.s4 1966171168
    %v377 = vunpack.c.0.s8 %v376
    %v378 = vlaneseq
    %v379 = vshrl.u32 %v378, 7
    %v380 = vsub.s32 %v377, %v379
    %v381 = vrot.slane %v373, %v380
    %v383 = vunpack.c.l.s4 1966171168
    %v384 = vunpack.c.0.s8 %v383
    %v385 = vlaneseq
    %v386 = vshrl.u32 %v385, 7
    %v387 = vsub.s32 %v384, %v386
    %v388 = vrot.slane %v374, %v387
    %391 = vmatprep.subr.bf16.mxu0 0
    %392 = vmatpush1.bf16.msra.mxu0 %v160
    %393 = vmatprep.subr.bf16.mxu0 0
    %394 = vmatpush1.bf16.msra.mxu0 %v161
    %395 = vmatprep.subr.bf16.mxu0 0
    %396 = vmatpush1.bf16.msra.mxu0 %v162
    %397 = vmatprep.subr.bf16.mxu0 0
    %398 = vmatpush1.bf16.msra.mxu0 %v163
    %399 = vmatprep.subr.bf16.mxu0 0
    %400 = vmatpush1.bf16.msra.mxu0 %v164
    %401 = vmatprep.subr.bf16.mxu0 0
    %402 = vmatpush1.bf16.msra.mxu0 %v165
    %403 = vmatprep.subr.bf16.mxu0 0
    %404 = vmatpush1.bf16.msra.mxu0 %v166
    %405 = vmatprep.subr.bf16.mxu0 0
    %406 = vmatpush1.bf16.msra.mxu0 %v167
    %407 = vmatprep.subr.bf16.mxu0 0
    %408 = vmatpush1.bf16.msra.mxu0 %v168
    %409 = vmatprep.subr.bf16.mxu0 0
    %410 = vmatpush1.bf16.msra.mxu0 %v169
    %411 = vmatprep.subr.bf16.mxu0 0
    %412 = vmatpush1.bf16.msra.mxu0 %v170
    %413 = vmatprep.subr.bf16.mxu0 0
    %414 = vmatpush1.bf16.msra.mxu0 %v171
    %415 = vmatprep.subr.bf16.mxu0 0
    %416 = vmatpush1.bf16.msra.mxu0 %v172
    %417 = vmatprep.subr.bf16.mxu0 0
    %418 = vmatpush1.bf16.msra.mxu0 %v173
    %419 = vmatprep.subr.bf16.mxu0 0
    %420 = vmatpush1.bf16.msra.mxu0 %v174
    %421 = vmatprep.subr.bf16.mxu0 0
    %422 = vmatpush1.bf16.msra.mxu0 %v175
    %423 = vmatprep.mubr.bf16.mxu0 %v388
    %424 = vmatmul.mubr.bf16.gmra.mrb[0].mxu0 %v381
    %v425 = vpop.f32.mrb[0].mxu0
    %v426 = vadd.f32 0.0, %v425
    %v427 = vpop.f32.mrb[0].mxu0
    %v428 = vpop.f32.mrb[0].mxu0
    %v429 = vpop.f32.mrb[0].mxu0
    %430 = vdwg.mxu0
    %v431 = vmax.f32 %v360, %v426
    %v432 = vmax.f32 %v298, %v431
    %v434 = vlaneseq
    %v435 = vshrl.u32 %v434, 7
    %v436 = vsub.s32 0, %v435
    %v437 = vrot.slane %v69, %v436
    %v439 = vadd.f32 %v432, %v437
    %v440 = vmax.f32 %v439, 0.0
    %v441 = vpack.c.bf16 %v440, %v440
    %v442 = vld [vmem:[%s6] sm:$0xf]
    %v443 = vld [vmem:[%s6 + $0x4] sm:$0xf]
    %v444 = vld [vmem:[%s6 + $0x8] sm:$0xf]
    %v445 = vld [vmem:[%s6 + $0xc] sm:$0xf]
    %v446 = vld [vmem:[%s6 + $0x10] sm:$0xf]
    %v447 = vld [vmem:[%s6 + $0x14] sm:$0xf]
    %v448 = vld [vmem:[%s6 + $0x18] sm:$0xf]
    %v449 = vld [vmem:[%s6 + $0x1c] sm:$0xf]
    %v450 = vld [vmem:[%s6 + $0x20] sm:$0xf]
    %v451 = vld [vmem:[%s6 + $0x24] sm:$0xf]
    %v452 = vld [vmem:[%s6 + $0x28] sm:$0xf]
    %v453 = vld [vmem:[%s6 + $0x2c] sm:$0xf]
    %v454 = vld [vmem:[%s6 + $0x30] sm:$0xf]
    %v455 = vld [vmem:[%s6 + $0x34] sm:$0xf]
    %v456 = vld [vmem:[%s6 + $0x38] sm:$0xf]
    %v457 = vld [vmem:[%s6 + $0x3c] sm:$0xf]
    %s458 = scalar_lea.vmem %s0, 2
    %v459 = vld [vmem:[%s458] sm:$0x3]
    %v462 = vunpack.c.l.s4 1966171168
    %v463 = vunpack.c.0.s8 %v462
    %v464 = vlaneseq
    %v465 = vshrl.u32 %v464, 7
    %v466 = vsub.s32 %v463, %v465
    %v467 = vrot.slane %v459, %v466
    %v468 = vcombine.high %v467, %v467
    %v470 = vunpack.c.l.s4 1966171168
    %v471 = vunpack.c.0.s8 %v470
    %v472 = vlaneseq
    %v473 = vshrl.u32 %v472, 7
    %v474 = vsub.s32 %v471, %v473
    %v475 = vrot.slane %v467, %v474
    %v477 = vunpack.c.l.s4 1966171168
    %v478 = vunpack.c.0.s8 %v477
    %v479 = vlaneseq
    %v480 = vshrl.u32 %v479, 7
    %v481 = vsub.s32 %v478, %v480
    %v482 = vrot.slane %v468, %v481
    %485 = vmatprep.subr.bf16.mxu0 0
    %486 = vmatpush1.bf16.msra.mxu0 %v160
    %487 = vmatprep.subr.bf16.mxu0 0
    %488 = vmatpush1.bf16.msra.mxu0 %v161
    %489 = vmatprep.subr.bf16.mxu0 0
    %490 = vmatpush1.bf16.msra.mxu0 %v162
    %491 = vmatprep.subr.bf16.mxu0 0
    %492 = vmatpush1.bf16.msra.mxu0 %v163
    %493 = vmatprep.subr.bf16.mxu0 0
    %494 = vmatpush1.bf16.msra.mxu0 %v164
    %495 = vmatprep.subr.bf16.mxu0 0
    %496 = vmatpush1.bf16.msra.mxu0 %v165
    %497 = vmatprep.subr.bf16.mxu0 0
    %498 = vmatpush1.bf16.msra.mxu0 %v166
    %499 = vmatprep.subr.bf16.mxu0 0
    %500 = vmatpush1.bf16.msra.mxu0 %v167
    %501 = vmatprep.subr.bf16.mxu0 0
    %502 = vmatpush1.bf16.msra.mxu0 %v168
    %503 = vmatprep.subr.bf16.mxu0 0
    %504 = vmatpush1.bf16.msra.mxu0 %v169
    %505 = vmatprep.subr.bf16.mxu0 0
    %506 = vmatpush1.bf16.msra.mxu0 %v170
    %507 = vmatprep.subr.bf16.mxu0 0
    %508 = vmatpush1.bf16.msra.mxu0 %v171
    %509 = vmatprep.subr.bf16.mxu0 0
    %510 = vmatpush1.bf16.msra.mxu0 %v172
    %511 = vmatprep.subr.bf16.mxu0 0
    %512 = vmatpush1.bf16.msra.mxu0 %v173
    %513 = vmatprep.subr.bf16.mxu0 0
    %514 = vmatpush1.bf16.msra.mxu0 %v174
    %515 = vmatprep.subr.bf16.mxu0 0
    %516 = vmatpush1.bf16.msra.mxu0 %v175
    %517 = vmatprep.mubr.bf16.mxu0 %v482
    %518 = vmatmul.mubr.bf16.gmra.mrb[0].mxu0 %v475
    %v519 = vpop.f32.mrb[0].mxu0
    %v520 = vadd.f32 0.0, %v519
    %v521 = vpop.f32.mrb[0].mxu0
    %v522 = vpop.f32.mrb[0].mxu0
    %v523 = vpop.f32.mrb[0].mxu0
    %524 = vdwg.mxu0
    %s525 = scalar_lea.vmem %s1, 2
    %v526 = vld [vmem:[%s525] sm:$0x3]
    %v529 = vunpack.c.l.s4 1966171168
    %v530 = vunpack.c.0.s8 %v529
    %v531 = vlaneseq
    %v532 = vshrl.u32 %v531, 7
    %v533 = vsub.s32 %v530, %v532
    %v534 = vrot.slane %v526, %v533
    %v535 = vcombine.high %v534, %v534
    %v537 = vunpack.c.l.s4 1966171168
    %v538 = vunpack.c.0.s8 %v537
    %v539 = vlaneseq
    %v540 = vshrl.u32 %v539, 7
    %v541 = vsub.s32 %v538, %v540
    %v542 = vrot.slane %v534, %v541
    %v544 = vunpack.c.l.s4 1966171168
    %v545 = vunpack.c.0.s8 %v544
    %v546 = vlaneseq
    %v547 = vshrl.u32 %v546, 7
    %v548 = vsub.s32 %v545, %v547
    %v549 = vrot.slane %v535, %v548
    %552 = vmatprep.subr.bf16.mxu0 0
    %553 = vmatpush1.bf16.msra.mxu0 %v160
    %554 = vmatprep.subr.bf16.mxu0 0
    %555 = vmatpush1.bf16.msra.mxu0 %v161
    %556 = vmatprep.subr.bf16.mxu0 0
    %557 = vmatpush1.bf16.msra.mxu0 %v162
    %558 = vmatprep.subr.bf16.mxu0 0
    %559 = vmatpush1.bf16.msra.mxu0 %v163
    %560 = vmatprep.subr.bf16.mxu0 0
    %561 = vmatpush1.bf16.msra.mxu0 %v164
    %562 = vmatprep.subr.bf16.mxu0 0
    %563 = vmatpush1.bf16.msra.mxu0 %v165
    %564 = vmatprep.subr.bf16.mxu0 0
    %565 = vmatpush1.bf16.msra.mxu0 %v166
    %566 = vmatprep.subr.bf16.mxu0 0
    %567 = vmatpush1.bf16.msra.mxu0 %v167
    %568 = vmatprep.subr.bf16.mxu0 0
    %569 = vmatpush1.bf16.msra.mxu0 %v168
    %570 = vmatprep.subr.bf16.mxu0 0
    %571 = vmatpush1.bf16.msra.mxu0 %v169
    %572 = vmatprep.subr.bf16.mxu0 0
    %573 = vmatpush1.bf16.msra.mxu0 %v170
    %574 = vmatprep.subr.bf16.mxu0 0
    %575 = vmatpush1.bf16.msra.mxu0 %v171
    %576 = vmatprep.subr.bf16.mxu0 0
    %577 = vmatpush1.bf16.msra.mxu0 %v172
    %578 = vmatprep.subr.bf16.mxu0 0
    %579 = vmatpush1.bf16.msra.mxu0 %v173
    %580 = vmatprep.subr.bf16.mxu0 0
    %581 = vmatpush1.bf16.msra.mxu0 %v174
    %582 = vmatprep.subr.bf16.mxu0 0
    %583 = vmatpush1.bf16.msra.mxu0 %v175
    %584 = vmatprep.mubr.bf16.mxu0 %v549
    %585 = vmatmul.mubr.bf16.gmra.mrb[0].mxu0 %v542
    %v586 = vpop.f32.mrb[0].mxu0
    %v587 = vadd.f32 0.0, %v586
    %v588 = vpop.f32.mrb[0].mxu0
    %v589 = vpop.f32.mrb[0].mxu0
    %v590 = vpop.f32.mrb[0].mxu0
    %591 = vdwg.mxu0
    %v592 = vmax.f32 %v520, %v587
    %s593 = scalar_lea.vmem %s2, 2
    %v594 = vld [vmem:[%s593] sm:$0x3]
    %v597 = vunpack.c.l.s4 1966171168
    %v598 = vunpack.c.0.s8 %v597
    %v599 = vlaneseq
    %v600 = vshrl.u32 %v599, 7
    %v601 = vsub.s32 %v598, %v600
    %v602 = vrot.slane %v594, %v601
    %v603 = vcombine.high %v602, %v602
    %v605 = vunpack.c.l.s4 1966171168
    %v606 = vunpack.c.0.s8 %v605
    %v607 = vlaneseq
    %v608 = vshrl.u32 %v607, 7
    %v609 = vsub.s32 %v606, %v608
    %v610 = vrot.slane %v602, %v609
    %v612 = vunpack.c.l.s4 1966171168
    %v613 = vunpack.c.0.s8 %v612
    %v614 = vlaneseq
    %v615 = vshrl.u32 %v614, 7
    %v616 = vsub.s32 %v613, %v615
    %v617 = vrot.slane %v603, %v616
    %620 = vmatprep.subr.bf16.mxu0 0
    %621 = vmatpush1.bf16.msra.mxu0 %v160
    %622 = vmatprep.subr.bf16.mxu0 0
    %623 = vmatpush1.bf16.msra.mxu0 %v161
    %624 = vmatprep.subr.bf16.mxu0 0
    %625 = vmatpush1.bf16.msra.mxu0 %v162
    %626 = vmatprep.subr.bf16.mxu0 0
    %627 = vmatpush1.bf16.msra.mxu0 %v163
    %628 = vmatprep.subr.bf16.mxu0 0
    %629 = vmatpush1.bf16.msra.mxu0 %v164
    %630 = vmatprep.subr.bf16.mxu0 0
    %631 = vmatpush1.bf16.msra.mxu0 %v165
    %632 = vmatprep.subr.bf16.mxu0 0
    %633 = vmatpush1.bf16.msra.mxu0 %v166
    %634 = vmatprep.subr.bf16.mxu0 0
    %635 = vmatpush1.bf16.msra.mxu0 %v167
    %636 = vmatprep.subr.bf16.mxu0 0
    %637 = vmatpush1.bf16.msra.mxu0 %v168
    %638 = vmatprep.subr.bf16.mxu0 0
    %639 = vmatpush1.bf16.msra.mxu0 %v169
    %640 = vmatprep.subr.bf16.mxu0 0
    %641 = vmatpush1.bf16.msra.mxu0 %v170
    %642 = vmatprep.subr.bf16.mxu0 0
    %643 = vmatpush1.bf16.msra.mxu0 %v171
    %644 = vmatprep.subr.bf16.mxu0 0
    %645 = vmatpush1.bf16.msra.mxu0 %v172
    %646 = vmatprep.subr.bf16.mxu0 0
    %647 = vmatpush1.bf16.msra.mxu0 %v173
    %648 = vmatprep.subr.bf16.mxu0 0
    %649 = vmatpush1.bf16.msra.mxu0 %v174
    %650 = vmatprep.subr.bf16.mxu0 0
    %651 = vmatpush1.bf16.msra.mxu0 %v175
    %652 = vmatprep.mubr.bf16.mxu0 %v617
    %653 = vmatmul.mubr.bf16.gmra.mrb[0].mxu0 %v610
    %v654 = vpop.f32.mrb[0].mxu0
    %v655 = vadd.f32 0.0, %v654
    %v656 = vpop.f32.mrb[0].mxu0
    %v657 = vpop.f32.mrb[0].mxu0
    %v658 = vpop.f32.mrb[0].mxu0
    %659 = vdwg.mxu0
    %s660 = scalar_lea.vmem %s3, 2
    %v661 = vld [vmem:[%s660] sm:$0x3]
    %v664 = vunpack.c.l.s4 1966171168
    %v665 = vunpack.c.0.s8 %v664
    %v666 = vlaneseq
    %v667 = vshrl.u32 %v666, 7
    %v668 = vsub.s32 %v665, %v667
    %v669 = vrot.slane %v661, %v668
    %v670 = vcombine.high %v669, %v669
    %v672 = vunpack.c.l.s4 1966171168
    %v673 = vunpack.c.0.s8 %v672
    %v674 = vlaneseq
    %v675 = vshrl.u32 %v674, 7
    %v676 = vsub.s32 %v673, %v675
    %v677 = vrot.slane %v669, %v676
    %v679 = vunpack.c.l.s4 1966171168
    %v680 = vunpack.c.0.s8 %v679
    %v681 = vlaneseq
    %v682 = vshrl.u32 %v681, 7
    %v683 = vsub.s32 %v680, %v682
    %v684 = vrot.slane %v670, %v683
    %687 = vmatprep.subr.bf16.mxu0 0
    %688 = vmatpush1.bf16.msra.mxu0 %v160
    %689 = vmatprep.subr.bf16.mxu0 0
    %690 = vmatpush1.bf16.msra.mxu0 %v161
    %691 = vmatprep.subr.bf16.mxu0 0
    %692 = vmatpush1.bf16.msra.mxu0 %v162
    %693 = vmatprep.subr.bf16.mxu0 0
    %694 = vmatpush1.bf16.msra.mxu0 %v163
    %695 = vmatprep.subr.bf16.mxu0 0
    %696 = vmatpush1.bf16.msra.mxu0 %v164
    %697 = vmatprep.subr.bf16.mxu0 0
    %698 = vmatpush1.bf16.msra.mxu0 %v165
    %699 = vmatprep.subr.bf16.mxu0 0
    %700 = vmatpush1.bf16.msra.mxu0 %v166
    %701 = vmatprep.subr.bf16.mxu0 0
    %702 = vmatpush1.bf16.msra.mxu0 %v167
    %703 = vmatprep.subr.bf16.mxu0 0
    %704 = vmatpush1.bf16.msra.mxu0 %v168
    %705 = vmatprep.subr.bf16.mxu0 0
    %706 = vmatpush1.bf16.msra.mxu0 %v169
    %707 = vmatprep.subr.bf16.mxu0 0
    %708 = vmatpush1.bf16.msra.mxu0 %v170
    %709 = vmatprep.subr.bf16.mxu0 0
    %710 = vmatpush1.bf16.msra.mxu0 %v171
    %711 = vmatprep.subr.bf16.mxu0 0
    %712 = vmatpush1.bf16.msra.mxu0 %v172
    %713 = vmatprep.subr.bf16.mxu0 0
    %714 = vmatpush1.bf16.msra.mxu0 %v173
    %715 = vmatprep.subr.bf16.mxu0 0
    %716 = vmatpush1.bf16.msra.mxu0 %v174
    %717 = vmatprep.subr.bf16.mxu0 0
    %718 = vmatpush1.bf16.msra.mxu0 %v175
    %719 = vmatprep.mubr.bf16.mxu0 %v684
    %720 = vmatmul.mubr.bf16.gmra.mrb[0].mxu0 %v677
    %v721 = vpop.f32.mrb[0].mxu0
    %v722 = vadd.f32 0.0, %v721
    %v723 = vpop.f32.mrb[0].mxu0
    %v724 = vpop.f32.mrb[0].mxu0
    %v725 = vpop.f32.mrb[0].mxu0
    %726 = vdwg.mxu0
    %v727 = vmax.f32 %v655, %v722
    %v728 = vmax.f32 %v592, %v727
    %v729 = vadd.f32 %v728, %v437
    %v730 = vmax.f32 %v729, 0.0
    %v731 = vpack.c.bf16 %v730, %v730
    %s732 = scalar_lea.vmem %s6, 64
    %v733 = vld [vmem:[%s732] sm:$0xf]
    %v734 = vld [vmem:[%s732 + $0x4] sm:$0xf]
    %v735 = vld [vmem:[%s732 + $0x8] sm:$0xf]
    %v736 = vld [vmem:[%s732 + $0xc] sm:$0xf]
    %v737 = vld [vmem:[%s732 + $0x10] sm:$0xf]
    %v738 = vld [vmem:[%s732 + $0x14] sm:$0xf]
    %v739 = vld [vmem:[%s732 + $0x18] sm:$0xf]
    %v740 = vld [vmem:[%s732 + $0x1c] sm:$0xf]
    %v741 = vld [vmem:[%s732 + $0x20] sm:$0xf]
    %v742 = vld [vmem:[%s732 + $0x24] sm:$0xf]
    %v743 = vld [vmem:[%s732 + $0x28] sm:$0xf]
    %v744 = vld [vmem:[%s732 + $0x2c] sm:$0xf]
    %v745 = vld [vmem:[%s732 + $0x30] sm:$0xf]
    %v746 = vld [vmem:[%s732 + $0x34] sm:$0xf]
    %v747 = vld [vmem:[%s732 + $0x38] sm:$0xf]
    %v748 = vld [vmem:[%s732 + $0x3c] sm:$0xf]
    %v765 = vunpack.c.l.b16 %v733
    %v766 = vunpack.c.l.b16 %v734
    %v767 = vunpack.c.l.b16 %v735
    %v768 = vunpack.c.l.b16 %v736
    %v769 = vunpack.c.l.b16 %v737
    %v770 = vunpack.c.l.b16 %v738
    %v771 = vunpack.c.l.b16 %v739
    %v772 = vunpack.c.l.b16 %v740
    %v773 = vunpack.c.l.b16 %v741
    %v774 = vunpack.c.l.b16 %v742
    %v775 = vunpack.c.l.b16 %v743
    %v776 = vunpack.c.l.b16 %v744
    %v777 = vunpack.c.l.b16 %v745
    %v778 = vunpack.c.l.b16 %v746
    %v779 = vunpack.c.l.b16 %v747
    %v780 = vunpack.c.l.b16 %v748
    %v781 = vpack.c.b16 %v766, %v765
    %v782 = vpack.c.b16 %v768, %v767
    %v783 = vpack.c.b16 %v770, %v769
    %v784 = vpack.c.b16 %v772, %v771
    %v785 = vpack.c.b16 %v774, %v773
    %v786 = vpack.c.b16 %v776, %v775
    %v787 = vpack.c.b16 %v778, %v777
    %v788 = vpack.c.b16 %v780, %v779
    %797 = vmatprep.subr.bf16.mxu0 0
    %798 = vmatpush1.bf16.msra.mxu0 %v781
    %799 = vmatprep.subr.bf16.mxu0 0
    %800 = vmatpush1.bf16.msra.mxu0 %v782
    %801 = vmatprep.subr.bf16.mxu0 0
    %802 = vmatpush1.bf16.msra.mxu0 %v783
    %803 = vmatprep.subr.bf16.mxu0 0
    %804 = vmatpush1.bf16.msra.mxu0 %v784
    %805 = vmatprep.subr.bf16.mxu0 0
    %806 = vmatpush1.bf16.msra.mxu0 %v785
    %807 = vmatprep.subr.bf16.mxu0 0
    %808 = vmatpush1.bf16.msra.mxu0 %v786
    %809 = vmatprep.subr.bf16.mxu0 0
    %810 = vmatpush1.bf16.msra.mxu0 %v787
    %811 = vmatprep.subr.bf16.mxu0 0
    %812 = vmatpush1.bf16.msra.mxu0 %v788
    %813 = vmatprep.subr.bf16.mxu0 0
    %814 = vmatpush1.bf16.msra.mxu0 0
    %815 = vmatprep.subr.bf16.mxu0 0
    %816 = vmatpush1.bf16.msra.mxu0 0
    %817 = vmatprep.subr.bf16.mxu0 0
    %818 = vmatpush1.bf16.msra.mxu0 0
    %819 = vmatprep.subr.bf16.mxu0 0
    %820 = vmatpush1.bf16.msra.mxu0 0
    %821 = vmatprep.subr.bf16.mxu0 0
    %822 = vmatpush1.bf16.msra.mxu0 0
    %823 = vmatprep.subr.bf16.mxu0 0
    %824 = vmatpush1.bf16.msra.mxu0 0
    %825 = vmatprep.subr.bf16.mxu0 0
    %826 = vmatpush1.bf16.msra.mxu0 0
    %827 = vmatprep.subr.bf16.mxu0 0
    %828 = vmatpush1.bf16.msra.mxu0 0
    %829 = vmatprep.mubr.bf16.mxu0 0
    %830 = vmatmul.mubr.bf16.gmra.mrb[0].mxu0 %v731
    %v831 = vpop.f32.mrb[0].mxu0
    %v832 = vadd.f32 0.0, %v831
    %v833 = vpop.f32.mrb[0].mxu0
    %v834 = vpop.f32.mrb[0].mxu0
    %v835 = vpop.f32.mrb[0].mxu0
    %836 = vdwg.mxu0
    %v853 = vunpack.c.l.b16 %v442
    %v854 = vunpack.c.l.b16 %v443
    %v855 = vunpack.c.l.b16 %v444
    %v856 = vunpack.c.l.b16 %v445
    %v857 = vunpack.c.l.b16 %v446
    %v858 = vunpack.c.l.b16 %v447
    %v859 = vunpack.c.l.b16 %v448
    %v860 = vunpack.c.l.b16 %v449
    %v861 = vunpack.c.l.b16 %v450
    %v862 = vunpack.c.l.b16 %v451
    %v863 = vunpack.c.l.b16 %v452
    %v864 = vunpack.c.l.b16 %v453
    %v865 = vunpack.c.l.b16 %v454
    %v866 = vunpack.c.l.b16 %v455
    %v867 = vunpack.c.l.b16 %v456
    %v868 = vunpack.c.l.b16 %v457
    %v869 = vpack.c.b16 %v854, %v853
    %v870 = vpack.c.b16 %v856, %v855
    %v871 = vpack.c.b16 %v858, %v857
    %v872 = vpack.c.b16 %v860, %v859
    %v873 = vpack.c.b16 %v862, %v861
    %v874 = vpack.c.b16 %v864, %v863
    %v875 = vpack.c.b16 %v866, %v865
    %v876 = vpack.c.b16 %v868, %v867
    %885 = vmatprep.subr.bf16.mxu0 0
    %886 = vmatpush1.bf16.msra.mxu0 %v869
    %887 = vmatprep.subr.bf16.mxu0 0
    %888 = vmatpush1.bf16.msra.mxu0 %v870
    %889 = vmatprep.subr.bf16.mxu0 0
    %890 = vmatpush1.bf16.msra.mxu0 %v871
    %891 = vmatprep.subr.bf16.mxu0 0
    %892 = vmatpush1.bf16.msra.mxu0 %v872
    %893 = vmatprep.subr.bf16.mxu0 0
    %894 = vmatpush1.bf16.msra.mxu0 %v873
    %895 = vmatprep.subr.bf16.mxu0 0
    %896 = vmatpush1.bf16.msra.mxu0 %v874
    %897 = vmatprep.subr.bf16.mxu0 0
    %898 = vmatpush1.bf16.msra.mxu0 %v875
    %899 = vmatprep.subr.bf16.mxu0 0
    %900 = vmatpush1.bf16.msra.mxu0 %v876
    %901 = vmatprep.subr.bf16.mxu0 0
    %902 = vmatpush1.bf16.msra.mxu0 0
    %903 = vmatprep.subr.bf16.mxu0 0
    %904 = vmatpush1.bf16.msra.mxu0 0
    %905 = vmatprep.subr.bf16.mxu0 0
    %906 = vmatpush1.bf16.msra.mxu0 0
    %907 = vmatprep.subr.bf16.mxu0 0
    %908 = vmatpush1.bf16.msra.mxu0 0
    %909 = vmatprep.subr.bf16.mxu0 0
    %910 = vmatpush1.bf16.msra.mxu0 0
    %911 = vmatprep.subr.bf16.mxu0 0
    %912 = vmatpush1.bf16.msra.mxu0 0
    %913 = vmatprep.subr.bf16.mxu0 0
    %914 = vmatpush1.bf16.msra.mxu0 0
    %915 = vmatprep.subr.bf16.mxu0 0
    %916 = vmatpush1.bf16.msra.mxu0 0
    %917 = vmatprep.mubr.bf16.mxu0 0
    %918 = vmatmul.mubr.bf16.gmra.mrb[0].mxu0 %v441
    %v919 = vpop.f32.mrb[0].mxu0
    %v920 = vadd.f32 %v832, %v919
    %v921 = vpop.f32.mrb[0].mxu0
    %v922 = vpop.f32.mrb[0].mxu0
    %v923 = vpop.f32.mrb[0].mxu0
    %924 = vdwg.mxu0
    %s925 = scalar_lea.vmem %s0, 4
    %v926 = vld [vmem:[%s925] sm:$0x3]
    %v929 = vunpack.c.l.s4 1966171168
    %v930 = vunpack.c.0.s8 %v929
    %v931 = vlaneseq
    %v932 = vshrl.u32 %v931, 7
    %v933 = vsub.s32 %v930, %v932
    %v934 = vrot.slane %v926, %v933
    %v935 = vcombine.high %v934, %v934
    %v937 = vunpack.c.l.s4 1966171168
    %v938 = vunpack.c.0.s8 %v937
    %v939 = vlaneseq
    %v940 = vshrl.u32 %v939, 7
    %v941 = vsub.s32 %v938, %v940
    %v942 = vrot.slane %v934, %v941
    %v944 = vunpack.c.l.s4 1966171168
    %v945 = vunpack.c.0.s8 %v944
    %v946 = vlaneseq
    %v947 = vshrl.u32 %v946, 7
    %v948 = vsub.s32 %v945, %v947
    %v949 = vrot.slane %v935, %v948
    %952 = vmatprep.subr.bf16.mxu0 0
    %953 = vmatpush1.bf16.msra.mxu0 %v160
    %954 = vmatprep.subr.bf16.mxu0 0
    %955 = vmatpush1.bf16.msra.mxu0 %v161
    %956 = vmatprep.subr.bf16.mxu0 0
    %957 = vmatpush1.bf16.msra.mxu0 %v162
    %958 = vmatprep.subr.bf16.mxu0 0
    %959 = vmatpush1.bf16.msra.mxu0 %v163
    %960 = vmatprep.subr.bf16.mxu0 0
    %961 = vmatpush1.bf16.msra.mxu0 %v164
    %962 = vmatprep.subr.bf16.mxu0 0
    %963 = vmatpush1.bf16.msra.mxu0 %v165
    %964 = vmatprep.subr.bf16.mxu0 0
    %965 = vmatpush1.bf16.msra.mxu0 %v166
    %966 = vmatprep.subr.bf16.mxu0 0
    %967 = vmatpush1.bf16.msra.mxu0 %v167
    %968 = vmatprep.subr.bf16.mxu0 0
    %969 = vmatpush1.bf16.msra.mxu0 %v168
    %970 = vmatprep.subr.bf16.mxu0 0
    %971 = vmatpush1.bf16.msra.mxu0 %v169
    %972 = vmatprep.subr.bf16.mxu0 0
    %973 = vmatpush1.bf16.msra.mxu0 %v170
    %974 = vmatprep.subr.bf16.mxu0 0
    %975 = vmatpush1.bf16.msra.mxu0 %v171
    %976 = vmatprep.subr.bf16.mxu0 0
    %977 = vmatpush1.bf16.msra.mxu0 %v172
    %978 = vmatprep.subr.bf16.mxu0 0
    %979 = vmatpush1.bf16.msra.mxu0 %v173
    %980 = vmatprep.subr.bf16.mxu0 0
    %981 = vmatpush1.bf16.msra.mxu0 %v174
    %982 = vmatprep.subr.bf16.mxu0 0
    %983 = vmatpush1.bf16.msra.mxu0 %v175
    %984 = vmatprep.mubr.bf16.mxu0 %v949
    %985 = vmatmul.mubr.bf16.gmra.mrb[0].mxu0 %v942
    %v986 = vpop.f32.mrb[0].mxu0
    %v987 = vadd.f32 0.0, %v986
    %v988 = vpop.f32.mrb[0].mxu0
    %v989 = vpop.f32.mrb[0].mxu0
    %v990 = vpop.f32.mrb[0].mxu0
    %991 = vdwg.mxu0
    %s992 = scalar_lea.vmem %s1, 4
    %v993 = vld [vmem:[%s992] sm:$0x3]
    %v996 = vunpack.c.l.s4 1966171168
    %v997 = vunpack.c.0.s8 %v996
    %v998 = vlaneseq
    %v999 = vshrl.u32 %v998, 7
    %v1000 = vsub.s32 %v997, %v999
    %v1001 = vrot.slane %v993, %v1000
    %v1002 = vcombine.high %v1001, %v1001
    %v1004 = vunpack.c.l.s4 1966171168
    %v1005 = vunpack.c.0.s8 %v1004
    %v1006 = vlaneseq
    %v1007 = vshrl.u32 %v1006, 7
    %v1008 = vsub.s32 %v1005, %v1007
    %v1009 = vrot.slane %v1001, %v1008
    %v1011 = vunpack.c.l.s4 1966171168
    %v1012 = vunpack.c.0.s8 %v1011
    %v1013 = vlaneseq
    %v1014 = vshrl.u32 %v1013, 7
    %v1015 = vsub.s32 %v1012, %v1014
    %v1016 = vrot.slane %v1002, %v1015
    %1019 = vmatprep.subr.bf16.mxu0 0
    %1020 = vmatpush1.bf16.msra.mxu0 %v160
    %1021 = vmatprep.subr.bf16.mxu0 0
    %1022 = vmatpush1.bf16.msra.mxu0 %v161
    %1023 = vmatprep.subr.bf16.mxu0 0
    %1024 = vmatpush1.bf16.msra.mxu0 %v162
    %1025 = vmatprep.subr.bf16.mxu0 0
    %1026 = vmatpush1.bf16.msra.mxu0 %v163
    %1027 = vmatprep.subr.bf16.mxu0 0
    %1028 = vmatpush1.bf16.msra.mxu0 %v164
    %1029 = vmatprep.subr.bf16.mxu0 0
    %1030 = vmatpush1.bf16.msra.mxu0 %v165
    %1031 = vmatprep.subr.bf16.mxu0 0
    %1032 = vmatpush1.bf16.msra.mxu0 %v166
    %1033 = vmatprep.subr.bf16.mxu0 0
    %1034 = vmatpush1.bf16.msra.mxu0 %v167
    %1035 = vmatprep.subr.bf16.mxu0 0
    %1036 = vmatpush1.bf16.msra.mxu0 %v168
    %1037 = vmatprep.subr.bf16.mxu0 0
    %1038 = vmatpush1.bf16.msra.mxu0 %v169
    %1039 = vmatprep.subr.bf16.mxu0 0
    %1040 = vmatpush1.bf16.msra.mxu0 %v170
    %1041 = vmatprep.subr.bf16.mxu0 0
    %1042 = vmatpush1.bf16.msra.mxu0 %v171
    %1043 = vmatprep.subr.bf16.mxu0 0
    %1044 = vmatpush1.bf16.msra.mxu0 %v172
    %1045 = vmatprep.subr.bf16.mxu0 0
    %1046 = vmatpush1.bf16.msra.mxu0 %v173
    %1047 = vmatprep.subr.bf16.mxu0 0
    %1048 = vmatpush1.bf16.msra.mxu0 %v174
    %1049 = vmatprep.subr.bf16.mxu0 0
    %1050 = vmatpush1.bf16.msra.mxu0 %v175
    %1051 = vmatprep.mubr.bf16.mxu0 %v1016
    %1052 = vmatmul.mubr.bf16.gmra.mrb[0].mxu0 %v1009
    %v1053 = vpop.f32.mrb[0].mxu0
    %v1054 = vadd.f32 0.0, %v1053
    %v1055 = vpop.f32.mrb[0].mxu0
    %v1056 = vpop.f32.mrb[0].mxu0
    %v1057 = vpop.f32.mrb[0].mxu0
    %1058 = vdwg.mxu0
    %v1059 = vmax.f32 %v987, %v1054
    %s1060 = scalar_lea.vmem %s2, 4
    %v1061 = vld [vmem:[%s1060] sm:$0x3]
    %v1064 = vunpack.c.l.s4 1966171168
    %v1065 = vunpack.c.0.s8 %v1064
    %v1066 = vlaneseq
    %v1067 = vshrl.u32 %v1066, 7
    %v1068 = vsub.s32 %v1065, %v1067
    %v1069 = vrot.slane %v1061, %v1068
    %v1070 = vcombine.high %v1069, %v1069
    %v1072 = vunpack.c.l.s4 1966171168
    %v1073 = vunpack.c.0.s8 %v1072
    %v1074 = vlaneseq
    %v1075 = vshrl.u32 %v1074, 7
    %v1076 = vsub.s32 %v1073, %v1075
    %v1077 = vrot.slane %v1069, %v1076
    %v1079 = vunpack.c.l.s4 1966171168
    %v1080 = vunpack.c.0.s8 %v1079
    %v1081 = vlaneseq
    %v1082 = vshrl.u32 %v1081, 7
    %v1083 = vsub.s32 %v1080, %v1082
    %v1084 = vrot.slane %v1070, %v1083
    %1087 = vmatprep.subr.bf16.mxu0 0
    %1088 = vmatpush1.bf16.msra.mxu0 %v160
    %1089 = vmatprep.subr.bf16.mxu0 0
    %1090 = vmatpush1.bf16.msra.mxu0 %v161
    %1091 = vmatprep.subr.bf16.mxu0 0
    %1092 = vmatpush1.bf16.msra.mxu0 %v162
    %1093 = vmatprep.subr.bf16.mxu0 0
    %1094 = vmatpush1.bf16.msra.mxu0 %v163
    %1095 = vmatprep.subr.bf16.mxu0 0
    %1096 = vmatpush1.bf16.msra.mxu0 %v164
    %1097 = vmatprep.subr.bf16.mxu0 0
    %1098 = vmatpush1.bf16.msra.mxu0 %v165
    %1099 = vmatprep.subr.bf16.mxu0 0
    %1100 = vmatpush1.bf16.msra.mxu0 %v166
    %1101 = vmatprep.subr.bf16.mxu0 0
    %1102 = vmatpush1.bf16.msra.mxu0 %v167
    %1103 = vmatprep.subr.bf16.mxu0 0
    %1104 = vmatpush1.bf16.msra.mxu0 %v168
    %1105 = vmatprep.subr.bf16.mxu0 0
    %1106 = vmatpush1.bf16.msra.mxu0 %v169
    %1107 = vmatprep.subr.bf16.mxu0 0
    %1108 = vmatpush1.bf16.msra.mxu0 %v170
    %1109 = vmatprep.subr.bf16.mxu0 0
    %1110 = vmatpush1.bf16.msra.mxu0 %v171
    %1111 = vmatprep.subr.bf16.mxu0 0
    %1112 = vmatpush1.bf16.msra.mxu0 %v172
    %1113 = vmatprep.subr.bf16.mxu0 0
    %1114 = vmatpush1.bf16.msra.mxu0 %v173
    %1115 = vmatprep.subr.bf16.mxu0 0
    %1116 = vmatpush1.bf16.msra.mxu0 %v174
    %1117 = vmatprep.subr.bf16.mxu0 0
    %1118 = vmatpush1.bf16.msra.mxu0 %v175
    %1119 = vmatprep.mubr.bf16.mxu0 %v1084
    %1120 = vmatmul.mubr.bf16.gmra.mrb[0].mxu0 %v1077
    %v1121 = vpop.f32.mrb[0].mxu0
    %v1122 = vadd.f32 0.0, %v1121
    %v1123 = vpop.f32.mrb[0].mxu0
    %v1124 = vpop.f32.mrb[0].mxu0
    %v1125 = vpop.f32.mrb[0].mxu0
    %1126 = vdwg.mxu0
    %s1127 = scalar_lea.vmem %s3, 4
    %v1128 = vld [vmem:[%s1127] sm:$0x3]
    %v1131 = vunpack.c.l.s4 1966171168
    %v1132 = vunpack.c.0.s8 %v1131
    %v1133 = vlaneseq
    %v1134 = vshrl.u32 %v1133, 7
    %v1135 = vsub.s32 %v1132, %v1134
    %v1136 = vrot.slane %v1128, %v1135
    %v1137 = vcombine.high %v1136, %v1136
    %v1139 = vunpack.c.l.s4 1966171168
    %v1140 = vunpack.c.0.s8 %v1139
    %v1141 = vlaneseq
    %v1142 = vshrl.u32 %v1141, 7
    %v1143 = vsub.s32 %v1140, %v1142
    %v1144 = vrot.slane %v1136, %v1143
    %v1146 = vunpack.c.l.s4 1966171168
    %v1147 = vunpack.c.0.s8 %v1146
    %v1148 = vlaneseq
    %v1149 = vshrl.u32 %v1148, 7
    %v1150 = vsub.s32 %v1147, %v1149
    %v1151 = vrot.slane %v1137, %v1150
    %1154 = vmatprep.subr.bf16.mxu0 0
    %1155 = vmatpush1.bf16.msra.mxu0 %v160
    %1156 = vmatprep.subr.bf16.mxu0 0
    %1157 = vmatpush1.bf16.msra.mxu0 %v161
    %1158 = vmatprep.subr.bf16.mxu0 0
    %1159 = vmatpush1.bf16.msra.mxu0 %v162
    %1160 = vmatprep.subr.bf16.mxu0 0
    %1161 = vmatpush1.bf16.msra.mxu0 %v163
    %1162 = vmatprep.subr.bf16.mxu0 0
    %1163 = vmatpush1.bf16.msra.mxu0 %v164
    %1164 = vmatprep.subr.bf16.mxu0 0
    %1165 = vmatpush1.bf16.msra.mxu0 %v165
    %1166 = vmatprep.subr.bf16.mxu0 0
    %1167 = vmatpush1.bf16.msra.mxu0 %v166
    %1168 = vmatprep.subr.bf16.mxu0 0
    %1169 = vmatpush1.bf16.msra.mxu0 %v167
    %1170 = vmatprep.subr.bf16.mxu0 0
    %1171 = vmatpush1.bf16.msra.mxu0 %v168
    %1172 = vmatprep.subr.bf16.mxu0 0
    %1173 = vmatpush1.bf16.msra.mxu0 %v169
    %1174 = vmatprep.subr.bf16.mxu0 0
    %1175 = vmatpush1.bf16.msra.mxu0 %v170
    %1176 = vmatprep.subr.bf16.mxu0 0
    %1177 = vmatpush1.bf16.msra.mxu0 %v171
    %1178 = vmatprep.subr.bf16.mxu0 0
    %1179 = vmatpush1.bf16.msra.mxu0 %v172
    %1180 = vmatprep.subr.bf16.mxu0 0
    %1181 = vmatpush1.bf16.msra.mxu0 %v173
    %1182 = vmatprep.subr.bf16.mxu0 0
    %1183 = vmatpush1.bf16.msra.mxu0 %v174
    %1184 = vmatprep.subr.bf16.mxu0 0
    %1185 = vmatpush1.bf16.msra.mxu0 %v175
    %1186 = vmatprep.mubr.bf16.mxu0 %v1151
    %1187 = vmatmul.mubr.bf16.gmra.mrb[0].mxu0 %v1144
    %v1188 = vpop.f32.mrb[0].mxu0
    %v1189 = vadd.f32 0.0, %v1188
    %v1190 = vpop.f32.mrb[0].mxu0
    %v1191 = vpop.f32.mrb[0].mxu0
    %v1192 = vpop.f32.mrb[0].mxu0
    %1193 = vdwg.mxu0
    %v1194 = vmax.f32 %v1122, %v1189
    %v1195 = vmax.f32 %v1059, %v1194
    %v1196 = vadd.f32 %v1195, %v437
    %v1197 = vmax.f32 %v1196, 0.0
    %v1198 = vpack.c.bf16 %v1197, %v1197
    %s1199 = scalar_lea.vmem %s6, 128
    %v1200 = vld [vmem:[%s1199] sm:$0xf]
    %v1201 = vld [vmem:[%s1199 + $0x4] sm:$0xf]
    %v1202 = vld [vmem:[%s1199 + $0x8] sm:$0xf]
    %v1203 = vld [vmem:[%s1199 + $0xc] sm:$0xf]
    %v1204 = vld [vmem:[%s1199 + $0x10] sm:$0xf]
    %v1205 = vld [vmem:[%s1199 + $0x14] sm:$0xf]
    %v1206 = vld [vmem:[%s1199 + $0x18] sm:$0xf]
    %v1207 = vld [vmem:[%s1199 + $0x1c] sm:$0xf]
    %v1208 = vld [vmem:[%s1199 + $0x20] sm:$0xf]
    %v1209 = vld [vmem:[%s1199 + $0x24] sm:$0xf]
    %v1210 = vld [vmem:[%s1199 + $0x28] sm:$0xf]
    %v1211 = vld [vmem:[%s1199 + $0x2c] sm:$0xf]
    %v1212 = vld [vmem:[%s1199 + $0x30] sm:$0xf]
    %v1213 = vld [vmem:[%s1199 + $0x34] sm:$0xf]
    %v1214 = vld [vmem:[%s1199 + $0x38] sm:$0xf]
    %v1215 = vld [vmem:[%s1199 + $0x3c] sm:$0xf]
    %v1232 = vunpack.c.l.b16 %v1200
    %v1233 = vunpack.c.l.b16 %v1201
    %v1234 = vunpack.c.l.b16 %v1202
    %v1235 = vunpack.c.l.b16 %v1203
    %v1236 = vunpack.c.l.b16 %v1204
    %v1237 = vunpack.c.l.b16 %v1205
    %v1238 = vunpack.c.l.b16 %v1206
    %v1239 = vunpack.c.l.b16 %v1207
    %v1240 = vunpack.c.l.b16 %v1208
    %v1241 = vunpack.c.l.b16 %v1209
    %v1242 = vunpack.c.l.b16 %v1210
    %v1243 = vunpack.c.l.b16 %v1211
    %v1244 = vunpack.c.l.b16 %v1212
    %v1245 = vunpack.c.l.b16 %v1213
    %v1246 = vunpack.c.l.b16 %v1214
    %v1247 = vunpack.c.l.b16 %v1215
    %v1248 = vpack.c.b16 %v1233, %v1232
    %v1249 = vpack.c.b16 %v1235, %v1234
    %v1250 = vpack.c.b16 %v1237, %v1236
    %v1251 = vpack.c.b16 %v1239, %v1238
    %v1252 = vpack.c.b16 %v1241, %v1240
    %v1253 = vpack.c.b16 %v1243, %v1242
    %v1254 = vpack.c.b16 %v1245, %v1244
    %v1255 = vpack.c.b16 %v1247, %v1246
    %1264 = vmatprep.subr.bf16.mxu0 0
    %1265 = vmatpush1.bf16.msra.mxu0 %v1248
    %1266 = vmatprep.subr.bf16.mxu0 0
    %1267 = vmatpush1.bf16.msra.mxu0 %v1249
    %1268 = vmatprep.subr.bf16.mxu0 0
    %1269 = vmatpush1.bf16.msra.mxu0 %v1250
    %1270 = vmatprep.subr.bf16.mxu0 0
    %1271 = vmatpush1.bf16.msra.mxu0 %v1251
    %1272 = vmatprep.subr.bf16.mxu0 0
    %1273 = vmatpush1.bf16.msra.mxu0 %v1252
    %1274 = vmatprep.subr.bf16.mxu0 0
    %1275 = vmatpush1.bf16.msra.mxu0 %v1253
    %1276 = vmatprep.subr.bf16.mxu0 0
    %1277 = vmatpush1.bf16.msra.mxu0 %v1254
    %1278 = vmatprep.subr.bf16.mxu0 0
    %1279 = vmatpush1.bf16.msra.mxu0 %v1255
    %1280 = vmatprep.subr.bf16.mxu0 0
    %1281 = vmatpush1.bf16.msra.mxu0 0
    %1282 = vmatprep.subr.bf16.mxu0 0
    %1283 = vmatpush1.bf16.msra.mxu0 0
    %1284 = vmatprep.subr.bf16.mxu0 0
    %1285 = vmatpush1.bf16.msra.mxu0 0
    %1286 = vmatprep.subr.bf16.mxu0 0
    %1287 = vmatpush1.bf16.msra.mxu0 0
    %1288 = vmatprep.subr.bf16.mxu0 0
    %1289 = vmatpush1.bf16.msra.mxu0 0
    %1290 = vmatprep.subr.bf16.mxu0 0
    %1291 = vmatpush1.bf16.msra.mxu0 0
    %1292 = vmatprep.subr.bf16.mxu0 0
    %1293 = vmatpush1.bf16.msra.mxu0 0
    %1294 = vmatprep.subr.bf16.mxu0 0
    %1295 = vmatpush1.bf16.msra.mxu0 0
    %1296 = vmatprep.mubr.bf16.mxu0 0
    %1297 = vmatmul.mubr.bf16.gmra.mrb[0].mxu0 %v1198
    %v1298 = vpop.f32.mrb[0].mxu0
    %v1299 = vadd.f32 0.0, %v1298
    %v1300 = vpop.f32.mrb[0].mxu0
    %v1301 = vpop.f32.mrb[0].mxu0
    %v1302 = vpop.f32.mrb[0].mxu0
    %1303 = vdwg.mxu0
    %v1304 = vadd.f32 %v920, %v1299
    %s1305 = scalar_lea.vmem %s0, 6
    %v1306 = vld [vmem:[%s1305] sm:$0x3]
    %v1309 = vunpack.c.l.s4 1966171168
    %v1310 = vunpack.c.0.s8 %v1309
    %v1311 = vlaneseq
    %v1312 = vshrl.u32 %v1311, 7
    %v1313 = vsub.s32 %v1310, %v1312
    %v1314 = vrot.slane %v1306, %v1313
    %v1315 = vcombine.high %v1314, %v1314
    %v1317 = vunpack.c.l.s4 1966171168
    %v1318 = vunpack.c.0.s8 %v1317
    %v1319 = vlaneseq
    %v1320 = vshrl.u32 %v1319, 7
    %v1321 = vsub.s32 %v1318, %v1320
    %v1322 = vrot.slane %v1314, %v1321
    %v1324 = vunpack.c.l.s4 1966171168
    %v1325 = vunpack.c.0.s8 %v1324
    %v1326 = vlaneseq
    %v1327 = vshrl.u32 %v1326, 7
    %v1328 = vsub.s32 %v1325, %v1327
    %v1329 = vrot.slane %v1315, %v1328
    %1332 = vmatprep.subr.bf16.mxu0 0
    %1333 = vmatpush1.bf16.msra.mxu0 %v160
    %1334 = vmatprep.subr.bf16.mxu0 0
    %1335 = vmatpush1.bf16.msra.mxu0 %v161
    %1336 = vmatprep.subr.bf16.mxu0 0
    %1337 = vmatpush1.bf16.msra.mxu0 %v162
    %1338 = vmatprep.subr.bf16.mxu0 0
    %1339 = vmatpush1.bf16.msra.mxu0 %v163
    %1340 = vmatprep.subr.bf16.mxu0 0
    %1341 = vmatpush1.bf16.msra.mxu0 %v164
    %1342 = vmatprep.subr.bf16.mxu0 0
    %1343 = vmatpush1.bf16.msra.mxu0 %v165
    %1344 = vmatprep.subr.bf16.mxu0 0
    %1345 = vmatpush1.bf16.msra.mxu0 %v166
    %1346 = vmatprep.subr.bf16.mxu0 0
    %1347 = vmatpush1.bf16.msra.mxu0 %v167
    %1348 = vmatprep.subr.bf16.mxu0 0
    %1349 = vmatpush1.bf16.msra.mxu0 %v168
    %1350 = vmatprep.subr.bf16.mxu0 0
    %1351 = vmatpush1.bf16.msra.mxu0 %v169
    %1352 = vmatprep.subr.bf16.mxu0 0
    %1353 = vmatpush1.bf16.msra.mxu0 %v170
    %1354 = vmatprep.subr.bf16.mxu0 0
    %1355 = vmatpush1.bf16.msra.mxu0 %v171
    %1356 = vmatprep.subr.bf16.mxu0 0
    %1357 = vmatpush1.bf16.msra.mxu0 %v172
    %1358 = vmatprep.subr.bf16.mxu0 0
    %1359 = vmatpush1.bf16.msra.mxu0 %v173
    %1360 = vmatprep.subr.bf16.mxu0 0
    %1361 = vmatpush1.bf16.msra.mxu0 %v174
    %1362 = vmatprep.subr.bf16.mxu0 0
    %1363 = vmatpush1.bf16.msra.mxu0 %v175
    %1364 = vmatprep.mubr.bf16.mxu0 %v1329
    %1365 = vmatmul.mubr.bf16.gmra.mrb[0].mxu0 %v1322
    %v1366 = vpop.f32.mrb[0].mxu0
    %v1367 = vadd.f32 0.0, %v1366
    %v1368 = vpop.f32.mrb[0].mxu0
    %v1369 = vpop.f32.mrb[0].mxu0
    %v1370 = vpop.f32.mrb[0].mxu0
    %1371 = vdwg.mxu0
    %s1372 = scalar_lea.vmem %s1, 6
    %v1373 = vld [vmem:[%s1372] sm:$0x3]
    %v1376 = vunpack.c.l.s4 1966171168
    %v1377 = vunpack.c.0.s8 %v1376
    %v1378 = vlaneseq
    %v1379 = vshrl.u32 %v1378, 7
    %v1380 = vsub.s32 %v1377, %v1379
    %v1381 = vrot.slane %v1373, %v1380
    %v1382 = vcombine.high %v1381, %v1381
    %v1384 = vunpack.c.l.s4 1966171168
    %v1385 = vunpack.c.0.s8 %v1384
    %v1386 = vlaneseq
    %v1387 = vshrl.u32 %v1386, 7
    %v1388 = vsub.s32 %v1385, %v1387
    %v1389 = vrot.slane %v1381, %v1388
    %v1391 = vunpack.c.l.s4 1966171168
    %v1392 = vunpack.c.0.s8 %v1391
    %v1393 = vlaneseq
    %v1394 = vshrl.u32 %v1393, 7
    %v1395 = vsub.s32 %v1392, %v1394
    %v1396 = vrot.slane %v1382, %v1395
    %1399 = vmatprep.subr.bf16.mxu0 0
    %1400 = vmatpush1.bf16.msra.mxu0 %v160
    %1401 = vmatprep.subr.bf16.mxu0 0
    %1402 = vmatpush1.bf16.msra.mxu0 %v161
    %1403 = vmatprep.subr.bf16.mxu0 0
    %1404 = vmatpush1.bf16.msra.mxu0 %v162
    %1405 = vmatprep.subr.bf16.mxu0 0
    %1406 = vmatpush1.bf16.msra.mxu0 %v163
    %1407 = vmatprep.subr.bf16.mxu0 0
    %1408 = vmatpush1.bf16.msra.mxu0 %v164
    %1409 = vmatprep.subr.bf16.mxu0 0
    %1410 = vmatpush1.bf16.msra.mxu0 %v165
    %1411 = vmatprep.subr.bf16.mxu0 0
    %1412 = vmatpush1.bf16.msra.mxu0 %v166
    %1413 = vmatprep.subr.bf16.mxu0 0
    %1414 = vmatpush1.bf16.msra.mxu0 %v167
    %1415 = vmatprep.subr.bf16.mxu0 0
    %1416 = vmatpush1.bf16.msra.mxu0 %v168
    %1417 = vmatprep.subr.bf16.mxu0 0
    %1418 = vmatpush1.bf16.msra.mxu0 %v169
    %1419 = vmatprep.subr.bf16.mxu0 0
    %1420 = vmatpush1.bf16.msra.mxu0 %v170
    %1421 = vmatprep.subr.bf16.mxu0 0
    %1422 = vmatpush1.bf16.msra.mxu0 %v171
    %1423 = vmatprep.subr.bf16.mxu0 0
    %1424 = vmatpush1.bf16.msra.mxu0 %v172
    %1425 = vmatprep.subr.bf16.mxu0 0
    %1426 = vmatpush1.bf16.msra.mxu0 %v173
    %1427 = vmatprep.subr.bf16.mxu0 0
    %1428 = vmatpush1.bf16.msra.mxu0 %v174
    %1429 = vmatprep.subr.bf16.mxu0 0
    %1430 = vmatpush1.bf16.msra.mxu0 %v175
    %1431 = vmatprep.mubr.bf16.mxu0 %v1396
    %1432 = vmatmul.mubr.bf16.gmra.mrb[0].mxu0 %v1389
    %v1433 = vpop.f32.mrb[0].mxu0
    %v1434 = vadd.f32 0.0, %v1433
    %v1435 = vpop.f32.mrb[0].mxu0
    %v1436 = vpop.f32.mrb[0].mxu0
    %v1437 = vpop.f32.mrb[0].mxu0
    %1438 = vdwg.mxu0
    %v1439 = vmax.f32 %v1367, %v1434
    %s1440 = scalar_lea.vmem %s2, 6
    %v1441 = vld [vmem:[%s1440] sm:$0x3]
    %v1444 = vunpack.c.l.s4 1966171168
    %v1445 = vunpack.c.0.s8 %v1444
    %v1446 = vlaneseq
    %v1447 = vshrl.u32 %v1446, 7
    %v1448 = vsub.s32 %v1445, %v1447
    %v1449 = vrot.slane %v1441, %v1448
    %v1450 = vcombine.high %v1449, %v1449
    %v1452 = vunpack.c.l.s4 1966171168
    %v1453 = vunpack.c.0.s8 %v1452
    %v1454 = vlaneseq
    %v1455 = vshrl.u32 %v1454, 7
    %v1456 = vsub.s32 %v1453, %v1455
    %v1457 = vrot.slane %v1449, %v1456
    %v1459 = vunpack.c.l.s4 1966171168
    %v1460 = vunpack.c.0.s8 %v1459
    %v1461 = vlaneseq
    %v1462 = vshrl.u32 %v1461, 7
    %v1463 = vsub.s32 %v1460, %v1462
    %v1464 = vrot.slane %v1450, %v1463
    %1467 = vmatprep.subr.bf16.mxu0 0
    %1468 = vmatpush1.bf16.msra.mxu0 %v160
    %1469 = vmatprep.subr.bf16.mxu0 0
    %1470 = vmatpush1.bf16.msra.mxu0 %v161
    %1471 = vmatprep.subr.bf16.mxu0 0
    %1472 = vmatpush1.bf16.msra.mxu0 %v162
    %1473 = vmatprep.subr.bf16.mxu0 0
    %1474 = vmatpush1.bf16.msra.mxu0 %v163
    %1475 = vmatprep.subr.bf16.mxu0 0
    %1476 = vmatpush1.bf16.msra.mxu0 %v164
    %1477 = vmatprep.subr.bf16.mxu0 0
    %1478 = vmatpush1.bf16.msra.mxu0 %v165
    %1479 = vmatprep.subr.bf16.mxu0 0
    %1480 = vmatpush1.bf16.msra.mxu0 %v166
    %1481 = vmatprep.subr.bf16.mxu0 0
    %1482 = vmatpush1.bf16.msra.mxu0 %v167
    %1483 = vmatprep.subr.bf16.mxu0 0
    %1484 = vmatpush1.bf16.msra.mxu0 %v168
    %1485 = vmatprep.subr.bf16.mxu0 0
    %1486 = vmatpush1.bf16.msra.mxu0 %v169
    %1487 = vmatprep.subr.bf16.mxu0 0
    %1488 = vmatpush1.bf16.msra.mxu0 %v170
    %1489 = vmatprep.subr.bf16.mxu0 0
    %1490 = vmatpush1.bf16.msra.mxu0 %v171
    %1491 = vmatprep.subr.bf16.mxu0 0
    %1492 = vmatpush1.bf16.msra.mxu0 %v172
    %1493 = vmatprep.subr.bf16.mxu0 0
    %1494 = vmatpush1.bf16.msra.mxu0 %v173
    %1495 = vmatprep.subr.bf16.mxu0 0
    %1496 = vmatpush1.bf16.msra.mxu0 %v174
    %1497 = vmatprep.subr.bf16.mxu0 0
    %1498 = vmatpush1.bf16.msra.mxu0 %v175
    %1499 = vmatprep.mubr.bf16.mxu0 %v1464
    %1500 = vmatmul.mubr.bf16.gmra.mrb[0].mxu0 %v1457
    %v1501 = vpop.f32.mrb[0].mxu0
    %v1502 = vadd.f32 0.0, %v1501
    %v1503 = vpop.f32.mrb[0].mxu0
    %v1504 = vpop.f32.mrb[0].mxu0
    %v1505 = vpop.f32.mrb[0].mxu0
    %1506 = vdwg.mxu0
    %s1507 = scalar_lea.vmem %s3, 6
    %v1508 = vld [vmem:[%s1507] sm:$0x3]
    %v1511 = vunpack.c.l.s4 1966171168
    %v1512 = vunpack.c.0.s8 %v1511
    %v1513 = vlaneseq
    %v1514 = vshrl.u32 %v1513, 7
    %v1515 = vsub.s32 %v1512, %v1514
    %v1516 = vrot.slane %v1508, %v1515
    %v1517 = vcombine.high %v1516, %v1516
    %v1519 = vunpack.c.l.s4 1966171168
    %v1520 = vunpack.c.0.s8 %v1519
    %v1521 = vlaneseq
    %v1522 = vshrl.u32 %v1521, 7
    %v1523 = vsub.s32 %v1520, %v1522
    %v1524 = vrot.slane %v1516, %v1523
    %v1526 = vunpack.c.l.s4 1966171168
    %v1527 = vunpack.c.0.s8 %v1526
    %v1528 = vlaneseq
    %v1529 = vshrl.u32 %v1528, 7
    %v1530 = vsub.s32 %v1527, %v1529
    %v1531 = vrot.slane %v1517, %v1530
    %1534 = vmatprep.subr.bf16.mxu0 0
    %1535 = vmatpush1.bf16.msra.mxu0 %v160
    %1536 = vmatprep.subr.bf16.mxu0 0
    %1537 = vmatpush1.bf16.msra.mxu0 %v161
    %1538 = vmatprep.subr.bf16.mxu0 0
    %1539 = vmatpush1.bf16.msra.mxu0 %v162
    %1540 = vmatprep.subr.bf16.mxu0 0
    %1541 = vmatpush1.bf16.msra.mxu0 %v163
    %1542 = vmatprep.subr.bf16.mxu0 0
    %1543 = vmatpush1.bf16.msra.mxu0 %v164
    %1544 = vmatprep.subr.bf16.mxu0 0
    %1545 = vmatpush1.bf16.msra.mxu0 %v165
    %1546 = vmatprep.subr.bf16.mxu0 0
    %1547 = vmatpush1.bf16.msra.mxu0 %v166
    %1548 = vmatprep.subr.bf16.mxu0 0
    %1549 = vmatpush1.bf16.msra.mxu0 %v167
    %1550 = vmatprep.subr.bf16.mxu0 0
    %1551 = vmatpush1.bf16.msra.mxu0 %v168
    %1552 = vmatprep.subr.bf16.mxu0 0
    %1553 = vmatpush1.bf16.msra.mxu0 %v169
    %1554 = vmatprep.subr.bf16.mxu0 0
    %1555 = vmatpush1.bf16.msra.mxu0 %v170
    %1556 = vmatprep.subr.bf16.mxu0 0
    %1557 = vmatpush1.bf16.msra.mxu0 %v171
    %1558 = vmatprep.subr.bf16.mxu0 0
    %1559 = vmatpush1.bf16.msra.mxu0 %v172
    %1560 = vmatprep.subr.bf16.mxu0 0
    %1561 = vmatpush1.bf16.msra.mxu0 %v173
    %1562 = vmatprep.subr.bf16.mxu0 0
    %1563 = vmatpush1.bf16.msra.mxu0 %v174
    %1564 = vmatprep.subr.bf16.mxu0 0
    %1565 = vmatpush1.bf16.msra.mxu0 %v175
    %1566 = vmatprep.mubr.bf16.mxu0 %v1531
    %1567 = vmatmul.mubr.bf16.gmra.mrb[0].mxu0 %v1524
    %v1568 = vpop.f32.mrb[0].mxu0
    %v1569 = vadd.f32 0.0, %v1568
    %v1570 = vpop.f32.mrb[0].mxu0
    %v1571 = vpop.f32.mrb[0].mxu0
    %v1572 = vpop.f32.mrb[0].mxu0
    %1573 = vdwg.mxu0
    %v1574 = vmax.f32 %v1502, %v1569
    %v1575 = vmax.f32 %v1439, %v1574
    %v1576 = vadd.f32 %v1575, %v437
    %v1577 = vmax.f32 %v1576, 0.0
    %v1578 = vpack.c.bf16 %v1577, %v1577
    %s1579 = scalar_lea.vmem %s6, 192
    %v1580 = vld [vmem:[%s1579] sm:$0xf]
    %v1581 = vld [vmem:[%s1579 + $0x4] sm:$0xf]
    %v1582 = vld [vmem:[%s1579 + $0x8] sm:$0xf]
    %v1583 = vld [vmem:[%s1579 + $0xc] sm:$0xf]
    %v1584 = vld [vmem:[%s1579 + $0x10] sm:$0xf]
    %v1585 = vld [vmem:[%s1579 + $0x14] sm:$0xf]
    %v1586 = vld [vmem:[%s1579 + $0x18] sm:$0xf]
    %v1587 = vld [vmem:[%s1579 + $0x1c] sm:$0xf]
    %v1588 = vld [vmem:[%s1579 + $0x20] sm:$0xf]
    %v1589 = vld [vmem:[%s1579 + $0x24] sm:$0xf]
    %v1590 = vld [vmem:[%s1579 + $0x28] sm:$0xf]
    %v1591 = vld [vmem:[%s1579 + $0x2c] sm:$0xf]
    %v1592 = vld [vmem:[%s1579 + $0x30] sm:$0xf]
    %v1593 = vld [vmem:[%s1579 + $0x34] sm:$0xf]
    %v1594 = vld [vmem:[%s1579 + $0x38] sm:$0xf]
    %v1595 = vld [vmem:[%s1579 + $0x3c] sm:$0xf]
    %v1612 = vunpack.c.l.b16 %v1580
    %v1613 = vunpack.c.l.b16 %v1581
    %v1614 = vunpack.c.l.b16 %v1582
    %v1615 = vunpack.c.l.b16 %v1583
    %v1616 = vunpack.c.l.b16 %v1584
    %v1617 = vunpack.c.l.b16 %v1585
    %v1618 = vunpack.c.l.b16 %v1586
    %v1619 = vunpack.c.l.b16 %v1587
    %v1620 = vunpack.c.l.b16 %v1588
    %v1621 = vunpack.c.l.b16 %v1589
    %v1622 = vunpack.c.l.b16 %v1590
    %v1623 = vunpack.c.l.b16 %v1591
    %v1624 = vunpack.c.l.b16 %v1592
    %v1625 = vunpack.c.l.b16 %v1593
    %v1626 = vunpack.c.l.b16 %v1594
    %v1627 = vunpack.c.l.b16 %v1595
    %v1628 = vpack.c.b16 %v1613, %v1612
    %v1629 = vpack.c.b16 %v1615, %v1614
    %v1630 = vpack.c.b16 %v1617, %v1616
    %v1631 = vpack.c.b16 %v1619, %v1618
    %v1632 = vpack.c.b16 %v1621, %v1620
    %v1633 = vpack.c.b16 %v1623, %v1622
    %v1634 = vpack.c.b16 %v1625, %v1624
    %v1635 = vpack.c.b16 %v1627, %v1626
    %1644 = vmatprep.subr.bf16.mxu0 0
    %1645 = vmatpush1.bf16.msra.mxu0 %v1628
    %1646 = vmatprep.subr.bf16.mxu0 0
    %1647 = vmatpush1.bf16.msra.mxu0 %v1629
    %1648 = vmatprep.subr.bf16.mxu0 0
    %1649 = vmatpush1.bf16.msra.mxu0 %v1630
    %1650 = vmatprep.subr.bf16.mxu0 0
    %1651 = vmatpush1.bf16.msra.mxu0 %v1631
    %1652 = vmatprep.subr.bf16.mxu0 0
    %1653 = vmatpush1.bf16.msra.mxu0 %v1632
    %1654 = vmatprep.subr.bf16.mxu0 0
    %1655 = vmatpush1.bf16.msra.mxu0 %v1633
    %1656 = vmatprep.subr.bf16.mxu0 0
    %1657 = vmatpush1.bf16.msra.mxu0 %v1634
    %1658 = vmatprep.subr.bf16.mxu0 0
    %1659 = vmatpush1.bf16.msra.mxu0 %v1635
    %1660 = vmatprep.subr.bf16.mxu0 0
    %1661 = vmatpush1.bf16.msra.mxu0 0
    %1662 = vmatprep.subr.bf16.mxu0 0
    %1663 = vmatpush1.bf16.msra.mxu0 0
    %1664 = vmatprep.subr.bf16.mxu0 0
    %1665 = vmatpush1.bf16.msra.mxu0 0
    %1666 = vmatprep.subr.bf16.mxu0 0
    %1667 = vmatpush1.bf16.msra.mxu0 0
    %1668 = vmatprep.subr.bf16.mxu0 0
    %1669 = vmatpush1.bf16.msra.mxu0 0
    %1670 = vmatprep.subr.bf16.mxu0 0
    %1671 = vmatpush1.bf16.msra.mxu0 0
    %1672 = vmatprep.subr.bf16.mxu0 0
    %1673 = vmatpush1.bf16.msra.mxu0 0
    %1674 = vmatprep.subr.bf16.mxu0 0
    %1675 = vmatpush1.bf16.msra.mxu0 0
    %1676 = vmatprep.mubr.bf16.mxu0 0
    %1677 = vmatmul.mubr.bf16.gmra.mrb[0].mxu0 %v1578
    %v1678 = vpop.f32.mrb[0].mxu0
    %v1679 = vadd.f32 0.0, %v1678
    %v1680 = vpop.f32.mrb[0].mxu0
    %v1681 = vpop.f32.mrb[0].mxu0
    %v1682 = vpop.f32.mrb[0].mxu0
    %1683 = vdwg.mxu0
    %v1684 = vadd.f32 %v1304, %v1679
    %s1685 = scalar_lea.vmem %s0, 8
    %v1686 = vld [vmem:[%s1685] sm:$0x3]
    %v1689 = vunpack.c.l.s4 1966171168
    %v1690 = vunpack.c.0.s8 %v1689
    %v1691 = vlaneseq
    %v1692 = vshrl.u32 %v1691, 7
    %v1693 = vsub.s32 %v1690, %v1692
    %v1694 = vrot.slane %v1686, %v1693
    %v1695 = vcombine.high %v1694, %v1694
    %v1697 = vunpack.c.l.s4 1966171168
    %v1698 = vunpack.c.0.s8 %v1697
    %v1699 = vlaneseq
    %v1700 = vshrl.u32 %v1699, 7
    %v1701 = vsub.s32 %v1698, %v1700
    %v1702 = vrot.slane %v1694, %v1701
    %v1704 = vunpack.c.l.s4 1966171168
    %v1705 = vunpack.c.0.s8 %v1704
    %v1706 = vlaneseq
    %v1707 = vshrl.u32 %v1706, 7
    %v1708 = vsub.s32 %v1705, %v1707
    %v1709 = vrot.slane %v1695, %v1708
    %1712 = vmatprep.subr.bf16.mxu0 0
    %1713 = vmatpush1.bf16.msra.mxu0 %v160
    %1714 = vmatprep.subr.bf16.mxu0 0
    %1715 = vmatpush1.bf16.msra.mxu0 %v161
    %1716 = vmatprep.subr.bf16.mxu0 0
    %1717 = vmatpush1.bf16.msra.mxu0 %v162
    %1718 = vmatprep.subr.bf16.mxu0 0
    %1719 = vmatpush1.bf16.msra.mxu0 %v163
    %1720 = vmatprep.subr.bf16.mxu0 0
    %1721 = vmatpush1.bf16.msra.mxu0 %v164
    %1722 = vmatprep.subr.bf16.mxu0 0
    %1723 = vmatpush1.bf16.msra.mxu0 %v165
    %1724 = vmatprep.subr.bf16.mxu0 0
    %1725 = vmatpush1.bf16.msra.mxu0 %v166
    %1726 = vmatprep.subr.bf16.mxu0 0
    %1727 = vmatpush1.bf16.msra.mxu0 %v167
    %1728 = vmatprep.subr.bf16.mxu0 0
    %1729 = vmatpush1.bf16.msra.mxu0 %v168
    %1730 = vmatprep.subr.bf16.mxu0 0
    %1731 = vmatpush1.bf16.msra.mxu0 %v169
    %1732 = vmatprep.subr.bf16.mxu0 0
    %1733 = vmatpush1.bf16.msra.mxu0 %v170
    %1734 = vmatprep.subr.bf16.mxu0 0
    %1735 = vmatpush1.bf16.msra.mxu0 %v171
    %1736 = vmatprep.subr.bf16.mxu0 0
    %1737 = vmatpush1.bf16.msra.mxu0 %v172
    %1738 = vmatprep.subr.bf16.mxu0 0
    %1739 = vmatpush1.bf16.msra.mxu0 %v173
    %1740 = vmatprep.subr.bf16.mxu0 0
    %1741 = vmatpush1.bf16.msra.mxu0 %v174
    %1742 = vmatprep.subr.bf16.mxu0 0
    %1743 = vmatpush1.bf16.msra.mxu0 %v175
    %1744 = vmatprep.mubr.bf16.mxu0 %v1709
    %1745 = vmatmul.mubr.bf16.gmra.mrb[0].mxu0 %v1702
    %v1746 = vpop.f32.mrb[0].mxu0
    %v1747 = vadd.f32 0.0, %v1746
    %v1748 = vpop.f32.mrb[0].mxu0
    %v1749 = vpop.f32.mrb[0].mxu0
    %v1750 = vpop.f32.mrb[0].mxu0
    %1751 = vdwg.mxu0
    %s1752 = scalar_lea.vmem %s1, 8
    %v1753 = vld [vmem:[%s1752] sm:$0x3]
    %v1756 = vunpack.c.l.s4 1966171168
    %v1757 = vunpack.c.0.s8 %v1756
    %v1758 = vlaneseq
    %v1759 = vshrl.u32 %v1758, 7
    %v1760 = vsub.s32 %v1757, %v1759
    %v1761 = vrot.slane %v1753, %v1760
    %v1762 = vcombine.high %v1761, %v1761
    %v1764 = vunpack.c.l.s4 1966171168
    %v1765 = vunpack.c.0.s8 %v1764
    %v1766 = vlaneseq
    %v1767 = vshrl.u32 %v1766, 7
    %v1768 = vsub.s32 %v1765, %v1767
    %v1769 = vrot.slane %v1761, %v1768
    %v1771 = vunpack.c.l.s4 1966171168
    %v1772 = vunpack.c.0.s8 %v1771
    %v1773 = vlaneseq
    %v1774 = vshrl.u32 %v1773, 7
    %v1775 = vsub.s32 %v1772, %v1774
    %v1776 = vrot.slane %v1762, %v1775
    %1779 = vmatprep.subr.bf16.mxu0 0
    %1780 = vmatpush1.bf16.msra.mxu0 %v160
    %1781 = vmatprep.subr.bf16.mxu0 0
    %1782 = vmatpush1.bf16.msra.mxu0 %v161
    %1783 = vmatprep.subr.bf16.mxu0 0
    %1784 = vmatpush1.bf16.msra.mxu0 %v162
    %1785 = vmatprep.subr.bf16.mxu0 0
    %1786 = vmatpush1.bf16.msra.mxu0 %v163
    %1787 = vmatprep.subr.bf16.mxu0 0
    %1788 = vmatpush1.bf16.msra.mxu0 %v164
    %1789 = vmatprep.subr.bf16.mxu0 0
    %1790 = vmatpush1.bf16.msra.mxu0 %v165
    %1791 = vmatprep.subr.bf16.mxu0 0
    %1792 = vmatpush1.bf16.msra.mxu0 %v166
    %1793 = vmatprep.subr.bf16.mxu0 0
    %1794 = vmatpush1.bf16.msra.mxu0 %v167
    %1795 = vmatprep.subr.bf16.mxu0 0
    %1796 = vmatpush1.bf16.msra.mxu0 %v168
    %1797 = vmatprep.subr.bf16.mxu0 0
    %1798 = vmatpush1.bf16.msra.mxu0 %v169
    %1799 = vmatprep.subr.bf16.mxu0 0
    %1800 = vmatpush1.bf16.msra.mxu0 %v170
    %1801 = vmatprep.subr.bf16.mxu0 0
    %1802 = vmatpush1.bf16.msra.mxu0 %v171
    %1803 = vmatprep.subr.bf16.mxu0 0
    %1804 = vmatpush1.bf16.msra.mxu0 %v172
    %1805 = vmatprep.subr.bf16.mxu0 0
    %1806 = vmatpush1.bf16.msra.mxu0 %v173
    %1807 = vmatprep.subr.bf16.mxu0 0
    %1808 = vmatpush1.bf16.msra.mxu0 %v174
    %1809 = vmatprep.subr.bf16.mxu0 0
    %1810 = vmatpush1.bf16.msra.mxu0 %v175
    %1811 = vmatprep.mubr.bf16.mxu0 %v1776
    %1812 = vmatmul.mubr.bf16.gmra.mrb[0].mxu0 %v1769
    %v1813 = vpop.f32.mrb[0].mxu0
    %v1814 = vadd.f32 0.0, %v1813
    %v1815 = vpop.f32.mrb[0].mxu0
    %v1816 = vpop.f32.mrb[0].mxu0
    %v1817 = vpop.f32.mrb[0].mxu0
    %1818 = vdwg.mxu0
    %v1819 = vmax.f32 %v1747, %v1814
    %s1820 = scalar_lea.vmem %s2, 8
    %v1821 = vld [vmem:[%s1820] sm:$0x3]
    %v1824 = vunpack.c.l.s4 1966171168
    %v1825 = vunpack.c.0.s8 %v1824
    %v1826 = vlaneseq
    %v1827 = vshrl.u32 %v1826, 7
    %v1828 = vsub.s32 %v1825, %v1827
    %v1829 = vrot.slane %v1821, %v1828
    %v1830 = vcombine.high %v1829, %v1829
    %v1832 = vunpack.c.l.s4 1966171168
    %v1833 = vunpack.c.0.s8 %v1832
    %v1834 = vlaneseq
    %v1835 = vshrl.u32 %v1834, 7
    %v1836 = vsub.s32 %v1833, %v1835
    %v1837 = vrot.slane %v1829, %v1836
    %v1839 = vunpack.c.l.s4 1966171168
    %v1840 = vunpack.c.0.s8 %v1839
    %v1841 = vlaneseq
    %v1842 = vshrl.u32 %v1841, 7
    %v1843 = vsub.s32 %v1840, %v1842
    %v1844 = vrot.slane %v1830, %v1843
    %1847 = vmatprep.subr.bf16.mxu0 0
    %1848 = vmatpush1.bf16.msra.mxu0 %v160
    %1849 = vmatprep.subr.bf16.mxu0 0
    %1850 = vmatpush1.bf16.msra.mxu0 %v161
    %1851 = vmatprep.subr.bf16.mxu0 0
    %1852 = vmatpush1.bf16.msra.mxu0 %v162
    %1853 = vmatprep.subr.bf16.mxu0 0
    %1854 = vmatpush1.bf16.msra.mxu0 %v163
    %1855 = vmatprep.subr.bf16.mxu0 0
    %1856 = vmatpush1.bf16.msra.mxu0 %v164
    %1857 = vmatprep.subr.bf16.mxu0 0
    %1858 = vmatpush1.bf16.msra.mxu0 %v165
    %1859 = vmatprep.subr.bf16.mxu0 0
    %1860 = vmatpush1.bf16.msra.mxu0 %v166
    %1861 = vmatprep.subr.bf16.mxu0 0
    %1862 = vmatpush1.bf16.msra.mxu0 %v167
    %1863 = vmatprep.subr.bf16.mxu0 0
    %1864 = vmatpush1.bf16.msra.mxu0 %v168
    %1865 = vmatprep.subr.bf16.mxu0 0
    %1866 = vmatpush1.bf16.msra.mxu0 %v169
    %1867 = vmatprep.subr.bf16.mxu0 0
    %1868 = vmatpush1.bf16.msra.mxu0 %v170
    %1869 = vmatprep.subr.bf16.mxu0 0
    %1870 = vmatpush1.bf16.msra.mxu0 %v171
    %1871 = vmatprep.subr.bf16.mxu0 0
    %1872 = vmatpush1.bf16.msra.mxu0 %v172
    %1873 = vmatprep.subr.bf16.mxu0 0
    %1874 = vmatpush1.bf16.msra.mxu0 %v173
    %1875 = vmatprep.subr.bf16.mxu0 0
    %1876 = vmatpush1.bf16.msra.mxu0 %v174
    %1877 = vmatprep.subr.bf16.mxu0 0
    %1878 = vmatpush1.bf16.msra.mxu0 %v175
    %1879 = vmatprep.mubr.bf16.mxu0 %v1844
    %1880 = vmatmul.mubr.bf16.gmra.mrb[0].mxu0 %v1837
    %v1881 = vpop.f32.mrb[0].mxu0
    %v1882 = vadd.f32 0.0, %v1881
    %v1883 = vpop.f32.mrb[0].mxu0
    %v1884 = vpop.f32.mrb[0].mxu0
    %v1885 = vpop.f32.mrb[0].mxu0
    %1886 = vdwg.mxu0
    %s1887 = scalar_lea.vmem %s3, 8
    %v1888 = vld [vmem:[%s1887] sm:$0x3]
    %v1891 = vunpack.c.l.s4 1966171168
    %v1892 = vunpack.c.0.s8 %v1891
    %v1893 = vlaneseq
    %v1894 = vshrl.u32 %v1893, 7
    %v1895 = vsub.s32 %v1892, %v1894
    %v1896 = vrot.slane %v1888, %v1895
    %v1897 = vcombine.high %v1896, %v1896
    %v1899 = vunpack.c.l.s4 1966171168
    %v1900 = vunpack.c.0.s8 %v1899
    %v1901 = vlaneseq
    %v1902 = vshrl.u32 %v1901, 7
    %v1903 = vsub.s32 %v1900, %v1902
    %v1904 = vrot.slane %v1896, %v1903
    %v1906 = vunpack.c.l.s4 1966171168
    %v1907 = vunpack.c.0.s8 %v1906
    %v1908 = vlaneseq
    %v1909 = vshrl.u32 %v1908, 7
    %v1910 = vsub.s32 %v1907, %v1909
    %v1911 = vrot.slane %v1897, %v1910
    %1914 = vmatprep.subr.bf16.mxu0 0
    %1915 = vmatpush1.bf16.msra.mxu0 %v160
    %1916 = vmatprep.subr.bf16.mxu0 0
    %1917 = vmatpush1.bf16.msra.mxu0 %v161
    %1918 = vmatprep.subr.bf16.mxu0 0
    %1919 = vmatpush1.bf16.msra.mxu0 %v162
    %1920 = vmatprep.subr.bf16.mxu0 0
    %1921 = vmatpush1.bf16.msra.mxu0 %v163
    %1922 = vmatprep.subr.bf16.mxu0 0
    %1923 = vmatpush1.bf16.msra.mxu0 %v164
    %1924 = vmatprep.subr.bf16.mxu0 0
    %1925 = vmatpush1.bf16.msra.mxu0 %v165
    %1926 = vmatprep.subr.bf16.mxu0 0
    %1927 = vmatpush1.bf16.msra.mxu0 %v166
    %1928 = vmatprep.subr.bf16.mxu0 0
    %1929 = vmatpush1.bf16.msra.mxu0 %v167
    %1930 = vmatprep.subr.bf16.mxu0 0
    %1931 = vmatpush1.bf16.msra.mxu0 %v168
    %1932 = vmatprep.subr.bf16.mxu0 0
    %1933 = vmatpush1.bf16.msra.mxu0 %v169
    %1934 = vmatprep.subr.bf16.mxu0 0
    %1935 = vmatpush1.bf16.msra.mxu0 %v170
    %1936 = vmatprep.subr.bf16.mxu0 0
    %1937 = vmatpush1.bf16.msra.mxu0 %v171
    %1938 = vmatprep.subr.bf16.mxu0 0
    %1939 = vmatpush1.bf16.msra.mxu0 %v172
    %1940 = vmatprep.subr.bf16.mxu0 0
    %1941 = vmatpush1.bf16.msra.mxu0 %v173
    %1942 = vmatprep.subr.bf16.mxu0 0
    %1943 = vmatpush1.bf16.msra.mxu0 %v174
    %1944 = vmatprep.subr.bf16.mxu0 0
    %1945 = vmatpush1.bf16.msra.mxu0 %v175
    %1946 = vmatprep.mubr.bf16.mxu0 %v1911
    %1947 = vmatmul.mubr.bf16.gmra.mrb[0].mxu0 %v1904
    %v1948 = vpop.f32.mrb[0].mxu0
    %v1949 = vadd.f32 0.0, %v1948
    %v1950 = vpop.f32.mrb[0].mxu0
    %v1951 = vpop.f32.mrb[0].mxu0
    %v1952 = vpop.f32.mrb[0].mxu0
    %1953 = vdwg.mxu0
    %v1954 = vmax.f32 %v1882, %v1949
    %v1955 = vmax.f32 %v1819, %v1954
    %v1956 = vadd.f32 %v1955, %v437
    %v1957 = vmax.f32 %v1956, 0.0
    %v1958 = vpack.c.bf16 %v1957, %v1957
    %s1959 = scalar_lea.vmem %s6, 256
    %v1960 = vld [vmem:[%s1959] sm:$0xf]
    %v1961 = vld [vmem:[%s1959 + $0x4] sm:$0xf]
    %v1962 = vld [vmem:[%s1959 + $0x8] sm:$0xf]
    %v1963 = vld [vmem:[%s1959 + $0xc] sm:$0xf]
    %v1964 = vld [vmem:[%s1959 + $0x10] sm:$0xf]
    %v1965 = vld [vmem:[%s1959 + $0x14] sm:$0xf]
    %v1966 = vld [vmem:[%s1959 + $0x18] sm:$0xf]
    %v1967 = vld [vmem:[%s1959 + $0x1c] sm:$0xf]
    %v1968 = vld [vmem:[%s1959 + $0x20] sm:$0xf]
    %v1969 = vld [vmem:[%s1959 + $0x24] sm:$0xf]
    %v1970 = vld [vmem:[%s1959 + $0x28] sm:$0xf]
    %v1971 = vld [vmem:[%s1959 + $0x2c] sm:$0xf]
    %v1972 = vld [vmem:[%s1959 + $0x30] sm:$0xf]
    %v1973 = vld [vmem:[%s1959 + $0x34] sm:$0xf]
    %v1974 = vld [vmem:[%s1959 + $0x38] sm:$0xf]
    %v1975 = vld [vmem:[%s1959 + $0x3c] sm:$0xf]
    %v1992 = vunpack.c.l.b16 %v1960
    %v1993 = vunpack.c.l.b16 %v1961
    %v1994 = vunpack.c.l.b16 %v1962
    %v1995 = vunpack.c.l.b16 %v1963
    %v1996 = vunpack.c.l.b16 %v1964
    %v1997 = vunpack.c.l.b16 %v1965
    %v1998 = vunpack.c.l.b16 %v1966
    %v1999 = vunpack.c.l.b16 %v1967
    %v2000 = vunpack.c.l.b16 %v1968
    %v2001 = vunpack.c.l.b16 %v1969
    %v2002 = vunpack.c.l.b16 %v1970
    %v2003 = vunpack.c.l.b16 %v1971
    %v2004 = vunpack.c.l.b16 %v1972
    %v2005 = vunpack.c.l.b16 %v1973
    %v2006 = vunpack.c.l.b16 %v1974
    %v2007 = vunpack.c.l.b16 %v1975
    %v2008 = vpack.c.b16 %v1993, %v1992
    %v2009 = vpack.c.b16 %v1995, %v1994
    %v2010 = vpack.c.b16 %v1997, %v1996
    %v2011 = vpack.c.b16 %v1999, %v1998
    %v2012 = vpack.c.b16 %v2001, %v2000
    %v2013 = vpack.c.b16 %v2003, %v2002
    %v2014 = vpack.c.b16 %v2005, %v2004
    %v2015 = vpack.c.b16 %v2007, %v2006
    %2024 = vmatprep.subr.bf16.mxu0 0
    %2025 = vmatpush1.bf16.msra.mxu0 %v2008
    %2026 = vmatprep.subr.bf16.mxu0 0
    %2027 = vmatpush1.bf16.msra.mxu0 %v2009
    %2028 = vmatprep.subr.bf16.mxu0 0
    %2029 = vmatpush1.bf16.msra.mxu0 %v2010
    %2030 = vmatprep.subr.bf16.mxu0 0
    %2031 = vmatpush1.bf16.msra.mxu0 %v2011
    %2032 = vmatprep.subr.bf16.mxu0 0
    %2033 = vmatpush1.bf16.msra.mxu0 %v2012
    %2034 = vmatprep.subr.bf16.mxu0 0
    %2035 = vmatpush1.bf16.msra.mxu0 %v2013
    %2036 = vmatprep.subr.bf16.mxu0 0
    %2037 = vmatpush1.bf16.msra.mxu0 %v2014
    %2038 = vmatprep.subr.bf16.mxu0 0
    %2039 = vmatpush1.bf16.msra.mxu0 %v2015
    %2040 = vmatprep.subr.bf16.mxu0 0
    %2041 = vmatpush1.bf16.msra.mxu0 0
    %2042 = vmatprep.subr.bf16.mxu0 0
    %2043 = vmatpush1.bf16.msra.mxu0 0
    %2044 = vmatprep.subr.bf16.mxu0 0
    %2045 = vmatpush1.bf16.msra.mxu0 0
    %2046 = vmatprep.subr.bf16.mxu0 0
    %2047 = vmatpush1.bf16.msra.mxu0 0
    %2048 = vmatprep.subr.bf16.mxu0 0
    %2049 = vmatpush1.bf16.msra.mxu0 0
    %2050 = vmatprep.subr.bf16.mxu0 0
    %2051 = vmatpush1.bf16.msra.mxu0 0
    %2052 = vmatprep.subr.bf16.mxu0 0
    %2053 = vmatpush1.bf16.msra.mxu0 0
    %2054 = vmatprep.subr.bf16.mxu0 0
    %2055 = vmatpush1.bf16.msra.mxu0 0
    %2056 = vmatprep.mubr.bf16.mxu0 0
    %2057 = vmatmul.mubr.bf16.gmra.mrb[0].mxu0 %v1958
    %v2058 = vpop.f32.mrb[0].mxu0
    %v2059 = vadd.f32 0.0, %v2058
    %v2060 = vpop.f32.mrb[0].mxu0
    %v2061 = vpop.f32.mrb[0].mxu0
    %v2062 = vpop.f32.mrb[0].mxu0
    %2063 = vdwg.mxu0
    %v2064 = vadd.f32 %v1684, %v2059
    %s2065 = scalar_lea.vmem %s0, 10
    %v2066 = vld [vmem:[%s2065] sm:$0x3]
    %v2069 = vunpack.c.l.s4 1966171168
    %v2070 = vunpack.c.0.s8 %v2069
    %v2071 = vlaneseq
    %v2072 = vshrl.u32 %v2071, 7
    %v2073 = vsub.s32 %v2070, %v2072
    %v2074 = vrot.slane %v2066, %v2073
    %v2075 = vcombine.high %v2074, %v2074
    %v2077 = vunpack.c.l.s4 1966171168
    %v2078 = vunpack.c.0.s8 %v2077
    %v2079 = vlaneseq
    %v2080 = vshrl.u32 %v2079, 7
    %v2081 = vsub.s32 %v2078, %v2080
    %v2082 = vrot.slane %v2074, %v2081
    %v2084 = vunpack.c.l.s4 1966171168
    %v2085 = vunpack.c.0.s8 %v2084
    %v2086 = vlaneseq
    %v2087 = vshrl.u32 %v2086, 7
    %v2088 = vsub.s32 %v2085, %v2087
    %v2089 = vrot.slane %v2075, %v2088
    %2092 = vmatprep.subr.bf16.mxu0 0
    %2093 = vmatpush1.bf16.msra.mxu0 %v160
    %2094 = vmatprep.subr.bf16.mxu0 0
    %2095 = vmatpush1.bf16.msra.mxu0 %v161
    %2096 = vmatprep.subr.bf16.mxu0 0
    %2097 = vmatpush1.bf16.msra.mxu0 %v162
    %2098 = vmatprep.subr.bf16.mxu0 0
    %2099 = vmatpush1.bf16.msra.mxu0 %v163
    %2100 = vmatprep.subr.bf16.mxu0 0
    %2101 = vmatpush1.bf16.msra.mxu0 %v164
    %2102 = vmatprep.subr.bf16.mxu0 0
    %2103 = vmatpush1.bf16.msra.mxu0 %v165
    %2104 = vmatprep.subr.bf16.mxu0 0
    %2105 = vmatpush1.bf16.msra.mxu0 %v166
    %2106 = vmatprep.subr.bf16.mxu0 0
    %2107 = vmatpush1.bf16.msra.mxu0 %v167
    %2108 = vmatprep.subr.bf16.mxu0 0
    %2109 = vmatpush1.bf16.msra.mxu0 %v168
    %2110 = vmatprep.subr.bf16.mxu0 0
    %2111 = vmatpush1.bf16.msra.mxu0 %v169
    %2112 = vmatprep.subr.bf16.mxu0 0
    %2113 = vmatpush1.bf16.msra.mxu0 %v170
    %2114 = vmatprep.subr.bf16.mxu0 0
    %2115 = vmatpush1.bf16.msra.mxu0 %v171
    %2116 = vmatprep.subr.bf16.mxu0 0
    %2117 = vmatpush1.bf16.msra.mxu0 %v172
    %2118 = vmatprep.subr.bf16.mxu0 0
    %2119 = vmatpush1.bf16.msra.mxu0 %v173
    %2120 = vmatprep.subr.bf16.mxu0 0
    %2121 = vmatpush1.bf16.msra.mxu0 %v174
    %2122 = vmatprep.subr.bf16.mxu0 0
    %2123 = vmatpush1.bf16.msra.mxu0 %v175
    %2124 = vmatprep.mubr.bf16.mxu0 %v2089
    %2125 = vmatmul.mubr.bf16.gmra.mrb[0].mxu0 %v2082
    %v2126 = vpop.f32.mrb[0].mxu0
    %v2127 = vadd.f32 0.0, %v2126
    %v2128 = vpop.f32.mrb[0].mxu0
    %v2129 = vpop.f32.mrb[0].mxu0
    %v2130 = vpop.f32.mrb[0].mxu0
    %2131 = vdwg.mxu0
    %s2132 = scalar_lea.vmem %s1, 10
    %v2133 = vld [vmem:[%s2132] sm:$0x3]
    %v2136 = vunpack.c.l.s4 1966171168
    %v2137 = vunpack.c.0.s8 %v2136
    %v2138 = vlaneseq
    %v2139 = vshrl.u32 %v2138, 7
    %v2140 = vsub.s32 %v2137, %v2139
    %v2141 = vrot.slane %v2133, %v2140
    %v2142 = vcombine.high %v2141, %v2141
    %v2144 = vunpack.c.l.s4 1966171168
    %v2145 = vunpack.c.0.s8 %v2144
    %v2146 = vlaneseq
    %v2147 = vshrl.u32 %v2146, 7
    %v2148 = vsub.s32 %v2145, %v2147
    %v2149 = vrot.slane %v2141, %v2148
    %v2151 = vunpack.c.l.s4 1966171168
    %v2152 = vunpack.c.0.s8 %v2151
    %v2153 = vlaneseq
    %v2154 = vshrl.u32 %v2153, 7
    %v2155 = vsub.s32 %v2152, %v2154
    %v2156 = vrot.slane %v2142, %v2155
    %2159 = vmatprep.subr.bf16.mxu0 0
    %2160 = vmatpush1.bf16.msra.mxu0 %v160
    %2161 = vmatprep.subr.bf16.mxu0 0
    %2162 = vmatpush1.bf16.msra.mxu0 %v161
    %2163 = vmatprep.subr.bf16.mxu0 0
    %2164 = vmatpush1.bf16.msra.mxu0 %v162
    %2165 = vmatprep.subr.bf16.mxu0 0
    %2166 = vmatpush1.bf16.msra.mxu0 %v163
    %2167 = vmatprep.subr.bf16.mxu0 0
    %2168 = vmatpush1.bf16.msra.mxu0 %v164
    %2169 = vmatprep.subr.bf16.mxu0 0
    %2170 = vmatpush1.bf16.msra.mxu0 %v165
    %2171 = vmatprep.subr.bf16.mxu0 0
    %2172 = vmatpush1.bf16.msra.mxu0 %v166
    %2173 = vmatprep.subr.bf16.mxu0 0
    %2174 = vmatpush1.bf16.msra.mxu0 %v167
    %2175 = vmatprep.subr.bf16.mxu0 0
    %2176 = vmatpush1.bf16.msra.mxu0 %v168
    %2177 = vmatprep.subr.bf16.mxu0 0
    %2178 = vmatpush1.bf16.msra.mxu0 %v169
    %2179 = vmatprep.subr.bf16.mxu0 0
    %2180 = vmatpush1.bf16.msra.mxu0 %v170
    %2181 = vmatprep.subr.bf16.mxu0 0
    %2182 = vmatpush1.bf16.msra.mxu0 %v171
    %2183 = vmatprep.subr.bf16.mxu0 0
    %2184 = vmatpush1.bf16.msra.mxu0 %v172
    %2185 = vmatprep.subr.bf16.mxu0 0
    %2186 = vmatpush1.bf16.msra.mxu0 %v173
    %2187 = vmatprep.subr.bf16.mxu0 0
    %2188 = vmatpush1.bf16.msra.mxu0 %v174
    %2189 = vmatprep.subr.bf16.mxu0 0
    %2190 = vmatpush1.bf16.msra.mxu0 %v175
    %2191 = vmatprep.mubr.bf16.mxu0 %v2156
    %2192 = vmatmul.mubr.bf16.gmra.mrb[0].mxu0 %v2149
    %v2193 = vpop.f32.mrb[0].mxu0
    %v2194 = vadd.f32 0.0, %v2193
    %v2195 = vpop.f32.mrb[0].mxu0
    %v2196 = vpop.f32.mrb[0].mxu0
    %v2197 = vpop.f32.mrb[0].mxu0
    %2198 = vdwg.mxu0
    %v2199 = vmax.f32 %v2127, %v2194
    %s2200 = scalar_lea.vmem %s2, 10
    %v2201 = vld [vmem:[%s2200] sm:$0x3]
    %v2204 = vunpack.c.l.s4 1966171168
    %v2205 = vunpack.c.0.s8 %v2204
    %v2206 = vlaneseq
    %v2207 = vshrl.u32 %v2206, 7
    %v2208 = vsub.s32 %v2205, %v2207
    %v2209 = vrot.slane %v2201, %v2208
    %v2210 = vcombine.high %v2209, %v2209
    %v2212 = vunpack.c.l.s4 1966171168
    %v2213 = vunpack.c.0.s8 %v2212
    %v2214 = vlaneseq
    %v2215 = vshrl.u32 %v2214, 7
    %v2216 = vsub.s32 %v2213, %v2215
    %v2217 = vrot.slane %v2209, %v2216
    %v2219 = vunpack.c.l.s4 1966171168
    %v2220 = vunpack.c.0.s8 %v2219
    %v2221 = vlaneseq
    %v2222 = vshrl.u32 %v2221, 7
    %v2223 = vsub.s32 %v2220, %v2222
    %v2224 = vrot.slane %v2210, %v2223
    %2227 = vmatprep.subr.bf16.mxu0 0
    %2228 = vmatpush1.bf16.msra.mxu0 %v160
    %2229 = vmatprep.subr.bf16.mxu0 0
    %2230 = vmatpush1.bf16.msra.mxu0 %v161
    %2231 = vmatprep.subr.bf16.mxu0 0
    %2232 = vmatpush1.bf16.msra.mxu0 %v162
    %2233 = vmatprep.subr.bf16.mxu0 0
    %2234 = vmatpush1.bf16.msra.mxu0 %v163
    %2235 = vmatprep.subr.bf16.mxu0 0
    %2236 = vmatpush1.bf16.msra.mxu0 %v164
    %2237 = vmatprep.subr.bf16.mxu0 0
    %2238 = vmatpush1.bf16.msra.mxu0 %v165
    %2239 = vmatprep.subr.bf16.mxu0 0
    %2240 = vmatpush1.bf16.msra.mxu0 %v166
    %2241 = vmatprep.subr.bf16.mxu0 0
    %2242 = vmatpush1.bf16.msra.mxu0 %v167
    %2243 = vmatprep.subr.bf16.mxu0 0
    %2244 = vmatpush1.bf16.msra.mxu0 %v168
    %2245 = vmatprep.subr.bf16.mxu0 0
    %2246 = vmatpush1.bf16.msra.mxu0 %v169
    %2247 = vmatprep.subr.bf16.mxu0 0
    %2248 = vmatpush1.bf16.msra.mxu0 %v170
    %2249 = vmatprep.subr.bf16.mxu0 0
    %2250 = vmatpush1.bf16.msra.mxu0 %v171
    %2251 = vmatprep.subr.bf16.mxu0 0
    %2252 = vmatpush1.bf16.msra.mxu0 %v172
    %2253 = vmatprep.subr.bf16.mxu0 0
    %2254 = vmatpush1.bf16.msra.mxu0 %v173
    %2255 = vmatprep.subr.bf16.mxu0 0
    %2256 = vmatpush1.bf16.msra.mxu0 %v174
    %2257 = vmatprep.subr.bf16.mxu0 0
    %2258 = vmatpush1.bf16.msra.mxu0 %v175
    %2259 = vmatprep.mubr.bf16.mxu0 %v2224
    %2260 = vmatmul.mubr.bf16.gmra.mrb[0].mxu0 %v2217
    %v2261 = vpop.f32.mrb[0].mxu0
    %v2262 = vadd.f32 0.0, %v2261
    %v2263 = vpop.f32.mrb[0].mxu0
    %v2264 = vpop.f32.mrb[0].mxu0
    %v2265 = vpop.f32.mrb[0].mxu0
    %2266 = vdwg.mxu0
    %s2267 = scalar_lea.vmem %s3, 10
    %v2268 = vld [vmem:[%s2267] sm:$0x3]
    %v2271 = vunpack.c.l.s4 1966171168
    %v2272 = vunpack.c.0.s8 %v2271
    %v2273 = vlaneseq
    %v2274 = vshrl.u32 %v2273, 7
    %v2275 = vsub.s32 %v2272, %v2274
    %v2276 = vrot.slane %v2268, %v2275
    %v2277 = vcombine.high %v2276, %v2276
    %v2279 = vunpack.c.l.s4 1966171168
    %v2280 = vunpack.c.0.s8 %v2279
    %v2281 = vlaneseq
    %v2282 = vshrl.u32 %v2281, 7
    %v2283 = vsub.s32 %v2280, %v2282
    %v2284 = vrot.slane %v2276, %v2283
    %v2286 = vunpack.c.l.s4 1966171168
    %v2287 = vunpack.c.0.s8 %v2286
    %v2288 = vlaneseq
    %v2289 = vshrl.u32 %v2288, 7
    %v2290 = vsub.s32 %v2287, %v2289
    %v2291 = vrot.slane %v2277, %v2290
    %2294 = vmatprep.subr.bf16.mxu0 0
    %2295 = vmatpush1.bf16.msra.mxu0 %v160
    %2296 = vmatprep.subr.bf16.mxu0 0
    %2297 = vmatpush1.bf16.msra.mxu0 %v161
    %2298 = vmatprep.subr.bf16.mxu0 0
    %2299 = vmatpush1.bf16.msra.mxu0 %v162
    %2300 = vmatprep.subr.bf16.mxu0 0
    %2301 = vmatpush1.bf16.msra.mxu0 %v163
    %2302 = vmatprep.subr.bf16.mxu0 0
    %2303 = vmatpush1.bf16.msra.mxu0 %v164
    %2304 = vmatprep.subr.bf16.mxu0 0
    %2305 = vmatpush1.bf16.msra.mxu0 %v165
    %2306 = vmatprep.subr.bf16.mxu0 0
    %2307 = vmatpush1.bf16.msra.mxu0 %v166
    %2308 = vmatprep.subr.bf16.mxu0 0
    %2309 = vmatpush1.bf16.msra.mxu0 %v167
    %2310 = vmatprep.subr.bf16.mxu0 0
    %2311 = vmatpush1.bf16.msra.mxu0 %v168
    %2312 = vmatprep.subr.bf16.mxu0 0
    %2313 = vmatpush1.bf16.msra.mxu0 %v169
    %2314 = vmatprep.subr.bf16.mxu0 0
    %2315 = vmatpush1.bf16.msra.mxu0 %v170
    %2316 = vmatprep.subr.bf16.mxu0 0
    %2317 = vmatpush1.bf16.msra.mxu0 %v171
    %2318 = vmatprep.subr.bf16.mxu0 0
    %2319 = vmatpush1.bf16.msra.mxu0 %v172
    %2320 = vmatprep.subr.bf16.mxu0 0
    %2321 = vmatpush1.bf16.msra.mxu0 %v173
    %2322 = vmatprep.subr.bf16.mxu0 0
    %2323 = vmatpush1.bf16.msra.mxu0 %v174
    %2324 = vmatprep.subr.bf16.mxu0 0
    %2325 = vmatpush1.bf16.msra.mxu0 %v175
    %2326 = vmatprep.mubr.bf16.mxu0 %v2291
    %2327 = vmatmul.mubr.bf16.gmra.mrb[0].mxu0 %v2284
    %v2328 = vpop.f32.mrb[0].mxu0
    %v2329 = vadd.f32 0.0, %v2328
    %v2330 = vpop.f32.mrb[0].mxu0
    %v2331 = vpop.f32.mrb[0].mxu0
    %v2332 = vpop.f32.mrb[0].mxu0
    %2333 = vdwg.mxu0
    %v2334 = vmax.f32 %v2262, %v2329
    %v2335 = vmax.f32 %v2199, %v2334
    %v2336 = vadd.f32 %v2335, %v437
    %v2337 = vmax.f32 %v2336, 0.0
    %v2338 = vpack.c.bf16 %v2337, %v2337
    %s2339 = scalar_lea.vmem %s6, 320
    %v2340 = vld [vmem:[%s2339] sm:$0xf]
    %v2341 = vld [vmem:[%s2339 + $0x4] sm:$0xf]
    %v2342 = vld [vmem:[%s2339 + $0x8] sm:$0xf]
    %v2343 = vld [vmem:[%s2339 + $0xc] sm:$0xf]
    %v2344 = vld [vmem:[%s2339 + $0x10] sm:$0xf]
    %v2345 = vld [vmem:[%s2339 + $0x14] sm:$0xf]
    %v2346 = vld [vmem:[%s2339 + $0x18] sm:$0xf]
    %v2347 = vld [vmem:[%s2339 + $0x1c] sm:$0xf]
    %v2348 = vld [vmem:[%s2339 + $0x20] sm:$0xf]
    %v2349 = vld [vmem:[%s2339 + $0x24] sm:$0xf]
    %v2350 = vld [vmem:[%s2339 + $0x28] sm:$0xf]
    %v2351 = vld [vmem:[%s2339 + $0x2c] sm:$0xf]
    %v2352 = vld [vmem:[%s2339 + $0x30] sm:$0xf]
    %v2353 = vld [vmem:[%s2339 + $0x34] sm:$0xf]
    %v2354 = vld [vmem:[%s2339 + $0x38] sm:$0xf]
    %v2355 = vld [vmem:[%s2339 + $0x3c] sm:$0xf]
    %v2372 = vunpack.c.l.b16 %v2340
    %v2373 = vunpack.c.l.b16 %v2341
    %v2374 = vunpack.c.l.b16 %v2342
    %v2375 = vunpack.c.l.b16 %v2343
    %v2376 = vunpack.c.l.b16 %v2344
    %v2377 = vunpack.c.l.b16 %v2345
    %v2378 = vunpack.c.l.b16 %v2346
    %v2379 = vunpack.c.l.b16 %v2347
    %v2380 = vunpack.c.l.b16 %v2348
    %v2381 = vunpack.c.l.b16 %v2349
    %v2382 = vunpack.c.l.b16 %v2350
    %v2383 = vunpack.c.l.b16 %v2351
    %v2384 = vunpack.c.l.b16 %v2352
    %v2385 = vunpack.c.l.b16 %v2353
    %v2386 = vunpack.c.l.b16 %v2354
    %v2387 = vunpack.c.l.b16 %v2355
    %v2388 = vpack.c.b16 %v2373, %v2372
    %v2389 = vpack.c.b16 %v2375, %v2374
    %v2390 = vpack.c.b16 %v2377, %v2376
    %v2391 = vpack.c.b16 %v2379, %v2378
    %v2392 = vpack.c.b16 %v2381, %v2380
    %v2393 = vpack.c.b16 %v2383, %v2382
    %v2394 = vpack.c.b16 %v2385, %v2384
    %v2395 = vpack.c.b16 %v2387, %v2386
    %2404 = vmatprep.subr.bf16.mxu0 0
    %2405 = vmatpush1.bf16.msra.mxu0 %v2388
    %2406 = vmatprep.subr.bf16.mxu0 0
    %2407 = vmatpush1.bf16.msra.mxu0 %v2389
    %2408 = vmatprep.subr.bf16.mxu0 0
    %2409 = vmatpush1.bf16.msra.mxu0 %v2390
    %2410 = vmatprep.subr.bf16.mxu0 0
    %2411 = vmatpush1.bf16.msra.mxu0 %v2391
    %2412 = vmatprep.subr.bf16.mxu0 0
    %2413 = vmatpush1.bf16.msra.mxu0 %v2392
    %2414 = vmatprep.subr.bf16.mxu0 0
    %2415 = vmatpush1.bf16.msra.mxu0 %v2393
    %2416 = vmatprep.subr.bf16.mxu0 0
    %2417 = vmatpush1.bf16.msra.mxu0 %v2394
    %2418 = vmatprep.subr.bf16.mxu0 0
    %2419 = vmatpush1.bf16.msra.mxu0 %v2395
    %2420 = vmatprep.subr.bf16.mxu0 0
    %2421 = vmatpush1.bf16.msra.mxu0 0
    %2422 = vmatprep.subr.bf16.mxu0 0
    %2423 = vmatpush1.bf16.msra.mxu0 0
    %2424 = vmatprep.subr.bf16.mxu0 0
    %2425 = vmatpush1.bf16.msra.mxu0 0
    %2426 = vmatprep.subr.bf16.mxu0 0
    %2427 = vmatpush1.bf16.msra.mxu0 0
    %2428 = vmatprep.subr.bf16.mxu0 0
    %2429 = vmatpush1.bf16.msra.mxu0 0
    %2430 = vmatprep.subr.bf16.mxu0 0
    %2431 = vmatpush1.bf16.msra.mxu0 0
    %2432 = vmatprep.subr.bf16.mxu0 0
    %2433 = vmatpush1.bf16.msra.mxu0 0
    %2434 = vmatprep.subr.bf16.mxu0 0
    %2435 = vmatpush1.bf16.msra.mxu0 0
    %2436 = vmatprep.mubr.bf16.mxu0 0
    %2437 = vmatmul.mubr.bf16.gmra.mrb[0].mxu0 %v2338
    %v2438 = vpop.f32.mrb[0].mxu0
    %v2439 = vadd.f32 0.0, %v2438
    %v2440 = vpop.f32.mrb[0].mxu0
    %v2441 = vpop.f32.mrb[0].mxu0
    %v2442 = vpop.f32.mrb[0].mxu0
    %2443 = vdwg.mxu0
    %v2444 = vadd.f32 %v2064, %v2439
    %s2445 = scalar_lea.vmem %s0, 12
    %v2446 = vld [vmem:[%s2445] sm:$0x3]
    %v2449 = vunpack.c.l.s4 1966171168
    %v2450 = vunpack.c.0.s8 %v2449
    %v2451 = vlaneseq
    %v2452 = vshrl.u32 %v2451, 7
    %v2453 = vsub.s32 %v2450, %v2452
    %v2454 = vrot.slane %v2446, %v2453
    %v2455 = vcombine.high %v2454, %v2454
    %v2457 = vunpack.c.l.s4 1966171168
    %v2458 = vunpack.c.0.s8 %v2457
    %v2459 = vlaneseq
    %v2460 = vshrl.u32 %v2459, 7
    %v2461 = vsub.s32 %v2458, %v2460
    %v2462 = vrot.slane %v2454, %v2461
    %v2464 = vunpack.c.l.s4 1966171168
    %v2465 = vunpack.c.0.s8 %v2464
    %v2466 = vlaneseq
    %v2467 = vshrl.u32 %v2466, 7
    %v2468 = vsub.s32 %v2465, %v2467
    %v2469 = vrot.slane %v2455, %v2468
    %2472 = vmatprep.subr.bf16.mxu0 0
    %2473 = vmatpush1.bf16.msra.mxu0 %v160
    %2474 = vmatprep.subr.bf16.mxu0 0
    %2475 = vmatpush1.bf16.msra.mxu0 %v161
    %2476 = vmatprep.subr.bf16.mxu0 0
    %2477 = vmatpush1.bf16.msra.mxu0 %v162
    %2478 = vmatprep.subr.bf16.mxu0 0
    %2479 = vmatpush1.bf16.msra.mxu0 %v163
    %2480 = vmatprep.subr.bf16.mxu0 0
    %2481 = vmatpush1.bf16.msra.mxu0 %v164
    %2482 = vmatprep.subr.bf16.mxu0 0
    %2483 = vmatpush1.bf16.msra.mxu0 %v165
    %2484 = vmatprep.subr.bf16.mxu0 0
    %2485 = vmatpush1.bf16.msra.mxu0 %v166
    %2486 = vmatprep.subr.bf16.mxu0 0
    %2487 = vmatpush1.bf16.msra.mxu0 %v167
    %2488 = vmatprep.subr.bf16.mxu0 0
    %2489 = vmatpush1.bf16.msra.mxu0 %v168
    %2490 = vmatprep.subr.bf16.mxu0 0
    %2491 = vmatpush1.bf16.msra.mxu0 %v169
    %2492 = vmatprep.subr.bf16.mxu0 0
    %2493 = vmatpush1.bf16.msra.mxu0 %v170
    %2494 = vmatprep.subr.bf16.mxu0 0
    %2495 = vmatpush1.bf16.msra.mxu0 %v171
    %2496 = vmatprep.subr.bf16.mxu0 0
    %2497 = vmatpush1.bf16.msra.mxu0 %v172
    %2498 = vmatprep.subr.bf16.mxu0 0
    %2499 = vmatpush1.bf16.msra.mxu0 %v173
    %2500 = vmatprep.subr.bf16.mxu0 0
    %2501 = vmatpush1.bf16.msra.mxu0 %v174
    %2502 = vmatprep.subr.bf16.mxu0 0
    %2503 = vmatpush1.bf16.msra.mxu0 %v175
    %2504 = vmatprep.mubr.bf16.mxu0 %v2469
    %2505 = vmatmul.mubr.bf16.gmra.mrb[0].mxu0 %v2462
    %v2506 = vpop.f32.mrb[0].mxu0
    %v2507 = vadd.f32 0.0, %v2506
    %v2508 = vpop.f32.mrb[0].mxu0
    %v2509 = vpop.f32.mrb[0].mxu0
    %v2510 = vpop.f32.mrb[0].mxu0
    %2511 = vdwg.mxu0
    %s2512 = scalar_lea.vmem %s1, 12
    %v2513 = vld [vmem:[%s2512] sm:$0x3]
    %v2516 = vunpack.c.l.s4 1966171168
    %v2517 = vunpack.c.0.s8 %v2516
    %v2518 = vlaneseq
    %v2519 = vshrl.u32 %v2518, 7
    %v2520 = vsub.s32 %v2517, %v2519
    %v2521 = vrot.slane %v2513, %v2520
    %v2522 = vcombine.high %v2521, %v2521
    %v2524 = vunpack.c.l.s4 1966171168
    %v2525 = vunpack.c.0.s8 %v2524
    %v2526 = vlaneseq
    %v2527 = vshrl.u32 %v2526, 7
    %v2528 = vsub.s32 %v2525, %v2527
    %v2529 = vrot.slane %v2521, %v2528
    %v2531 = vunpack.c.l.s4 1966171168
    %v2532 = vunpack.c.0.s8 %v2531
    %v2533 = vlaneseq
    %v2534 = vshrl.u32 %v2533, 7
    %v2535 = vsub.s32 %v2532, %v2534
    %v2536 = vrot.slane %v2522, %v2535
    %2539 = vmatprep.subr.bf16.mxu0 0
    %2540 = vmatpush1.bf16.msra.mxu0 %v160
    %2541 = vmatprep.subr.bf16.mxu0 0
    %2542 = vmatpush1.bf16.msra.mxu0 %v161
    %2543 = vmatprep.subr.bf16.mxu0 0
    %2544 = vmatpush1.bf16.msra.mxu0 %v162
    %2545 = vmatprep.subr.bf16.mxu0 0
    %2546 = vmatpush1.bf16.msra.mxu0 %v163
    %2547 = vmatprep.subr.bf16.mxu0 0
    %2548 = vmatpush1.bf16.msra.mxu0 %v164
    %2549 = vmatprep.subr.bf16.mxu0 0
    %2550 = vmatpush1.bf16.msra.mxu0 %v165
    %2551 = vmatprep.subr.bf16.mxu0 0
    %2552 = vmatpush1.bf16.msra.mxu0 %v166
    %2553 = vmatprep.subr.bf16.mxu0 0
    %2554 = vmatpush1.bf16.msra.mxu0 %v167
    %2555 = vmatprep.subr.bf16.mxu0 0
    %2556 = vmatpush1.bf16.msra.mxu0 %v168
    %2557 = vmatprep.subr.bf16.mxu0 0
    %2558 = vmatpush1.bf16.msra.mxu0 %v169
    %2559 = vmatprep.subr.bf16.mxu0 0
    %2560 = vmatpush1.bf16.msra.mxu0 %v170
    %2561 = vmatprep.subr.bf16.mxu0 0
    %2562 = vmatpush1.bf16.msra.mxu0 %v171
    %2563 = vmatprep.subr.bf16.mxu0 0
    %2564 = vmatpush1.bf16.msra.mxu0 %v172
    %2565 = vmatprep.subr.bf16.mxu0 0
    %2566 = vmatpush1.bf16.msra.mxu0 %v173
    %2567 = vmatprep.subr.bf16.mxu0 0
    %2568 = vmatpush1.bf16.msra.mxu0 %v174
    %2569 = vmatprep.subr.bf16.mxu0 0
    %2570 = vmatpush1.bf16.msra.mxu0 %v175
    %2571 = vmatprep.mubr.bf16.mxu0 %v2536
    %2572 = vmatmul.mubr.bf16.gmra.mrb[0].mxu0 %v2529
    %v2573 = vpop.f32.mrb[0].mxu0
    %v2574 = vadd.f32 0.0, %v2573
    %v2575 = vpop.f32.mrb[0].mxu0
    %v2576 = vpop.f32.mrb[0].mxu0
    %v2577 = vpop.f32.mrb[0].mxu0
    %2578 = vdwg.mxu0
    %v2579 = vmax.f32 %v2507, %v2574
    %s2580 = scalar_lea.vmem %s2, 12
    %v2581 = vld [vmem:[%s2580] sm:$0x3]
    %v2584 = vunpack.c.l.s4 1966171168
    %v2585 = vunpack.c.0.s8 %v2584
    %v2586 = vlaneseq
    %v2587 = vshrl.u32 %v2586, 7
    %v2588 = vsub.s32 %v2585, %v2587
    %v2589 = vrot.slane %v2581, %v2588
    %v2590 = vcombine.high %v2589, %v2589
    %v2592 = vunpack.c.l.s4 1966171168
    %v2593 = vunpack.c.0.s8 %v2592
    %v2594 = vlaneseq
    %v2595 = vshrl.u32 %v2594, 7
    %v2596 = vsub.s32 %v2593, %v2595
    %v2597 = vrot.slane %v2589, %v2596
    %v2599 = vunpack.c.l.s4 1966171168
    %v2600 = vunpack.c.0.s8 %v2599
    %v2601 = vlaneseq
    %v2602 = vshrl.u32 %v2601, 7
    %v2603 = vsub.s32 %v2600, %v2602
    %v2604 = vrot.slane %v2590, %v2603
    %2607 = vmatprep.subr.bf16.mxu0 0
    %2608 = vmatpush1.bf16.msra.mxu0 %v160
    %2609 = vmatprep.subr.bf16.mxu0 0
    %2610 = vmatpush1.bf16.msra.mxu0 %v161
    %2611 = vmatprep.subr.bf16.mxu0 0
    %2612 = vmatpush1.bf16.msra.mxu0 %v162
    %2613 = vmatprep.subr.bf16.mxu0 0
    %2614 = vmatpush1.bf16.msra.mxu0 %v163
    %2615 = vmatprep.subr.bf16.mxu0 0
    %2616 = vmatpush1.bf16.msra.mxu0 %v164
    %2617 = vmatprep.subr.bf16.mxu0 0
    %2618 = vmatpush1.bf16.msra.mxu0 %v165
    %2619 = vmatprep.subr.bf16.mxu0 0
    %2620 = vmatpush1.bf16.msra.mxu0 %v166
    %2621 = vmatprep.subr.bf16.mxu0 0
    %2622 = vmatpush1.bf16.msra.mxu0 %v167
    %2623 = vmatprep.subr.bf16.mxu0 0
    %2624 = vmatpush1.bf16.msra.mxu0 %v168
    %2625 = vmatprep.subr.bf16.mxu0 0
    %2626 = vmatpush1.bf16.msra.mxu0 %v169
    %2627 = vmatprep.subr.bf16.mxu0 0
    %2628 = vmatpush1.bf16.msra.mxu0 %v170
    %2629 = vmatprep.subr.bf16.mxu0 0
    %2630 = vmatpush1.bf16.msra.mxu0 %v171
    %2631 = vmatprep.subr.bf16.mxu0 0
    %2632 = vmatpush1.bf16.msra.mxu0 %v172
    %2633 = vmatprep.subr.bf16.mxu0 0
    %2634 = vmatpush1.bf16.msra.mxu0 %v173
    %2635 = vmatprep.subr.bf16.mxu0 0
    %2636 = vmatpush1.bf16.msra.mxu0 %v174
    %2637 = vmatprep.subr.bf16.mxu0 0
    %2638 = vmatpush1.bf16.msra.mxu0 %v175
    %2639 = vmatprep.mubr.bf16.mxu0 %v2604
    %2640 = vmatmul.mubr.bf16.gmra.mrb[0].mxu0 %v2597
    %v2641 = vpop.f32.mrb[0].mxu0
    %v2642 = vadd.f32 0.0, %v2641
    %v2643 = vpop.f32.mrb[0].mxu0
    %v2644 = vpop.f32.mrb[0].mxu0
    %v2645 = vpop.f32.mrb[0].mxu0
    %2646 = vdwg.mxu0
    %s2647 = scalar_lea.vmem %s3, 12
    %v2648 = vld [vmem:[%s2647] sm:$0x3]
    %v2651 = vunpack.c.l.s4 1966171168
    %v2652 = vunpack.c.0.s8 %v2651
    %v2653 = vlaneseq
    %v2654 = vshrl.u32 %v2653, 7
    %v2655 = vsub.s32 %v2652, %v2654
    %v2656 = vrot.slane %v2648, %v2655
    %v2657 = vcombine.high %v2656, %v2656
    %v2659 = vunpack.c.l.s4 1966171168
    %v2660 = vunpack.c.0.s8 %v2659
    %v2661 = vlaneseq
    %v2662 = vshrl.u32 %v2661, 7
    %v2663 = vsub.s32 %v2660, %v2662
    %v2664 = vrot.slane %v2656, %v2663
    %v2666 = vunpack.c.l.s4 1966171168
    %v2667 = vunpack.c.0.s8 %v2666
    %v2668 = vlaneseq
    %v2669 = vshrl.u32 %v2668, 7
    %v2670 = vsub.s32 %v2667, %v2669
    %v2671 = vrot.slane %v2657, %v2670
    %2674 = vmatprep.subr.bf16.mxu0 0
    %2675 = vmatpush1.bf16.msra.mxu0 %v160
    %2676 = vmatprep.subr.bf16.mxu0 0
    %2677 = vmatpush1.bf16.msra.mxu0 %v161
    %2678 = vmatprep.subr.bf16.mxu0 0
    %2679 = vmatpush1.bf16.msra.mxu0 %v162
    %2680 = vmatprep.subr.bf16.mxu0 0
    %2681 = vmatpush1.bf16.msra.mxu0 %v163
    %2682 = vmatprep.subr.bf16.mxu0 0
    %2683 = vmatpush1.bf16.msra.mxu0 %v164
    %2684 = vmatprep.subr.bf16.mxu0 0
    %2685 = vmatpush1.bf16.msra.mxu0 %v165
    %2686 = vmatprep.subr.bf16.mxu0 0
    %2687 = vmatpush1.bf16.msra.mxu0 %v166
    %2688 = vmatprep.subr.bf16.mxu0 0
    %2689 = vmatpush1.bf16.msra.mxu0 %v167
    %2690 = vmatprep.subr.bf16.mxu0 0
    %2691 = vmatpush1.bf16.msra.mxu0 %v168
    %2692 = vmatprep.subr.bf16.mxu0 0
    %2693 = vmatpush1.bf16.msra.mxu0 %v169
    %2694 = vmatprep.subr.bf16.mxu0 0
    %2695 = vmatpush1.bf16.msra.mxu0 %v170
    %2696 = vmatprep.subr.bf16.mxu0 0
    %2697 = vmatpush1.bf16.msra.mxu0 %v171
    %2698 = vmatprep.subr.bf16.mxu0 0
    %2699 = vmatpush1.bf16.msra.mxu0 %v172
    %2700 = vmatprep.subr.bf16.mxu0 0
    %2701 = vmatpush1.bf16.msra.mxu0 %v173
    %2702 = vmatprep.subr.bf16.mxu0 0
    %2703 = vmatpush1.bf16.msra.mxu0 %v174
    %2704 = vmatprep.subr.bf16.mxu0 0
    %2705 = vmatpush1.bf16.msra.mxu0 %v175
    %2706 = vmatprep.mubr.bf16.mxu0 %v2671
    %2707 = vmatmul.mubr.bf16.gmra.mrb[0].mxu0 %v2664
    %v2708 = vpop.f32.mrb[0].mxu0
    %v2709 = vadd.f32 0.0, %v2708
    %v2710 = vpop.f32.mrb[0].mxu0
    %v2711 = vpop.f32.mrb[0].mxu0
    %v2712 = vpop.f32.mrb[0].mxu0
    %2713 = vdwg.mxu0
    %v2714 = vmax.f32 %v2642, %v2709
    %v2715 = vmax.f32 %v2579, %v2714
    %v2716 = vadd.f32 %v2715, %v437
    %v2717 = vmax.f32 %v2716, 0.0
    %v2718 = vpack.c.bf16 %v2717, %v2717
    %s2719 = scalar_lea.vmem %s6, 384
    %v2720 = vld [vmem:[%s2719] sm:$0xf]
    %v2721 = vld [vmem:[%s2719 + $0x4] sm:$0xf]
    %v2722 = vld [vmem:[%s2719 + $0x8] sm:$0xf]
    %v2723 = vld [vmem:[%s2719 + $0xc] sm:$0xf]
    %v2724 = vld [vmem:[%s2719 + $0x10] sm:$0xf]
    %v2725 = vld [vmem:[%s2719 + $0x14] sm:$0xf]
    %v2726 = vld [vmem:[%s2719 + $0x18] sm:$0xf]
    %v2727 = vld [vmem:[%s2719 + $0x1c] sm:$0xf]
    %v2728 = vld [vmem:[%s2719 + $0x20] sm:$0xf]
    %v2729 = vld [vmem:[%s2719 + $0x24] sm:$0xf]
    %v2730 = vld [vmem:[%s2719 + $0x28] sm:$0xf]
    %v2731 = vld [vmem:[%s2719 + $0x2c] sm:$0xf]
    %v2732 = vld [vmem:[%s2719 + $0x30] sm:$0xf]
    %v2733 = vld [vmem:[%s2719 + $0x34] sm:$0xf]
    %v2734 = vld [vmem:[%s2719 + $0x38] sm:$0xf]
    %v2735 = vld [vmem:[%s2719 + $0x3c] sm:$0xf]
    %v2752 = vunpack.c.l.b16 %v2720
    %v2753 = vunpack.c.l.b16 %v2721
    %v2754 = vunpack.c.l.b16 %v2722
    %v2755 = vunpack.c.l.b16 %v2723
    %v2756 = vunpack.c.l.b16 %v2724
    %v2757 = vunpack.c.l.b16 %v2725
    %v2758 = vunpack.c.l.b16 %v2726
    %v2759 = vunpack.c.l.b16 %v2727
    %v2760 = vunpack.c.l.b16 %v2728
    %v2761 = vunpack.c.l.b16 %v2729
    %v2762 = vunpack.c.l.b16 %v2730
    %v2763 = vunpack.c.l.b16 %v2731
    %v2764 = vunpack.c.l.b16 %v2732
    %v2765 = vunpack.c.l.b16 %v2733
    %v2766 = vunpack.c.l.b16 %v2734
    %v2767 = vunpack.c.l.b16 %v2735
    %v2768 = vpack.c.b16 %v2753, %v2752
    %v2769 = vpack.c.b16 %v2755, %v2754
    %v2770 = vpack.c.b16 %v2757, %v2756
    %v2771 = vpack.c.b16 %v2759, %v2758
    %v2772 = vpack.c.b16 %v2761, %v2760
    %v2773 = vpack.c.b16 %v2763, %v2762
    %v2774 = vpack.c.b16 %v2765, %v2764
    %v2775 = vpack.c.b16 %v2767, %v2766
    %2784 = vmatprep.subr.bf16.mxu0 0
    %2785 = vmatpush1.bf16.msra.mxu0 %v2768
    %2786 = vmatprep.subr.bf16.mxu0 0
    %2787 = vmatpush1.bf16.msra.mxu0 %v2769
    %2788 = vmatprep.subr.bf16.mxu0 0
    %2789 = vmatpush1.bf16.msra.mxu0 %v2770
    %2790 = vmatprep.subr.bf16.mxu0 0
    %2791 = vmatpush1.bf16.msra.mxu0 %v2771
    %2792 = vmatprep.subr.bf16.mxu0 0
    %2793 = vmatpush1.bf16.msra.mxu0 %v2772
    %2794 = vmatprep.subr.bf16.mxu0 0
    %2795 = vmatpush1.bf16.msra.mxu0 %v2773
    %2796 = vmatprep.subr.bf16.mxu0 0
    %2797 = vmatpush1.bf16.msra.mxu0 %v2774
    %2798 = vmatprep.subr.bf16.mxu0 0
    %2799 = vmatpush1.bf16.msra.mxu0 %v2775
    %2800 = vmatprep.subr.bf16.mxu0 0
    %2801 = vmatpush1.bf16.msra.mxu0 0
    %2802 = vmatprep.subr.bf16.mxu0 0
    %2803 = vmatpush1.bf16.msra.mxu0 0
    %2804 = vmatprep.subr.bf16.mxu0 0
    %2805 = vmatpush1.bf16.msra.mxu0 0
    %2806 = vmatprep.subr.bf16.mxu0 0
    %2807 = vmatpush1.bf16.msra.mxu0 0
    %2808 = vmatprep.subr.bf16.mxu0 0
    %2809 = vmatpush1.bf16.msra.mxu0 0
    %2810 = vmatprep.subr.bf16.mxu0 0
    %2811 = vmatpush1.bf16.msra.mxu0 0
    %2812 = vmatprep.subr.bf16.mxu0 0
    %2813 = vmatpush1.bf16.msra.mxu0 0
    %2814 = vmatprep.subr.bf16.mxu0 0
    %2815 = vmatpush1.bf16.msra.mxu0 0
    %2816 = vmatprep.mubr.bf16.mxu0 0
    %2817 = vmatmul.mubr.bf16.gmra.mrb[0].mxu0 %v2718
    %v2818 = vpop.f32.mrb[0].mxu0
    %v2819 = vadd.f32 0.0, %v2818
    %v2820 = vpop.f32.mrb[0].mxu0
    %v2821 = vpop.f32.mrb[0].mxu0
    %v2822 = vpop.f32.mrb[0].mxu0
    %2823 = vdwg.mxu0
    %v2824 = vadd.f32 %v2444, %v2819
    %s2825 = scalar_lea.vmem %s0, 14
    %v2826 = vld [vmem:[%s2825] sm:$0x3]
    %v2829 = vunpack.c.l.s4 1966171168
    %v2830 = vunpack.c.0.s8 %v2829
    %v2831 = vlaneseq
    %v2832 = vshrl.u32 %v2831, 7
    %v2833 = vsub.s32 %v2830, %v2832
    %v2834 = vrot.slane %v2826, %v2833
    %v2835 = vcombine.high %v2834, %v2834
    %v2837 = vunpack.c.l.s4 1966171168
    %v2838 = vunpack.c.0.s8 %v2837
    %v2839 = vlaneseq
    %v2840 = vshrl.u32 %v2839, 7
    %v2841 = vsub.s32 %v2838, %v2840
    %v2842 = vrot.slane %v2834, %v2841
    %v2844 = vunpack.c.l.s4 1966171168
    %v2845 = vunpack.c.0.s8 %v2844
    %v2846 = vlaneseq
    %v2847 = vshrl.u32 %v2846, 7
    %v2848 = vsub.s32 %v2845, %v2847
    %v2849 = vrot.slane %v2835, %v2848
    %2852 = vmatprep.subr.bf16.mxu0 0
    %2853 = vmatpush1.bf16.msra.mxu0 %v160
    %2854 = vmatprep.subr.bf16.mxu0 0
    %2855 = vmatpush1.bf16.msra.mxu0 %v161
    %2856 = vmatprep.subr.bf16.mxu0 0
    %2857 = vmatpush1.bf16.msra.mxu0 %v162
    %2858 = vmatprep.subr.bf16.mxu0 0
    %2859 = vmatpush1.bf16.msra.mxu0 %v163
    %2860 = vmatprep.subr.bf16.mxu0 0
    %2861 = vmatpush1.bf16.msra.mxu0 %v164
    %2862 = vmatprep.subr.bf16.mxu0 0
    %2863 = vmatpush1.bf16.msra.mxu0 %v165
    %2864 = vmatprep.subr.bf16.mxu0 0
    %2865 = vmatpush1.bf16.msra.mxu0 %v166
    %2866 = vmatprep.subr.bf16.mxu0 0
    %2867 = vmatpush1.bf16.msra.mxu0 %v167
    %2868 = vmatprep.subr.bf16.mxu0 0
    %2869 = vmatpush1.bf16.msra.mxu0 %v168
    %2870 = vmatprep.subr.bf16.mxu0 0
    %2871 = vmatpush1.bf16.msra.mxu0 %v169
    %2872 = vmatprep.subr.bf16.mxu0 0
    %2873 = vmatpush1.bf16.msra.mxu0 %v170
    %2874 = vmatprep.subr.bf16.mxu0 0
    %2875 = vmatpush1.bf16.msra.mxu0 %v171
    %2876 = vmatprep.subr.bf16.mxu0 0
    %2877 = vmatpush1.bf16.msra.mxu0 %v172
    %2878 = vmatprep.subr.bf16.mxu0 0
    %2879 = vmatpush1.bf16.msra.mxu0 %v173
    %2880 = vmatprep.subr.bf16.mxu0 0
    %2881 = vmatpush1.bf16.msra.mxu0 %v174
    %2882 = vmatprep.subr.bf16.mxu0 0
    %2883 = vmatpush1.bf16.msra.mxu0 %v175
    %2884 = vmatprep.mubr.bf16.mxu0 %v2849
    %2885 = vmatmul.mubr.bf16.gmra.mrb[0].mxu0 %v2842
    %v2886 = vpop.f32.mrb[0].mxu0
    %v2887 = vadd.f32 0.0, %v2886
    %v2888 = vpop.f32.mrb[0].mxu0
    %v2889 = vpop.f32.mrb[0].mxu0
    %v2890 = vpop.f32.mrb[0].mxu0
    %2891 = vdwg.mxu0
    %s2892 = scalar_lea.vmem %s1, 14
    %v2893 = vld [vmem:[%s2892] sm:$0x3]
    %v2896 = vunpack.c.l.s4 1966171168
    %v2897 = vunpack.c.0.s8 %v2896
    %v2898 = vlaneseq
    %v2899 = vshrl.u32 %v2898, 7
    %v2900 = vsub.s32 %v2897, %v2899
    %v2901 = vrot.slane %v2893, %v2900
    %v2902 = vcombine.high %v2901, %v2901
    %v2904 = vunpack.c.l.s4 1966171168
    %v2905 = vunpack.c.0.s8 %v2904
    %v2906 = vlaneseq
    %v2907 = vshrl.u32 %v2906, 7
    %v2908 = vsub.s32 %v2905, %v2907
    %v2909 = vrot.slane %v2901, %v2908
    %v2911 = vunpack.c.l.s4 1966171168
    %v2912 = vunpack.c.0.s8 %v2911
    %v2913 = vlaneseq
    %v2914 = vshrl.u32 %v2913, 7
    %v2915 = vsub.s32 %v2912, %v2914
    %v2916 = vrot.slane %v2902, %v2915
    %2919 = vmatprep.subr.bf16.mxu0 0
    %2920 = vmatpush1.bf16.msra.mxu0 %v160
    %2921 = vmatprep.subr.bf16.mxu0 0
    %2922 = vmatpush1.bf16.msra.mxu0 %v161
    %2923 = vmatprep.subr.bf16.mxu0 0
    %2924 = vmatpush1.bf16.msra.mxu0 %v162
    %2925 = vmatprep.subr.bf16.mxu0 0
    %2926 = vmatpush1.bf16.msra.mxu0 %v163
    %2927 = vmatprep.subr.bf16.mxu0 0
    %2928 = vmatpush1.bf16.msra.mxu0 %v164
    %2929 = vmatprep.subr.bf16.mxu0 0
    %2930 = vmatpush1.bf16.msra.mxu0 %v165
    %2931 = vmatprep.subr.bf16.mxu0 0
    %2932 = vmatpush1.bf16.msra.mxu0 %v166
    %2933 = vmatprep.subr.bf16.mxu0 0
    %2934 = vmatpush1.bf16.msra.mxu0 %v167
    %2935 = vmatprep.subr.bf16.mxu0 0
    %2936 = vmatpush1.bf16.msra.mxu0 %v168
    %2937 = vmatprep.subr.bf16.mxu0 0
    %2938 = vmatpush1.bf16.msra.mxu0 %v169
    %2939 = vmatprep.subr.bf16.mxu0 0
    %2940 = vmatpush1.bf16.msra.mxu0 %v170
    %2941 = vmatprep.subr.bf16.mxu0 0
    %2942 = vmatpush1.bf16.msra.mxu0 %v171
    %2943 = vmatprep.subr.bf16.mxu0 0
    %2944 = vmatpush1.bf16.msra.mxu0 %v172
    %2945 = vmatprep.subr.bf16.mxu0 0
    %2946 = vmatpush1.bf16.msra.mxu0 %v173
    %2947 = vmatprep.subr.bf16.mxu0 0
    %2948 = vmatpush1.bf16.msra.mxu0 %v174
    %2949 = vmatprep.subr.bf16.mxu0 0
    %2950 = vmatpush1.bf16.msra.mxu0 %v175
    %2951 = vmatprep.mubr.bf16.mxu0 %v2916
    %2952 = vmatmul.mubr.bf16.gmra.mrb[0].mxu0 %v2909
    %v2953 = vpop.f32.mrb[0].mxu0
    %v2954 = vadd.f32 0.0, %v2953
    %v2955 = vpop.f32.mrb[0].mxu0
    %v2956 = vpop.f32.mrb[0].mxu0
    %v2957 = vpop.f32.mrb[0].mxu0
    %2958 = vdwg.mxu0
    %v2959 = vmax.f32 %v2887, %v2954
    %s2960 = scalar_lea.vmem %s2, 14
    %v2961 = vld [vmem:[%s2960] sm:$0x3]
    %v2964 = vunpack.c.l.s4 1966171168
    %v2965 = vunpack.c.0.s8 %v2964
    %v2966 = vlaneseq
    %v2967 = vshrl.u32 %v2966, 7
    %v2968 = vsub.s32 %v2965, %v2967
    %v2969 = vrot.slane %v2961, %v2968
    %v2970 = vcombine.high %v2969, %v2969
    %v2972 = vunpack.c.l.s4 1966171168
    %v2973 = vunpack.c.0.s8 %v2972
    %v2974 = vlaneseq
    %v2975 = vshrl.u32 %v2974, 7
    %v2976 = vsub.s32 %v2973, %v2975
    %v2977 = vrot.slane %v2969, %v2976
    %v2979 = vunpack.c.l.s4 1966171168
    %v2980 = vunpack.c.0.s8 %v2979
    %v2981 = vlaneseq
    %v2982 = vshrl.u32 %v2981, 7
    %v2983 = vsub.s32 %v2980, %v2982
    %v2984 = vrot.slane %v2970, %v2983
    %2987 = vmatprep.subr.bf16.mxu0 0
    %2988 = vmatpush1.bf16.msra.mxu0 %v160
    %2989 = vmatprep.subr.bf16.mxu0 0
    %2990 = vmatpush1.bf16.msra.mxu0 %v161
    %2991 = vmatprep.subr.bf16.mxu0 0
    %2992 = vmatpush1.bf16.msra.mxu0 %v162
    %2993 = vmatprep.subr.bf16.mxu0 0
    %2994 = vmatpush1.bf16.msra.mxu0 %v163
    %2995 = vmatprep.subr.bf16.mxu0 0
    %2996 = vmatpush1.bf16.msra.mxu0 %v164
    %2997 = vmatprep.subr.bf16.mxu0 0
    %2998 = vmatpush1.bf16.msra.mxu0 %v165
    %2999 = vmatprep.subr.bf16.mxu0 0
    %3000 = vmatpush1.bf16.msra.mxu0 %v166
    %3001 = vmatprep.subr.bf16.mxu0 0
    %3002 = vmatpush1.bf16.msra.mxu0 %v167
    %3003 = vmatprep.subr.bf16.mxu0 0
    %3004 = vmatpush1.bf16.msra.mxu0 %v168
    %3005 = vmatprep.subr.bf16.mxu0 0
    %3006 = vmatpush1.bf16.msra.mxu0 %v169
    %3007 = vmatprep.subr.bf16.mxu0 0
    %3008 = vmatpush1.bf16.msra.mxu0 %v170
    %3009 = vmatprep.subr.bf16.mxu0 0
    %3010 = vmatpush1.bf16.msra.mxu0 %v171
    %3011 = vmatprep.subr.bf16.mxu0 0
    %3012 = vmatpush1.bf16.msra.mxu0 %v172
    %3013 = vmatprep.subr.bf16.mxu0 0
    %3014 = vmatpush1.bf16.msra.mxu0 %v173
    %3015 = vmatprep.subr.bf16.mxu0 0
    %3016 = vmatpush1.bf16.msra.mxu0 %v174
    %3017 = vmatprep.subr.bf16.mxu0 0
    %3018 = vmatpush1.bf16.msra.mxu0 %v175
    %3019 = vmatprep.mubr.bf16.mxu0 %v2984
    %3020 = vmatmul.mubr.bf16.gmra.mrb[0].mxu0 %v2977
    %v3021 = vpop.f32.mrb[0].mxu0
    %v3022 = vadd.f32 0.0, %v3021
    %v3023 = vpop.f32.mrb[0].mxu0
    %v3024 = vpop.f32.mrb[0].mxu0
    %v3025 = vpop.f32.mrb[0].mxu0
    %3026 = vdwg.mxu0
    %s3027 = scalar_lea.vmem %s3, 14
    %v3028 = vld [vmem:[%s3027] sm:$0x3]
    %v3031 = vunpack.c.l.s4 1966171168
    %v3032 = vunpack.c.0.s8 %v3031
    %v3033 = vlaneseq
    %v3034 = vshrl.u32 %v3033, 7
    %v3035 = vsub.s32 %v3032, %v3034
    %v3036 = vrot.slane %v3028, %v3035
    %v3037 = vcombine.high %v3036, %v3036
    %v3039 = vunpack.c.l.s4 1966171168
    %v3040 = vunpack.c.0.s8 %v3039
    %v3041 = vlaneseq
    %v3042 = vshrl.u32 %v3041, 7
    %v3043 = vsub.s32 %v3040, %v3042
    %v3044 = vrot.slane %v3036, %v3043
    %v3046 = vunpack.c.l.s4 1966171168
    %v3047 = vunpack.c.0.s8 %v3046
    %v3048 = vlaneseq
    %v3049 = vshrl.u32 %v3048, 7
    %v3050 = vsub.s32 %v3047, %v3049
    %v3051 = vrot.slane %v3037, %v3050
    %3054 = vmatprep.subr.bf16.mxu0 0
    %3055 = vmatpush1.bf16.msra.mxu0 %v160
    %3056 = vmatprep.subr.bf16.mxu0 0
    %3057 = vmatpush1.bf16.msra.mxu0 %v161
    %3058 = vmatprep.subr.bf16.mxu0 0
    %3059 = vmatpush1.bf16.msra.mxu0 %v162
    %3060 = vmatprep.subr.bf16.mxu0 0
    %3061 = vmatpush1.bf16.msra.mxu0 %v163
    %3062 = vmatprep.subr.bf16.mxu0 0
    %3063 = vmatpush1.bf16.msra.mxu0 %v164
    %3064 = vmatprep.subr.bf16.mxu0 0
    %3065 = vmatpush1.bf16.msra.mxu0 %v165
    %3066 = vmatprep.subr.bf16.mxu0 0
    %3067 = vmatpush1.bf16.msra.mxu0 %v166
    %3068 = vmatprep.subr.bf16.mxu0 0
    %3069 = vmatpush1.bf16.msra.mxu0 %v167
    %3070 = vmatprep.subr.bf16.mxu0 0
    %3071 = vmatpush1.bf16.msra.mxu0 %v168
    %3072 = vmatprep.subr.bf16.mxu0 0
    %3073 = vmatpush1.bf16.msra.mxu0 %v169
    %3074 = vmatprep.subr.bf16.mxu0 0
    %3075 = vmatpush1.bf16.msra.mxu0 %v170
    %3076 = vmatprep.subr.bf16.mxu0 0
    %3077 = vmatpush1.bf16.msra.mxu0 %v171
    %3078 = vmatprep.subr.bf16.mxu0 0
    %3079 = vmatpush1.bf16.msra.mxu0 %v172
    %3080 = vmatprep.subr.bf16.mxu0 0
    %3081 = vmatpush1.bf16.msra.mxu0 %v173
    %3082 = vmatprep.subr.bf16.mxu0 0
    %3083 = vmatpush1.bf16.msra.mxu0 %v174
    %3084 = vmatprep.subr.bf16.mxu0 0
    %3085 = vmatpush1.bf16.msra.mxu0 %v175
    %3086 = vmatprep.mubr.bf16.mxu0 %v3051
    %3087 = vmatmul.mubr.bf16.gmra.mrb[0].mxu0 %v3044
    %v3088 = vpop.f32.mrb[0].mxu0
    %v3089 = vadd.f32 0.0, %v3088
    %v3090 = vpop.f32.mrb[0].mxu0
    %v3091 = vpop.f32.mrb[0].mxu0
    %v3092 = vpop.f32.mrb[0].mxu0
    %3093 = vdwg.mxu0
    %v3094 = vmax.f32 %v3022, %v3089
    %v3095 = vmax.f32 %v2959, %v3094
    %v3096 = vadd.f32 %v3095, %v437
    %v3097 = vmax.f32 %v3096, 0.0
    %v3098 = vpack.c.bf16 %v3097, %v3097
    %s3099 = scalar_lea.vmem %s6, 448
    %v3100 = vld [vmem:[%s3099] sm:$0xf]
    %v3101 = vld [vmem:[%s3099 + $0x4] sm:$0xf]
    %v3102 = vld [vmem:[%s3099 + $0x8] sm:$0xf]
    %v3103 = vld [vmem:[%s3099 + $0xc] sm:$0xf]
    %v3104 = vld [vmem:[%s3099 + $0x10] sm:$0xf]
    %v3105 = vld [vmem:[%s3099 + $0x14] sm:$0xf]
    %v3106 = vld [vmem:[%s3099 + $0x18] sm:$0xf]
    %v3107 = vld [vmem:[%s3099 + $0x1c] sm:$0xf]
    %v3108 = vld [vmem:[%s3099 + $0x20] sm:$0xf]
    %v3109 = vld [vmem:[%s3099 + $0x24] sm:$0xf]
    %v3110 = vld [vmem:[%s3099 + $0x28] sm:$0xf]
    %v3111 = vld [vmem:[%s3099 + $0x2c] sm:$0xf]
    %v3112 = vld [vmem:[%s3099 + $0x30] sm:$0xf]
    %v3113 = vld [vmem:[%s3099 + $0x34] sm:$0xf]
    %v3114 = vld [vmem:[%s3099 + $0x38] sm:$0xf]
    %v3115 = vld [vmem:[%s3099 + $0x3c] sm:$0xf]
    %v3132 = vunpack.c.l.b16 %v3100
    %v3133 = vunpack.c.l.b16 %v3101
    %v3134 = vunpack.c.l.b16 %v3102
    %v3135 = vunpack.c.l.b16 %v3103
    %v3136 = vunpack.c.l.b16 %v3104
    %v3137 = vunpack.c.l.b16 %v3105
    %v3138 = vunpack.c.l.b16 %v3106
    %v3139 = vunpack.c.l.b16 %v3107
    %v3140 = vunpack.c.l.b16 %v3108
    %v3141 = vunpack.c.l.b16 %v3109
    %v3142 = vunpack.c.l.b16 %v3110
    %v3143 = vunpack.c.l.b16 %v3111
    %v3144 = vunpack.c.l.b16 %v3112
    %v3145 = vunpack.c.l.b16 %v3113
    %v3146 = vunpack.c.l.b16 %v3114
    %v3147 = vunpack.c.l.b16 %v3115
    %v3148 = vpack.c.b16 %v3133, %v3132
    %v3149 = vpack.c.b16 %v3135, %v3134
    %v3150 = vpack.c.b16 %v3137, %v3136
    %v3151 = vpack.c.b16 %v3139, %v3138
    %v3152 = vpack.c.b16 %v3141, %v3140
    %v3153 = vpack.c.b16 %v3143, %v3142
    %v3154 = vpack.c.b16 %v3145, %v3144
    %v3155 = vpack.c.b16 %v3147, %v3146
    %3164 = vmatprep.subr.bf16.mxu0 0
    %3165 = vmatpush1.bf16.msra.mxu0 %v3148
    %3166 = vmatprep.subr.bf16.mxu0 0
    %3167 = vmatpush1.bf16.msra.mxu0 %v3149
    %3168 = vmatprep.subr.bf16.mxu0 0
    %3169 = vmatpush1.bf16.msra.mxu0 %v3150
    %3170 = vmatprep.subr.bf16.mxu0 0
    %3171 = vmatpush1.bf16.msra.mxu0 %v3151
    %3172 = vmatprep.subr.bf16.mxu0 0
    %3173 = vmatpush1.bf16.msra.mxu0 %v3152
    %3174 = vmatprep.subr.bf16.mxu0 0
    %3175 = vmatpush1.bf16.msra.mxu0 %v3153
    %3176 = vmatprep.subr.bf16.mxu0 0
    %3177 = vmatpush1.bf16.msra.mxu0 %v3154
    %3178 = vmatprep.subr.bf16.mxu0 0
    %3179 = vmatpush1.bf16.msra.mxu0 %v3155
    %3180 = vmatprep.subr.bf16.mxu0 0
    %3181 = vmatpush1.bf16.msra.mxu0 0
    %3182 = vmatprep.subr.bf16.mxu0 0
    %3183 = vmatpush1.bf16.msra.mxu0 0
    %3184 = vmatprep.subr.bf16.mxu0 0
    %3185 = vmatpush1.bf16.msra.mxu0 0
    %3186 = vmatprep.subr.bf16.mxu0 0
    %3187 = vmatpush1.bf16.msra.mxu0 0
    %3188 = vmatprep.subr.bf16.mxu0 0
    %3189 = vmatpush1.bf16.msra.mxu0 0
    %3190 = vmatprep.subr.bf16.mxu0 0
    %3191 = vmatpush1.bf16.msra.mxu0 0
    %3192 = vmatprep.subr.bf16.mxu0 0
    %3193 = vmatpush1.bf16.msra.mxu0 0
    %3194 = vmatprep.subr.bf16.mxu0 0
    %3195 = vmatpush1.bf16.msra.mxu0 0
    %3196 = vmatprep.mubr.bf16.mxu0 0
    %3197 = vmatmul.mubr.bf16.gmra.mrb[0].mxu0 %v3098
    %v3198 = vpop.f32.mrb[0].mxu0
    %v3199 = vadd.f32 0.0, %v3198
    %v3200 = vpop.f32.mrb[0].mxu0
    %v3201 = vpop.f32.mrb[0].mxu0
    %v3202 = vpop.f32.mrb[0].mxu0
    %3203 = vdwg.mxu0
    %v3204 = vadd.f32 %v2824, %v3199
    %s3205 = scalar_lea.vmem %s0, 16
    %v3206 = vld [vmem:[%s3205] sm:$0x3]
    %v3209 = vunpack.c.l.s4 1966171168
    %v3210 = vunpack.c.0.s8 %v3209
    %v3211 = vlaneseq
    %v3212 = vshrl.u32 %v3211, 7
    %v3213 = vsub.s32 %v3210, %v3212
    %v3214 = vrot.slane %v3206, %v3213
    %v3215 = vcombine.high %v3214, %v3214
    %v3217 = vunpack.c.l.s4 1966171168
    %v3218 = vunpack.c.0.s8 %v3217
    %v3219 = vlaneseq
    %v3220 = vshrl.u32 %v3219, 7
    %v3221 = vsub.s32 %v3218, %v3220
    %v3222 = vrot.slane %v3214, %v3221
    %v3224 = vunpack.c.l.s4 1966171168
    %v3225 = vunpack.c.0.s8 %v3224
    %v3226 = vlaneseq
    %v3227 = vshrl.u32 %v3226, 7
    %v3228 = vsub.s32 %v3225, %v3227
    %v3229 = vrot.slane %v3215, %v3228
    %3232 = vmatprep.subr.bf16.mxu0 0
    %3233 = vmatpush1.bf16.msra.mxu0 %v160
    %3234 = vmatprep.subr.bf16.mxu0 0
    %3235 = vmatpush1.bf16.msra.mxu0 %v161
    %3236 = vmatprep.subr.bf16.mxu0 0
    %3237 = vmatpush1.bf16.msra.mxu0 %v162
    %3238 = vmatprep.subr.bf16.mxu0 0
    %3239 = vmatpush1.bf16.msra.mxu0 %v163
    %3240 = vmatprep.subr.bf16.mxu0 0
    %3241 = vmatpush1.bf16.msra.mxu0 %v164
    %3242 = vmatprep.subr.bf16.mxu0 0
    %3243 = vmatpush1.bf16.msra.mxu0 %v165
    %3244 = vmatprep.subr.bf16.mxu0 0
    %3245 = vmatpush1.bf16.msra.mxu0 %v166
    %3246 = vmatprep.subr.bf16.mxu0 0
    %3247 = vmatpush1.bf16.msra.mxu0 %v167
    %3248 = vmatprep.subr.bf16.mxu0 0
    %3249 = vmatpush1.bf16.msra.mxu0 %v168
    %3250 = vmatprep.subr.bf16.mxu0 0
    %3251 = vmatpush1.bf16.msra.mxu0 %v169
    %3252 = vmatprep.subr.bf16.mxu0 0
    %3253 = vmatpush1.bf16.msra.mxu0 %v170
    %3254 = vmatprep.subr.bf16.mxu0 0
    %3255 = vmatpush1.bf16.msra.mxu0 %v171
    %3256 = vmatprep.subr.bf16.mxu0 0
    %3257 = vmatpush1.bf16.msra.mxu0 %v172
    %3258 = vmatprep.subr.bf16.mxu0 0
    %3259 = vmatpush1.bf16.msra.mxu0 %v173
    %3260 = vmatprep.subr.bf16.mxu0 0
    %3261 = vmatpush1.bf16.msra.mxu0 %v174
    %3262 = vmatprep.subr.bf16.mxu0 0
    %3263 = vmatpush1.bf16.msra.mxu0 %v175
    %3264 = vmatprep.mubr.bf16.mxu0 %v3229
    %3265 = vmatmul.mubr.bf16.gmra.mrb[0].mxu0 %v3222
    %v3266 = vpop.f32.mrb[0].mxu0
    %v3267 = vadd.f32 0.0, %v3266
    %v3268 = vpop.f32.mrb[0].mxu0
    %v3269 = vpop.f32.mrb[0].mxu0
    %v3270 = vpop.f32.mrb[0].mxu0
    %3271 = vdwg.mxu0
    %s3272 = scalar_lea.vmem %s1, 16
    %v3273 = vld [vmem:[%s3272] sm:$0x3]
    %v3276 = vunpack.c.l.s4 1966171168
    %v3277 = vunpack.c.0.s8 %v3276
    %v3278 = vlaneseq
    %v3279 = vshrl.u32 %v3278, 7
    %v3280 = vsub.s32 %v3277, %v3279
    %v3281 = vrot.slane %v3273, %v3280
    %v3282 = vcombine.high %v3281, %v3281
    %v3284 = vunpack.c.l.s4 1966171168
    %v3285 = vunpack.c.0.s8 %v3284
    %v3286 = vlaneseq
    %v3287 = vshrl.u32 %v3286, 7
    %v3288 = vsub.s32 %v3285, %v3287
    %v3289 = vrot.slane %v3281, %v3288
    %v3291 = vunpack.c.l.s4 1966171168
    %v3292 = vunpack.c.0.s8 %v3291
    %v3293 = vlaneseq
    %v3294 = vshrl.u32 %v3293, 7
    %v3295 = vsub.s32 %v3292, %v3294
    %v3296 = vrot.slane %v3282, %v3295
    %3299 = vmatprep.subr.bf16.mxu0 0
    %3300 = vmatpush1.bf16.msra.mxu0 %v160
    %3301 = vmatprep.subr.bf16.mxu0 0
    %3302 = vmatpush1.bf16.msra.mxu0 %v161
    %3303 = vmatprep.subr.bf16.mxu0 0
    %3304 = vmatpush1.bf16.msra.mxu0 %v162
    %3305 = vmatprep.subr.bf16.mxu0 0
    %3306 = vmatpush1.bf16.msra.mxu0 %v163
    %3307 = vmatprep.subr.bf16.mxu0 0
    %3308 = vmatpush1.bf16.msra.mxu0 %v164
    %3309 = vmatprep.subr.bf16.mxu0 0
    %3310 = vmatpush1.bf16.msra.mxu0 %v165
    %3311 = vmatprep.subr.bf16.mxu0 0
    %3312 = vmatpush1.bf16.msra.mxu0 %v166
    %3313 = vmatprep.subr.bf16.mxu0 0
    %3314 = vmatpush1.bf16.msra.mxu0 %v167
    %3315 = vmatprep.subr.bf16.mxu0 0
    %3316 = vmatpush1.bf16.msra.mxu0 %v168
    %3317 = vmatprep.subr.bf16.mxu0 0
    %3318 = vmatpush1.bf16.msra.mxu0 %v169
    %3319 = vmatprep.subr.bf16.mxu0 0
    %3320 = vmatpush1.bf16.msra.mxu0 %v170
    %3321 = vmatprep.subr.bf16.mxu0 0
    %3322 = vmatpush1.bf16.msra.mxu0 %v171
    %3323 = vmatprep.subr.bf16.mxu0 0
    %3324 = vmatpush1.bf16.msra.mxu0 %v172
    %3325 = vmatprep.subr.bf16.mxu0 0
    %3326 = vmatpush1.bf16.msra.mxu0 %v173
    %3327 = vmatprep.subr.bf16.mxu0 0
    %3328 = vmatpush1.bf16.msra.mxu0 %v174
    %3329 = vmatprep.subr.bf16.mxu0 0
    %3330 = vmatpush1.bf16.msra.mxu0 %v175
    %3331 = vmatprep.mubr.bf16.mxu0 %v3296
    %3332 = vmatmul.mubr.bf16.gmra.mrb[0].mxu0 %v3289
    %v3333 = vpop.f32.mrb[0].mxu0
    %v3334 = vadd.f32 0.0, %v3333
    %v3335 = vpop.f32.mrb[0].mxu0
    %v3336 = vpop.f32.mrb[0].mxu0
    %v3337 = vpop.f32.mrb[0].mxu0
    %3338 = vdwg.mxu0
    %v3339 = vmax.f32 %v3267, %v3334
    %s3340 = scalar_lea.vmem %s2, 16
    %v3341 = vld [vmem:[%s3340] sm:$0x3]
    %v3344 = vunpack.c.l.s4 1966171168
    %v3345 = vunpack.c.0.s8 %v3344
    %v3346 = vlaneseq
    %v3347 = vshrl.u32 %v3346, 7
    %v3348 = vsub.s32 %v3345, %v3347
    %v3349 = vrot.slane %v3341, %v3348
    %v3350 = vcombine.high %v3349, %v3349
    %v3352 = vunpack.c.l.s4 1966171168
    %v3353 = vunpack.c.0.s8 %v3352
    %v3354 = vlaneseq
    %v3355 = vshrl.u32 %v3354, 7
    %v3356 = vsub.s32 %v3353, %v3355
    %v3357 = vrot.slane %v3349, %v3356
    %v3359 = vunpack.c.l.s4 1966171168
    %v3360 = vunpack.c.0.s8 %v3359
    %v3361 = vlaneseq
    %v3362 = vshrl.u32 %v3361, 7
    %v3363 = vsub.s32 %v3360, %v3362
    %v3364 = vrot.slane %v3350, %v3363
    %3367 = vmatprep.subr.bf16.mxu0 0
    %3368 = vmatpush1.bf16.msra.mxu0 %v160
    %3369 = vmatprep.subr.bf16.mxu0 0
    %3370 = vmatpush1.bf16.msra.mxu0 %v161
    %3371 = vmatprep.subr.bf16.mxu0 0
    %3372 = vmatpush1.bf16.msra.mxu0 %v162
    %3373 = vmatprep.subr.bf16.mxu0 0
    %3374 = vmatpush1.bf16.msra.mxu0 %v163
    %3375 = vmatprep.subr.bf16.mxu0 0
    %3376 = vmatpush1.bf16.msra.mxu0 %v164
    %3377 = vmatprep.subr.bf16.mxu0 0
    %3378 = vmatpush1.bf16.msra.mxu0 %v165
    %3379 = vmatprep.subr.bf16.mxu0 0
    %3380 = vmatpush1.bf16.msra.mxu0 %v166
    %3381 = vmatprep.subr.bf16.mxu0 0
    %3382 = vmatpush1.bf16.msra.mxu0 %v167
    %3383 = vmatprep.subr.bf16.mxu0 0
    %3384 = vmatpush1.bf16.msra.mxu0 %v168
    %3385 = vmatprep.subr.bf16.mxu0 0
    %3386 = vmatpush1.bf16.msra.mxu0 %v169
    %3387 = vmatprep.subr.bf16.mxu0 0
    %3388 = vmatpush1.bf16.msra.mxu0 %v170
    %3389 = vmatprep.subr.bf16.mxu0 0
    %3390 = vmatpush1.bf16.msra.mxu0 %v171
    %3391 = vmatprep.subr.bf16.mxu0 0
    %3392 = vmatpush1.bf16.msra.mxu0 %v172
    %3393 = vmatprep.subr.bf16.mxu0 0
    %3394 = vmatpush1.bf16.msra.mxu0 %v173
    %3395 = vmatprep.subr.bf16.mxu0 0
    %3396 = vmatpush1.bf16.msra.mxu0 %v174
    %3397 = vmatprep.subr.bf16.mxu0 0
    %3398 = vmatpush1.bf16.msra.mxu0 %v175
    %3399 = vmatprep.mubr.bf16.mxu0 %v3364
    %3400 = vmatmul.mubr.bf16.gmra.mrb[0].mxu0 %v3357
    %v3401 = vpop.f32.mrb[0].mxu0
    %v3402 = vadd.f32 0.0, %v3401
    %v3403 = vpop.f32.mrb[0].mxu0
    %v3404 = vpop.f32.mrb[0].mxu0
    %v3405 = vpop.f32.mrb[0].mxu0
    %3406 = vdwg.mxu0
    %s3407 = scalar_lea.vmem %s3, 16
    %v3408 = vld [vmem:[%s3407] sm:$0x3]
    %v3411 = vunpack.c.l.s4 1966171168
    %v3412 = vunpack.c.0.s8 %v3411
    %v3413 = vlaneseq
    %v3414 = vshrl.u32 %v3413, 7
    %v3415 = vsub.s32 %v3412, %v3414
    %v3416 = vrot.slane %v3408, %v3415
    %v3417 = vcombine.high %v3416, %v3416
    %v3419 = vunpack.c.l.s4 1966171168
    %v3420 = vunpack.c.0.s8 %v3419
    %v3421 = vlaneseq
    %v3422 = vshrl.u32 %v3421, 7
    %v3423 = vsub.s32 %v3420, %v3422
    %v3424 = vrot.slane %v3416, %v3423
    %v3426 = vunpack.c.l.s4 1966171168
    %v3427 = vunpack.c.0.s8 %v3426
    %v3428 = vlaneseq
    %v3429 = vshrl.u32 %v3428, 7
    %v3430 = vsub.s32 %v3427, %v3429
    %v3431 = vrot.slane %v3417, %v3430
    %3434 = vmatprep.subr.bf16.mxu0 0
    %3435 = vmatpush1.bf16.msra.mxu0 %v160
    %3436 = vmatprep.subr.bf16.mxu0 0
    %3437 = vmatpush1.bf16.msra.mxu0 %v161
    %3438 = vmatprep.subr.bf16.mxu0 0
    %3439 = vmatpush1.bf16.msra.mxu0 %v162
    %3440 = vmatprep.subr.bf16.mxu0 0
    %3441 = vmatpush1.bf16.msra.mxu0 %v163
    %3442 = vmatprep.subr.bf16.mxu0 0
    %3443 = vmatpush1.bf16.msra.mxu0 %v164
    %3444 = vmatprep.subr.bf16.mxu0 0
    %3445 = vmatpush1.bf16.msra.mxu0 %v165
    %3446 = vmatprep.subr.bf16.mxu0 0
    %3447 = vmatpush1.bf16.msra.mxu0 %v166
    %3448 = vmatprep.subr.bf16.mxu0 0
    %3449 = vmatpush1.bf16.msra.mxu0 %v167
    %3450 = vmatprep.subr.bf16.mxu0 0
    %3451 = vmatpush1.bf16.msra.mxu0 %v168
    %3452 = vmatprep.subr.bf16.mxu0 0
    %3453 = vmatpush1.bf16.msra.mxu0 %v169
    %3454 = vmatprep.subr.bf16.mxu0 0
    %3455 = vmatpush1.bf16.msra.mxu0 %v170
    %3456 = vmatprep.subr.bf16.mxu0 0
    %3457 = vmatpush1.bf16.msra.mxu0 %v171
    %3458 = vmatprep.subr.bf16.mxu0 0
    %3459 = vmatpush1.bf16.msra.mxu0 %v172
    %3460 = vmatprep.subr.bf16.mxu0 0
    %3461 = vmatpush1.bf16.msra.mxu0 %v173
    %3462 = vmatprep.subr.bf16.mxu0 0
    %3463 = vmatpush1.bf16.msra.mxu0 %v174
    %3464 = vmatprep.subr.bf16.mxu0 0
    %3465 = vmatpush1.bf16.msra.mxu0 %v175
    %3466 = vmatprep.mubr.bf16.mxu0 %v3431
    %3467 = vmatmul.mubr.bf16.gmra.mrb[0].mxu0 %v3424
    %v3468 = vpop.f32.mrb[0].mxu0
    %v3469 = vadd.f32 0.0, %v3468
    %v3470 = vpop.f32.mrb[0].mxu0
    %v3471 = vpop.f32.mrb[0].mxu0
    %v3472 = vpop.f32.mrb[0].mxu0
    %3473 = vdwg.mxu0
    %v3474 = vmax.f32 %v3402, %v3469
    %v3475 = vmax.f32 %v3339, %v3474
    %v3476 = vadd.f32 %v3475, %v437
    %v3477 = vmax.f32 %v3476, 0.0
    %v3478 = vpack.c.bf16 %v3477, %v3477
    %s3479 = scalar_lea.vmem %s6, 512
    %v3480 = vld [vmem:[%s3479] sm:$0xf]
    %v3481 = vld [vmem:[%s3479 + $0x4] sm:$0xf]
    %v3482 = vld [vmem:[%s3479 + $0x8] sm:$0xf]
    %v3483 = vld [vmem:[%s3479 + $0xc] sm:$0xf]
    %v3484 = vld [vmem:[%s3479 + $0x10] sm:$0xf]
    %v3485 = vld [vmem:[%s3479 + $0x14] sm:$0xf]
    %v3486 = vld [vmem:[%s3479 + $0x18] sm:$0xf]
    %v3487 = vld [vmem:[%s3479 + $0x1c] sm:$0xf]
    %v3488 = vld [vmem:[%s3479 + $0x20] sm:$0xf]
    %v3489 = vld [vmem:[%s3479 + $0x24] sm:$0xf]
    %v3490 = vld [vmem:[%s3479 + $0x28] sm:$0xf]
    %v3491 = vld [vmem:[%s3479 + $0x2c] sm:$0xf]
    %v3492 = vld [vmem:[%s3479 + $0x30] sm:$0xf]
    %v3493 = vld [vmem:[%s3479 + $0x34] sm:$0xf]
    %v3494 = vld [vmem:[%s3479 + $0x38] sm:$0xf]
    %v3495 = vld [vmem:[%s3479 + $0x3c] sm:$0xf]
    %v3512 = vunpack.c.l.b16 %v3480
    %v3513 = vunpack.c.l.b16 %v3481
    %v3514 = vunpack.c.l.b16 %v3482
    %v3515 = vunpack.c.l.b16 %v3483
    %v3516 = vunpack.c.l.b16 %v3484
    %v3517 = vunpack.c.l.b16 %v3485
    %v3518 = vunpack.c.l.b16 %v3486
    %v3519 = vunpack.c.l.b16 %v3487
    %v3520 = vunpack.c.l.b16 %v3488
    %v3521 = vunpack.c.l.b16 %v3489
    %v3522 = vunpack.c.l.b16 %v3490
    %v3523 = vunpack.c.l.b16 %v3491
    %v3524 = vunpack.c.l.b16 %v3492
    %v3525 = vunpack.c.l.b16 %v3493
    %v3526 = vunpack.c.l.b16 %v3494
    %v3527 = vunpack.c.l.b16 %v3495
    %v3528 = vpack.c.b16 %v3513, %v3512
    %v3529 = vpack.c.b16 %v3515, %v3514
    %v3530 = vpack.c.b16 %v3517, %v3516
    %v3531 = vpack.c.b16 %v3519, %v3518
    %v3532 = vpack.c.b16 %v3521, %v3520
    %v3533 = vpack.c.b16 %v3523, %v3522
    %v3534 = vpack.c.b16 %v3525, %v3524
    %v3535 = vpack.c.b16 %v3527, %v3526
    %3544 = vmatprep.subr.bf16.mxu0 0
    %3545 = vmatpush1.bf16.msra.mxu0 %v3528
    %3546 = vmatprep.subr.bf16.mxu0 0
    %3547 = vmatpush1.bf16.msra.mxu0 %v3529
    %3548 = vmatprep.subr.bf16.mxu0 0
    %3549 = vmatpush1.bf16.msra.mxu0 %v3530
    %3550 = vmatprep.subr.bf16.mxu0 0
    %3551 = vmatpush1.bf16.msra.mxu0 %v3531
    %3552 = vmatprep.subr.bf16.mxu0 0
    %3553 = vmatpush1.bf16.msra.mxu0 %v3532
    %3554 = vmatprep.subr.bf16.mxu0 0
    %3555 = vmatpush1.bf16.msra.mxu0 %v3533
    %3556 = vmatprep.subr.bf16.mxu0 0
    %3557 = vmatpush1.bf16.msra.mxu0 %v3534
    %3558 = vmatprep.subr.bf16.mxu0 0
    %3559 = vmatpush1.bf16.msra.mxu0 %v3535
    %3560 = vmatprep.subr.bf16.mxu0 0
    %3561 = vmatpush1.bf16.msra.mxu0 0
    %3562 = vmatprep.subr.bf16.mxu0 0
    %3563 = vmatpush1.bf16.msra.mxu0 0
    %3564 = vmatprep.subr.bf16.mxu0 0
    %3565 = vmatpush1.bf16.msra.mxu0 0
    %3566 = vmatprep.subr.bf16.mxu0 0
    %3567 = vmatpush1.bf16.msra.mxu0 0
    %3568 = vmatprep.subr.bf16.mxu0 0
    %3569 = vmatpush1.bf16.msra.mxu0 0
    %3570 = vmatprep.subr.bf16.mxu0 0
    %3571 = vmatpush1.bf16.msra.mxu0 0
    %3572 = vmatprep.subr.bf16.mxu0 0
    %3573 = vmatpush1.bf16.msra.mxu0 0
    %3574 = vmatprep.subr.bf16.mxu0 0
    %3575 = vmatpush1.bf16.msra.mxu0 0
    %3576 = vmatprep.mubr.bf16.mxu0 0
    %3577 = vmatmul.mubr.bf16.gmra.mrb[0].mxu0 %v3478
    %v3578 = vpop.f32.mrb[0].mxu0
    %v3579 = vadd.f32 0.0, %v3578
    %v3580 = vpop.f32.mrb[0].mxu0
    %v3581 = vpop.f32.mrb[0].mxu0
    %v3582 = vpop.f32.mrb[0].mxu0
    %3583 = vdwg.mxu0
    %v3584 = vadd.f32 %v3204, %v3579
    %s3585 = scalar_lea.vmem %s0, 18
    %v3586 = vld [vmem:[%s3585] sm:$0x3]
    %v3589 = vunpack.c.l.s4 1966171168
    %v3590 = vunpack.c.0.s8 %v3589
    %v3591 = vlaneseq
    %v3592 = vshrl.u32 %v3591, 7
    %v3593 = vsub.s32 %v3590, %v3592
    %v3594 = vrot.slane %v3586, %v3593
    %v3595 = vcombine.high %v3594, %v3594
    %v3597 = vunpack.c.l.s4 1966171168
    %v3598 = vunpack.c.0.s8 %v3597
    %v3599 = vlaneseq
    %v3600 = vshrl.u32 %v3599, 7
    %v3601 = vsub.s32 %v3598, %v3600
    %v3602 = vrot.slane %v3594, %v3601
    %v3604 = vunpack.c.l.s4 1966171168
    %v3605 = vunpack.c.0.s8 %v3604
    %v3606 = vlaneseq
    %v3607 = vshrl.u32 %v3606, 7
    %v3608 = vsub.s32 %v3605, %v3607
    %v3609 = vrot.slane %v3595, %v3608
    %3612 = vmatprep.subr.bf16.mxu0 0
    %3613 = vmatpush1.bf16.msra.mxu0 %v160
    %3614 = vmatprep.subr.bf16.mxu0 0
    %3615 = vmatpush1.bf16.msra.mxu0 %v161
    %3616 = vmatprep.subr.bf16.mxu0 0
    %3617 = vmatpush1.bf16.msra.mxu0 %v162
    %3618 = vmatprep.subr.bf16.mxu0 0
    %3619 = vmatpush1.bf16.msra.mxu0 %v163
    %3620 = vmatprep.subr.bf16.mxu0 0
    %3621 = vmatpush1.bf16.msra.mxu0 %v164
    %3622 = vmatprep.subr.bf16.mxu0 0
    %3623 = vmatpush1.bf16.msra.mxu0 %v165
    %3624 = vmatprep.subr.bf16.mxu0 0
    %3625 = vmatpush1.bf16.msra.mxu0 %v166
    %3626 = vmatprep.subr.bf16.mxu0 0
    %3627 = vmatpush1.bf16.msra.mxu0 %v167
    %3628 = vmatprep.subr.bf16.mxu0 0
    %3629 = vmatpush1.bf16.msra.mxu0 %v168
    %3630 = vmatprep.subr.bf16.mxu0 0
    %3631 = vmatpush1.bf16.msra.mxu0 %v169
    %3632 = vmatprep.subr.bf16.mxu0 0
    %3633 = vmatpush1.bf16.msra.mxu0 %v170
    %3634 = vmatprep.subr.bf16.mxu0 0
    %3635 = vmatpush1.bf16.msra.mxu0 %v171
    %3636 = vmatprep.subr.bf16.mxu0 0
    %3637 = vmatpush1.bf16.msra.mxu0 %v172
    %3638 = vmatprep.subr.bf16.mxu0 0
    %3639 = vmatpush1.bf16.msra.mxu0 %v173
    %3640 = vmatprep.subr.bf16.mxu0 0
    %3641 = vmatpush1.bf16.msra.mxu0 %v174
    %3642 = vmatprep.subr.bf16.mxu0 0
    %3643 = vmatpush1.bf16.msra.mxu0 %v175
    %3644 = vmatprep.mubr.bf16.mxu0 %v3609
    %3645 = vmatmul.mubr.bf16.gmra.mrb[0].mxu0 %v3602
    %v3646 = vpop.f32.mrb[0].mxu0
    %v3647 = vadd.f32 0.0, %v3646
    %v3648 = vpop.f32.mrb[0].mxu0
    %v3649 = vpop.f32.mrb[0].mxu0
    %v3650 = vpop.f32.mrb[0].mxu0
    %3651 = vdwg.mxu0
    %s3652 = scalar_lea.vmem %s1, 18
    %v3653 = vld [vmem:[%s3652] sm:$0x3]
    %v3656 = vunpack.c.l.s4 1966171168
    %v3657 = vunpack.c.0.s8 %v3656
    %v3658 = vlaneseq
    %v3659 = vshrl.u32 %v3658, 7
    %v3660 = vsub.s32 %v3657, %v3659
    %v3661 = vrot.slane %v3653, %v3660
    %v3662 = vcombine.high %v3661, %v3661
    %v3664 = vunpack.c.l.s4 1966171168
    %v3665 = vunpack.c.0.s8 %v3664
    %v3666 = vlaneseq
    %v3667 = vshrl.u32 %v3666, 7
    %v3668 = vsub.s32 %v3665, %v3667
    %v3669 = vrot.slane %v3661, %v3668
    %v3671 = vunpack.c.l.s4 1966171168
    %v3672 = vunpack.c.0.s8 %v3671
    %v3673 = vlaneseq
    %v3674 = vshrl.u32 %v3673, 7
    %v3675 = vsub.s32 %v3672, %v3674
    %v3676 = vrot.slane %v3662, %v3675
    %3679 = vmatprep.subr.bf16.mxu0 0
    %3680 = vmatpush1.bf16.msra.mxu0 %v160
    %3681 = vmatprep.subr.bf16.mxu0 0
    %3682 = vmatpush1.bf16.msra.mxu0 %v161
    %3683 = vmatprep.subr.bf16.mxu0 0
    %3684 = vmatpush1.bf16.msra.mxu0 %v162
    %3685 = vmatprep.subr.bf16.mxu0 0
    %3686 = vmatpush1.bf16.msra.mxu0 %v163
    %3687 = vmatprep.subr.bf16.mxu0 0
    %3688 = vmatpush1.bf16.msra.mxu0 %v164
    %3689 = vmatprep.subr.bf16.mxu0 0
    %3690 = vmatpush1.bf16.msra.mxu0 %v165
    %3691 = vmatprep.subr.bf16.mxu0 0
    %3692 = vmatpush1.bf16.msra.mxu0 %v166
    %3693 = vmatprep.subr.bf16.mxu0 0
    %3694 = vmatpush1.bf16.msra.mxu0 %v167
    %3695 = vmatprep.subr.bf16.mxu0 0
    %3696 = vmatpush1.bf16.msra.mxu0 %v168
    %3697 = vmatprep.subr.bf16.mxu0 0
    %3698 = vmatpush1.bf16.msra.mxu0 %v169
    %3699 = vmatprep.subr.bf16.mxu0 0
    %3700 = vmatpush1.bf16.msra.mxu0 %v170
    %3701 = vmatprep.subr.bf16.mxu0 0
    %3702 = vmatpush1.bf16.msra.mxu0 %v171
    %3703 = vmatprep.subr.bf16.mxu0 0
    %3704 = vmatpush1.bf16.msra.mxu0 %v172
    %3705 = vmatprep.subr.bf16.mxu0 0
    %3706 = vmatpush1.bf16.msra.mxu0 %v173
    %3707 = vmatprep.subr.bf16.mxu0 0
    %3708 = vmatpush1.bf16.msra.mxu0 %v174
    %3709 = vmatprep.subr.bf16.mxu0 0
    %3710 = vmatpush1.bf16.msra.mxu0 %v175
    %3711 = vmatprep.mubr.bf16.mxu0 %v3676
    %3712 = vmatmul.mubr.bf16.gmra.mrb[0].mxu0 %v3669
    %v3713 = vpop.f32.mrb[0].mxu0
    %v3714 = vadd.f32 0.0, %v3713
    %v3715 = vpop.f32.mrb[0].mxu0
    %v3716 = vpop.f32.mrb[0].mxu0
    %v3717 = vpop.f32.mrb[0].mxu0
    %3718 = vdwg.mxu0
    %v3719 = vmax.f32 %v3647, %v3714
    %s3720 = scalar_lea.vmem %s2, 18
    %v3721 = vld [vmem:[%s3720] sm:$0x3]
    %v3724 = vunpack.c.l.s4 1966171168
    %v3725 = vunpack.c.0.s8 %v3724
    %v3726 = vlaneseq
    %v3727 = vshrl.u32 %v3726, 7
    %v3728 = vsub.s32 %v3725, %v3727
    %v3729 = vrot.slane %v3721, %v3728
    %v3730 = vcombine.high %v3729, %v3729
    %v3732 = vunpack.c.l.s4 1966171168
    %v3733 = vunpack.c.0.s8 %v3732
    %v3734 = vlaneseq
    %v3735 = vshrl.u32 %v3734, 7
    %v3736 = vsub.s32 %v3733, %v3735
    %v3737 = vrot.slane %v3729, %v3736
    %v3739 = vunpack.c.l.s4 1966171168
    %v3740 = vunpack.c.0.s8 %v3739
    %v3741 = vlaneseq
    %v3742 = vshrl.u32 %v3741, 7
    %v3743 = vsub.s32 %v3740, %v3742
    %v3744 = vrot.slane %v3730, %v3743
    %3747 = vmatprep.subr.bf16.mxu0 0
    %3748 = vmatpush1.bf16.msra.mxu0 %v160
    %3749 = vmatprep.subr.bf16.mxu0 0
    %3750 = vmatpush1.bf16.msra.mxu0 %v161
    %3751 = vmatprep.subr.bf16.mxu0 0
    %3752 = vmatpush1.bf16.msra.mxu0 %v162
    %3753 = vmatprep.subr.bf16.mxu0 0
    %3754 = vmatpush1.bf16.msra.mxu0 %v163
    %3755 = vmatprep.subr.bf16.mxu0 0
    %3756 = vmatpush1.bf16.msra.mxu0 %v164
    %3757 = vmatprep.subr.bf16.mxu0 0
    %3758 = vmatpush1.bf16.msra.mxu0 %v165
    %3759 = vmatprep.subr.bf16.mxu0 0
    %3760 = vmatpush1.bf16.msra.mxu0 %v166
    %3761 = vmatprep.subr.bf16.mxu0 0
    %3762 = vmatpush1.bf16.msra.mxu0 %v167
    %3763 = vmatprep.subr.bf16.mxu0 0
    %3764 = vmatpush1.bf16.msra.mxu0 %v168
    %3765 = vmatprep.subr.bf16.mxu0 0
    %3766 = vmatpush1.bf16.msra.mxu0 %v169
    %3767 = vmatprep.subr.bf16.mxu0 0
    %3768 = vmatpush1.bf16.msra.mxu0 %v170
    %3769 = vmatprep.subr.bf16.mxu0 0
    %3770 = vmatpush1.bf16.msra.mxu0 %v171
    %3771 = vmatprep.subr.bf16.mxu0 0
    %3772 = vmatpush1.bf16.msra.mxu0 %v172
    %3773 = vmatprep.subr.bf16.mxu0 0
    %3774 = vmatpush1.bf16.msra.mxu0 %v173
    %3775 = vmatprep.subr.bf16.mxu0 0
    %3776 = vmatpush1.bf16.msra.mxu0 %v174
    %3777 = vmatprep.subr.bf16.mxu0 0
    %3778 = vmatpush1.bf16.msra.mxu0 %v175
    %3779 = vmatprep.mubr.bf16.mxu0 %v3744
    %3780 = vmatmul.mubr.bf16.gmra.mrb[0].mxu0 %v3737
    %v3781 = vpop.f32.mrb[0].mxu0
    %v3782 = vadd.f32 0.0, %v3781
    %v3783 = vpop.f32.mrb[0].mxu0
    %v3784 = vpop.f32.mrb[0].mxu0
    %v3785 = vpop.f32.mrb[0].mxu0
    %3786 = vdwg.mxu0
    %s3787 = scalar_lea.vmem %s3, 18
    %v3788 = vld [vmem:[%s3787] sm:$0x3]
    %v3791 = vunpack.c.l.s4 1966171168
    %v3792 = vunpack.c.0.s8 %v3791
    %v3793 = vlaneseq
    %v3794 = vshrl.u32 %v3793, 7
    %v3795 = vsub.s32 %v3792, %v3794
    %v3796 = vrot.slane %v3788, %v3795
    %v3797 = vcombine.high %v3796, %v3796
    %v3799 = vunpack.c.l.s4 1966171168
    %v3800 = vunpack.c.0.s8 %v3799
    %v3801 = vlaneseq
    %v3802 = vshrl.u32 %v3801, 7
    %v3803 = vsub.s32 %v3800, %v3802
    %v3804 = vrot.slane %v3796, %v3803
    %v3806 = vunpack.c.l.s4 1966171168
    %v3807 = vunpack.c.0.s8 %v3806
    %v3808 = vlaneseq
    %v3809 = vshrl.u32 %v3808, 7
    %v3810 = vsub.s32 %v3807, %v3809
    %v3811 = vrot.slane %v3797, %v3810
    %3814 = vmatprep.subr.bf16.mxu0 0
    %3815 = vmatpush1.bf16.msra.mxu0 %v160
    %3816 = vmatprep.subr.bf16.mxu0 0
    %3817 = vmatpush1.bf16.msra.mxu0 %v161
    %3818 = vmatprep.subr.bf16.mxu0 0
    %3819 = vmatpush1.bf16.msra.mxu0 %v162
    %3820 = vmatprep.subr.bf16.mxu0 0
    %3821 = vmatpush1.bf16.msra.mxu0 %v163
    %3822 = vmatprep.subr.bf16.mxu0 0
    %3823 = vmatpush1.bf16.msra.mxu0 %v164
    %3824 = vmatprep.subr.bf16.mxu0 0
    %3825 = vmatpush1.bf16.msra.mxu0 %v165
    %3826 = vmatprep.subr.bf16.mxu0 0
    %3827 = vmatpush1.bf16.msra.mxu0 %v166
    %3828 = vmatprep.subr.bf16.mxu0 0
    %3829 = vmatpush1.bf16.msra.mxu0 %v167
    %3830 = vmatprep.subr.bf16.mxu0 0
    %3831 = vmatpush1.bf16.msra.mxu0 %v168
    %3832 = vmatprep.subr.bf16.mxu0 0
    %3833 = vmatpush1.bf16.msra.mxu0 %v169
    %3834 = vmatprep.subr.bf16.mxu0 0
    %3835 = vmatpush1.bf16.msra.mxu0 %v170
    %3836 = vmatprep.subr.bf16.mxu0 0
    %3837 = vmatpush1.bf16.msra.mxu0 %v171
    %3838 = vmatprep.subr.bf16.mxu0 0
    %3839 = vmatpush1.bf16.msra.mxu0 %v172
    %3840 = vmatprep.subr.bf16.mxu0 0
    %3841 = vmatpush1.bf16.msra.mxu0 %v173
    %3842 = vmatprep.subr.bf16.mxu0 0
    %3843 = vmatpush1.bf16.msra.mxu0 %v174
    %3844 = vmatprep.subr.bf16.mxu0 0
    %3845 = vmatpush1.bf16.msra.mxu0 %v175
    %3846 = vmatprep.mubr.bf16.mxu0 %v3811
    %3847 = vmatmul.mubr.bf16.gmra.mrb[0].mxu0 %v3804
    %v3848 = vpop.f32.mrb[0].mxu0
    %v3849 = vadd.f32 0.0, %v3848
    %v3850 = vpop.f32.mrb[0].mxu0
    %v3851 = vpop.f32.mrb[0].mxu0
    %v3852 = vpop.f32.mrb[0].mxu0
    %3853 = vdwg.mxu0
    %v3854 = vmax.f32 %v3782, %v3849
    %v3855 = vmax.f32 %v3719, %v3854
    %v3856 = vadd.f32 %v3855, %v437
    %v3857 = vmax.f32 %v3856, 0.0
    %v3858 = vpack.c.bf16 %v3857, %v3857
    %s3859 = scalar_lea.vmem %s6, 576
    %v3860 = vld [vmem:[%s3859] sm:$0xf]
    %v3861 = vld [vmem:[%s3859 + $0x4] sm:$0xf]
    %v3862 = vld [vmem:[%s3859 + $0x8] sm:$0xf]
    %v3863 = vld [vmem:[%s3859 + $0xc] sm:$0xf]
    %v3864 = vld [vmem:[%s3859 + $0x10] sm:$0xf]
    %v3865 = vld [vmem:[%s3859 + $0x14] sm:$0xf]
    %v3866 = vld [vmem:[%s3859 + $0x18] sm:$0xf]
    %v3867 = vld [vmem:[%s3859 + $0x1c] sm:$0xf]
    %v3868 = vld [vmem:[%s3859 + $0x20] sm:$0xf]
    %v3869 = vld [vmem:[%s3859 + $0x24] sm:$0xf]
    %v3870 = vld [vmem:[%s3859 + $0x28] sm:$0xf]
    %v3871 = vld [vmem:[%s3859 + $0x2c] sm:$0xf]
    %v3872 = vld [vmem:[%s3859 + $0x30] sm:$0xf]
    %v3873 = vld [vmem:[%s3859 + $0x34] sm:$0xf]
    %v3874 = vld [vmem:[%s3859 + $0x38] sm:$0xf]
    %v3875 = vld [vmem:[%s3859 + $0x3c] sm:$0xf]
    %v3892 = vunpack.c.l.b16 %v3860
    %v3893 = vunpack.c.l.b16 %v3861
    %v3894 = vunpack.c.l.b16 %v3862
    %v3895 = vunpack.c.l.b16 %v3863
    %v3896 = vunpack.c.l.b16 %v3864
    %v3897 = vunpack.c.l.b16 %v3865
    %v3898 = vunpack.c.l.b16 %v3866
    %v3899 = vunpack.c.l.b16 %v3867
    %v3900 = vunpack.c.l.b16 %v3868
    %v3901 = vunpack.c.l.b16 %v3869
    %v3902 = vunpack.c.l.b16 %v3870
    %v3903 = vunpack.c.l.b16 %v3871
    %v3904 = vunpack.c.l.b16 %v3872
    %v3905 = vunpack.c.l.b16 %v3873
    %v3906 = vunpack.c.l.b16 %v3874
    %v3907 = vunpack.c.l.b16 %v3875
    %v3908 = vpack.c.b16 %v3893, %v3892
    %v3909 = vpack.c.b16 %v3895, %v3894
    %v3910 = vpack.c.b16 %v3897, %v3896
    %v3911 = vpack.c.b16 %v3899, %v3898
    %v3912 = vpack.c.b16 %v3901, %v3900
    %v3913 = vpack.c.b16 %v3903, %v3902
    %v3914 = vpack.c.b16 %v3905, %v3904
    %v3915 = vpack.c.b16 %v3907, %v3906
    %3924 = vmatprep.subr.bf16.mxu0 0
    %3925 = vmatpush1.bf16.msra.mxu0 %v3908
    %3926 = vmatprep.subr.bf16.mxu0 0
    %3927 = vmatpush1.bf16.msra.mxu0 %v3909
    %3928 = vmatprep.subr.bf16.mxu0 0
    %3929 = vmatpush1.bf16.msra.mxu0 %v3910
    %3930 = vmatprep.subr.bf16.mxu0 0
    %3931 = vmatpush1.bf16.msra.mxu0 %v3911
    %3932 = vmatprep.subr.bf16.mxu0 0
    %3933 = vmatpush1.bf16.msra.mxu0 %v3912
    %3934 = vmatprep.subr.bf16.mxu0 0
    %3935 = vmatpush1.bf16.msra.mxu0 %v3913
    %3936 = vmatprep.subr.bf16.mxu0 0
    %3937 = vmatpush1.bf16.msra.mxu0 %v3914
    %3938 = vmatprep.subr.bf16.mxu0 0
    %3939 = vmatpush1.bf16.msra.mxu0 %v3915
    %3940 = vmatprep.subr.bf16.mxu0 0
    %3941 = vmatpush1.bf16.msra.mxu0 0
    %3942 = vmatprep.subr.bf16.mxu0 0
    %3943 = vmatpush1.bf16.msra.mxu0 0
    %3944 = vmatprep.subr.bf16.mxu0 0
    %3945 = vmatpush1.bf16.msra.mxu0 0
    %3946 = vmatprep.subr.bf16.mxu0 0
    %3947 = vmatpush1.bf16.msra.mxu0 0
    %3948 = vmatprep.subr.bf16.mxu0 0
    %3949 = vmatpush1.bf16.msra.mxu0 0
    %3950 = vmatprep.subr.bf16.mxu0 0
    %3951 = vmatpush1.bf16.msra.mxu0 0
    %3952 = vmatprep.subr.bf16.mxu0 0
    %3953 = vmatpush1.bf16.msra.mxu0 0
    %3954 = vmatprep.subr.bf16.mxu0 0
    %3955 = vmatpush1.bf16.msra.mxu0 0
    %3956 = vmatprep.mubr.bf16.mxu0 0
    %3957 = vmatmul.mubr.bf16.gmra.mrb[0].mxu0 %v3858
    %v3958 = vpop.f32.mrb[0].mxu0
    %v3959 = vadd.f32 0.0, %v3958
    %v3960 = vpop.f32.mrb[0].mxu0
    %v3961 = vpop.f32.mrb[0].mxu0
    %v3962 = vpop.f32.mrb[0].mxu0
    %3963 = vdwg.mxu0
    %v3964 = vadd.f32 %v3584, %v3959
    %s3965 = scalar_lea.vmem %s0, 20
    %v3966 = vld [vmem:[%s3965] sm:$0x3]
    %v3969 = vunpack.c.l.s4 1966171168
    %v3970 = vunpack.c.0.s8 %v3969
    %v3971 = vlaneseq
    %v3972 = vshrl.u32 %v3971, 7
    %v3973 = vsub.s32 %v3970, %v3972
    %v3974 = vrot.slane %v3966, %v3973
    %v3975 = vcombine.high %v3974, %v3974
    %v3977 = vunpack.c.l.s4 1966171168
    %v3978 = vunpack.c.0.s8 %v3977
    %v3979 = vlaneseq
    %v3980 = vshrl.u32 %v3979, 7
    %v3981 = vsub.s32 %v3978, %v3980
    %v3982 = vrot.slane %v3974, %v3981
    %v3984 = vunpack.c.l.s4 1966171168
    %v3985 = vunpack.c.0.s8 %v3984
    %v3986 = vlaneseq
    %v3987 = vshrl.u32 %v3986, 7
    %v3988 = vsub.s32 %v3985, %v3987
    %v3989 = vrot.slane %v3975, %v3988
    %3992 = vmatprep.subr.bf16.mxu0 0
    %3993 = vmatpush1.bf16.msra.mxu0 %v160
    %3994 = vmatprep.subr.bf16.mxu0 0
    %3995 = vmatpush1.bf16.msra.mxu0 %v161
    %3996 = vmatprep.subr.bf16.mxu0 0
    %3997 = vmatpush1.bf16.msra.mxu0 %v162
    %3998 = vmatprep.subr.bf16.mxu0 0
    %3999 = vmatpush1.bf16.msra.mxu0 %v163
    %4000 = vmatprep.subr.bf16.mxu0 0
    %4001 = vmatpush1.bf16.msra.mxu0 %v164
    %4002 = vmatprep.subr.bf16.mxu0 0
    %4003 = vmatpush1.bf16.msra.mxu0 %v165
    %4004 = vmatprep.subr.bf16.mxu0 0
    %4005 = vmatpush1.bf16.msra.mxu0 %v166
    %4006 = vmatprep.subr.bf16.mxu0 0
    %4007 = vmatpush1.bf16.msra.mxu0 %v167
    %4008 = vmatprep.subr.bf16.mxu0 0
    %4009 = vmatpush1.bf16.msra.mxu0 %v168
    %4010 = vmatprep.subr.bf16.mxu0 0
    %4011 = vmatpush1.bf16.msra.mxu0 %v169
    %4012 = vmatprep.subr.bf16.mxu0 0
    %4013 = vmatpush1.bf16.msra.mxu0 %v170
    %4014 = vmatprep.subr.bf16.mxu0 0
    %4015 = vmatpush1.bf16.msra.mxu0 %v171
    %4016 = vmatprep.subr.bf16.mxu0 0
    %4017 = vmatpush1.bf16.msra.mxu0 %v172
    %4018 = vmatprep.subr.bf16.mxu0 0
    %4019 = vmatpush1.bf16.msra.mxu0 %v173
    %4020 = vmatprep.subr.bf16.mxu0 0
    %4021 = vmatpush1.bf16.msra.mxu0 %v174
    %4022 = vmatprep.subr.bf16.mxu0 0
    %4023 = vmatpush1.bf16.msra.mxu0 %v175
    %4024 = vmatprep.mubr.bf16.mxu0 %v3989
    %4025 = vmatmul.mubr.bf16.gmra.mrb[0].mxu0 %v3982
    %v4026 = vpop.f32.mrb[0].mxu0
    %v4027 = vadd.f32 0.0, %v4026
    %v4028 = vpop.f32.mrb[0].mxu0
    %v4029 = vpop.f32.mrb[0].mxu0
    %v4030 = vpop.f32.mrb[0].mxu0
    %4031 = vdwg.mxu0
    %s4032 = scalar_lea.vmem %s1, 20
    %v4033 = vld [vmem:[%s4032] sm:$0x3]
    %v4036 = vunpack.c.l.s4 1966171168
    %v4037 = vunpack.c.0.s8 %v4036
    %v4038 = vlaneseq
    %v4039 = vshrl.u32 %v4038, 7
    %v4040 = vsub.s32 %v4037, %v4039
    %v4041 = vrot.slane %v4033, %v4040
    %v4042 = vcombine.high %v4041, %v4041
    %v4044 = vunpack.c.l.s4 1966171168
    %v4045 = vunpack.c.0.s8 %v4044
    %v4046 = vlaneseq
    %v4047 = vshrl.u32 %v4046, 7
    %v4048 = vsub.s32 %v4045, %v4047
    %v4049 = vrot.slane %v4041, %v4048
    %v4051 = vunpack.c.l.s4 1966171168
    %v4052 = vunpack.c.0.s8 %v4051
    %v4053 = vlaneseq
    %v4054 = vshrl.u32 %v4053, 7
    %v4055 = vsub.s32 %v4052, %v4054
    %v4056 = vrot.slane %v4042, %v4055
    %4059 = vmatprep.subr.bf16.mxu0 0
    %4060 = vmatpush1.bf16.msra.mxu0 %v160
    %4061 = vmatprep.subr.bf16.mxu0 0
    %4062 = vmatpush1.bf16.msra.mxu0 %v161
    %4063 = vmatprep.subr.bf16.mxu0 0
    %4064 = vmatpush1.bf16.msra.mxu0 %v162
    %4065 = vmatprep.subr.bf16.mxu0 0
    %4066 = vmatpush1.bf16.msra.mxu0 %v163
    %4067 = vmatprep.subr.bf16.mxu0 0
    %4068 = vmatpush1.bf16.msra.mxu0 %v164
    %4069 = vmatprep.subr.bf16.mxu0 0
    %4070 = vmatpush1.bf16.msra.mxu0 %v165
    %4071 = vmatprep.subr.bf16.mxu0 0
    %4072 = vmatpush1.bf16.msra.mxu0 %v166
    %4073 = vmatprep.subr.bf16.mxu0 0
    %4074 = vmatpush1.bf16.msra.mxu0 %v167
    %4075 = vmatprep.subr.bf16.mxu0 0
    %4076 = vmatpush1.bf16.msra.mxu0 %v168
    %4077 = vmatprep.subr.bf16.mxu0 0
    %4078 = vmatpush1.bf16.msra.mxu0 %v169
    %4079 = vmatprep.subr.bf16.mxu0 0
    %4080 = vmatpush1.bf16.msra.mxu0 %v170
    %4081 = vmatprep.subr.bf16.mxu0 0
    %4082 = vmatpush1.bf16.msra.mxu0 %v171
    %4083 = vmatprep.subr.bf16.mxu0 0
    %4084 = vmatpush1.bf16.msra.mxu0 %v172
    %4085 = vmatprep.subr.bf16.mxu0 0
    %4086 = vmatpush1.bf16.msra.mxu0 %v173
    %4087 = vmatprep.subr.bf16.mxu0 0
    %4088 = vmatpush1.bf16.msra.mxu0 %v174
    %4089 = vmatprep.subr.bf16.mxu0 0
    %4090 = vmatpush1.bf16.msra.mxu0 %v175
    %4091 = vmatprep.mubr.bf16.mxu0 %v4056
    %4092 = vmatmul.mubr.bf16.gmra.mrb[0].mxu0 %v4049
    %v4093 = vpop.f32.mrb[0].mxu0
    %v4094 = vadd.f32 0.0, %v4093
    %v4095 = vpop.f32.mrb[0].mxu0
    %v4096 = vpop.f32.mrb[0].mxu0
    %v4097 = vpop.f32.mrb[0].mxu0
    %4098 = vdwg.mxu0
    %v4099 = vmax.f32 %v4027, %v4094
    %s4100 = scalar_lea.vmem %s2, 20
    %v4101 = vld [vmem:[%s4100] sm:$0x3]
    %v4104 = vunpack.c.l.s4 1966171168
    %v4105 = vunpack.c.0.s8 %v4104
    %v4106 = vlaneseq
    %v4107 = vshrl.u32 %v4106, 7
    %v4108 = vsub.s32 %v4105, %v4107
    %v4109 = vrot.slane %v4101, %v4108
    %v4110 = vcombine.high %v4109, %v4109
    %v4112 = vunpack.c.l.s4 1966171168
    %v4113 = vunpack.c.0.s8 %v4112
    %v4114 = vlaneseq
    %v4115 = vshrl.u32 %v4114, 7
    %v4116 = vsub.s32 %v4113, %v4115
    %v4117 = vrot.slane %v4109, %v4116
    %v4119 = vunpack.c.l.s4 1966171168
    %v4120 = vunpack.c.0.s8 %v4119
    %v4121 = vlaneseq
    %v4122 = vshrl.u32 %v4121, 7
    %v4123 = vsub.s32 %v4120, %v4122
    %v4124 = vrot.slane %v4110, %v4123
    %4127 = vmatprep.subr.bf16.mxu0 0
    %4128 = vmatpush1.bf16.msra.mxu0 %v160
    %4129 = vmatprep.subr.bf16.mxu0 0
    %4130 = vmatpush1.bf16.msra.mxu0 %v161
    %4131 = vmatprep.subr.bf16.mxu0 0
    %4132 = vmatpush1.bf16.msra.mxu0 %v162
    %4133 = vmatprep.subr.bf16.mxu0 0
    %4134 = vmatpush1.bf16.msra.mxu0 %v163
    %4135 = vmatprep.subr.bf16.mxu0 0
    %4136 = vmatpush1.bf16.msra.mxu0 %v164
    %4137 = vmatprep.subr.bf16.mxu0 0
    %4138 = vmatpush1.bf16.msra.mxu0 %v165
    %4139 = vmatprep.subr.bf16.mxu0 0
    %4140 = vmatpush1.bf16.msra.mxu0 %v166
    %4141 = vmatprep.subr.bf16.mxu0 0
    %4142 = vmatpush1.bf16.msra.mxu0 %v167
    %4143 = vmatprep.subr.bf16.mxu0 0
    %4144 = vmatpush1.bf16.msra.mxu0 %v168
    %4145 = vmatprep.subr.bf16.mxu0 0
    %4146 = vmatpush1.bf16.msra.mxu0 %v169
    %4147 = vmatprep.subr.bf16.mxu0 0
    %4148 = vmatpush1.bf16.msra.mxu0 %v170
    %4149 = vmatprep.subr.bf16.mxu0 0
    %4150 = vmatpush1.bf16.msra.mxu0 %v171
    %4151 = vmatprep.subr.bf16.mxu0 0
    %4152 = vmatpush1.bf16.msra.mxu0 %v172
    %4153 = vmatprep.subr.bf16.mxu0 0
    %4154 = vmatpush1.bf16.msra.mxu0 %v173
    %4155 = vmatprep.subr.bf16.mxu0 0
    %4156 = vmatpush1.bf16.msra.mxu0 %v174
    %4157 = vmatprep.subr.bf16.mxu0 0
    %4158 = vmatpush1.bf16.msra.mxu0 %v175
    %4159 = vmatprep.mubr.bf16.mxu0 %v4124
    %4160 = vmatmul.mubr.bf16.gmra.mrb[0].mxu0 %v4117
    %v4161 = vpop.f32.mrb[0].mxu0
    %v4162 = vadd.f32 0.0, %v4161
    %v4163 = vpop.f32.mrb[0].mxu0
    %v4164 = vpop.f32.mrb[0].mxu0
    %v4165 = vpop.f32.mrb[0].mxu0
    %4166 = vdwg.mxu0
    %s4167 = scalar_lea.vmem %s3, 20
    %v4168 = vld [vmem:[%s4167] sm:$0x3]
    %v4171 = vunpack.c.l.s4 1966171168
    %v4172 = vunpack.c.0.s8 %v4171
    %v4173 = vlaneseq
    %v4174 = vshrl.u32 %v4173, 7
    %v4175 = vsub.s32 %v4172, %v4174
    %v4176 = vrot.slane %v4168, %v4175
    %v4177 = vcombine.high %v4176, %v4176
    %v4179 = vunpack.c.l.s4 1966171168
    %v4180 = vunpack.c.0.s8 %v4179
    %v4181 = vlaneseq
    %v4182 = vshrl.u32 %v4181, 7
    %v4183 = vsub.s32 %v4180, %v4182
    %v4184 = vrot.slane %v4176, %v4183
    %v4186 = vunpack.c.l.s4 1966171168
    %v4187 = vunpack.c.0.s8 %v4186
    %v4188 = vlaneseq
    %v4189 = vshrl.u32 %v4188, 7
    %v4190 = vsub.s32 %v4187, %v4189
    %v4191 = vrot.slane %v4177, %v4190
    %4194 = vmatprep.subr.bf16.mxu0 0
    %4195 = vmatpush1.bf16.msra.mxu0 %v160
    %4196 = vmatprep.subr.bf16.mxu0 0
    %4197 = vmatpush1.bf16.msra.mxu0 %v161
    %4198 = vmatprep.subr.bf16.mxu0 0
    %4199 = vmatpush1.bf16.msra.mxu0 %v162
    %4200 = vmatprep.subr.bf16.mxu0 0
    %4201 = vmatpush1.bf16.msra.mxu0 %v163
    %4202 = vmatprep.subr.bf16.mxu0 0
    %4203 = vmatpush1.bf16.msra.mxu0 %v164
    %4204 = vmatprep.subr.bf16.mxu0 0
    %4205 = vmatpush1.bf16.msra.mxu0 %v165
    %4206 = vmatprep.subr.bf16.mxu0 0
    %4207 = vmatpush1.bf16.msra.mxu0 %v166
    %4208 = vmatprep.subr.bf16.mxu0 0
    %4209 = vmatpush1.bf16.msra.mxu0 %v167
    %4210 = vmatprep.subr.bf16.mxu0 0
    %4211 = vmatpush1.bf16.msra.mxu0 %v168
    %4212 = vmatprep.subr.bf16.mxu0 0
    %4213 = vmatpush1.bf16.msra.mxu0 %v169
    %4214 = vmatprep.subr.bf16.mxu0 0
    %4215 = vmatpush1.bf16.msra.mxu0 %v170
    %4216 = vmatprep.subr.bf16.mxu0 0
    %4217 = vmatpush1.bf16.msra.mxu0 %v171
    %4218 = vmatprep.subr.bf16.mxu0 0
    %4219 = vmatpush1.bf16.msra.mxu0 %v172
    %4220 = vmatprep.subr.bf16.mxu0 0
    %4221 = vmatpush1.bf16.msra.mxu0 %v173
    %4222 = vmatprep.subr.bf16.mxu0 0
    %4223 = vmatpush1.bf16.msra.mxu0 %v174
    %4224 = vmatprep.subr.bf16.mxu0 0
    %4225 = vmatpush1.bf16.msra.mxu0 %v175
    %4226 = vmatprep.mubr.bf16.mxu0 %v4191
    %4227 = vmatmul.mubr.bf16.gmra.mrb[0].mxu0 %v4184
    %v4228 = vpop.f32.mrb[0].mxu0
    %v4229 = vadd.f32 0.0, %v4228
    %v4230 = vpop.f32.mrb[0].mxu0
    %v4231 = vpop.f32.mrb[0].mxu0
    %v4232 = vpop.f32.mrb[0].mxu0
    %4233 = vdwg.mxu0
    %v4234 = vmax.f32 %v4162, %v4229
    %v4235 = vmax.f32 %v4099, %v4234
    %v4236 = vadd.f32 %v4235, %v437
    %v4237 = vmax.f32 %v4236, 0.0
    %v4238 = vpack.c.bf16 %v4237, %v4237
    %s4239 = scalar_lea.vmem %s6, 640
    %v4240 = vld [vmem:[%s4239] sm:$0xf]
    %v4241 = vld [vmem:[%s4239 + $0x4] sm:$0xf]
    %v4242 = vld [vmem:[%s4239 + $0x8] sm:$0xf]
    %v4243 = vld [vmem:[%s4239 + $0xc] sm:$0xf]
    %v4244 = vld [vmem:[%s4239 + $0x10] sm:$0xf]
    %v4245 = vld [vmem:[%s4239 + $0x14] sm:$0xf]
    %v4246 = vld [vmem:[%s4239 + $0x18] sm:$0xf]
    %v4247 = vld [vmem:[%s4239 + $0x1c] sm:$0xf]
    %v4248 = vld [vmem:[%s4239 + $0x20] sm:$0xf]
    %v4249 = vld [vmem:[%s4239 + $0x24] sm:$0xf]
    %v4250 = vld [vmem:[%s4239 + $0x28] sm:$0xf]
    %v4251 = vld [vmem:[%s4239 + $0x2c] sm:$0xf]
    %v4252 = vld [vmem:[%s4239 + $0x30] sm:$0xf]
    %v4253 = vld [vmem:[%s4239 + $0x34] sm:$0xf]
    %v4254 = vld [vmem:[%s4239 + $0x38] sm:$0xf]
    %v4255 = vld [vmem:[%s4239 + $0x3c] sm:$0xf]
    %v4272 = vunpack.c.l.b16 %v4240
    %v4273 = vunpack.c.l.b16 %v4241
    %v4274 = vunpack.c.l.b16 %v4242
    %v4275 = vunpack.c.l.b16 %v4243
    %v4276 = vunpack.c.l.b16 %v4244
    %v4277 = vunpack.c.l.b16 %v4245
    %v4278 = vunpack.c.l.b16 %v4246
    %v4279 = vunpack.c.l.b16 %v4247
    %v4280 = vunpack.c.l.b16 %v4248
    %v4281 = vunpack.c.l.b16 %v4249
    %v4282 = vunpack.c.l.b16 %v4250
    %v4283 = vunpack.c.l.b16 %v4251
    %v4284 = vunpack.c.l.b16 %v4252
    %v4285 = vunpack.c.l.b16 %v4253
    %v4286 = vunpack.c.l.b16 %v4254
    %v4287 = vunpack.c.l.b16 %v4255
    %v4288 = vpack.c.b16 %v4273, %v4272
    %v4289 = vpack.c.b16 %v4275, %v4274
    %v4290 = vpack.c.b16 %v4277, %v4276
    %v4291 = vpack.c.b16 %v4279, %v4278
    %v4292 = vpack.c.b16 %v4281, %v4280
    %v4293 = vpack.c.b16 %v4283, %v4282
    %v4294 = vpack.c.b16 %v4285, %v4284
    %v4295 = vpack.c.b16 %v4287, %v4286
    %4304 = vmatprep.subr.bf16.mxu0 0
    %4305 = vmatpush1.bf16.msra.mxu0 %v4288
    %4306 = vmatprep.subr.bf16.mxu0 0
    %4307 = vmatpush1.bf16.msra.mxu0 %v4289
    %4308 = vmatprep.subr.bf16.mxu0 0
    %4309 = vmatpush1.bf16.msra.mxu0 %v4290
    %4310 = vmatprep.subr.bf16.mxu0 0
    %4311 = vmatpush1.bf16.msra.mxu0 %v4291
    %4312 = vmatprep.subr.bf16.mxu0 0
    %4313 = vmatpush1.bf16.msra.mxu0 %v4292
    %4314 = vmatprep.subr.bf16.mxu0 0
    %4315 = vmatpush1.bf16.msra.mxu0 %v4293
    %4316 = vmatprep.subr.bf16.mxu0 0
    %4317 = vmatpush1.bf16.msra.mxu0 %v4294
    %4318 = vmatprep.subr.bf16.mxu0 0
    %4319 = vmatpush1.bf16.msra.mxu0 %v4295
    %4320 = vmatprep.subr.bf16.mxu0 0
    %4321 = vmatpush1.bf16.msra.mxu0 0
    %4322 = vmatprep.subr.bf16.mxu0 0
    %4323 = vmatpush1.bf16.msra.mxu0 0
    %4324 = vmatprep.subr.bf16.mxu0 0
    %4325 = vmatpush1.bf16.msra.mxu0 0
    %4326 = vmatprep.subr.bf16.mxu0 0
    %4327 = vmatpush1.bf16.msra.mxu0 0
    %4328 = vmatprep.subr.bf16.mxu0 0
    %4329 = vmatpush1.bf16.msra.mxu0 0
    %4330 = vmatprep.subr.bf16.mxu0 0
    %4331 = vmatpush1.bf16.msra.mxu0 0
    %4332 = vmatprep.subr.bf16.mxu0 0
    %4333 = vmatpush1.bf16.msra.mxu0 0
    %4334 = vmatprep.subr.bf16.mxu0 0
    %4335 = vmatpush1.bf16.msra.mxu0 0
    %4336 = vmatprep.mubr.bf16.mxu0 0
    %4337 = vmatmul.mubr.bf16.gmra.mrb[0].mxu0 %v4238
    %v4338 = vpop.f32.mrb[0].mxu0
    %v4339 = vadd.f32 0.0, %v4338
    %v4340 = vpop.f32.mrb[0].mxu0
    %v4341 = vpop.f32.mrb[0].mxu0
    %v4342 = vpop.f32.mrb[0].mxu0
    %4343 = vdwg.mxu0
    %v4344 = vadd.f32 %v3964, %v4339
    %s4345 = scalar_lea.vmem %s0, 22
    %v4346 = vld [vmem:[%s4345] sm:$0x3]
    %v4349 = vunpack.c.l.s4 1966171168
    %v4350 = vunpack.c.0.s8 %v4349
    %v4351 = vlaneseq
    %v4352 = vshrl.u32 %v4351, 7
    %v4353 = vsub.s32 %v4350, %v4352
    %v4354 = vrot.slane %v4346, %v4353
    %v4355 = vcombine.high %v4354, %v4354
    %v4357 = vunpack.c.l.s4 1966171168
    %v4358 = vunpack.c.0.s8 %v4357
    %v4359 = vlaneseq
    %v4360 = vshrl.u32 %v4359, 7
    %v4361 = vsub.s32 %v4358, %v4360
    %v4362 = vrot.slane %v4354, %v4361
    %v4364 = vunpack.c.l.s4 1966171168
    %v4365 = vunpack.c.0.s8 %v4364
    %v4366 = vlaneseq
    %v4367 = vshrl.u32 %v4366, 7
    %v4368 = vsub.s32 %v4365, %v4367
    %v4369 = vrot.slane %v4355, %v4368
    %4372 = vmatprep.subr.bf16.mxu0 0
    %4373 = vmatpush1.bf16.msra.mxu0 %v160
    %4374 = vmatprep.subr.bf16.mxu0 0
    %4375 = vmatpush1.bf16.msra.mxu0 %v161
    %4376 = vmatprep.subr.bf16.mxu0 0
    %4377 = vmatpush1.bf16.msra.mxu0 %v162
    %4378 = vmatprep.subr.bf16.mxu0 0
    %4379 = vmatpush1.bf16.msra.mxu0 %v163
    %4380 = vmatprep.subr.bf16.mxu0 0
    %4381 = vmatpush1.bf16.msra.mxu0 %v164
    %4382 = vmatprep.subr.bf16.mxu0 0
    %4383 = vmatpush1.bf16.msra.mxu0 %v165
    %4384 = vmatprep.subr.bf16.mxu0 0
    %4385 = vmatpush1.bf16.msra.mxu0 %v166
    %4386 = vmatprep.subr.bf16.mxu0 0
    %4387 = vmatpush1.bf16.msra.mxu0 %v167
    %4388 = vmatprep.subr.bf16.mxu0 0
    %4389 = vmatpush1.bf16.msra.mxu0 %v168
    %4390 = vmatprep.subr.bf16.mxu0 0
    %4391 = vmatpush1.bf16.msra.mxu0 %v169
    %4392 = vmatprep.subr.bf16.mxu0 0
    %4393 = vmatpush1.bf16.msra.mxu0 %v170
    %4394 = vmatprep.subr.bf16.mxu0 0
    %4395 = vmatpush1.bf16.msra.mxu0 %v171
    %4396 = vmatprep.subr.bf16.mxu0 0
    %4397 = vmatpush1.bf16.msra.mxu0 %v172
    %4398 = vmatprep.subr.bf16.mxu0 0
    %4399 = vmatpush1.bf16.msra.mxu0 %v173
    %4400 = vmatprep.subr.bf16.mxu0 0
    %4401 = vmatpush1.bf16.msra.mxu0 %v174
    %4402 = vmatprep.subr.bf16.mxu0 0
    %4403 = vmatpush1.bf16.msra.mxu0 %v175
    %4404 = vmatprep.mubr.bf16.mxu0 %v4369
    %4405 = vmatmul.mubr.bf16.gmra.mrb[0].mxu0 %v4362
    %v4406 = vpop.f32.mrb[0].mxu0
    %v4407 = vadd.f32 0.0, %v4406
    %v4408 = vpop.f32.mrb[0].mxu0
    %v4409 = vpop.f32.mrb[0].mxu0
    %v4410 = vpop.f32.mrb[0].mxu0
    %4411 = vdwg.mxu0
    %s4412 = scalar_lea.vmem %s1, 22
    %v4413 = vld [vmem:[%s4412] sm:$0x3]
    %v4416 = vunpack.c.l.s4 1966171168
    %v4417 = vunpack.c.0.s8 %v4416
    %v4418 = vlaneseq
    %v4419 = vshrl.u32 %v4418, 7
    %v4420 = vsub.s32 %v4417, %v4419
    %v4421 = vrot.slane %v4413, %v4420
    %v4422 = vcombine.high %v4421, %v4421
    %v4424 = vunpack.c.l.s4 1966171168
    %v4425 = vunpack.c.0.s8 %v4424
    %v4426 = vlaneseq
    %v4427 = vshrl.u32 %v4426, 7
    %v4428 = vsub.s32 %v4425, %v4427
    %v4429 = vrot.slane %v4421, %v4428
    %v4431 = vunpack.c.l.s4 1966171168
    %v4432 = vunpack.c.0.s8 %v4431
    %v4433 = vlaneseq
    %v4434 = vshrl.u32 %v4433, 7
    %v4435 = vsub.s32 %v4432, %v4434
    %v4436 = vrot.slane %v4422, %v4435
    %4439 = vmatprep.subr.bf16.mxu0 0
    %4440 = vmatpush1.bf16.msra.mxu0 %v160
    %4441 = vmatprep.subr.bf16.mxu0 0
    %4442 = vmatpush1.bf16.msra.mxu0 %v161
    %4443 = vmatprep.subr.bf16.mxu0 0
    %4444 = vmatpush1.bf16.msra.mxu0 %v162
    %4445 = vmatprep.subr.bf16.mxu0 0
    %4446 = vmatpush1.bf16.msra.mxu0 %v163
    %4447 = vmatprep.subr.bf16.mxu0 0
    %4448 = vmatpush1.bf16.msra.mxu0 %v164
    %4449 = vmatprep.subr.bf16.mxu0 0
    %4450 = vmatpush1.bf16.msra.mxu0 %v165
    %4451 = vmatprep.subr.bf16.mxu0 0
    %4452 = vmatpush1.bf16.msra.mxu0 %v166
    %4453 = vmatprep.subr.bf16.mxu0 0
    %4454 = vmatpush1.bf16.msra.mxu0 %v167
    %4455 = vmatprep.subr.bf16.mxu0 0
    %4456 = vmatpush1.bf16.msra.mxu0 %v168
    %4457 = vmatprep.subr.bf16.mxu0 0
    %4458 = vmatpush1.bf16.msra.mxu0 %v169
    %4459 = vmatprep.subr.bf16.mxu0 0
    %4460 = vmatpush1.bf16.msra.mxu0 %v170
    %4461 = vmatprep.subr.bf16.mxu0 0
    %4462 = vmatpush1.bf16.msra.mxu0 %v171
    %4463 = vmatprep.subr.bf16.mxu0 0
    %4464 = vmatpush1.bf16.msra.mxu0 %v172
    %4465 = vmatprep.subr.bf16.mxu0 0
    %4466 = vmatpush1.bf16.msra.mxu0 %v173
    %4467 = vmatprep.subr.bf16.mxu0 0
    %4468 = vmatpush1.bf16.msra.mxu0 %v174
    %4469 = vmatprep.subr.bf16.mxu0 0
    %4470 = vmatpush1.bf16.msra.mxu0 %v175
    %4471 = vmatprep.mubr.bf16.mxu0 %v4436
    %4472 = vmatmul.mubr.bf16.gmra.mrb[0].mxu0 %v4429
    %v4473 = vpop.f32.mrb[0].mxu0
    %v4474 = vadd.f32 0.0, %v4473
    %v4475 = vpop.f32.mrb[0].mxu0
    %v4476 = vpop.f32.mrb[0].mxu0
    %v4477 = vpop.f32.mrb[0].mxu0
    %4478 = vdwg.mxu0
    %v4479 = vmax.f32 %v4407, %v4474
    %s4480 = scalar_lea.vmem %s2, 22
    %v4481 = vld [vmem:[%s4480] sm:$0x3]
    %v4484 = vunpack.c.l.s4 1966171168
    %v4485 = vunpack.c.0.s8 %v4484
    %v4486 = vlaneseq
    %v4487 = vshrl.u32 %v4486, 7
    %v4488 = vsub.s32 %v4485, %v4487
    %v4489 = vrot.slane %v4481, %v4488
    %v4490 = vcombine.high %v4489, %v4489
    %v4492 = vunpack.c.l.s4 1966171168
    %v4493 = vunpack.c.0.s8 %v4492
    %v4494 = vlaneseq
    %v4495 = vshrl.u32 %v4494, 7
    %v4496 = vsub.s32 %v4493, %v4495
    %v4497 = vrot.slane %v4489, %v4496
    %v4499 = vunpack.c.l.s4 1966171168
    %v4500 = vunpack.c.0.s8 %v4499
    %v4501 = vlaneseq
    %v4502 = vshrl.u32 %v4501, 7
    %v4503 = vsub.s32 %v4500, %v4502
    %v4504 = vrot.slane %v4490, %v4503
    %4507 = vmatprep.subr.bf16.mxu0 0
    %4508 = vmatpush1.bf16.msra.mxu0 %v160
    %4509 = vmatprep.subr.bf16.mxu0 0
    %4510 = vmatpush1.bf16.msra.mxu0 %v161
    %4511 = vmatprep.subr.bf16.mxu0 0
    %4512 = vmatpush1.bf16.msra.mxu0 %v162
    %4513 = vmatprep.subr.bf16.mxu0 0
    %4514 = vmatpush1.bf16.msra.mxu0 %v163
    %4515 = vmatprep.subr.bf16.mxu0 0
    %4516 = vmatpush1.bf16.msra.mxu0 %v164
    %4517 = vmatprep.subr.bf16.mxu0 0
    %4518 = vmatpush1.bf16.msra.mxu0 %v165
    %4519 = vmatprep.subr.bf16.mxu0 0
    %4520 = vmatpush1.bf16.msra.mxu0 %v166
    %4521 = vmatprep.subr.bf16.mxu0 0
    %4522 = vmatpush1.bf16.msra.mxu0 %v167
    %4523 = vmatprep.subr.bf16.mxu0 0
    %4524 = vmatpush1.bf16.msra.mxu0 %v168
    %4525 = vmatprep.subr.bf16.mxu0 0
    %4526 = vmatpush1.bf16.msra.mxu0 %v169
    %4527 = vmatprep.subr.bf16.mxu0 0
    %4528 = vmatpush1.bf16.msra.mxu0 %v170
    %4529 = vmatprep.subr.bf16.mxu0 0
    %4530 = vmatpush1.bf16.msra.mxu0 %v171
    %4531 = vmatprep.subr.bf16.mxu0 0
    %4532 = vmatpush1.bf16.msra.mxu0 %v172
    %4533 = vmatprep.subr.bf16.mxu0 0
    %4534 = vmatpush1.bf16.msra.mxu0 %v173
    %4535 = vmatprep.subr.bf16.mxu0 0
    %4536 = vmatpush1.bf16.msra.mxu0 %v174
    %4537 = vmatprep.subr.bf16.mxu0 0
    %4538 = vmatpush1.bf16.msra.mxu0 %v175
    %4539 = vmatprep.mubr.bf16.mxu0 %v4504
    %4540 = vmatmul.mubr.bf16.gmra.mrb[0].mxu0 %v4497
    %v4541 = vpop.f32.mrb[0].mxu0
    %v4542 = vadd.f32 0.0, %v4541
    %v4543 = vpop.f32.mrb[0].mxu0
    %v4544 = vpop.f32.mrb[0].mxu0
    %v4545 = vpop.f32.mrb[0].mxu0
    %4546 = vdwg.mxu0
    %s4547 = scalar_lea.vmem %s3, 22
    %v4548 = vld [vmem:[%s4547] sm:$0x3]
    %v4551 = vunpack.c.l.s4 1966171168
    %v4552 = vunpack.c.0.s8 %v4551
    %v4553 = vlaneseq
    %v4554 = vshrl.u32 %v4553, 7
    %v4555 = vsub.s32 %v4552, %v4554
    %v4556 = vrot.slane %v4548, %v4555
    %v4557 = vcombine.high %v4556, %v4556
    %v4559 = vunpack.c.l.s4 1966171168
    %v4560 = vunpack.c.0.s8 %v4559
    %v4561 = vlaneseq
    %v4562 = vshrl.u32 %v4561, 7
    %v4563 = vsub.s32 %v4560, %v4562
    %v4564 = vrot.slane %v4556, %v4563
    %v4566 = vunpack.c.l.s4 1966171168
    %v4567 = vunpack.c.0.s8 %v4566
    %v4568 = vlaneseq
    %v4569 = vshrl.u32 %v4568, 7
    %v4570 = vsub.s32 %v4567, %v4569
    %v4571 = vrot.slane %v4557, %v4570
    %4574 = vmatprep.subr.bf16.mxu0 0
    %4575 = vmatpush1.bf16.msra.mxu0 %v160
    %4576 = vmatprep.subr.bf16.mxu0 0
    %4577 = vmatpush1.bf16.msra.mxu0 %v161
    %4578 = vmatprep.subr.bf16.mxu0 0
    %4579 = vmatpush1.bf16.msra.mxu0 %v162
    %4580 = vmatprep.subr.bf16.mxu0 0
    %4581 = vmatpush1.bf16.msra.mxu0 %v163
    %4582 = vmatprep.subr.bf16.mxu0 0
    %4583 = vmatpush1.bf16.msra.mxu0 %v164
    %4584 = vmatprep.subr.bf16.mxu0 0
    %4585 = vmatpush1.bf16.msra.mxu0 %v165
    %4586 = vmatprep.subr.bf16.mxu0 0
    %4587 = vmatpush1.bf16.msra.mxu0 %v166
    %4588 = vmatprep.subr.bf16.mxu0 0
    %4589 = vmatpush1.bf16.msra.mxu0 %v167
    %4590 = vmatprep.subr.bf16.mxu0 0
    %4591 = vmatpush1.bf16.msra.mxu0 %v168
    %4592 = vmatprep.subr.bf16.mxu0 0
    %4593 = vmatpush1.bf16.msra.mxu0 %v169
    %4594 = vmatprep.subr.bf16.mxu0 0
    %4595 = vmatpush1.bf16.msra.mxu0 %v170
    %4596 = vmatprep.subr.bf16.mxu0 0
    %4597 = vmatpush1.bf16.msra.mxu0 %v171
    %4598 = vmatprep.subr.bf16.mxu0 0
    %4599 = vmatpush1.bf16.msra.mxu0 %v172
    %4600 = vmatprep.subr.bf16.mxu0 0
    %4601 = vmatpush1.bf16.msra.mxu0 %v173
    %4602 = vmatprep.subr.bf16.mxu0 0
    %4603 = vmatpush1.bf16.msra.mxu0 %v174
    %4604 = vmatprep.subr.bf16.mxu0 0
    %4605 = vmatpush1.bf16.msra.mxu0 %v175
    %4606 = vmatprep.mubr.bf16.mxu0 %v4571
    %4607 = vmatmul.mubr.bf16.gmra.mrb[0].mxu0 %v4564
    %v4608 = vpop.f32.mrb[0].mxu0
    %v4609 = vadd.f32 0.0, %v4608
    %v4610 = vpop.f32.mrb[0].mxu0
    %v4611 = vpop.f32.mrb[0].mxu0
    %v4612 = vpop.f32.mrb[0].mxu0
    %4613 = vdwg.mxu0
    %v4614 = vmax.f32 %v4542, %v4609
    %v4615 = vmax.f32 %v4479, %v4614
    %v4616 = vadd.f32 %v4615, %v437
    %v4617 = vmax.f32 %v4616, 0.0
    %v4618 = vpack.c.bf16 %v4617, %v4617
    %s4619 = scalar_lea.vmem %s6, 704
    %v4620 = vld [vmem:[%s4619] sm:$0xf]
    %v4621 = vld [vmem:[%s4619 + $0x4] sm:$0xf]
    %v4622 = vld [vmem:[%s4619 + $0x8] sm:$0xf]
    %v4623 = vld [vmem:[%s4619 + $0xc] sm:$0xf]
    %v4624 = vld [vmem:[%s4619 + $0x10] sm:$0xf]
    %v4625 = vld [vmem:[%s4619 + $0x14] sm:$0xf]
    %v4626 = vld [vmem:[%s4619 + $0x18] sm:$0xf]
    %v4627 = vld [vmem:[%s4619 + $0x1c] sm:$0xf]
    %v4628 = vld [vmem:[%s4619 + $0x20] sm:$0xf]
    %v4629 = vld [vmem:[%s4619 + $0x24] sm:$0xf]
    %v4630 = vld [vmem:[%s4619 + $0x28] sm:$0xf]
    %v4631 = vld [vmem:[%s4619 + $0x2c] sm:$0xf]
    %v4632 = vld [vmem:[%s4619 + $0x30] sm:$0xf]
    %v4633 = vld [vmem:[%s4619 + $0x34] sm:$0xf]
    %v4634 = vld [vmem:[%s4619 + $0x38] sm:$0xf]
    %v4635 = vld [vmem:[%s4619 + $0x3c] sm:$0xf]
    %v4652 = vunpack.c.l.b16 %v4620
    %v4653 = vunpack.c.l.b16 %v4621
    %v4654 = vunpack.c.l.b16 %v4622
    %v4655 = vunpack.c.l.b16 %v4623
    %v4656 = vunpack.c.l.b16 %v4624
    %v4657 = vunpack.c.l.b16 %v4625
    %v4658 = vunpack.c.l.b16 %v4626
    %v4659 = vunpack.c.l.b16 %v4627
    %v4660 = vunpack.c.l.b16 %v4628
    %v4661 = vunpack.c.l.b16 %v4629
    %v4662 = vunpack.c.l.b16 %v4630
    %v4663 = vunpack.c.l.b16 %v4631
    %v4664 = vunpack.c.l.b16 %v4632
    %v4665 = vunpack.c.l.b16 %v4633
    %v4666 = vunpack.c.l.b16 %v4634
    %v4667 = vunpack.c.l.b16 %v4635
    %v4668 = vpack.c.b16 %v4653, %v4652
    %v4669 = vpack.c.b16 %v4655, %v4654
    %v4670 = vpack.c.b16 %v4657, %v4656
    %v4671 = vpack.c.b16 %v4659, %v4658
    %v4672 = vpack.c.b16 %v4661, %v4660
    %v4673 = vpack.c.b16 %v4663, %v4662
    %v4674 = vpack.c.b16 %v4665, %v4664
    %v4675 = vpack.c.b16 %v4667, %v4666
    %4684 = vmatprep.subr.bf16.mxu0 0
    %4685 = vmatpush1.bf16.msra.mxu0 %v4668
    %4686 = vmatprep.subr.bf16.mxu0 0
    %4687 = vmatpush1.bf16.msra.mxu0 %v4669
    %4688 = vmatprep.subr.bf16.mxu0 0
    %4689 = vmatpush1.bf16.msra.mxu0 %v4670
    %4690 = vmatprep.subr.bf16.mxu0 0
    %4691 = vmatpush1.bf16.msra.mxu0 %v4671
    %4692 = vmatprep.subr.bf16.mxu0 0
    %4693 = vmatpush1.bf16.msra.mxu0 %v4672
    %4694 = vmatprep.subr.bf16.mxu0 0
    %4695 = vmatpush1.bf16.msra.mxu0 %v4673
    %4696 = vmatprep.subr.bf16.mxu0 0
    %4697 = vmatpush1.bf16.msra.mxu0 %v4674
    %4698 = vmatprep.subr.bf16.mxu0 0
    %4699 = vmatpush1.bf16.msra.mxu0 %v4675
    %4700 = vmatprep.subr.bf16.mxu0 0
    %4701 = vmatpush1.bf16.msra.mxu0 0
    %4702 = vmatprep.subr.bf16.mxu0 0
    %4703 = vmatpush1.bf16.msra.mxu0 0
    %4704 = vmatprep.subr.bf16.mxu0 0
    %4705 = vmatpush1.bf16.msra.mxu0 0
    %4706 = vmatprep.subr.bf16.mxu0 0
    %4707 = vmatpush1.bf16.msra.mxu0 0
    %4708 = vmatprep.subr.bf16.mxu0 0
    %4709 = vmatpush1.bf16.msra.mxu0 0
    %4710 = vmatprep.subr.bf16.mxu0 0
    %4711 = vmatpush1.bf16.msra.mxu0 0
    %4712 = vmatprep.subr.bf16.mxu0 0
    %4713 = vmatpush1.bf16.msra.mxu0 0
    %4714 = vmatprep.subr.bf16.mxu0 0
    %4715 = vmatpush1.bf16.msra.mxu0 0
    %4716 = vmatprep.mubr.bf16.mxu0 0
    %4717 = vmatmul.mubr.bf16.gmra.mrb[0].mxu0 %v4618
    %v4718 = vpop.f32.mrb[0].mxu0
    %v4719 = vadd.f32 0.0, %v4718
    %v4720 = vpop.f32.mrb[0].mxu0
    %v4721 = vpop.f32.mrb[0].mxu0
    %v4722 = vpop.f32.mrb[0].mxu0
    %4723 = vdwg.mxu0
    %v4724 = vadd.f32 %v4344, %v4719
    %s4725 = scalar_lea.vmem %s0, 24
    %v4726 = vld [vmem:[%s4725] sm:$0x3]
    %v4729 = vunpack.c.l.s4 1966171168
    %v4730 = vunpack.c.0.s8 %v4729
    %v4731 = vlaneseq
    %v4732 = vshrl.u32 %v4731, 7
    %v4733 = vsub.s32 %v4730, %v4732
    %v4734 = vrot.slane %v4726, %v4733
    %v4735 = vcombine.high %v4734, %v4734
    %v4737 = vunpack.c.l.s4 1966171168
    %v4738 = vunpack.c.0.s8 %v4737
    %v4739 = vlaneseq
    %v4740 = vshrl.u32 %v4739, 7
    %v4741 = vsub.s32 %v4738, %v4740
    %v4742 = vrot.slane %v4734, %v4741
    %v4744 = vunpack.c.l.s4 1966171168
    %v4745 = vunpack.c.0.s8 %v4744
    %v4746 = vlaneseq
    %v4747 = vshrl.u32 %v4746, 7
    %v4748 = vsub.s32 %v4745, %v4747
    %v4749 = vrot.slane %v4735, %v4748
    %4752 = vmatprep.subr.bf16.mxu0 0
    %4753 = vmatpush1.bf16.msra.mxu0 %v160
    %4754 = vmatprep.subr.bf16.mxu0 0
    %4755 = vmatpush1.bf16.msra.mxu0 %v161
    %4756 = vmatprep.subr.bf16.mxu0 0
    %4757 = vmatpush1.bf16.msra.mxu0 %v162
    %4758 = vmatprep.subr.bf16.mxu0 0
    %4759 = vmatpush1.bf16.msra.mxu0 %v163
    %4760 = vmatprep.subr.bf16.mxu0 0
    %4761 = vmatpush1.bf16.msra.mxu0 %v164
    %4762 = vmatprep.subr.bf16.mxu0 0
    %4763 = vmatpush1.bf16.msra.mxu0 %v165
    %4764 = vmatprep.subr.bf16.mxu0 0
    %4765 = vmatpush1.bf16.msra.mxu0 %v166
    %4766 = vmatprep.subr.bf16.mxu0 0
    %4767 = vmatpush1.bf16.msra.mxu0 %v167
    %4768 = vmatprep.subr.bf16.mxu0 0
    %4769 = vmatpush1.bf16.msra.mxu0 %v168
    %4770 = vmatprep.subr.bf16.mxu0 0
    %4771 = vmatpush1.bf16.msra.mxu0 %v169
    %4772 = vmatprep.subr.bf16.mxu0 0
    %4773 = vmatpush1.bf16.msra.mxu0 %v170
    %4774 = vmatprep.subr.bf16.mxu0 0
    %4775 = vmatpush1.bf16.msra.mxu0 %v171
    %4776 = vmatprep.subr.bf16.mxu0 0
    %4777 = vmatpush1.bf16.msra.mxu0 %v172
    %4778 = vmatprep.subr.bf16.mxu0 0
    %4779 = vmatpush1.bf16.msra.mxu0 %v173
    %4780 = vmatprep.subr.bf16.mxu0 0
    %4781 = vmatpush1.bf16.msra.mxu0 %v174
    %4782 = vmatprep.subr.bf16.mxu0 0
    %4783 = vmatpush1.bf16.msra.mxu0 %v175
    %4784 = vmatprep.mubr.bf16.mxu0 %v4749
    %4785 = vmatmul.mubr.bf16.gmra.mrb[0].mxu0 %v4742
    %v4786 = vpop.f32.mrb[0].mxu0
    %v4787 = vadd.f32 0.0, %v4786
    %v4788 = vpop.f32.mrb[0].mxu0
    %v4789 = vpop.f32.mrb[0].mxu0
    %v4790 = vpop.f32.mrb[0].mxu0
    %4791 = vdwg.mxu0
    %s4792 = scalar_lea.vmem %s1, 24
    %v4793 = vld [vmem:[%s4792] sm:$0x3]
    %v4796 = vunpack.c.l.s4 1966171168
    %v4797 = vunpack.c.0.s8 %v4796
    %v4798 = vlaneseq
    %v4799 = vshrl.u32 %v4798, 7
    %v4800 = vsub.s32 %v4797, %v4799
    %v4801 = vrot.slane %v4793, %v4800
    %v4802 = vcombine.high %v4801, %v4801
    %v4804 = vunpack.c.l.s4 1966171168
    %v4805 = vunpack.c.0.s8 %v4804
    %v4806 = vlaneseq
    %v4807 = vshrl.u32 %v4806, 7
    %v4808 = vsub.s32 %v4805, %v4807
    %v4809 = vrot.slane %v4801, %v4808
    %v4811 = vunpack.c.l.s4 1966171168
    %v4812 = vunpack.c.0.s8 %v4811
    %v4813 = vlaneseq
    %v4814 = vshrl.u32 %v4813, 7
    %v4815 = vsub.s32 %v4812, %v4814
    %v4816 = vrot.slane %v4802, %v4815
    %4819 = vmatprep.subr.bf16.mxu0 0
    %4820 = vmatpush1.bf16.msra.mxu0 %v160
    %4821 = vmatprep.subr.bf16.mxu0 0
    %4822 = vmatpush1.bf16.msra.mxu0 %v161
    %4823 = vmatprep.subr.bf16.mxu0 0
    %4824 = vmatpush1.bf16.msra.mxu0 %v162
    %4825 = vmatprep.subr.bf16.mxu0 0
    %4826 = vmatpush1.bf16.msra.mxu0 %v163
    %4827 = vmatprep.subr.bf16.mxu0 0
    %4828 = vmatpush1.bf16.msra.mxu0 %v164
    %4829 = vmatprep.subr.bf16.mxu0 0
    %4830 = vmatpush1.bf16.msra.mxu0 %v165
    %4831 = vmatprep.subr.bf16.mxu0 0
    %4832 = vmatpush1.bf16.msra.mxu0 %v166
    %4833 = vmatprep.subr.bf16.mxu0 0
    %4834 = vmatpush1.bf16.msra.mxu0 %v167
    %4835 = vmatprep.subr.bf16.mxu0 0
    %4836 = vmatpush1.bf16.msra.mxu0 %v168
    %4837 = vmatprep.subr.bf16.mxu0 0
    %4838 = vmatpush1.bf16.msra.mxu0 %v169
    %4839 = vmatprep.subr.bf16.mxu0 0
    %4840 = vmatpush1.bf16.msra.mxu0 %v170
    %4841 = vmatprep.subr.bf16.mxu0 0
    %4842 = vmatpush1.bf16.msra.mxu0 %v171
    %4843 = vmatprep.subr.bf16.mxu0 0
    %4844 = vmatpush1.bf16.msra.mxu0 %v172
    %4845 = vmatprep.subr.bf16.mxu0 0
    %4846 = vmatpush1.bf16.msra.mxu0 %v173
    %4847 = vmatprep.subr.bf16.mxu0 0
    %4848 = vmatpush1.bf16.msra.mxu0 %v174
    %4849 = vmatprep.subr.bf16.mxu0 0
    %4850 = vmatpush1.bf16.msra.mxu0 %v175
    %4851 = vmatprep.mubr.bf16.mxu0 %v4816
    %4852 = vmatmul.mubr.bf16.gmra.mrb[0].mxu0 %v4809
    %v4853 = vpop.f32.mrb[0].mxu0
    %v4854 = vadd.f32 0.0, %v4853
    %v4855 = vpop.f32.mrb[0].mxu0
    %v4856 = vpop.f32.mrb[0].mxu0
    %v4857 = vpop.f32.mrb[0].mxu0
    %4858 = vdwg.mxu0
    %v4859 = vmax.f32 %v4787, %v4854
    %s4860 = scalar_lea.vmem %s2, 24
    %v4861 = vld [vmem:[%s4860] sm:$0x3]
    %v4864 = vunpack.c.l.s4 1966171168
    %v4865 = vunpack.c.0.s8 %v4864
    %v4866 = vlaneseq
    %v4867 = vshrl.u32 %v4866, 7
    %v4868 = vsub.s32 %v4865, %v4867
    %v4869 = vrot.slane %v4861, %v4868
    %v4870 = vcombine.high %v4869, %v4869
    %v4872 = vunpack.c.l.s4 1966171168
    %v4873 = vunpack.c.0.s8 %v4872
    %v4874 = vlaneseq
    %v4875 = vshrl.u32 %v4874, 7
    %v4876 = vsub.s32 %v4873, %v4875
    %v4877 = vrot.slane %v4869, %v4876
    %v4879 = vunpack.c.l.s4 1966171168
    %v4880 = vunpack.c.0.s8 %v4879
    %v4881 = vlaneseq
    %v4882 = vshrl.u32 %v4881, 7
    %v4883 = vsub.s32 %v4880, %v4882
    %v4884 = vrot.slane %v4870, %v4883
    %4887 = vmatprep.subr.bf16.mxu0 0
    %4888 = vmatpush1.bf16.msra.mxu0 %v160
    %4889 = vmatprep.subr.bf16.mxu0 0
    %4890 = vmatpush1.bf16.msra.mxu0 %v161
    %4891 = vmatprep.subr.bf16.mxu0 0
    %4892 = vmatpush1.bf16.msra.mxu0 %v162
    %4893 = vmatprep.subr.bf16.mxu0 0
    %4894 = vmatpush1.bf16.msra.mxu0 %v163
    %4895 = vmatprep.subr.bf16.mxu0 0
    %4896 = vmatpush1.bf16.msra.mxu0 %v164
    %4897 = vmatprep.subr.bf16.mxu0 0
    %4898 = vmatpush1.bf16.msra.mxu0 %v165
    %4899 = vmatprep.subr.bf16.mxu0 0
    %4900 = vmatpush1.bf16.msra.mxu0 %v166
    %4901 = vmatprep.subr.bf16.mxu0 0
    %4902 = vmatpush1.bf16.msra.mxu0 %v167
    %4903 = vmatprep.subr.bf16.mxu0 0
    %4904 = vmatpush1.bf16.msra.mxu0 %v168
    %4905 = vmatprep.subr.bf16.mxu0 0
    %4906 = vmatpush1.bf16.msra.mxu0 %v169
    %4907 = vmatprep.subr.bf16.mxu0 0
    %4908 = vmatpush1.bf16.msra.mxu0 %v170
    %4909 = vmatprep.subr.bf16.mxu0 0
    %4910 = vmatpush1.bf16.msra.mxu0 %v171
    %4911 = vmatprep.subr.bf16.mxu0 0
    %4912 = vmatpush1.bf16.msra.mxu0 %v172
    %4913 = vmatprep.subr.bf16.mxu0 0
    %4914 = vmatpush1.bf16.msra.mxu0 %v173
    %4915 = vmatprep.subr.bf16.mxu0 0
    %4916 = vmatpush1.bf16.msra.mxu0 %v174
    %4917 = vmatprep.subr.bf16.mxu0 0
    %4918 = vmatpush1.bf16.msra.mxu0 %v175
    %4919 = vmatprep.mubr.bf16.mxu0 %v4884
    %4920 = vmatmul.mubr.bf16.gmra.mrb[0].mxu0 %v4877
    %v4921 = vpop.f32.mrb[0].mxu0
    %v4922 = vadd.f32 0.0, %v4921
    %v4923 = vpop.f32.mrb[0].mxu0
    %v4924 = vpop.f32.mrb[0].mxu0
    %v4925 = vpop.f32.mrb[0].mxu0
    %4926 = vdwg.mxu0
    %s4927 = scalar_lea.vmem %s3, 24
    %v4928 = vld [vmem:[%s4927] sm:$0x3]
    %v4931 = vunpack.c.l.s4 1966171168
    %v4932 = vunpack.c.0.s8 %v4931
    %v4933 = vlaneseq
    %v4934 = vshrl.u32 %v4933, 7
    %v4935 = vsub.s32 %v4932, %v4934
    %v4936 = vrot.slane %v4928, %v4935
    %v4937 = vcombine.high %v4936, %v4936
    %v4939 = vunpack.c.l.s4 1966171168
    %v4940 = vunpack.c.0.s8 %v4939
    %v4941 = vlaneseq
    %v4942 = vshrl.u32 %v4941, 7
    %v4943 = vsub.s32 %v4940, %v4942
    %v4944 = vrot.slane %v4936, %v4943
    %v4946 = vunpack.c.l.s4 1966171168
    %v4947 = vunpack.c.0.s8 %v4946
    %v4948 = vlaneseq
    %v4949 = vshrl.u32 %v4948, 7
    %v4950 = vsub.s32 %v4947, %v4949
    %v4951 = vrot.slane %v4937, %v4950
    %4954 = vmatprep.subr.bf16.mxu0 0
    %4955 = vmatpush1.bf16.msra.mxu0 %v160
    %4956 = vmatprep.subr.bf16.mxu0 0
    %4957 = vmatpush1.bf16.msra.mxu0 %v161
    %4958 = vmatprep.subr.bf16.mxu0 0
    %4959 = vmatpush1.bf16.msra.mxu0 %v162
    %4960 = vmatprep.subr.bf16.mxu0 0
    %4961 = vmatpush1.bf16.msra.mxu0 %v163
    %4962 = vmatprep.subr.bf16.mxu0 0
    %4963 = vmatpush1.bf16.msra.mxu0 %v164
    %4964 = vmatprep.subr.bf16.mxu0 0
    %4965 = vmatpush1.bf16.msra.mxu0 %v165
    %4966 = vmatprep.subr.bf16.mxu0 0
    %4967 = vmatpush1.bf16.msra.mxu0 %v166
    %4968 = vmatprep.subr.bf16.mxu0 0
    %4969 = vmatpush1.bf16.msra.mxu0 %v167
    %4970 = vmatprep.subr.bf16.mxu0 0
    %4971 = vmatpush1.bf16.msra.mxu0 %v168
    %4972 = vmatprep.subr.bf16.mxu0 0
    %4973 = vmatpush1.bf16.msra.mxu0 %v169
    %4974 = vmatprep.subr.bf16.mxu0 0
    %4975 = vmatpush1.bf16.msra.mxu0 %v170
    %4976 = vmatprep.subr.bf16.mxu0 0
    %4977 = vmatpush1.bf16.msra.mxu0 %v171
    %4978 = vmatprep.subr.bf16.mxu0 0
    %4979 = vmatpush1.bf16.msra.mxu0 %v172
    %4980 = vmatprep.subr.bf16.mxu0 0
    %4981 = vmatpush1.bf16.msra.mxu0 %v173
    %4982 = vmatprep.subr.bf16.mxu0 0
    %4983 = vmatpush1.bf16.msra.mxu0 %v174
    %4984 = vmatprep.subr.bf16.mxu0 0
    %4985 = vmatpush1.bf16.msra.mxu0 %v175
    %4986 = vmatprep.mubr.bf16.mxu0 %v4951
    %4987 = vmatmul.mubr.bf16.gmra.mrb[0].mxu0 %v4944
    %v4988 = vpop.f32.mrb[0].mxu0
    %v4989 = vadd.f32 0.0, %v4988
    %v4990 = vpop.f32.mrb[0].mxu0
    %v4991 = vpop.f32.mrb[0].mxu0
    %v4992 = vpop.f32.mrb[0].mxu0
    %4993 = vdwg.mxu0
    %v4994 = vmax.f32 %v4922, %v4989
    %v4995 = vmax.f32 %v4859, %v4994
    %v4996 = vadd.f32 %v4995, %v437
    %v4997 = vmax.f32 %v4996, 0.0
    %v4998 = vpack.c.bf16 %v4997, %v4997
    %s4999 = scalar_lea.vmem %s6, 768
    %v5000 = vld [vmem:[%s4999] sm:$0xf]
    %v5001 = vld [vmem:[%s4999 + $0x4] sm:$0xf]
    %v5002 = vld [vmem:[%s4999 + $0x8] sm:$0xf]
    %v5003 = vld [vmem:[%s4999 + $0xc] sm:$0xf]
    %v5004 = vld [vmem:[%s4999 + $0x10] sm:$0xf]
    %v5005 = vld [vmem:[%s4999 + $0x14] sm:$0xf]
    %v5006 = vld [vmem:[%s4999 + $0x18] sm:$0xf]
    %v5007 = vld [vmem:[%s4999 + $0x1c] sm:$0xf]
    %v5008 = vld [vmem:[%s4999 + $0x20] sm:$0xf]
    %v5009 = vld [vmem:[%s4999 + $0x24] sm:$0xf]
    %v5010 = vld [vmem:[%s4999 + $0x28] sm:$0xf]
    %v5011 = vld [vmem:[%s4999 + $0x2c] sm:$0xf]
    %v5012 = vld [vmem:[%s4999 + $0x30] sm:$0xf]
    %v5013 = vld [vmem:[%s4999 + $0x34] sm:$0xf]
    %v5014 = vld [vmem:[%s4999 + $0x38] sm:$0xf]
    %v5015 = vld [vmem:[%s4999 + $0x3c] sm:$0xf]
    %v5032 = vunpack.c.l.b16 %v5000
    %v5033 = vunpack.c.l.b16 %v5001
    %v5034 = vunpack.c.l.b16 %v5002
    %v5035 = vunpack.c.l.b16 %v5003
    %v5036 = vunpack.c.l.b16 %v5004
    %v5037 = vunpack.c.l.b16 %v5005
    %v5038 = vunpack.c.l.b16 %v5006
    %v5039 = vunpack.c.l.b16 %v5007
    %v5040 = vunpack.c.l.b16 %v5008
    %v5041 = vunpack.c.l.b16 %v5009
    %v5042 = vunpack.c.l.b16 %v5010
    %v5043 = vunpack.c.l.b16 %v5011
    %v5044 = vunpack.c.l.b16 %v5012
    %v5045 = vunpack.c.l.b16 %v5013
    %v5046 = vunpack.c.l.b16 %v5014
    %v5047 = vunpack.c.l.b16 %v5015
    %v5048 = vpack.c.b16 %v5033, %v5032
    %v5049 = vpack.c.b16 %v5035, %v5034
    %v5050 = vpack.c.b16 %v5037, %v5036
    %v5051 = vpack.c.b16 %v5039, %v5038
    %v5052 = vpack.c.b16 %v5041, %v5040
    %v5053 = vpack.c.b16 %v5043, %v5042
    %v5054 = vpack.c.b16 %v5045, %v5044
    %v5055 = vpack.c.b16 %v5047, %v5046
    %5064 = vmatprep.subr.bf16.mxu0 0
    %5065 = vmatpush1.bf16.msra.mxu0 %v5048
    %5066 = vmatprep.subr.bf16.mxu0 0
    %5067 = vmatpush1.bf16.msra.mxu0 %v5049
    %5068 = vmatprep.subr.bf16.mxu0 0
    %5069 = vmatpush1.bf16.msra.mxu0 %v5050
    %5070 = vmatprep.subr.bf16.mxu0 0
    %5071 = vmatpush1.bf16.msra.mxu0 %v5051
    %5072 = vmatprep.subr.bf16.mxu0 0
    %5073 = vmatpush1.bf16.msra.mxu0 %v5052
    %5074 = vmatprep.subr.bf16.mxu0 0
    %5075 = vmatpush1.bf16.msra.mxu0 %v5053
    %5076 = vmatprep.subr.bf16.mxu0 0
    %5077 = vmatpush1.bf16.msra.mxu0 %v5054
    %5078 = vmatprep.subr.bf16.mxu0 0
    %5079 = vmatpush1.bf16.msra.mxu0 %v5055
    %5080 = vmatprep.subr.bf16.mxu0 0
    %5081 = vmatpush1.bf16.msra.mxu0 0
    %5082 = vmatprep.subr.bf16.mxu0 0
    %5083 = vmatpush1.bf16.msra.mxu0 0
    %5084 = vmatprep.subr.bf16.mxu0 0
    %5085 = vmatpush1.bf16.msra.mxu0 0
    %5086 = vmatprep.subr.bf16.mxu0 0
    %5087 = vmatpush1.bf16.msra.mxu0 0
    %5088 = vmatprep.subr.bf16.mxu0 0
    %5089 = vmatpush1.bf16.msra.mxu0 0
    %5090 = vmatprep.subr.bf16.mxu0 0
    %5091 = vmatpush1.bf16.msra.mxu0 0
    %5092 = vmatprep.subr.bf16.mxu0 0
    %5093 = vmatpush1.bf16.msra.mxu0 0
    %5094 = vmatprep.subr.bf16.mxu0 0
    %5095 = vmatpush1.bf16.msra.mxu0 0
    %5096 = vmatprep.mubr.bf16.mxu0 0
    %5097 = vmatmul.mubr.bf16.gmra.mrb[0].mxu0 %v4998
    %v5098 = vpop.f32.mrb[0].mxu0
    %v5099 = vadd.f32 0.0, %v5098
    %v5100 = vpop.f32.mrb[0].mxu0
    %v5101 = vpop.f32.mrb[0].mxu0
    %v5102 = vpop.f32.mrb[0].mxu0
    %5103 = vdwg.mxu0
    %v5104 = vadd.f32 %v4724, %v5099
    %s5105 = scalar_lea.vmem %s0, 26
    %v5106 = vld [vmem:[%s5105] sm:$0x3]
    %v5109 = vunpack.c.l.s4 1966171168
    %v5110 = vunpack.c.0.s8 %v5109
    %v5111 = vlaneseq
    %v5112 = vshrl.u32 %v5111, 7
    %v5113 = vsub.s32 %v5110, %v5112
    %v5114 = vrot.slane %v5106, %v5113
    %v5115 = vcombine.high %v5114, %v5114
    %v5117 = vunpack.c.l.s4 1966171168
    %v5118 = vunpack.c.0.s8 %v5117
    %v5119 = vlaneseq
    %v5120 = vshrl.u32 %v5119, 7
    %v5121 = vsub.s32 %v5118, %v5120
    %v5122 = vrot.slane %v5114, %v5121
    %v5124 = vunpack.c.l.s4 1966171168
    %v5125 = vunpack.c.0.s8 %v5124
    %v5126 = vlaneseq
    %v5127 = vshrl.u32 %v5126, 7
    %v5128 = vsub.s32 %v5125, %v5127
    %v5129 = vrot.slane %v5115, %v5128
    %5132 = vmatprep.subr.bf16.mxu0 0
    %5133 = vmatpush1.bf16.msra.mxu0 %v160
    %5134 = vmatprep.subr.bf16.mxu0 0
    %5135 = vmatpush1.bf16.msra.mxu0 %v161
    %5136 = vmatprep.subr.bf16.mxu0 0
    %5137 = vmatpush1.bf16.msra.mxu0 %v162
    %5138 = vmatprep.subr.bf16.mxu0 0
    %5139 = vmatpush1.bf16.msra.mxu0 %v163
    %5140 = vmatprep.subr.bf16.mxu0 0
    %5141 = vmatpush1.bf16.msra.mxu0 %v164
    %5142 = vmatprep.subr.bf16.mxu0 0
    %5143 = vmatpush1.bf16.msra.mxu0 %v165
    %5144 = vmatprep.subr.bf16.mxu0 0
    %5145 = vmatpush1.bf16.msra.mxu0 %v166
    %5146 = vmatprep.subr.bf16.mxu0 0
    %5147 = vmatpush1.bf16.msra.mxu0 %v167
    %5148 = vmatprep.subr.bf16.mxu0 0
    %5149 = vmatpush1.bf16.msra.mxu0 %v168
    %5150 = vmatprep.subr.bf16.mxu0 0
    %5151 = vmatpush1.bf16.msra.mxu0 %v169
    %5152 = vmatprep.subr.bf16.mxu0 0
    %5153 = vmatpush1.bf16.msra.mxu0 %v170
    %5154 = vmatprep.subr.bf16.mxu0 0
    %5155 = vmatpush1.bf16.msra.mxu0 %v171
    %5156 = vmatprep.subr.bf16.mxu0 0
    %5157 = vmatpush1.bf16.msra.mxu0 %v172
    %5158 = vmatprep.subr.bf16.mxu0 0
    %5159 = vmatpush1.bf16.msra.mxu0 %v173
    %5160 = vmatprep.subr.bf16.mxu0 0
    %5161 = vmatpush1.bf16.msra.mxu0 %v174
    %5162 = vmatprep.subr.bf16.mxu0 0
    %5163 = vmatpush1.bf16.msra.mxu0 %v175
    %5164 = vmatprep.mubr.bf16.mxu0 %v5129
    %5165 = vmatmul.mubr.bf16.gmra.mrb[0].mxu0 %v5122
    %v5166 = vpop.f32.mrb[0].mxu0
    %v5167 = vadd.f32 0.0, %v5166
    %v5168 = vpop.f32.mrb[0].mxu0
    %v5169 = vpop.f32.mrb[0].mxu0
    %v5170 = vpop.f32.mrb[0].mxu0
    %5171 = vdwg.mxu0
    %s5172 = scalar_lea.vmem %s1, 26
    %v5173 = vld [vmem:[%s5172] sm:$0x3]
    %v5176 = vunpack.c.l.s4 1966171168
    %v5177 = vunpack.c.0.s8 %v5176
    %v5178 = vlaneseq
    %v5179 = vshrl.u32 %v5178, 7
    %v5180 = vsub.s32 %v5177, %v5179
    %v5181 = vrot.slane %v5173, %v5180
    %v5182 = vcombine.high %v5181, %v5181
    %v5184 = vunpack.c.l.s4 1966171168
    %v5185 = vunpack.c.0.s8 %v5184
    %v5186 = vlaneseq
    %v5187 = vshrl.u32 %v5186, 7
    %v5188 = vsub.s32 %v5185, %v5187
    %v5189 = vrot.slane %v5181, %v5188
    %v5191 = vunpack.c.l.s4 1966171168
    %v5192 = vunpack.c.0.s8 %v5191
    %v5193 = vlaneseq
    %v5194 = vshrl.u32 %v5193, 7
    %v5195 = vsub.s32 %v5192, %v5194
    %v5196 = vrot.slane %v5182, %v5195
    %5199 = vmatprep.subr.bf16.mxu0 0
    %5200 = vmatpush1.bf16.msra.mxu0 %v160
    %5201 = vmatprep.subr.bf16.mxu0 0
    %5202 = vmatpush1.bf16.msra.mxu0 %v161
    %5203 = vmatprep.subr.bf16.mxu0 0
    %5204 = vmatpush1.bf16.msra.mxu0 %v162
    %5205 = vmatprep.subr.bf16.mxu0 0
    %5206 = vmatpush1.bf16.msra.mxu0 %v163
    %5207 = vmatprep.subr.bf16.mxu0 0
    %5208 = vmatpush1.bf16.msra.mxu0 %v164
    %5209 = vmatprep.subr.bf16.mxu0 0
    %5210 = vmatpush1.bf16.msra.mxu0 %v165
    %5211 = vmatprep.subr.bf16.mxu0 0
    %5212 = vmatpush1.bf16.msra.mxu0 %v166
    %5213 = vmatprep.subr.bf16.mxu0 0
    %5214 = vmatpush1.bf16.msra.mxu0 %v167
    %5215 = vmatprep.subr.bf16.mxu0 0
    %5216 = vmatpush1.bf16.msra.mxu0 %v168
    %5217 = vmatprep.subr.bf16.mxu0 0
    %5218 = vmatpush1.bf16.msra.mxu0 %v169
    %5219 = vmatprep.subr.bf16.mxu0 0
    %5220 = vmatpush1.bf16.msra.mxu0 %v170
    %5221 = vmatprep.subr.bf16.mxu0 0
    %5222 = vmatpush1.bf16.msra.mxu0 %v171
    %5223 = vmatprep.subr.bf16.mxu0 0
    %5224 = vmatpush1.bf16.msra.mxu0 %v172
    %5225 = vmatprep.subr.bf16.mxu0 0
    %5226 = vmatpush1.bf16.msra.mxu0 %v173
    %5227 = vmatprep.subr.bf16.mxu0 0
    %5228 = vmatpush1.bf16.msra.mxu0 %v174
    %5229 = vmatprep.subr.bf16.mxu0 0
    %5230 = vmatpush1.bf16.msra.mxu0 %v175
    %5231 = vmatprep.mubr.bf16.mxu0 %v5196
    %5232 = vmatmul.mubr.bf16.gmra.mrb[0].mxu0 %v5189
    %v5233 = vpop.f32.mrb[0].mxu0
    %v5234 = vadd.f32 0.0, %v5233
    %v5235 = vpop.f32.mrb[0].mxu0
    %v5236 = vpop.f32.mrb[0].mxu0
    %v5237 = vpop.f32.mrb[0].mxu0
    %5238 = vdwg.mxu0
    %v5239 = vmax.f32 %v5167, %v5234
    %s5240 = scalar_lea.vmem %s2, 26
    %v5241 = vld [vmem:[%s5240] sm:$0x3]
    %v5244 = vunpack.c.l.s4 1966171168
    %v5245 = vunpack.c.0.s8 %v5244
    %v5246 = vlaneseq
    %v5247 = vshrl.u32 %v5246, 7
    %v5248 = vsub.s32 %v5245, %v5247
    %v5249 = vrot.slane %v5241, %v5248
    %v5250 = vcombine.high %v5249, %v5249
    %v5252 = vunpack.c.l.s4 1966171168
    %v5253 = vunpack.c.0.s8 %v5252
    %v5254 = vlaneseq
    %v5255 = vshrl.u32 %v5254, 7
    %v5256 = vsub.s32 %v5253, %v5255
    %v5257 = vrot.slane %v5249, %v5256
    %v5259 = vunpack.c.l.s4 1966171168
    %v5260 = vunpack.c.0.s8 %v5259
    %v5261 = vlaneseq
    %v5262 = vshrl.u32 %v5261, 7
    %v5263 = vsub.s32 %v5260, %v5262
    %v5264 = vrot.slane %v5250, %v5263
    %5267 = vmatprep.subr.bf16.mxu0 0
    %5268 = vmatpush1.bf16.msra.mxu0 %v160
    %5269 = vmatprep.subr.bf16.mxu0 0
    %5270 = vmatpush1.bf16.msra.mxu0 %v161
    %5271 = vmatprep.subr.bf16.mxu0 0
    %5272 = vmatpush1.bf16.msra.mxu0 %v162
    %5273 = vmatprep.subr.bf16.mxu0 0
    %5274 = vmatpush1.bf16.msra.mxu0 %v163
    %5275 = vmatprep.subr.bf16.mxu0 0
    %5276 = vmatpush1.bf16.msra.mxu0 %v164
    %5277 = vmatprep.subr.bf16.mxu0 0
    %5278 = vmatpush1.bf16.msra.mxu0 %v165
    %5279 = vmatprep.subr.bf16.mxu0 0
    %5280 = vmatpush1.bf16.msra.mxu0 %v166
    %5281 = vmatprep.subr.bf16.mxu0 0
    %5282 = vmatpush1.bf16.msra.mxu0 %v167
    %5283 = vmatprep.subr.bf16.mxu0 0
    %5284 = vmatpush1.bf16.msra.mxu0 %v168
    %5285 = vmatprep.subr.bf16.mxu0 0
    %5286 = vmatpush1.bf16.msra.mxu0 %v169
    %5287 = vmatprep.subr.bf16.mxu0 0
    %5288 = vmatpush1.bf16.msra.mxu0 %v170
    %5289 = vmatprep.subr.bf16.mxu0 0
    %5290 = vmatpush1.bf16.msra.mxu0 %v171
    %5291 = vmatprep.subr.bf16.mxu0 0
    %5292 = vmatpush1.bf16.msra.mxu0 %v172
    %5293 = vmatprep.subr.bf16.mxu0 0
    %5294 = vmatpush1.bf16.msra.mxu0 %v173
    %5295 = vmatprep.subr.bf16.mxu0 0
    %5296 = vmatpush1.bf16.msra.mxu0 %v174
    %5297 = vmatprep.subr.bf16.mxu0 0
    %5298 = vmatpush1.bf16.msra.mxu0 %v175
    %5299 = vmatprep.mubr.bf16.mxu0 %v5264
    %5300 = vmatmul.mubr.bf16.gmra.mrb[0].mxu0 %v5257
    %v5301 = vpop.f32.mrb[0].mxu0
    %v5302 = vadd.f32 0.0, %v5301
    %v5303 = vpop.f32.mrb[0].mxu0
    %v5304 = vpop.f32.mrb[0].mxu0
    %v5305 = vpop.f32.mrb[0].mxu0
    %5306 = vdwg.mxu0
    %s5307 = scalar_lea.vmem %s3, 26
    %v5308 = vld [vmem:[%s5307] sm:$0x3]
    %v5311 = vunpack.c.l.s4 1966171168
    %v5312 = vunpack.c.0.s8 %v5311
    %v5313 = vlaneseq
    %v5314 = vshrl.u32 %v5313, 7
    %v5315 = vsub.s32 %v5312, %v5314
    %v5316 = vrot.slane %v5308, %v5315
    %v5317 = vcombine.high %v5316, %v5316
    %v5319 = vunpack.c.l.s4 1966171168
    %v5320 = vunpack.c.0.s8 %v5319
    %v5321 = vlaneseq
    %v5322 = vshrl.u32 %v5321, 7
    %v5323 = vsub.s32 %v5320, %v5322
    %v5324 = vrot.slane %v5316, %v5323
    %v5326 = vunpack.c.l.s4 1966171168
    %v5327 = vunpack.c.0.s8 %v5326
    %v5328 = vlaneseq
    %v5329 = vshrl.u32 %v5328, 7
    %v5330 = vsub.s32 %v5327, %v5329
    %v5331 = vrot.slane %v5317, %v5330
    %5334 = vmatprep.subr.bf16.mxu0 0
    %5335 = vmatpush1.bf16.msra.mxu0 %v160
    %5336 = vmatprep.subr.bf16.mxu0 0
    %5337 = vmatpush1.bf16.msra.mxu0 %v161
    %5338 = vmatprep.subr.bf16.mxu0 0
    %5339 = vmatpush1.bf16.msra.mxu0 %v162
    %5340 = vmatprep.subr.bf16.mxu0 0
    %5341 = vmatpush1.bf16.msra.mxu0 %v163
    %5342 = vmatprep.subr.bf16.mxu0 0
    %5343 = vmatpush1.bf16.msra.mxu0 %v164
    %5344 = vmatprep.subr.bf16.mxu0 0
    %5345 = vmatpush1.bf16.msra.mxu0 %v165
    %5346 = vmatprep.subr.bf16.mxu0 0
    %5347 = vmatpush1.bf16.msra.mxu0 %v166
    %5348 = vmatprep.subr.bf16.mxu0 0
    %5349 = vmatpush1.bf16.msra.mxu0 %v167
    %5350 = vmatprep.subr.bf16.mxu0 0
    %5351 = vmatpush1.bf16.msra.mxu0 %v168
    %5352 = vmatprep.subr.bf16.mxu0 0
    %5353 = vmatpush1.bf16.msra.mxu0 %v169
    %5354 = vmatprep.subr.bf16.mxu0 0
    %5355 = vmatpush1.bf16.msra.mxu0 %v170
    %5356 = vmatprep.subr.bf16.mxu0 0
    %5357 = vmatpush1.bf16.msra.mxu0 %v171
    %5358 = vmatprep.subr.bf16.mxu0 0
    %5359 = vmatpush1.bf16.msra.mxu0 %v172
    %5360 = vmatprep.subr.bf16.mxu0 0
    %5361 = vmatpush1.bf16.msra.mxu0 %v173
    %5362 = vmatprep.subr.bf16.mxu0 0
    %5363 = vmatpush1.bf16.msra.mxu0 %v174
    %5364 = vmatprep.subr.bf16.mxu0 0
    %5365 = vmatpush1.bf16.msra.mxu0 %v175
    %5366 = vmatprep.mubr.bf16.mxu0 %v5331
    %5367 = vmatmul.mubr.bf16.gmra.mrb[0].mxu0 %v5324
    %v5368 = vpop.f32.mrb[0].mxu0
    %v5369 = vadd.f32 0.0, %v5368
    %v5370 = vpop.f32.mrb[0].mxu0
    %v5371 = vpop.f32.mrb[0].mxu0
    %v5372 = vpop.f32.mrb[0].mxu0
    %5373 = vdwg.mxu0
    %v5374 = vmax.f32 %v5302, %v5369
    %v5375 = vmax.f32 %v5239, %v5374
    %v5376 = vadd.f32 %v5375, %v437
    %v5377 = vmax.f32 %v5376, 0.0
    %v5378 = vpack.c.bf16 %v5377, %v5377
    %s5379 = scalar_lea.vmem %s6, 832
    %v5380 = vld [vmem:[%s5379] sm:$0xf]
    %v5381 = vld [vmem:[%s5379 + $0x4] sm:$0xf]
    %v5382 = vld [vmem:[%s5379 + $0x8] sm:$0xf]
    %v5383 = vld [vmem:[%s5379 + $0xc] sm:$0xf]
    %v5384 = vld [vmem:[%s5379 + $0x10] sm:$0xf]
    %v5385 = vld [vmem:[%s5379 + $0x14] sm:$0xf]
    %v5386 = vld [vmem:[%s5379 + $0x18] sm:$0xf]
    %v5387 = vld [vmem:[%s5379 + $0x1c] sm:$0xf]
    %v5388 = vld [vmem:[%s5379 + $0x20] sm:$0xf]
    %v5389 = vld [vmem:[%s5379 + $0x24] sm:$0xf]
    %v5390 = vld [vmem:[%s5379 + $0x28] sm:$0xf]
    %v5391 = vld [vmem:[%s5379 + $0x2c] sm:$0xf]
    %v5392 = vld [vmem:[%s5379 + $0x30] sm:$0xf]
    %v5393 = vld [vmem:[%s5379 + $0x34] sm:$0xf]
    %v5394 = vld [vmem:[%s5379 + $0x38] sm:$0xf]
    %v5395 = vld [vmem:[%s5379 + $0x3c] sm:$0xf]
    %v5412 = vunpack.c.l.b16 %v5380
    %v5413 = vunpack.c.l.b16 %v5381
    %v5414 = vunpack.c.l.b16 %v5382
    %v5415 = vunpack.c.l.b16 %v5383
    %v5416 = vunpack.c.l.b16 %v5384
    %v5417 = vunpack.c.l.b16 %v5385
    %v5418 = vunpack.c.l.b16 %v5386
    %v5419 = vunpack.c.l.b16 %v5387
    %v5420 = vunpack.c.l.b16 %v5388
    %v5421 = vunpack.c.l.b16 %v5389
    %v5422 = vunpack.c.l.b16 %v5390
    %v5423 = vunpack.c.l.b16 %v5391
    %v5424 = vunpack.c.l.b16 %v5392
    %v5425 = vunpack.c.l.b16 %v5393
    %v5426 = vunpack.c.l.b16 %v5394
    %v5427 = vunpack.c.l.b16 %v5395
    %v5428 = vpack.c.b16 %v5413, %v5412
    %v5429 = vpack.c.b16 %v5415, %v5414
    %v5430 = vpack.c.b16 %v5417, %v5416
    %v5431 = vpack.c.b16 %v5419, %v5418
    %v5432 = vpack.c.b16 %v5421, %v5420
    %v5433 = vpack.c.b16 %v5423, %v5422
    %v5434 = vpack.c.b16 %v5425, %v5424
    %v5435 = vpack.c.b16 %v5427, %v5426
    %5444 = vmatprep.subr.bf16.mxu0 0
    %5445 = vmatpush1.bf16.msra.mxu0 %v5428
    %5446 = vmatprep.subr.bf16.mxu0 0
    %5447 = vmatpush1.bf16.msra.mxu0 %v5429
    %5448 = vmatprep.subr.bf16.mxu0 0
    %5449 = vmatpush1.bf16.msra.mxu0 %v5430
    %5450 = vmatprep.subr.bf16.mxu0 0
    %5451 = vmatpush1.bf16.msra.mxu0 %v5431
    %5452 = vmatprep.subr.bf16.mxu0 0
    %5453 = vmatpush1.bf16.msra.mxu0 %v5432
    %5454 = vmatprep.subr.bf16.mxu0 0
    %5455 = vmatpush1.bf16.msra.mxu0 %v5433
    %5456 = vmatprep.subr.bf16.mxu0 0
    %5457 = vmatpush1.bf16.msra.mxu0 %v5434
    %5458 = vmatprep.subr.bf16.mxu0 0
    %5459 = vmatpush1.bf16.msra.mxu0 %v5435
    %5460 = vmatprep.subr.bf16.mxu0 0
    %5461 = vmatpush1.bf16.msra.mxu0 0
    %5462 = vmatprep.subr.bf16.mxu0 0
    %5463 = vmatpush1.bf16.msra.mxu0 0
    %5464 = vmatprep.subr.bf16.mxu0 0
    %5465 = vmatpush1.bf16.msra.mxu0 0
    %5466 = vmatprep.subr.bf16.mxu0 0
    %5467 = vmatpush1.bf16.msra.mxu0 0
    %5468 = vmatprep.subr.bf16.mxu0 0
    %5469 = vmatpush1.bf16.msra.mxu0 0
    %5470 = vmatprep.subr.bf16.mxu0 0
    %5471 = vmatpush1.bf16.msra.mxu0 0
    %5472 = vmatprep.subr.bf16.mxu0 0
    %5473 = vmatpush1.bf16.msra.mxu0 0
    %5474 = vmatprep.subr.bf16.mxu0 0
    %5475 = vmatpush1.bf16.msra.mxu0 0
    %5476 = vmatprep.mubr.bf16.mxu0 0
    %5477 = vmatmul.mubr.bf16.gmra.mrb[0].mxu0 %v5378
    %v5478 = vpop.f32.mrb[0].mxu0
    %v5479 = vadd.f32 0.0, %v5478
    %v5480 = vpop.f32.mrb[0].mxu0
    %v5481 = vpop.f32.mrb[0].mxu0
    %v5482 = vpop.f32.mrb[0].mxu0
    %5483 = vdwg.mxu0
    %v5484 = vadd.f32 %v5104, %v5479
    %s5485 = scalar_lea.vmem %s0, 28
    %v5486 = vld [vmem:[%s5485] sm:$0x3]
    %v5489 = vunpack.c.l.s4 1966171168
    %v5490 = vunpack.c.0.s8 %v5489
    %v5491 = vlaneseq
    %v5492 = vshrl.u32 %v5491, 7
    %v5493 = vsub.s32 %v5490, %v5492
    %v5494 = vrot.slane %v5486, %v5493
    %v5495 = vcombine.high %v5494, %v5494
    %v5497 = vunpack.c.l.s4 1966171168
    %v5498 = vunpack.c.0.s8 %v5497
    %v5499 = vlaneseq
    %v5500 = vshrl.u32 %v5499, 7
    %v5501 = vsub.s32 %v5498, %v5500
    %v5502 = vrot.slane %v5494, %v5501
    %v5504 = vunpack.c.l.s4 1966171168
    %v5505 = vunpack.c.0.s8 %v5504
    %v5506 = vlaneseq
    %v5507 = vshrl.u32 %v5506, 7
    %v5508 = vsub.s32 %v5505, %v5507
    %v5509 = vrot.slane %v5495, %v5508
    %5512 = vmatprep.subr.bf16.mxu0 0
    %5513 = vmatpush1.bf16.msra.mxu0 %v160
    %5514 = vmatprep.subr.bf16.mxu0 0
    %5515 = vmatpush1.bf16.msra.mxu0 %v161
    %5516 = vmatprep.subr.bf16.mxu0 0
    %5517 = vmatpush1.bf16.msra.mxu0 %v162
    %5518 = vmatprep.subr.bf16.mxu0 0
    %5519 = vmatpush1.bf16.msra.mxu0 %v163
    %5520 = vmatprep.subr.bf16.mxu0 0
    %5521 = vmatpush1.bf16.msra.mxu0 %v164
    %5522 = vmatprep.subr.bf16.mxu0 0
    %5523 = vmatpush1.bf16.msra.mxu0 %v165
    %5524 = vmatprep.subr.bf16.mxu0 0
    %5525 = vmatpush1.bf16.msra.mxu0 %v166
    %5526 = vmatprep.subr.bf16.mxu0 0
    %5527 = vmatpush1.bf16.msra.mxu0 %v167
    %5528 = vmatprep.subr.bf16.mxu0 0
    %5529 = vmatpush1.bf16.msra.mxu0 %v168
    %5530 = vmatprep.subr.bf16.mxu0 0
    %5531 = vmatpush1.bf16.msra.mxu0 %v169
    %5532 = vmatprep.subr.bf16.mxu0 0
    %5533 = vmatpush1.bf16.msra.mxu0 %v170
    %5534 = vmatprep.subr.bf16.mxu0 0
    %5535 = vmatpush1.bf16.msra.mxu0 %v171
    %5536 = vmatprep.subr.bf16.mxu0 0
    %5537 = vmatpush1.bf16.msra.mxu0 %v172
    %5538 = vmatprep.subr.bf16.mxu0 0
    %5539 = vmatpush1.bf16.msra.mxu0 %v173
    %5540 = vmatprep.subr.bf16.mxu0 0
    %5541 = vmatpush1.bf16.msra.mxu0 %v174
    %5542 = vmatprep.subr.bf16.mxu0 0
    %5543 = vmatpush1.bf16.msra.mxu0 %v175
    %5544 = vmatprep.mubr.bf16.mxu0 %v5509
    %5545 = vmatmul.mubr.bf16.gmra.mrb[0].mxu0 %v5502
    %v5546 = vpop.f32.mrb[0].mxu0
    %v5547 = vadd.f32 0.0, %v5546
    %v5548 = vpop.f32.mrb[0].mxu0
    %v5549 = vpop.f32.mrb[0].mxu0
    %v5550 = vpop.f32.mrb[0].mxu0
    %5551 = vdwg.mxu0
    %s5552 = scalar_lea.vmem %s1, 28
    %v5553 = vld [vmem:[%s5552] sm:$0x3]
    %v5556 = vunpack.c.l.s4 1966171168
    %v5557 = vunpack.c.0.s8 %v5556
    %v5558 = vlaneseq
    %v5559 = vshrl.u32 %v5558, 7
    %v5560 = vsub.s32 %v5557, %v5559
    %v5561 = vrot.slane %v5553, %v5560
    %v5562 = vcombine.high %v5561, %v5561
    %v5564 = vunpack.c.l.s4 1966171168
    %v5565 = vunpack.c.0.s8 %v5564
    %v5566 = vlaneseq
    %v5567 = vshrl.u32 %v5566, 7
    %v5568 = vsub.s32 %v5565, %v5567
    %v5569 = vrot.slane %v5561, %v5568
    %v5571 = vunpack.c.l.s4 1966171168
    %v5572 = vunpack.c.0.s8 %v5571
    %v5573 = vlaneseq
    %v5574 = vshrl.u32 %v5573, 7
    %v5575 = vsub.s32 %v5572, %v5574
    %v5576 = vrot.slane %v5562, %v5575
    %5579 = vmatprep.subr.bf16.mxu0 0
    %5580 = vmatpush1.bf16.msra.mxu0 %v160
    %5581 = vmatprep.subr.bf16.mxu0 0
    %5582 = vmatpush1.bf16.msra.mxu0 %v161
    %5583 = vmatprep.subr.bf16.mxu0 0
    %5584 = vmatpush1.bf16.msra.mxu0 %v162
    %5585 = vmatprep.subr.bf16.mxu0 0
    %5586 = vmatpush1.bf16.msra.mxu0 %v163
    %5587 = vmatprep.subr.bf16.mxu0 0
    %5588 = vmatpush1.bf16.msra.mxu0 %v164
    %5589 = vmatprep.subr.bf16.mxu0 0
    %5590 = vmatpush1.bf16.msra.mxu0 %v165
    %5591 = vmatprep.subr.bf16.mxu0 0
    %5592 = vmatpush1.bf16.msra.mxu0 %v166
    %5593 = vmatprep.subr.bf16.mxu0 0
    %5594 = vmatpush1.bf16.msra.mxu0 %v167
    %5595 = vmatprep.subr.bf16.mxu0 0
    %5596 = vmatpush1.bf16.msra.mxu0 %v168
    %5597 = vmatprep.subr.bf16.mxu0 0
    %5598 = vmatpush1.bf16.msra.mxu0 %v169
    %5599 = vmatprep.subr.bf16.mxu0 0
    %5600 = vmatpush1.bf16.msra.mxu0 %v170
    %5601 = vmatprep.subr.bf16.mxu0 0
    %5602 = vmatpush1.bf16.msra.mxu0 %v171
    %5603 = vmatprep.subr.bf16.mxu0 0
    %5604 = vmatpush1.bf16.msra.mxu0 %v172
    %5605 = vmatprep.subr.bf16.mxu0 0
    %5606 = vmatpush1.bf16.msra.mxu0 %v173
    %5607 = vmatprep.subr.bf16.mxu0 0
    %5608 = vmatpush1.bf16.msra.mxu0 %v174
    %5609 = vmatprep.subr.bf16.mxu0 0
    %5610 = vmatpush1.bf16.msra.mxu0 %v175
    %5611 = vmatprep.mubr.bf16.mxu0 %v5576
    %5612 = vmatmul.mubr.bf16.gmra.mrb[0].mxu0 %v5569
    %v5613 = vpop.f32.mrb[0].mxu0
    %v5614 = vadd.f32 0.0, %v5613
    %v5615 = vpop.f32.mrb[0].mxu0
    %v5616 = vpop.f32.mrb[0].mxu0
    %v5617 = vpop.f32.mrb[0].mxu0
    %5618 = vdwg.mxu0
    %v5619 = vmax.f32 %v5547, %v5614
    %s5620 = scalar_lea.vmem %s2, 28
    %v5621 = vld [vmem:[%s5620] sm:$0x3]
    %v5624 = vunpack.c.l.s4 1966171168
    %v5625 = vunpack.c.0.s8 %v5624
    %v5626 = vlaneseq
    %v5627 = vshrl.u32 %v5626, 7
    %v5628 = vsub.s32 %v5625, %v5627
    %v5629 = vrot.slane %v5621, %v5628
    %v5630 = vcombine.high %v5629, %v5629
    %v5632 = vunpack.c.l.s4 1966171168
    %v5633 = vunpack.c.0.s8 %v5632
    %v5634 = vlaneseq
    %v5635 = vshrl.u32 %v5634, 7
    %v5636 = vsub.s32 %v5633, %v5635
    %v5637 = vrot.slane %v5629, %v5636
    %v5639 = vunpack.c.l.s4 1966171168
    %v5640 = vunpack.c.0.s8 %v5639
    %v5641 = vlaneseq
    %v5642 = vshrl.u32 %v5641, 7
    %v5643 = vsub.s32 %v5640, %v5642
    %v5644 = vrot.slane %v5630, %v5643
    %5647 = vmatprep.subr.bf16.mxu0 0
    %5648 = vmatpush1.bf16.msra.mxu0 %v160
    %5649 = vmatprep.subr.bf16.mxu0 0
    %5650 = vmatpush1.bf16.msra.mxu0 %v161
    %5651 = vmatprep.subr.bf16.mxu0 0
    %5652 = vmatpush1.bf16.msra.mxu0 %v162
    %5653 = vmatprep.subr.bf16.mxu0 0
    %5654 = vmatpush1.bf16.msra.mxu0 %v163
    %5655 = vmatprep.subr.bf16.mxu0 0
    %5656 = vmatpush1.bf16.msra.mxu0 %v164
    %5657 = vmatprep.subr.bf16.mxu0 0
    %5658 = vmatpush1.bf16.msra.mxu0 %v165
    %5659 = vmatprep.subr.bf16.mxu0 0
    %5660 = vmatpush1.bf16.msra.mxu0 %v166
    %5661 = vmatprep.subr.bf16.mxu0 0
    %5662 = vmatpush1.bf16.msra.mxu0 %v167
    %5663 = vmatprep.subr.bf16.mxu0 0
    %5664 = vmatpush1.bf16.msra.mxu0 %v168
    %5665 = vmatprep.subr.bf16.mxu0 0
    %5666 = vmatpush1.bf16.msra.mxu0 %v169
    %5667 = vmatprep.subr.bf16.mxu0 0
    %5668 = vmatpush1.bf16.msra.mxu0 %v170
    %5669 = vmatprep.subr.bf16.mxu0 0
    %5670 = vmatpush1.bf16.msra.mxu0 %v171
    %5671 = vmatprep.subr.bf16.mxu0 0
    %5672 = vmatpush1.bf16.msra.mxu0 %v172
    %5673 = vmatprep.subr.bf16.mxu0 0
    %5674 = vmatpush1.bf16.msra.mxu0 %v173
    %5675 = vmatprep.subr.bf16.mxu0 0
    %5676 = vmatpush1.bf16.msra.mxu0 %v174
    %5677 = vmatprep.subr.bf16.mxu0 0
    %5678 = vmatpush1.bf16.msra.mxu0 %v175
    %5679 = vmatprep.mubr.bf16.mxu0 %v5644
    %5680 = vmatmul.mubr.bf16.gmra.mrb[0].mxu0 %v5637
    %v5681 = vpop.f32.mrb[0].mxu0
    %v5682 = vadd.f32 0.0, %v5681
    %v5683 = vpop.f32.mrb[0].mxu0
    %v5684 = vpop.f32.mrb[0].mxu0
    %v5685 = vpop.f32.mrb[0].mxu0
    %5686 = vdwg.mxu0
    %s5687 = scalar_lea.vmem %s3, 28
    %v5688 = vld [vmem:[%s5687] sm:$0x3]
    %v5691 = vunpack.c.l.s4 1966171168
    %v5692 = vunpack.c.0.s8 %v5691
    %v5693 = vlaneseq
    %v5694 = vshrl.u32 %v5693, 7
    %v5695 = vsub.s32 %v5692, %v5694
    %v5696 = vrot.slane %v5688, %v5695
    %v5697 = vcombine.high %v5696, %v5696
    %v5699 = vunpack.c.l.s4 1966171168
    %v5700 = vunpack.c.0.s8 %v5699
    %v5701 = vlaneseq
    %v5702 = vshrl.u32 %v5701, 7
    %v5703 = vsub.s32 %v5700, %v5702
    %v5704 = vrot.slane %v5696, %v5703
    %v5706 = vunpack.c.l.s4 1966171168
    %v5707 = vunpack.c.0.s8 %v5706
    %v5708 = vlaneseq
    %v5709 = vshrl.u32 %v5708, 7
    %v5710 = vsub.s32 %v5707, %v5709
    %v5711 = vrot.slane %v5697, %v5710
    %5714 = vmatprep.subr.bf16.mxu0 0
    %5715 = vmatpush1.bf16.msra.mxu0 %v160
    %5716 = vmatprep.subr.bf16.mxu0 0
    %5717 = vmatpush1.bf16.msra.mxu0 %v161
    %5718 = vmatprep.subr.bf16.mxu0 0
    %5719 = vmatpush1.bf16.msra.mxu0 %v162
    %5720 = vmatprep.subr.bf16.mxu0 0
    %5721 = vmatpush1.bf16.msra.mxu0 %v163
    %5722 = vmatprep.subr.bf16.mxu0 0
    %5723 = vmatpush1.bf16.msra.mxu0 %v164
    %5724 = vmatprep.subr.bf16.mxu0 0
    %5725 = vmatpush1.bf16.msra.mxu0 %v165
    %5726 = vmatprep.subr.bf16.mxu0 0
    %5727 = vmatpush1.bf16.msra.mxu0 %v166
    %5728 = vmatprep.subr.bf16.mxu0 0
    %5729 = vmatpush1.bf16.msra.mxu0 %v167
    %5730 = vmatprep.subr.bf16.mxu0 0
    %5731 = vmatpush1.bf16.msra.mxu0 %v168
    %5732 = vmatprep.subr.bf16.mxu0 0
    %5733 = vmatpush1.bf16.msra.mxu0 %v169
    %5734 = vmatprep.subr.bf16.mxu0 0
    %5735 = vmatpush1.bf16.msra.mxu0 %v170
    %5736 = vmatprep.subr.bf16.mxu0 0
    %5737 = vmatpush1.bf16.msra.mxu0 %v171
    %5738 = vmatprep.subr.bf16.mxu0 0
    %5739 = vmatpush1.bf16.msra.mxu0 %v172
    %5740 = vmatprep.subr.bf16.mxu0 0
    %5741 = vmatpush1.bf16.msra.mxu0 %v173
    %5742 = vmatprep.subr.bf16.mxu0 0
    %5743 = vmatpush1.bf16.msra.mxu0 %v174
    %5744 = vmatprep.subr.bf16.mxu0 0
    %5745 = vmatpush1.bf16.msra.mxu0 %v175
    %5746 = vmatprep.mubr.bf16.mxu0 %v5711
    %5747 = vmatmul.mubr.bf16.gmra.mrb[0].mxu0 %v5704
    %v5748 = vpop.f32.mrb[0].mxu0
    %v5749 = vadd.f32 0.0, %v5748
    %v5750 = vpop.f32.mrb[0].mxu0
    %v5751 = vpop.f32.mrb[0].mxu0
    %v5752 = vpop.f32.mrb[0].mxu0
    %5753 = vdwg.mxu0
    %v5754 = vmax.f32 %v5682, %v5749
    %v5755 = vmax.f32 %v5619, %v5754
    %v5756 = vadd.f32 %v5755, %v437
    %v5757 = vmax.f32 %v5756, 0.0
    %v5758 = vpack.c.bf16 %v5757, %v5757
    %s5759 = scalar_lea.vmem %s6, 896
    %v5760 = vld [vmem:[%s5759] sm:$0xf]
    %v5761 = vld [vmem:[%s5759 + $0x4] sm:$0xf]
    %v5762 = vld [vmem:[%s5759 + $0x8] sm:$0xf]
    %v5763 = vld [vmem:[%s5759 + $0xc] sm:$0xf]
    %v5764 = vld [vmem:[%s5759 + $0x10] sm:$0xf]
    %v5765 = vld [vmem:[%s5759 + $0x14] sm:$0xf]
    %v5766 = vld [vmem:[%s5759 + $0x18] sm:$0xf]
    %v5767 = vld [vmem:[%s5759 + $0x1c] sm:$0xf]
    %v5768 = vld [vmem:[%s5759 + $0x20] sm:$0xf]
    %v5769 = vld [vmem:[%s5759 + $0x24] sm:$0xf]
    %v5770 = vld [vmem:[%s5759 + $0x28] sm:$0xf]
    %v5771 = vld [vmem:[%s5759 + $0x2c] sm:$0xf]
    %v5772 = vld [vmem:[%s5759 + $0x30] sm:$0xf]
    %v5773 = vld [vmem:[%s5759 + $0x34] sm:$0xf]
    %v5774 = vld [vmem:[%s5759 + $0x38] sm:$0xf]
    %v5775 = vld [vmem:[%s5759 + $0x3c] sm:$0xf]
    %v5792 = vunpack.c.l.b16 %v5760
    %v5793 = vunpack.c.l.b16 %v5761
    %v5794 = vunpack.c.l.b16 %v5762
    %v5795 = vunpack.c.l.b16 %v5763
    %v5796 = vunpack.c.l.b16 %v5764
    %v5797 = vunpack.c.l.b16 %v5765
    %v5798 = vunpack.c.l.b16 %v5766
    %v5799 = vunpack.c.l.b16 %v5767
    %v5800 = vunpack.c.l.b16 %v5768
    %v5801 = vunpack.c.l.b16 %v5769
    %v5802 = vunpack.c.l.b16 %v5770
    %v5803 = vunpack.c.l.b16 %v5771
    %v5804 = vunpack.c.l.b16 %v5772
    %v5805 = vunpack.c.l.b16 %v5773
    %v5806 = vunpack.c.l.b16 %v5774
    %v5807 = vunpack.c.l.b16 %v5775
    %v5808 = vpack.c.b16 %v5793, %v5792
    %v5809 = vpack.c.b16 %v5795, %v5794
    %v5810 = vpack.c.b16 %v5797, %v5796
    %v5811 = vpack.c.b16 %v5799, %v5798
    %v5812 = vpack.c.b16 %v5801, %v5800
    %v5813 = vpack.c.b16 %v5803, %v5802
    %v5814 = vpack.c.b16 %v5805, %v5804
    %v5815 = vpack.c.b16 %v5807, %v5806
    %5824 = vmatprep.subr.bf16.mxu0 0
    %5825 = vmatpush1.bf16.msra.mxu0 %v5808
    %5826 = vmatprep.subr.bf16.mxu0 0
    %5827 = vmatpush1.bf16.msra.mxu0 %v5809
    %5828 = vmatprep.subr.bf16.mxu0 0
    %5829 = vmatpush1.bf16.msra.mxu0 %v5810
    %5830 = vmatprep.subr.bf16.mxu0 0
    %5831 = vmatpush1.bf16.msra.mxu0 %v5811
    %5832 = vmatprep.subr.bf16.mxu0 0
    %5833 = vmatpush1.bf16.msra.mxu0 %v5812
    %5834 = vmatprep.subr.bf16.mxu0 0
    %5835 = vmatpush1.bf16.msra.mxu0 %v5813
    %5836 = vmatprep.subr.bf16.mxu0 0
    %5837 = vmatpush1.bf16.msra.mxu0 %v5814
    %5838 = vmatprep.subr.bf16.mxu0 0
    %5839 = vmatpush1.bf16.msra.mxu0 %v5815
    %5840 = vmatprep.subr.bf16.mxu0 0
    %5841 = vmatpush1.bf16.msra.mxu0 0
    %5842 = vmatprep.subr.bf16.mxu0 0
    %5843 = vmatpush1.bf16.msra.mxu0 0
    %5844 = vmatprep.subr.bf16.mxu0 0
    %5845 = vmatpush1.bf16.msra.mxu0 0
    %5846 = vmatprep.subr.bf16.mxu0 0
    %5847 = vmatpush1.bf16.msra.mxu0 0
    %5848 = vmatprep.subr.bf16.mxu0 0
    %5849 = vmatpush1.bf16.msra.mxu0 0
    %5850 = vmatprep.subr.bf16.mxu0 0
    %5851 = vmatpush1.bf16.msra.mxu0 0
    %5852 = vmatprep.subr.bf16.mxu0 0
    %5853 = vmatpush1.bf16.msra.mxu0 0
    %5854 = vmatprep.subr.bf16.mxu0 0
    %5855 = vmatpush1.bf16.msra.mxu0 0
    %5856 = vmatprep.mubr.bf16.mxu0 0
    %5857 = vmatmul.mubr.bf16.gmra.mrb[0].mxu0 %v5758
    %v5858 = vpop.f32.mrb[0].mxu0
    %v5859 = vadd.f32 0.0, %v5858
    %v5860 = vpop.f32.mrb[0].mxu0
    %v5861 = vpop.f32.mrb[0].mxu0
    %v5862 = vpop.f32.mrb[0].mxu0
    %5863 = vdwg.mxu0
    %v5864 = vadd.f32 %v5484, %v5859
    %s5865 = scalar_lea.vmem %s0, 30
    %v5866 = vld [vmem:[%s5865] sm:$0x3]
    %v5869 = vunpack.c.l.s4 1966171168
    %v5870 = vunpack.c.0.s8 %v5869
    %v5871 = vlaneseq
    %v5872 = vshrl.u32 %v5871, 7
    %v5873 = vsub.s32 %v5870, %v5872
    %v5874 = vrot.slane %v5866, %v5873
    %v5875 = vcombine.high %v5874, %v5874
    %v5877 = vunpack.c.l.s4 1966171168
    %v5878 = vunpack.c.0.s8 %v5877
    %v5879 = vlaneseq
    %v5880 = vshrl.u32 %v5879, 7
    %v5881 = vsub.s32 %v5878, %v5880
    %v5882 = vrot.slane %v5874, %v5881
    %v5884 = vunpack.c.l.s4 1966171168
    %v5885 = vunpack.c.0.s8 %v5884
    %v5886 = vlaneseq
    %v5887 = vshrl.u32 %v5886, 7
    %v5888 = vsub.s32 %v5885, %v5887
    %v5889 = vrot.slane %v5875, %v5888
    %5892 = vmatprep.subr.bf16.mxu0 0
    %5893 = vmatpush1.bf16.msra.mxu0 %v160
    %5894 = vmatprep.subr.bf16.mxu0 0
    %5895 = vmatpush1.bf16.msra.mxu0 %v161
    %5896 = vmatprep.subr.bf16.mxu0 0
    %5897 = vmatpush1.bf16.msra.mxu0 %v162
    %5898 = vmatprep.subr.bf16.mxu0 0
    %5899 = vmatpush1.bf16.msra.mxu0 %v163
    %5900 = vmatprep.subr.bf16.mxu0 0
    %5901 = vmatpush1.bf16.msra.mxu0 %v164
    %5902 = vmatprep.subr.bf16.mxu0 0
    %5903 = vmatpush1.bf16.msra.mxu0 %v165
    %5904 = vmatprep.subr.bf16.mxu0 0
    %5905 = vmatpush1.bf16.msra.mxu0 %v166
    %5906 = vmatprep.subr.bf16.mxu0 0
    %5907 = vmatpush1.bf16.msra.mxu0 %v167
    %5908 = vmatprep.subr.bf16.mxu0 0
    %5909 = vmatpush1.bf16.msra.mxu0 %v168
    %5910 = vmatprep.subr.bf16.mxu0 0
    %5911 = vmatpush1.bf16.msra.mxu0 %v169
    %5912 = vmatprep.subr.bf16.mxu0 0
    %5913 = vmatpush1.bf16.msra.mxu0 %v170
    %5914 = vmatprep.subr.bf16.mxu0 0
    %5915 = vmatpush1.bf16.msra.mxu0 %v171
    %5916 = vmatprep.subr.bf16.mxu0 0
    %5917 = vmatpush1.bf16.msra.mxu0 %v172
    %5918 = vmatprep.subr.bf16.mxu0 0
    %5919 = vmatpush1.bf16.msra.mxu0 %v173
    %5920 = vmatprep.subr.bf16.mxu0 0
    %5921 = vmatpush1.bf16.msra.mxu0 %v174
    %5922 = vmatprep.subr.bf16.mxu0 0
    %5923 = vmatpush1.bf16.msra.mxu0 %v175
    %5924 = vmatprep.mubr.bf16.mxu0 %v5889
    %5925 = vmatmul.mubr.bf16.gmra.mrb[0].mxu0 %v5882
    %v5926 = vpop.f32.mrb[0].mxu0
    %v5927 = vadd.f32 0.0, %v5926
    %v5928 = vpop.f32.mrb[0].mxu0
    %v5929 = vpop.f32.mrb[0].mxu0
    %v5930 = vpop.f32.mrb[0].mxu0
    %5931 = vdwg.mxu0
    %s5932 = scalar_lea.vmem %s1, 30
    %v5933 = vld [vmem:[%s5932] sm:$0x3]
    %v5936 = vunpack.c.l.s4 1966171168
    %v5937 = vunpack.c.0.s8 %v5936
    %v5938 = vlaneseq
    %v5939 = vshrl.u32 %v5938, 7
    %v5940 = vsub.s32 %v5937, %v5939
    %v5941 = vrot.slane %v5933, %v5940
    %v5942 = vcombine.high %v5941, %v5941
    %v5944 = vunpack.c.l.s4 1966171168
    %v5945 = vunpack.c.0.s8 %v5944
    %v5946 = vlaneseq
    %v5947 = vshrl.u32 %v5946, 7
    %v5948 = vsub.s32 %v5945, %v5947
    %v5949 = vrot.slane %v5941, %v5948
    %v5951 = vunpack.c.l.s4 1966171168
    %v5952 = vunpack.c.0.s8 %v5951
    %v5953 = vlaneseq
    %v5954 = vshrl.u32 %v5953, 7
    %v5955 = vsub.s32 %v5952, %v5954
    %v5956 = vrot.slane %v5942, %v5955
    %5959 = vmatprep.subr.bf16.mxu0 0
    %5960 = vmatpush1.bf16.msra.mxu0 %v160
    %5961 = vmatprep.subr.bf16.mxu0 0
    %5962 = vmatpush1.bf16.msra.mxu0 %v161
    %5963 = vmatprep.subr.bf16.mxu0 0
    %5964 = vmatpush1.bf16.msra.mxu0 %v162
    %5965 = vmatprep.subr.bf16.mxu0 0
    %5966 = vmatpush1.bf16.msra.mxu0 %v163
    %5967 = vmatprep.subr.bf16.mxu0 0
    %5968 = vmatpush1.bf16.msra.mxu0 %v164
    %5969 = vmatprep.subr.bf16.mxu0 0
    %5970 = vmatpush1.bf16.msra.mxu0 %v165
    %5971 = vmatprep.subr.bf16.mxu0 0
    %5972 = vmatpush1.bf16.msra.mxu0 %v166
    %5973 = vmatprep.subr.bf16.mxu0 0
    %5974 = vmatpush1.bf16.msra.mxu0 %v167
    %5975 = vmatprep.subr.bf16.mxu0 0
    %5976 = vmatpush1.bf16.msra.mxu0 %v168
    %5977 = vmatprep.subr.bf16.mxu0 0
    %5978 = vmatpush1.bf16.msra.mxu0 %v169
    %5979 = vmatprep.subr.bf16.mxu0 0
    %5980 = vmatpush1.bf16.msra.mxu0 %v170
    %5981 = vmatprep.subr.bf16.mxu0 0
    %5982 = vmatpush1.bf16.msra.mxu0 %v171
    %5983 = vmatprep.subr.bf16.mxu0 0
    %5984 = vmatpush1.bf16.msra.mxu0 %v172
    %5985 = vmatprep.subr.bf16.mxu0 0
    %5986 = vmatpush1.bf16.msra.mxu0 %v173
    %5987 = vmatprep.subr.bf16.mxu0 0
    %5988 = vmatpush1.bf16.msra.mxu0 %v174
    %5989 = vmatprep.subr.bf16.mxu0 0
    %5990 = vmatpush1.bf16.msra.mxu0 %v175
    %5991 = vmatprep.mubr.bf16.mxu0 %v5956
    %5992 = vmatmul.mubr.bf16.gmra.mrb[0].mxu0 %v5949
    %v5993 = vpop.f32.mrb[0].mxu0
    %v5994 = vadd.f32 0.0, %v5993
    %v5995 = vpop.f32.mrb[0].mxu0
    %v5996 = vpop.f32.mrb[0].mxu0
    %v5997 = vpop.f32.mrb[0].mxu0
    %5998 = vdwg.mxu0
    %v5999 = vmax.f32 %v5927, %v5994
    %s6000 = scalar_lea.vmem %s2, 30
    %v6001 = vld [vmem:[%s6000] sm:$0x3]
    %v6004 = vunpack.c.l.s4 1966171168
    %v6005 = vunpack.c.0.s8 %v6004
    %v6006 = vlaneseq
    %v6007 = vshrl.u32 %v6006, 7
    %v6008 = vsub.s32 %v6005, %v6007
    %v6009 = vrot.slane %v6001, %v6008
    %v6010 = vcombine.high %v6009, %v6009
    %v6012 = vunpack.c.l.s4 1966171168
    %v6013 = vunpack.c.0.s8 %v6012
    %v6014 = vlaneseq
    %v6015 = vshrl.u32 %v6014, 7
    %v6016 = vsub.s32 %v6013, %v6015
    %v6017 = vrot.slane %v6009, %v6016
    %v6019 = vunpack.c.l.s4 1966171168
    %v6020 = vunpack.c.0.s8 %v6019
    %v6021 = vlaneseq
    %v6022 = vshrl.u32 %v6021, 7
    %v6023 = vsub.s32 %v6020, %v6022
    %v6024 = vrot.slane %v6010, %v6023
    %6027 = vmatprep.subr.bf16.mxu0 0
    %6028 = vmatpush1.bf16.msra.mxu0 %v160
    %6029 = vmatprep.subr.bf16.mxu0 0
    %6030 = vmatpush1.bf16.msra.mxu0 %v161
    %6031 = vmatprep.subr.bf16.mxu0 0
    %6032 = vmatpush1.bf16.msra.mxu0 %v162
    %6033 = vmatprep.subr.bf16.mxu0 0
    %6034 = vmatpush1.bf16.msra.mxu0 %v163
    %6035 = vmatprep.subr.bf16.mxu0 0
    %6036 = vmatpush1.bf16.msra.mxu0 %v164
    %6037 = vmatprep.subr.bf16.mxu0 0
    %6038 = vmatpush1.bf16.msra.mxu0 %v165
    %6039 = vmatprep.subr.bf16.mxu0 0
    %6040 = vmatpush1.bf16.msra.mxu0 %v166
    %6041 = vmatprep.subr.bf16.mxu0 0
    %6042 = vmatpush1.bf16.msra.mxu0 %v167
    %6043 = vmatprep.subr.bf16.mxu0 0
    %6044 = vmatpush1.bf16.msra.mxu0 %v168
    %6045 = vmatprep.subr.bf16.mxu0 0
    %6046 = vmatpush1.bf16.msra.mxu0 %v169
    %6047 = vmatprep.subr.bf16.mxu0 0
    %6048 = vmatpush1.bf16.msra.mxu0 %v170
    %6049 = vmatprep.subr.bf16.mxu0 0
    %6050 = vmatpush1.bf16.msra.mxu0 %v171
    %6051 = vmatprep.subr.bf16.mxu0 0
    %6052 = vmatpush1.bf16.msra.mxu0 %v172
    %6053 = vmatprep.subr.bf16.mxu0 0
    %6054 = vmatpush1.bf16.msra.mxu0 %v173
    %6055 = vmatprep.subr.bf16.mxu0 0
    %6056 = vmatpush1.bf16.msra.mxu0 %v174
    %6057 = vmatprep.subr.bf16.mxu0 0
    %6058 = vmatpush1.bf16.msra.mxu0 %v175
    %6059 = vmatprep.mubr.bf16.mxu0 %v6024
    %6060 = vmatmul.mubr.bf16.gmra.mrb[0].mxu0 %v6017
    %v6061 = vpop.f32.mrb[0].mxu0
    %v6062 = vadd.f32 0.0, %v6061
    %v6063 = vpop.f32.mrb[0].mxu0
    %v6064 = vpop.f32.mrb[0].mxu0
    %v6065 = vpop.f32.mrb[0].mxu0
    %6066 = vdwg.mxu0
    %s6067 = scalar_lea.vmem %s3, 30
    %v6068 = vld [vmem:[%s6067] sm:$0x3]
    %v6071 = vunpack.c.l.s4 1966171168
    %v6072 = vunpack.c.0.s8 %v6071
    %v6073 = vlaneseq
    %v6074 = vshrl.u32 %v6073, 7
    %v6075 = vsub.s32 %v6072, %v6074
    %v6076 = vrot.slane %v6068, %v6075
    %v6077 = vcombine.high %v6076, %v6076
    %v6079 = vunpack.c.l.s4 1966171168
    %v6080 = vunpack.c.0.s8 %v6079
    %v6081 = vlaneseq
    %v6082 = vshrl.u32 %v6081, 7
    %v6083 = vsub.s32 %v6080, %v6082
    %v6084 = vrot.slane %v6076, %v6083
    %v6086 = vunpack.c.l.s4 1966171168
    %v6087 = vunpack.c.0.s8 %v6086
    %v6088 = vlaneseq
    %v6089 = vshrl.u32 %v6088, 7
    %v6090 = vsub.s32 %v6087, %v6089
    %v6091 = vrot.slane %v6077, %v6090
    %6094 = vmatprep.subr.bf16.mxu0 0
    %6095 = vmatpush1.bf16.msra.mxu0 %v160
    %6096 = vmatprep.subr.bf16.mxu0 0
    %6097 = vmatpush1.bf16.msra.mxu0 %v161
    %6098 = vmatprep.subr.bf16.mxu0 0
    %6099 = vmatpush1.bf16.msra.mxu0 %v162
    %6100 = vmatprep.subr.bf16.mxu0 0
    %6101 = vmatpush1.bf16.msra.mxu0 %v163
    %6102 = vmatprep.subr.bf16.mxu0 0
    %6103 = vmatpush1.bf16.msra.mxu0 %v164
    %6104 = vmatprep.subr.bf16.mxu0 0
    %6105 = vmatpush1.bf16.msra.mxu0 %v165
    %6106 = vmatprep.subr.bf16.mxu0 0
    %6107 = vmatpush1.bf16.msra.mxu0 %v166
    %6108 = vmatprep.subr.bf16.mxu0 0
    %6109 = vmatpush1.bf16.msra.mxu0 %v167
    %6110 = vmatprep.subr.bf16.mxu0 0
    %6111 = vmatpush1.bf16.msra.mxu0 %v168
    %6112 = vmatprep.subr.bf16.mxu0 0
    %6113 = vmatpush1.bf16.msra.mxu0 %v169
    %6114 = vmatprep.subr.bf16.mxu0 0
    %6115 = vmatpush1.bf16.msra.mxu0 %v170
    %6116 = vmatprep.subr.bf16.mxu0 0
    %6117 = vmatpush1.bf16.msra.mxu0 %v171
    %6118 = vmatprep.subr.bf16.mxu0 0
    %6119 = vmatpush1.bf16.msra.mxu0 %v172
    %6120 = vmatprep.subr.bf16.mxu0 0
    %6121 = vmatpush1.bf16.msra.mxu0 %v173
    %6122 = vmatprep.subr.bf16.mxu0 0
    %6123 = vmatpush1.bf16.msra.mxu0 %v174
    %6124 = vmatprep.subr.bf16.mxu0 0
    %6125 = vmatpush1.bf16.msra.mxu0 %v175
    %6126 = vmatprep.mubr.bf16.mxu0 %v6091
    %6127 = vmatmul.mubr.bf16.gmra.mrb[0].mxu0 %v6084
    %v6128 = vpop.f32.mrb[0].mxu0
    %v6129 = vadd.f32 0.0, %v6128
    %v6130 = vpop.f32.mrb[0].mxu0
    %v6131 = vpop.f32.mrb[0].mxu0
    %v6132 = vpop.f32.mrb[0].mxu0
    %6133 = vdwg.mxu0
    %v6134 = vmax.f32 %v6062, %v6129
    %v6135 = vmax.f32 %v5999, %v6134
    %v6136 = vadd.f32 %v6135, %v437
    %v6137 = vmax.f32 %v6136, 0.0
    %v6138 = vpack.c.bf16 %v6137, %v6137
    %s6139 = scalar_lea.vmem %s6, 960
    %v6140 = vld [vmem:[%s6139] sm:$0xf]
    %v6141 = vld [vmem:[%s6139 + $0x4] sm:$0xf]
    %v6142 = vld [vmem:[%s6139 + $0x8] sm:$0xf]
    %v6143 = vld [vmem:[%s6139 + $0xc] sm:$0xf]
    %v6144 = vld [vmem:[%s6139 + $0x10] sm:$0xf]
    %v6145 = vld [vmem:[%s6139 + $0x14] sm:$0xf]
    %v6146 = vld [vmem:[%s6139 + $0x18] sm:$0xf]
    %v6147 = vld [vmem:[%s6139 + $0x1c] sm:$0xf]
    %v6148 = vld [vmem:[%s6139 + $0x20] sm:$0xf]
    %v6149 = vld [vmem:[%s6139 + $0x24] sm:$0xf]
    %v6150 = vld [vmem:[%s6139 + $0x28] sm:$0xf]
    %v6151 = vld [vmem:[%s6139 + $0x2c] sm:$0xf]
    %v6152 = vld [vmem:[%s6139 + $0x30] sm:$0xf]
    %v6153 = vld [vmem:[%s6139 + $0x34] sm:$0xf]
    %v6154 = vld [vmem:[%s6139 + $0x38] sm:$0xf]
    %v6155 = vld [vmem:[%s6139 + $0x3c] sm:$0xf]
    %v6172 = vunpack.c.l.b16 %v6140
    %v6173 = vunpack.c.l.b16 %v6141
    %v6174 = vunpack.c.l.b16 %v6142
    %v6175 = vunpack.c.l.b16 %v6143
    %v6176 = vunpack.c.l.b16 %v6144
    %v6177 = vunpack.c.l.b16 %v6145
    %v6178 = vunpack.c.l.b16 %v6146
    %v6179 = vunpack.c.l.b16 %v6147
    %v6180 = vunpack.c.l.b16 %v6148
    %v6181 = vunpack.c.l.b16 %v6149
    %v6182 = vunpack.c.l.b16 %v6150
    %v6183 = vunpack.c.l.b16 %v6151
    %v6184 = vunpack.c.l.b16 %v6152
    %v6185 = vunpack.c.l.b16 %v6153
    %v6186 = vunpack.c.l.b16 %v6154
    %v6187 = vunpack.c.l.b16 %v6155
    %v6188 = vpack.c.b16 %v6173, %v6172
    %v6189 = vpack.c.b16 %v6175, %v6174
    %v6190 = vpack.c.b16 %v6177, %v6176
    %v6191 = vpack.c.b16 %v6179, %v6178
    %v6192 = vpack.c.b16 %v6181, %v6180
    %v6193 = vpack.c.b16 %v6183, %v6182
    %v6194 = vpack.c.b16 %v6185, %v6184
    %v6195 = vpack.c.b16 %v6187, %v6186
    %6204 = vmatprep.subr.bf16.mxu0 0
    %6205 = vmatpush1.bf16.msra.mxu0 %v6188
    %6206 = vmatprep.subr.bf16.mxu0 0
    %6207 = vmatpush1.bf16.msra.mxu0 %v6189
    %6208 = vmatprep.subr.bf16.mxu0 0
    %6209 = vmatpush1.bf16.msra.mxu0 %v6190
    %6210 = vmatprep.subr.bf16.mxu0 0
    %6211 = vmatpush1.bf16.msra.mxu0 %v6191
    %6212 = vmatprep.subr.bf16.mxu0 0
    %6213 = vmatpush1.bf16.msra.mxu0 %v6192
    %6214 = vmatprep.subr.bf16.mxu0 0
    %6215 = vmatpush1.bf16.msra.mxu0 %v6193
    %6216 = vmatprep.subr.bf16.mxu0 0
    %6217 = vmatpush1.bf16.msra.mxu0 %v6194
    %6218 = vmatprep.subr.bf16.mxu0 0
    %6219 = vmatpush1.bf16.msra.mxu0 %v6195
    %6220 = vmatprep.subr.bf16.mxu0 0
    %6221 = vmatpush1.bf16.msra.mxu0 0
    %6222 = vmatprep.subr.bf16.mxu0 0
    %6223 = vmatpush1.bf16.msra.mxu0 0
    %6224 = vmatprep.subr.bf16.mxu0 0
    %6225 = vmatpush1.bf16.msra.mxu0 0
    %6226 = vmatprep.subr.bf16.mxu0 0
    %6227 = vmatpush1.bf16.msra.mxu0 0
    %6228 = vmatprep.subr.bf16.mxu0 0
    %6229 = vmatpush1.bf16.msra.mxu0 0
    %6230 = vmatprep.subr.bf16.mxu0 0
    %6231 = vmatpush1.bf16.msra.mxu0 0
    %6232 = vmatprep.subr.bf16.mxu0 0
    %6233 = vmatpush1.bf16.msra.mxu0 0
    %6234 = vmatprep.subr.bf16.mxu0 0
    %6235 = vmatpush1.bf16.msra.mxu0 0
    %6236 = vmatprep.mubr.bf16.mxu0 0
    %6237 = vmatmul.mubr.bf16.gmra.mrb[0].mxu0 %v6138
    %v6238 = vpop.f32.mrb[0].mxu0
    %v6239 = vadd.f32 0.0, %v6238
    %v6240 = vpop.f32.mrb[0].mxu0
    %v6241 = vpop.f32.mrb[0].mxu0
    %v6242 = vpop.f32.mrb[0].mxu0
    %6243 = vdwg.mxu0
    %v6244 = vadd.f32 %v5864, %v6239
    %v6245 = vld [vmem:[%s7] sm:$0x1]
    %v6247 = vlaneseq
    %v6248 = vshrl.u32 %v6247, 7
    %v6249 = vsub.s32 0, %v6248
    %v6250 = vrot.slane %v6245, %v6249
    %v6252 = vadd.f32 %v6244, %v6250
    %v6253 = vmax.f32 %v6252, 0.0
    %v6254 = vpack.c.bf16 %v6253, %v6253
    %v6255 = vld [vmem:[%s8] sm:$0xf]
    %v6256 = vld [vmem:[%s8 + $0x4] sm:$0xf]
    %v6257 = vld [vmem:[%s8 + $0x8] sm:$0xf]
    %v6258 = vld [vmem:[%s8 + $0xc] sm:$0xf]
    %v6259 = vld [vmem:[%s8 + $0x10] sm:$0xf]
    %v6260 = vld [vmem:[%s8 + $0x14] sm:$0xf]
    %v6261 = vld [vmem:[%s8 + $0x18] sm:$0xf]
    %v6262 = vld [vmem:[%s8 + $0x1c] sm:$0xf]
    %v6263 = vld [vmem:[%s8 + $0x20] sm:$0xf]
    %v6264 = vld [vmem:[%s8 + $0x24] sm:$0xf]
    %v6265 = vld [vmem:[%s8 + $0x28] sm:$0xf]
    %v6266 = vld [vmem:[%s8 + $0x2c] sm:$0xf]
    %v6267 = vld [vmem:[%s8 + $0x30] sm:$0xf]
    %v6268 = vld [vmem:[%s8 + $0x34] sm:$0xf]
    %v6269 = vld [vmem:[%s8 + $0x38] sm:$0xf]
    %v6270 = vld [vmem:[%s8 + $0x3c] sm:$0xf]
    %v6271 = vld [vmem:[%s9] sm:$0x1]
    %v6273 = vlaneseq
    %v6274 = vshrl.u32 %v6273, 7
    %v6275 = vsub.s32 0, %v6274
    %v6276 = vrot.slane %v6271, %v6275
    %v6294 = vunpack.c.l.b16 %v6255
    %v6295 = vunpack.c.l.b16 %v6256
    %v6296 = vunpack.c.l.b16 %v6257
    %v6297 = vunpack.c.l.b16 %v6258
    %v6298 = vunpack.c.l.b16 %v6259
    %v6299 = vunpack.c.l.b16 %v6260
    %v6300 = vunpack.c.l.b16 %v6261
    %v6301 = vunpack.c.l.b16 %v6262
    %v6302 = vunpack.c.l.b16 %v6263
    %v6303 = vunpack.c.l.b16 %v6264
    %v6304 = vunpack.c.l.b16 %v6265
    %v6305 = vunpack.c.l.b16 %v6266
    %v6306 = vunpack.c.l.b16 %v6267
    %v6307 = vunpack.c.l.b16 %v6268
    %v6308 = vunpack.c.l.b16 %v6269
    %v6309 = vunpack.c.l.b16 %v6270
    %v6310 = vpack.c.b16 %v6295, %v6294
    %v6311 = vpack.c.b16 %v6297, %v6296
    %v6312 = vpack.c.b16 %v6299, %v6298
    %v6313 = vpack.c.b16 %v6301, %v6300
    %v6314 = vpack.c.b16 %v6303, %v6302
    %v6315 = vpack.c.b16 %v6305, %v6304
    %v6316 = vpack.c.b16 %v6307, %v6306
    %v6317 = vpack.c.b16 %v6309, %v6308
    %6326 = vmatprep.subr.bf16.mxu0 0
    %6327 = vmatpush1.bf16.msra.mxu0 %v6310
    %6328 = vmatprep.subr.bf16.mxu0 0
    %6329 = vmatpush1.bf16.msra.mxu0 %v6311
    %6330 = vmatprep.subr.bf16.mxu0 0
    %6331 = vmatpush1.bf16.msra.mxu0 %v6312
    %6332 = vmatprep.subr.bf16.mxu0 0
    %6333 = vmatpush1.bf16.msra.mxu0 %v6313
    %6334 = vmatprep.subr.bf16.mxu0 0
    %6335 = vmatpush1.bf16.msra.mxu0 %v6314
    %6336 = vmatprep.subr.bf16.mxu0 0
    %6337 = vmatpush1.bf16.msra.mxu0 %v6315
    %6338 = vmatprep.subr.bf16.mxu0 0
    %6339 = vmatpush1.bf16.msra.mxu0 %v6316
    %6340 = vmatprep.subr.bf16.mxu0 0
    %6341 = vmatpush1.bf16.msra.mxu0 %v6317
    %6342 = vmatprep.subr.bf16.mxu0 0
    %6343 = vmatpush1.bf16.msra.mxu0 0
    %6344 = vmatprep.subr.bf16.mxu0 0
    %6345 = vmatpush1.bf16.msra.mxu0 0
    %6346 = vmatprep.subr.bf16.mxu0 0
    %6347 = vmatpush1.bf16.msra.mxu0 0
    %6348 = vmatprep.subr.bf16.mxu0 0
    %6349 = vmatpush1.bf16.msra.mxu0 0
    %6350 = vmatprep.subr.bf16.mxu0 0
    %6351 = vmatpush1.bf16.msra.mxu0 0
    %6352 = vmatprep.subr.bf16.mxu0 0
    %6353 = vmatpush1.bf16.msra.mxu0 0
    %6354 = vmatprep.subr.bf16.mxu0 0
    %6355 = vmatpush1.bf16.msra.mxu0 0
    %6356 = vmatprep.subr.bf16.mxu0 0
    %6357 = vmatpush1.bf16.msra.mxu0 0
    %6358 = vmatprep.mubr.bf16.mxu0 0
    %6359 = vmatmul.mubr.bf16.gmra.mrb[0].mxu0 %v6254
    %v6360 = vpop.f32.mrb[0].mxu0
    %v6361 = vadd.f32 %v6276, %v6360
    %v6362 = vpop.f32.mrb[0].mxu0
    %v6363 = vpop.f32.mrb[0].mxu0
    %v6364 = vpop.f32.mrb[0].mxu0
    %6365 = vdwg.mxu0
    %v6366 = vlaneseq
    %v6367 = vand.u32 %v6366, 127
    %vm6368 = vcmp.lt.s32.totalorder %v6367, 10
    %v6369 = vsel %vm6368, %v6361, -1e+30
    %vm6370 = vcmask 1041408
    %v6371 = vsel %vm6370, %v6369, -inf
    %6372 = vmax.xlane.f32.xlu0 %v6371
    %v6373 = vpop.xlane.xlu0 %6372
    %v6374 = vsub.f32 %v6369, %v6373
    %v6375 = vmul.f32 %v6374, 1.442695
    %v6376 = vpow.pop %v6375
    %v6377 = vsel %vm6370, %v6376, 0.0
    %6378 = vadd.xlane.f32.xlu0 %v6377
    %v6379 = vpop.xlane.xlu0 %6378
    %v6380 = vlog2.pop %v6379
    %v6381 = vmul.f32 %v6380, 0.6931472
    %v6382 = vsub.f32 %v6374, %v6381
    %6383 = vst [vmem:[#allocation2] sm:$0x3] %v6382
    // Predicated region
    $region42: #{mnist_forward.3} parent=1 // pred_check
      _
    $region43: #{mnist_forward.3} parent=1 // pred_check_branch
      %6385 = sbr.rel (0) target = $region45
    $region44: #{mnist_forward.3} parent=1 // pred_region
      %s6387 = ssub.s32 32, 32
      %6388 = vsyncadd [#allocation3], %s6387
      %s6390 = sshll.u32 [#allocation2], 4
      %s6391 = int_to_ptr.vmem [resolvable:$true] %s6390
      %6393 = dma.vmem_to_hbm [thread:$0]  %s6391, 32, %s10, [#allocation3]
    $region45: #{mnist_forward.3} parent=1 // pred_fallthru
      _
    // Predicated region
    $region46: #{mnist_forward.3} parent=1 // pred_check
      _
    $region47: #{mnist_forward.3} parent=1 // pred_check_branch
      %6395 = sbr.rel (0) target = $region49
    $region48: #{mnist_forward.3} parent=1 // pred_region
      %6396 = dma.done [#allocation3], 32
    $region49: #{mnist_forward.3} parent=1 // pred_fallthru
      _
    %6397 = vsyncpa [#allocation3], 1

</llo_original>
